<compile_context>
chip_gen: v5e
topology: v5e:2x2
jax: 0.10.0
libtpu: 0.0.40
codegen_flags: <defaults>
</compile_context>

<pallas_src>
import functools

import numpy as np
import jax
import jax.numpy as jnp
from jax.experimental import pallas as pl
from jax.experimental.pallas import tpu as pltpu


def _vmem_limit(n_f32_elems):
    """Scoped-VMEM request derived from the block footprint (double-buffered),
    kept well under v7x's 64 MiB physical VMEM (v5e/v6e have 128 MiB)."""
    need = 8 * n_f32_elems * 4 + (4 << 20)
    return int(min(48 << 20, max(8 << 20, need)))


# --------------------------------------------------------------------------
# XLA-side im2col (one small HBM copy; see TODO above).
# --------------------------------------------------------------------------
def _conv_patches(x, k, pad):
    """x: (N, H, W, C) -> (N, H, W, k*k*C) same-spatial conv patches."""
    N, H, W, C = x.shape
    xp = jnp.pad(x, ((0, 0), (pad, pad), (pad, pad), (0, 0)))
    cols = [xp[:, ky:ky + H, kx:kx + W, :]
            for ky in range(k) for kx in range(k)]
    return jnp.concatenate(cols, axis=-1)


# --------------------------------------------------------------------------
# Pallas kernel 1: fused encoder block
#   conv (4 dots, one per 2x2 pooling-window position) -> BatchNorm2d
#   training-mode batch stats (two-pass variance) -> affine -> ReLU -> maxpool.
# --------------------------------------------------------------------------
def _encoder_block_kernel(p_ref, w_ref, o_ref, *, eps, m_total):
    """p_ref: (4, G, K) pooling-grouped patches (axis 0 = 2x2 window position,
    G = N*H/2*W/2).  w_ref: (K, Cout).  o_ref: (G, Cout) pooled output."""
    w = w_ref[...]
    y = [jnp.dot(p_ref[b], w, preferred_element_type=jnp.float32)
         for b in range(4)]                                       # 4 x (G, Cout)

    # BatchNorm2d batch statistics over all N*H*W pre-pool conv outputs.
    mean = jnp.sum(y[0] + y[1] + y[2] + y[3], axis=0, keepdims=True) / m_total
    var = (jnp.sum((y[0] - mean) ** 2, axis=0, keepdims=True)
           + jnp.sum((y[1] - mean) ** 2, axis=0, keepdims=True)
           + jnp.sum((y[2] - mean) ** 2, axis=0, keepdims=True)
           + jnp.sum((y[3] - mean) ** 2, axis=0, keepdims=True)) / m_total
    scale = jax.lax.rsqrt(var + eps)          # gamma = 1
    shift = -mean * scale                     # beta = 0 (conv bias cancelled)

    # 2x2 max-pool commutes with the monotone (scale > 0) affine + ReLU,
    # so pool first, then apply affine + ReLU to the pooled values only.
    ym = jnp.maximum(jnp.maximum(y[0], y[1]), jnp.maximum(y[2], y[3]))
    o_ref[...] = jnp.maximum(ym * scale + shift, 0.0)


def encoder_block_fwd(x, w_mat, k, pad, eps=1e-5):
    """conv -> BatchNorm2d (training-mode stats, gamma=1, beta=0) -> ReLU ->
    MaxPool2d(2,2), as one Pallas kernel.  Conv bias is mathematically
    cancelled by the BN mean subtraction and therefore omitted."""
    N, H, W, Cin = x.shape
    Cout = w_mat.shape[1]
    K = k * k * Cin
    H2, W2 = H // 2, W // 2
    G = N * H2 * W2

    # Pooling-grouped patches: p[b, g, :] is the patch of output pixel
    # (n, 2*h2 + b//2, 2*w2 + b%2) with g = ((n*H2)+h2)*W2 + w2.
    p = (_conv_patches(x, k, pad)
         .reshape(N, H2, 2, W2, 2, K)
         .transpose(2, 4, 0, 1, 3, 5)
         .reshape(4, G, K))

    cost = pl.CostEstimate(flops=2 * 4 * G * K * Cout + 12 * G * Cout,
                           transcendentals=Cout,
                           bytes_accessed=4 * (4 * G * K + K * Cout + G * Cout))

    # NOTE: grid=(1,) because the BN batch statistics couple the whole batch;
    # a >=2-step parallel grid (v7x megacore) would need a cross-step/core
    # reduction or a second pass over the pre-pool activation.
    out = pl.pallas_call(
        functools.partial(_encoder_block_kernel, eps=eps, m_total=float(4 * G)),
        out_shape=jax.ShapeDtypeStruct((G, Cout), jnp.float32),
        grid_spec=pltpu.PrefetchScalarGridSpec(
            num_scalar_prefetch=0,
            grid=(1,),
            in_specs=[pl.BlockSpec((4, G, K), lambda i: (0, 0, 0)),
                      pl.BlockSpec((K, Cout), lambda i: (0, 0))],
            out_specs=pl.BlockSpec((G, Cout), lambda i: (0, 0))),
        compiler_params=pltpu.CompilerParams(
            dimension_semantics=("arbitrary",),
            vmem_limit_bytes=_vmem_limit(4 * G * K + K * Cout + G * Cout)),
        cost_estimate=cost,
    )(p, w_mat)
    return out.reshape(N, H2, W2, Cout)


# --------------------------------------------------------------------------
# Pallas kernel 2: fused decoder block
#   conv + bias + ReLU + bilinear x2 upsample (align_corners=False) per image.
#   Upsample uses fixed-weight (0.25/0.75) shifted adds — no gathers.
#   Even / odd output columns are stored as two planes (interleaved by a tiny
#   XLA stack outside); output rows are interleaved directly in-kernel.
# --------------------------------------------------------------------------
def _decoder_block_kernel(p_ref, w_ref, b_ref, even_ref, odd_ref, *, h):
    """p_ref: (1, H, W, K) per-image patches; w_ref: (K, C); b_ref: (1, C).
    even_ref / odd_ref: (1, 2H, W, C) -> even / odd output columns."""
    wm = w_ref[...]
    bias = b_ref[...]

    ys = []
    for r in range(h):                                        # conv + ReLU rows
        yr = jnp.dot(p_ref[0, r, :, :], wm,
                     preferred_element_type=jnp.float32) + bias
        ys.append(jnp.maximum(yr, 0.0))                       # (W, C)

    def shift_prev(v):   # v[j-1], clamped at j = 0
        return jnp.concatenate([v[:1], v[:-1]], axis=0)

    def shift_next(v):   # v[j+1], clamped at j = W-1
        return jnp.concatenate([v[1:], v[-1:]], axis=0)

    for r in range(h):
        top = ys[r - 1] if r > 0 else ys[0]
        bot = ys[r + 1] if r + 1 < h else ys[h - 1]
        # output row 2r   = 0.25*y[r-1] + 0.75*y[r]
        # output row 2r+1 = 0.75*y[r]   + 0.25*y[r+1]
        for a, row in ((0, 0.25 * top + 0.75 * ys[r]),
                       (1, 0.75 * ys[r] + 0.25 * bot)):
            even_ref[0, 2 * r + a, :, :] = 0.75 * row + 0.25 * shift_prev(row)
            odd_ref[0, 2 * r + a, :, :] = 0.75 * row + 0.25 * shift_next(row)


def decoder_block_fwd(x, w_mat, bias, k, pad):
    """conv -> ReLU -> Upsample(scale_factor=2, bilinear), one Pallas kernel."""
    N, H, W, Cin = x.shape
    Cout = w_mat.shape[1]
    K = k * k * Cin
    p = _conv_patches(x, k, pad)                              # (N, H, W, K)

    out_sds = jax.ShapeDtypeStruct((N, 2 * H, W, Cout), jnp.float32)
    cost = pl.CostEstimate(
        flops=2 * N * H * W * K * Cout + 16 * N * H * W * Cout,
        transcendentals=0,
        bytes_accessed=4 * (N * H * W * K + K * Cout + Cout
                            + 2 * N * 2 * H * W * Cout))

    even, odd = pl.pallas_call(
        functools.partial(_decoder_block_kernel, h=H),
        out_shape=(out_sds, out_sds),
        grid_spec=pltpu.PrefetchScalarGridSpec(
            num_scalar_prefetch=0,
            grid=(N,),                                        # parallel over batch
            in_specs=[pl.BlockSpec((1, H, W, K), lambda n: (n, 0, 0, 0)),
                      pl.BlockSpec((K, Cout), lambda n: (0, 0)),
                      pl.BlockSpec((1, Cout), lambda n: (0, 0))],
            out_specs=(pl.BlockSpec((1, 2 * H, W, Cout), lambda n: (n, 0, 0, 0)),
                       pl.BlockSpec((1, 2 * H, W, Cout), lambda n: (n, 0, 0, 0)))),
        compiler_params=pltpu.CompilerParams(
            dimension_semantics=("parallel",),                # 2 steps for v7x
            vmem_limit_bytes=_vmem_limit(H * W * K + K * Cout
                                         + 4 * H * W * Cout)),
        cost_estimate=cost,
    )(p, w_mat, bias.reshape(1, Cout))

    # Interleave even/odd output columns (tiny XLA copy; all upsample math is
    # already done in-kernel).
    return jnp.stack([even, odd], axis=3).reshape(N, 2 * H, 2 * W, Cout)


# --------------------------------------------------------------------------
# Parameter init (deterministic, PyTorch-style uniform(-1/sqrt(fan_in), ...))
# --------------------------------------------------------------------------
def init_conv(key, k, cin, cout):
    k1, k2 = jax.random.split(key)
    fan_in = k * k * cin
    bound = 1.0 / np.sqrt(fan_in)
    w = jax.random.uniform(k1, (k, k, cin, cout), minval=-bound, maxval=bound,
                           dtype=jnp.float32)
    b = jax.random.uniform(k2, (cout,), minval=-bound, maxval=bound,
                           dtype=jnp.float32)
    return w.reshape(k * k * cin, cout), b


def init_autoencoder_params(key):
    ks = jax.random.split(key, 6)
    return {
        "enc": [init_conv(ks[0], 7, 3, 32),
                init_conv(ks[1], 3, 32, 64),
                init_conv(ks[2], 3, 64, 128)],
        "dec": [init_conv(ks[3], 3, 128, 64),
                init_conv(ks[4], 3, 64, 32),
                init_conv(ks[5], 3, 32, 3)],
    }


def autoencoder_forward(x_nchw, params):
    # NCHW (PyTorch) -> NHWC (kernel layout)
    x = jnp.transpose(x_nchw, (0, 2, 3, 1)).astype(jnp.float32)

    enc_cfg = [(7, 3), (3, 1), (3, 1)]
    for (w, _b), (k, p) in zip(params["enc"], enc_cfg):
        x = encoder_block_fwd(x, w, k, p)          # bias cancelled by BN

    dec_cfg = [(3, 1), (3, 1), (3, 1)]
    for (w, b), (k, p) in zip(params["dec"], dec_cfg):
        x = decoder_block_fwd(x, w, b, k, p)

    # NHWC -> NCHW
    return jnp.transpose(x, (0, 3, 1, 2))


if __name__ == "__main__":
    key = jax.random.PRNGKey(0)
    k_x, k_p = jax.random.split(key)
    x = jax.random.normal(k_x, (2, 3, 16, 16), dtype=jnp.float32)   # NCHW input
    params = init_autoencoder_params(k_p)

    out = jax.jit(autoencoder_forward)(x, params)
    out = jax.block_until_ready(out)

    assert out.shape == (2, 3, 16, 16), out.shape
    assert out.dtype == jnp.float32
    assert bool(jnp.all(jnp.isfinite(out)))
    print("KERNEL_OK")
</pallas_src>

<mosaic_0001>
module attributes {stable_mosaic.version = 11 : i64} {
  func.func @_encoder_block_kernel(%arg0: i32, %arg1: memref<4x128x147xf32, #tpu.memory_space<vmem>>, %arg2: memref<147x32xf32, #tpu.memory_space<vmem>>, %arg3: memref<128x32xf32, #tpu.memory_space<vmem>>) attributes {dimension_semantics = [#tpu.dimension_semantics<arbitrary>], iteration_bounds = array<i64: 1>, scalar_prefetch = 0 : i64, scratch_operands = 0 : i64, tpu.core_type = #tpu.core_type<tc>, window_params = [{pipeline_mode = #tpu.pipeline_mode<synchronous>, transform_indices = @transform_0, window_bounds = array<i64: 4, 128, 147>}, {pipeline_mode = #tpu.pipeline_mode<synchronous>, transform_indices = @transform_1, window_bounds = array<i64: 147, 32>}, {pipeline_mode = #tpu.pipeline_mode<synchronous>, transform_indices = @transform_2, window_bounds = array<i64: 128, 32>}]} {
    %c0 = arith.constant 0 : index
    %c0_0 = arith.constant 0 : index
    %0 = vector.load %arg2[%c0, %c0_0] : memref<147x32xf32, #tpu.memory_space<vmem>>, vector<147x32xf32>
    %c0_1 = arith.constant 0 : index
    %c0_2 = arith.constant 0 : index
    %c0_3 = arith.constant 0 : index
    %1 = vector.load %arg1[%c0_1, %c0_2, %c0_3] : memref<4x128x147xf32, #tpu.memory_space<vmem>>, vector<1x128x147xf32>
    %2 = vector.shape_cast %1 : vector<1x128x147xf32> to vector<128x147xf32>
    %cst = arith.constant dense<0.000000e+00> : vector<128x32xf32>
    %3 = tpu.matmul %2, %0, %cst {dimension_numbers = #tpu.dot_dimension_numbers<[1], [0], [0], [1], [0, 0, 1, 1], [], []>} : vector<128x147xf32>, vector<147x32xf32>, vector<128x32xf32> -> vector<128x32xf32>
    %c1 = arith.constant 1 : index
    %c0_4 = arith.constant 0 : index
    %c0_5 = arith.constant 0 : index
    %4 = vector.load %arg1[%c1, %c0_4, %c0_5] : memref<4x128x147xf32, #tpu.memory_space<vmem>>, vector<1x128x147xf32>
    %5 = vector.shape_cast %4 : vector<1x128x147xf32> to vector<128x147xf32>
    %cst_6 = arith.constant dense<0.000000e+00> : vector<128x32xf32>
    %6 = tpu.matmul %5, %0, %cst_6 {dimension_numbers = #tpu.dot_dimension_numbers<[1], [0], [0], [1], [0, 0, 1, 1], [], []>} : vector<128x147xf32>, vector<147x32xf32>, vector<128x32xf32> -> vector<128x32xf32>
    %c2 = arith.constant 2 : index
    %c0_7 = arith.constant 0 : index
    %c0_8 = arith.constant 0 : index
    %7 = vector.load %arg1[%c2, %c0_7, %c0_8] : memref<4x128x147xf32, #tpu.memory_space<vmem>>, vector<1x128x147xf32>
    %8 = vector.shape_cast %7 : vector<1x128x147xf32> to vector<128x147xf32>
    %cst_9 = arith.constant dense<0.000000e+00> : vector<128x32xf32>
    %9 = tpu.matmul %8, %0, %cst_9 {dimension_numbers = #tpu.dot_dimension_numbers<[1], [0], [0], [1], [0, 0, 1, 1], [], []>} : vector<128x147xf32>, vector<147x32xf32>, vector<128x32xf32> -> vector<128x32xf32>
    %c3 = arith.constant 3 : index
    %c0_10 = arith.constant 0 : index
    %c0_11 = arith.constant 0 : index
    %10 = vector.load %arg1[%c3, %c0_10, %c0_11] : memref<4x128x147xf32, #tpu.memory_space<vmem>>, vector<1x128x147xf32>
    %11 = vector.shape_cast %10 : vector<1x128x147xf32> to vector<128x147xf32>
    %cst_12 = arith.constant dense<0.000000e+00> : vector<128x32xf32>
    %12 = tpu.matmul %11, %0, %cst_12 {dimension_numbers = #tpu.dot_dimension_numbers<[1], [0], [0], [1], [0, 0, 1, 1], [], []>} : vector<128x147xf32>, vector<147x32xf32>, vector<128x32xf32> -> vector<128x32xf32>
    %13 = arith.addf %3, %6 : vector<128x32xf32>
    %14 = arith.addf %13, %9 : vector<128x32xf32>
    %15 = arith.addf %14, %12 : vector<128x32xf32>
    %cst_13 = arith.constant dense<0.000000e+00> : vector<32xf32>
    %16 = vector.multi_reduction <add>, %15, %cst_13 [0] : vector<128x32xf32> to vector<32xf32>
    %17 = vector.shape_cast %16 : vector<32xf32> to vector<1x32xf32>
    %cst_14 = arith.constant 5.120000e+02 : f32
    %18 = vector.broadcast %cst_14 : f32 to vector<1x32xf32>
    %19 = arith.divf %17, %18 : vector<1x32xf32>
    %20 = vector.broadcast %19 : vector<1x32xf32> to vector<128x32xf32>
    %21 = arith.subf %3, %20 : vector<128x32xf32>
    %22 = arith.mulf %21, %21 : vector<128x32xf32>
    %cst_15 = arith.constant dense<0.000000e+00> : vector<32xf32>
    %23 = vector.multi_reduction <add>, %22, %cst_15 [0] : vector<128x32xf32> to vector<32xf32>
    %24 = vector.shape_cast %23 : vector<32xf32> to vector<1x32xf32>
    %25 = vector.broadcast %19 : vector<1x32xf32> to vector<128x32xf32>
    %26 = arith.subf %6, %25 : vector<128x32xf32>
    %27 = arith.mulf %26, %26 : vector<128x32xf32>
    %cst_16 = arith.constant dense<0.000000e+00> : vector<32xf32>
    %28 = vector.multi_reduction <add>, %27, %cst_16 [0] : vector<128x32xf32> to vector<32xf32>
    %29 = vector.shape_cast %28 : vector<32xf32> to vector<1x32xf32>
    %30 = arith.addf %24, %29 : vector<1x32xf32>
    %31 = vector.broadcast %19 : vector<1x32xf32> to vector<128x32xf32>
    %32 = arith.subf %9, %31 : vector<128x32xf32>
    %33 = arith.mulf %32, %32 : vector<128x32xf32>
    %cst_17 = arith.constant dense<0.000000e+00> : vector<32xf32>
    %34 = vector.multi_reduction <add>, %33, %cst_17 [0] : vector<128x32xf32> to vector<32xf32>
    %35 = vector.shape_cast %34 : vector<32xf32> to vector<1x32xf32>
    %36 = arith.addf %30, %35 : vector<1x32xf32>
    %37 = vector.broadcast %19 : vector<1x32xf32> to vector<128x32xf32>
    %38 = arith.subf %12, %37 : vector<128x32xf32>
    %39 = arith.mulf %38, %38 : vector<128x32xf32>
    %cst_18 = arith.constant dense<0.000000e+00> : vector<32xf32>
    %40 = vector.multi_reduction <add>, %39, %cst_18 [0] : vector<128x32xf32> to vector<32xf32>
    %41 = vector.shape_cast %40 : vector<32xf32> to vector<1x32xf32>
    %42 = arith.addf %36, %41 : vector<1x32xf32>
    %cst_19 = arith.constant 5.120000e+02 : f32
    %43 = vector.broadcast %cst_19 : f32 to vector<1x32xf32>
    %44 = arith.divf %42, %43 : vector<1x32xf32>
    %cst_20 = arith.constant 9.99999974E-6 : f32
    %45 = vector.broadcast %cst_20 : f32 to vector<1x32xf32>
    %46 = arith.addf %44, %45 : vector<1x32xf32>
    %47 = math.rsqrt %46 : vector<1x32xf32>
    %cst_21 = arith.constant 0.000000e+00 : f32
    %48 = vector.broadcast %cst_21 : f32 to vector<1x32xf32>
    %49 = arith.subf %48, %19 : vector<1x32xf32>
    %50 = arith.mulf %49, %47 : vector<1x32xf32>
    %51 = arith.maximumf %3, %6 : vector<128x32xf32>
    %52 = arith.maximumf %9, %12 : vector<128x32xf32>
    %53 = arith.maximumf %51, %52 : vector<128x32xf32>
    %54 = vector.broadcast %47 : vector<1x32xf32> to vector<128x32xf32>
    %55 = arith.mulf %53, %54 : vector<128x32xf32>
    %56 = vector.broadcast %50 : vector<1x32xf32> to vector<128x32xf32>
    %57 = arith.addf %55, %56 : vector<128x32xf32>
    %cst_22 = arith.constant 0.000000e+00 : f32
    %58 = vector.broadcast %cst_22 : f32 to vector<128x32xf32>
    %59 = arith.maximumf %57, %58 : vector<128x32xf32>
    %c0_23 = arith.constant 0 : index
    %c0_24 = arith.constant 0 : index
    %60 = vector.load %arg3[%c0_23, %c0_24] : memref<128x32xf32, #tpu.memory_space<vmem>>, vector<128x32xf32>
    tpu.vector_store %arg3[%c0_23, %c0_24], %59 {strides = array<i32>} : memref<128x32xf32, #tpu.memory_space<vmem>>, vector<128x32xf32>,
    return
  }
  func.func @transform_0(%arg0: i32) -> (i32, i32, i32) {
    %c0_i32 = arith.constant 0 : i32
    %c0_i32_0 = arith.constant 0 : i32
    %c0_i32_1 = arith.constant 0 : i32
    %c0_i32_2 = arith.constant 0 : i32
    return %c0_i32, %c0_i32_0, %c0_i32_1 : i32, i32, i32
  }
  func.func @transform_1(%arg0: i32) -> (i32, i32) {
    %c0_i32 = arith.constant 0 : i32
    %c0_i32_0 = arith.constant 0 : i32
    %c0_i32_1 = arith.constant 0 : i32
    return %c0_i32, %c0_i32_0 : i32, i32
  }
  func.func @transform_2(%arg0: i32) -> (i32, i32) {
    %c0_i32 = arith.constant 0 : i32
    %c0_i32_0 = arith.constant 0 : i32
    %c0_i32_1 = arith.constant 0 : i32
    return %c0_i32, %c0_i32_0 : i32, i32
  }
}

module attributes {stable_mosaic.version = 11 : i64} {
  func.func @_encoder_block_kernel(%arg0: i32, %arg1: memref<4x32x288xf32, #tpu.memory_space<vmem>>, %arg2: memref<288x64xf32, #tpu.memory_space<vmem>>, %arg3: memref<32x64xf32, #tpu.memory_space<vmem>>) attributes {dimension_semantics = [#tpu.dimension_semantics<arbitrary>], iteration_bounds = array<i64: 1>, scalar_prefetch = 0 : i64, scratch_operands = 0 : i64, tpu.core_type = #tpu.core_type<tc>, window_params = [{pipeline_mode = #tpu.pipeline_mode<synchronous>, transform_indices = @transform_0, window_bounds = array<i64: 4, 32, 288>}, {pipeline_mode = #tpu.pipeline_mode<synchronous>, transform_indices = @transform_1, window_bounds = array<i64: 288, 64>}, {pipeline_mode = #tpu.pipeline_mode<synchronous>, transform_indices = @transform_2, window_bounds = array<i64: 32, 64>}]} {
    %c0 = arith.constant 0 : index
    %c0_0 = arith.constant 0 : index
    %0 = vector.load %arg2[%c0, %c0_0] : memref<288x64xf32, #tpu.memory_space<vmem>>, vector<288x64xf32>
    %c0_1 = arith.constant 0 : index
    %c0_2 = arith.constant 0 : index
    %c0_3 = arith.constant 0 : index
    %1 = vector.load %arg1[%c0_1, %c0_2, %c0_3] : memref<4x32x288xf32, #tpu.memory_space<vmem>>, vector<1x32x288xf32>
    %2 = vector.shape_cast %1 : vector<1x32x288xf32> to vector<32x288xf32>
    %cst = arith.constant dense<0.000000e+00> : vector<32x64xf32>
    %3 = tpu.matmul %2, %0, %cst {dimension_numbers = #tpu.dot_dimension_numbers<[1], [0], [0], [1], [0, 0, 1, 1], [], []>} : vector<32x288xf32>, vector<288x64xf32>, vector<32x64xf32> -> vector<32x64xf32>
    %c1 = arith.constant 1 : index
    %c0_4 = arith.constant 0 : index
    %c0_5 = arith.constant 0 : index
    %4 = vector.load %arg1[%c1, %c0_4, %c0_5] : memref<4x32x288xf32, #tpu.memory_space<vmem>>, vector<1x32x288xf32>
    %5 = vector.shape_cast %4 : vector<1x32x288xf32> to vector<32x288xf32>
    %cst_6 = arith.constant dense<0.000000e+00> : vector<32x64xf32>
    %6 = tpu.matmul %5, %0, %cst_6 {dimension_numbers = #tpu.dot_dimension_numbers<[1], [0], [0], [1], [0, 0, 1, 1], [], []>} : vector<32x288xf32>, vector<288x64xf32>, vector<32x64xf32> -> vector<32x64xf32>
    %c2 = arith.constant 2 : index
    %c0_7 = arith.constant 0 : index
    %c0_8 = arith.constant 0 : index
    %7 = vector.load %arg1[%c2, %c0_7, %c0_8] : memref<4x32x288xf32, #tpu.memory_space<vmem>>, vector<1x32x288xf32>
    %8 = vector.shape_cast %7 : vector<1x32x288xf32> to vector<32x288xf32>
    %cst_9 = arith.constant dense<0.000000e+00> : vector<32x64xf32>
    %9 = tpu.matmul %8, %0, %cst_9 {dimension_numbers = #tpu.dot_dimension_numbers<[1], [0], [0], [1], [0, 0, 1, 1], [], []>} : vector<32x288xf32>, vector<288x64xf32>, vector<32x64xf32> -> vector<32x64xf32>
    %c3 = arith.constant 3 : index
    %c0_10 = arith.constant 0 : index
    %c0_11 = arith.constant 0 : index
    %10 = vector.load %arg1[%c3, %c0_10, %c0_11] : memref<4x32x288xf32, #tpu.memory_space<vmem>>, vector<1x32x288xf32>
    %11 = vector.shape_cast %10 : vector<1x32x288xf32> to vector<32x288xf32>
    %cst_12 = arith.constant dense<0.000000e+00> : vector<32x64xf32>
    %12 = tpu.matmul %11, %0, %cst_12 {dimension_numbers = #tpu.dot_dimension_numbers<[1], [0], [0], [1], [0, 0, 1, 1], [], []>} : vector<32x288xf32>, vector<288x64xf32>, vector<32x64xf32> -> vector<32x64xf32>
    %13 = arith.addf %3, %6 : vector<32x64xf32>
    %14 = arith.addf %13, %9 : vector<32x64xf32>
    %15 = arith.addf %14, %12 : vector<32x64xf32>
    %cst_13 = arith.constant dense<0.000000e+00> : vector<64xf32>
    %16 = vector.multi_reduction <add>, %15, %cst_13 [0] : vector<32x64xf32> to vector<64xf32>
    %17 = vector.shape_cast %16 : vector<64xf32> to vector<1x64xf32>
    %cst_14 = arith.constant 1.280000e+02 : f32
    %18 = vector.broadcast %cst_14 : f32 to vector<1x64xf32>
    %19 = arith.divf %17, %18 : vector<1x64xf32>
    %20 = vector.broadcast %19 : vector<1x64xf32> to vector<32x64xf32>
    %21 = arith.subf %3, %20 : vector<32x64xf32>
    %22 = arith.mulf %21, %21 : vector<32x64xf32>
    %cst_15 = arith.constant dense<0.000000e+00> : vector<64xf32>
    %23 = vector.multi_reduction <add>, %22, %cst_15 [0] : vector<32x64xf32> to vector<64xf32>
    %24 = vector.shape_cast %23 : vector<64xf32> to vector<1x64xf32>
    %25 = vector.broadcast %19 : vector<1x64xf32> to vector<32x64xf32>
    %26 = arith.subf %6, %25 : vector<32x64xf32>
    %27 = arith.mulf %26, %26 : vector<32x64xf32>
    %cst_16 = arith.constant dense<0.000000e+00> : vector<64xf32>
    %28 = vector.multi_reduction <add>, %27, %cst_16 [0] : vector<32x64xf32> to vector<64xf32>
    %29 = vector.shape_cast %28 : vector<64xf32> to vector<1x64xf32>
    %30 = arith.addf %24, %29 : vector<1x64xf32>
    %31 = vector.broadcast %19 : vector<1x64xf32> to vector<32x64xf32>
    %32 = arith.subf %9, %31 : vector<32x64xf32>
    %33 = arith.mulf %32, %32 : vector<32x64xf32>
    %cst_17 = arith.constant dense<0.000000e+00> : vector<64xf32>
    %34 = vector.multi_reduction <add>, %33, %cst_17 [0] : vector<32x64xf32> to vector<64xf32>
    %35 = vector.shape_cast %34 : vector<64xf32> to vector<1x64xf32>
    %36 = arith.addf %30, %35 : vector<1x64xf32>
    %37 = vector.broadcast %19 : vector<1x64xf32> to vector<32x64xf32>
    %38 = arith.subf %12, %37 : vector<32x64xf32>
    %39 = arith.mulf %38, %38 : vector<32x64xf32>
    %cst_18 = arith.constant dense<0.000000e+00> : vector<64xf32>
    %40 = vector.multi_reduction <add>, %39, %cst_18 [0] : vector<32x64xf32> to vector<64xf32>
    %41 = vector.shape_cast %40 : vector<64xf32> to vector<1x64xf32>
    %42 = arith.addf %36, %41 : vector<1x64xf32>
    %cst_19 = arith.constant 1.280000e+02 : f32
    %43 = vector.broadcast %cst_19 : f32 to vector<1x64xf32>
    %44 = arith.divf %42, %43 : vector<1x64xf32>
    %cst_20 = arith.constant 9.99999974E-6 : f32
    %45 = vector.broadcast %cst_20 : f32 to vector<1x64xf32>
    %46 = arith.addf %44, %45 : vector<1x64xf32>
    %47 = math.rsqrt %46 : vector<1x64xf32>
    %cst_21 = arith.constant 0.000000e+00 : f32
    %48 = vector.broadcast %cst_21 : f32 to vector<1x64xf32>
    %49 = arith.subf %48, %19 : vector<1x64xf32>
    %50 = arith.mulf %49, %47 : vector<1x64xf32>
    %51 = arith.maximumf %3, %6 : vector<32x64xf32>
    %52 = arith.maximumf %9, %12 : vector<32x64xf32>
    %53 = arith.maximumf %51, %52 : vector<32x64xf32>
    %54 = vector.broadcast %47 : vector<1x64xf32> to vector<32x64xf32>
    %55 = arith.mulf %53, %54 : vector<32x64xf32>
    %56 = vector.broadcast %50 : vector<1x64xf32> to vector<32x64xf32>
    %57 = arith.addf %55, %56 : vector<32x64xf32>
    %cst_22 = arith.constant 0.000000e+00 : f32
    %58 = vector.broadcast %cst_22 : f32 to vector<32x64xf32>
    %59 = arith.maximumf %57, %58 : vector<32x64xf32>
    %c0_23 = arith.constant 0 : index
    %c0_24 = arith.constant 0 : index
    %60 = vector.load %arg3[%c0_23, %c0_24] : memref<32x64xf32, #tpu.memory_space<vmem>>, vector<32x64xf32>
    tpu.vector_store %arg3[%c0_23, %c0_24], %59 {strides = array<i32>} : memref<32x64xf32, #tpu.memory_space<vmem>>, vector<32x64xf32>,
    return
  }
  func.func @transform_0(%arg0: i32) -> (i32, i32, i32) {
    %c0_i32 = arith.constant 0 : i32
    %c0_i32_0 = arith.constant 0 : i32
    %c0_i32_1 = arith.constant 0 : i32
    %c0_i32_2 = arith.constant 0 : i32
    return %c0_i32, %c0_i32_0, %c0_i32_1 : i32, i32, i32
  }
  func.func @transform_1(%arg0: i32) -> (i32, i32) {
    %c0_i32 = arith.constant 0 : i32
    %c0_i32_0 = arith.constant 0 : i32
    %c0_i32_1 = arith.constant 0 : i32
    return %c0_i32, %c0_i32_0 : i32, i32
  }
  func.func @transform_2(%arg0: i32) -> (i32, i32) {
    %c0_i32 = arith.constant 0 : i32
    %c0_i32_0 = arith.constant 0 : i32
    %c0_i32_1 = arith.constant 0 : i32
    return %c0_i32, %c0_i32_0 : i32, i32
  }
}

module attributes {stable_mosaic.version = 11 : i64} {
  func.func @_encoder_block_kernel(%arg0: i32, %arg1: memref<4x8x576xf32, #tpu.memory_space<vmem>>, %arg2: memref<576x128xf32, #tpu.memory_space<vmem>>, %arg3: memref<8x128xf32, #tpu.memory_space<vmem>>) attributes {dimension_semantics = [#tpu.dimension_semantics<arbitrary>], iteration_bounds = array<i64: 1>, scalar_prefetch = 0 : i64, scratch_operands = 0 : i64, tpu.core_type = #tpu.core_type<tc>, window_params = [{pipeline_mode = #tpu.pipeline_mode<synchronous>, transform_indices = @transform_0, window_bounds = array<i64: 4, 8, 576>}, {pipeline_mode = #tpu.pipeline_mode<synchronous>, transform_indices = @transform_1, window_bounds = array<i64: 576, 128>}, {pipeline_mode = #tpu.pipeline_mode<synchronous>, transform_indices = @transform_2, window_bounds = array<i64: 8, 128>}]} {
    %c0 = arith.constant 0 : index
    %c0_0 = arith.constant 0 : index
    %0 = vector.load %arg2[%c0, %c0_0] : memref<576x128xf32, #tpu.memory_space<vmem>>, vector<576x128xf32>
    %c0_1 = arith.constant 0 : index
    %c0_2 = arith.constant 0 : index
    %c0_3 = arith.constant 0 : index
    %1 = vector.load %arg1[%c0_1, %c0_2, %c0_3] : memref<4x8x576xf32, #tpu.memory_space<vmem>>, vector<1x8x576xf32>
    %2 = vector.shape_cast %1 : vector<1x8x576xf32> to vector<8x576xf32>
    %cst = arith.constant dense<0.000000e+00> : vector<8x128xf32>
    %3 = tpu.matmul %2, %0, %cst {dimension_numbers = #tpu.dot_dimension_numbers<[1], [0], [0], [1], [0, 0, 1, 1], [], []>} : vector<8x576xf32>, vector<576x128xf32>, vector<8x128xf32> -> vector<8x128xf32>
    %c1 = arith.constant 1 : index
    %c0_4 = arith.constant 0 : index
    %c0_5 = arith.constant 0 : index
    %4 = vector.load %arg1[%c1, %c0_4, %c0_5] : memref<4x8x576xf32, #tpu.memory_space<vmem>>, vector<1x8x576xf32>
    %5 = vector.shape_cast %4 : vector<1x8x576xf32> to vector<8x576xf32>
    %cst_6 = arith.constant dense<0.000000e+00> : vector<8x128xf32>
    %6 = tpu.matmul %5, %0, %cst_6 {dimension_numbers = #tpu.dot_dimension_numbers<[1], [0], [0], [1], [0, 0, 1, 1], [], []>} : vector<8x576xf32>, vector<576x128xf32>, vector<8x128xf32> -> vector<8x128xf32>
    %c2 = arith.constant 2 : index
    %c0_7 = arith.constant 0 : index
    %c0_8 = arith.constant 0 : index
    %7 = vector.load %arg1[%c2, %c0_7, %c0_8] : memref<4x8x576xf32, #tpu.memory_space<vmem>>, vector<1x8x576xf32>
    %8 = vector.shape_cast %7 : vector<1x8x576xf32> to vector<8x576xf32>
    %cst_9 = arith.constant dense<0.000000e+00> : vector<8x128xf32>
    %9 = tpu.matmul %8, %0, %cst_9 {dimension_numbers = #tpu.dot_dimension_numbers<[1], [0], [0], [1], [0, 0, 1, 1], [], []>} : vector<8x576xf32>, vector<576x128xf32>, vector<8x128xf32> -> vector<8x128xf32>
    %c3 = arith.constant 3 : index
    %c0_10 = arith.constant 0 : index
    %c0_11 = arith.constant 0 : index
    %10 = vector.load %arg1[%c3, %c0_10, %c0_11] : memref<4x8x576xf32, #tpu.memory_space<vmem>>, vector<1x8x576xf32>
    %11 = vector.shape_cast %10 : vector<1x8x576xf32> to vector<8x576xf32>
    %cst_12 = arith.constant dense<0.000000e+00> : vector<8x128xf32>
    %12 = tpu.matmul %11, %0, %cst_12 {dimension_numbers = #tpu.dot_dimension_numbers<[1], [0], [0], [1], [0, 0, 1, 1], [], []>} : vector<8x576xf32>, vector<576x128xf32>, vector<8x128xf32> -> vector<8x128xf32>
    %13 = arith.addf %3, %6 : vector<8x128xf32>
    %14 = arith.addf %13, %9 : vector<8x128xf32>
    %15 = arith.addf %14, %12 : vector<8x128xf32>
    %cst_13 = arith.constant dense<0.000000e+00> : vector<128xf32>
    %16 = vector.multi_reduction <add>, %15, %cst_13 [0] : vector<8x128xf32> to vector<128xf32>
    %17 = vector.shape_cast %16 : vector<128xf32> to vector<1x128xf32>
    %cst_14 = arith.constant 3.200000e+01 : f32
    %18 = vector.broadcast %cst_14 : f32 to vector<1x128xf32>
    %19 = arith.divf %17, %18 : vector<1x128xf32>
    %20 = vector.broadcast %19 : vector<1x128xf32> to vector<8x128xf32>
    %21 = arith.subf %3, %20 : vector<8x128xf32>
    %22 = arith.mulf %21, %21 : vector<8x128xf32>
    %cst_15 = arith.constant dense<0.000000e+00> : vector<128xf32>
    %23 = vector.multi_reduction <add>, %22, %cst_15 [0] : vector<8x128xf32> to vector<128xf32>
    %24 = vector.shape_cast %23 : vector<128xf32> to vector<1x128xf32>
    %25 = vector.broadcast %19 : vector<1x128xf32> to vector<8x128xf32>
    %26 = arith.subf %6, %25 : vector<8x128xf32>
    %27 = arith.mulf %26, %26 : vector<8x128xf32>
    %cst_16 = arith.constant dense<0.000000e+00> : vector<128xf32>
    %28 = vector.multi_reduction <add>, %27, %cst_16 [0] : vector<8x128xf32> to vector<128xf32>
    %29 = vector.shape_cast %28 : vector<128xf32> to vector<1x128xf32>
    %30 = arith.addf %24, %29 : vector<1x128xf32>
    %31 = vector.broadcast %19 : vector<1x128xf32> to vector<8x128xf32>
    %32 = arith.subf %9, %31 : vector<8x128xf32>
    %33 = arith.mulf %32, %32 : vector<8x128xf32>
    %cst_17 = arith.constant dense<0.000000e+00> : vector<128xf32>
    %34 = vector.multi_reduction <add>, %33, %cst_17 [0] : vector<8x128xf32> to vector<128xf32>
    %35 = vector.shape_cast %34 : vector<128xf32> to vector<1x128xf32>
    %36 = arith.addf %30, %35 : vector<1x128xf32>
    %37 = vector.broadcast %19 : vector<1x128xf32> to vector<8x128xf32>
    %38 = arith.subf %12, %37 : vector<8x128xf32>
    %39 = arith.mulf %38, %38 : vector<8x128xf32>
    %cst_18 = arith.constant dense<0.000000e+00> : vector<128xf32>
    %40 = vector.multi_reduction <add>, %39, %cst_18 [0] : vector<8x128xf32> to vector<128xf32>
    %41 = vector.shape_cast %40 : vector<128xf32> to vector<1x128xf32>
    %42 = arith.addf %36, %41 : vector<1x128xf32>
    %cst_19 = arith.constant 3.200000e+01 : f32
    %43 = vector.broadcast %cst_19 : f32 to vector<1x128xf32>
    %44 = arith.divf %42, %43 : vector<1x128xf32>
    %cst_20 = arith.constant 9.99999974E-6 : f32
    %45 = vector.broadcast %cst_20 : f32 to vector<1x128xf32>
    %46 = arith.addf %44, %45 : vector<1x128xf32>
    %47 = math.rsqrt %46 : vector<1x128xf32>
    %cst_21 = arith.constant 0.000000e+00 : f32
    %48 = vector.broadcast %cst_21 : f32 to vector<1x128xf32>
    %49 = arith.subf %48, %19 : vector<1x128xf32>
    %50 = arith.mulf %49, %47 : vector<1x128xf32>
    %51 = arith.maximumf %3, %6 : vector<8x128xf32>
    %52 = arith.maximumf %9, %12 : vector<8x128xf32>
    %53 = arith.maximumf %51, %52 : vector<8x128xf32>
    %54 = vector.broadcast %47 : vector<1x128xf32> to vector<8x128xf32>
    %55 = arith.mulf %53, %54 : vector<8x128xf32>
    %56 = vector.broadcast %50 : vector<1x128xf32> to vector<8x128xf32>
    %57 = arith.addf %55, %56 : vector<8x128xf32>
    %cst_22 = arith.constant 0.000000e+00 : f32
    %58 = vector.broadcast %cst_22 : f32 to vector<8x128xf32>
    %59 = arith.maximumf %57, %58 : vector<8x128xf32>
    %c0_23 = arith.constant 0 : index
    %c0_24 = arith.constant 0 : index
    %60 = vector.load %arg3[%c0_23, %c0_24] : memref<8x128xf32, #tpu.memory_space<vmem>>, vector<8x128xf32>
    tpu.vector_store %arg3[%c0_23, %c0_24], %59 {strides = array<i32>} : memref<8x128xf32, #tpu.memory_space<vmem>>, vector<8x128xf32>,
    return
  }
  func.func @transform_0(%arg0: i32) -> (i32, i32, i32) {
    %c0_i32 = arith.constant 0 : i32
    %c0_i32_0 = arith.constant 0 : i32
    %c0_i32_1 = arith.constant 0 : i32
    %c0_i32_2 = arith.constant 0 : i32
    return %c0_i32, %c0_i32_0, %c0_i32_1 : i32, i32, i32
  }
  func.func @transform_1(%arg0: i32) -> (i32, i32) {
    %c0_i32 = arith.constant 0 : i32
    %c0_i32_0 = arith.constant 0 : i32
    %c0_i32_1 = arith.constant 0 : i32
    return %c0_i32, %c0_i32_0 : i32, i32
  }
  func.func @transform_2(%arg0: i32) -> (i32, i32) {
    %c0_i32 = arith.constant 0 : i32
    %c0_i32_0 = arith.constant 0 : i32
    %c0_i32_1 = arith.constant 0 : i32
    return %c0_i32, %c0_i32_0 : i32, i32
  }
}

module attributes {stable_mosaic.version = 11 : i64} {
  func.func @_decoder_block_kernel(%arg0: i32, %arg1: memref<1x2x2x1152xf32, #tpu.memory_space<vmem>>, %arg2: memref<1152x64xf32, #tpu.memory_space<vmem>>, %arg3: memref<1x64xf32, #tpu.memory_space<vmem>>, %arg4: memref<1x4x2x64xf32, #tpu.memory_space<vmem>>, %arg5: memref<1x4x2x64xf32, #tpu.memory_space<vmem>>) attributes {dimension_semantics = [#tpu.dimension_semantics<parallel>], iteration_bounds = array<i64: 2>, scalar_prefetch = 0 : i64, scratch_operands = 0 : i64, tpu.core_type = #tpu.core_type<tc>, window_params = [{transform_indices = @transform_0, window_bounds = array<i64: 1, 2, 2, 1152>}, {pipeline_mode = #tpu.pipeline_mode<synchronous>, transform_indices = @transform_1, window_bounds = array<i64: 1152, 64>}, {pipeline_mode = #tpu.pipeline_mode<synchronous>, transform_indices = @transform_2, window_bounds = array<i64: 1, 64>}, {transform_indices = @transform_3, window_bounds = array<i64: 1, 4, 2, 64>}, {transform_indices = @transform_4, window_bounds = array<i64: 1, 4, 2, 64>}]} {
    %c0 = arith.constant 0 : index
    %c0_0 = arith.constant 0 : index
    %0 = vector.load %arg2[%c0, %c0_0] : memref<1152x64xf32, #tpu.memory_space<vmem>>, vector<1152x64xf32>
    %c0_1 = arith.constant 0 : index
    %c0_2 = arith.constant 0 : index
    %1 = vector.load %arg3[%c0_1, %c0_2] : memref<1x64xf32, #tpu.memory_space<vmem>>, vector<1x64xf32>
    %c0_3 = arith.constant 0 : index
    %c0_4 = arith.constant 0 : index
    %c0_5 = arith.constant 0 : index
    %c0_6 = arith.constant 0 : index
    %2 = vector.load %arg1[%c0_3, %c0_4, %c0_5, %c0_6] : memref<1x2x2x1152xf32, #tpu.memory_space<vmem>>, vector<1x1x2x1152xf32>
    %3 = vector.shape_cast %2 : vector<1x1x2x1152xf32> to vector<2x1152xf32>
    %cst = arith.constant dense<0.000000e+00> : vector<2x64xf32>
    %4 = tpu.matmul %3, %0, %cst {dimension_numbers = #tpu.dot_dimension_numbers<[1], [0], [0], [1], [0, 0, 1, 1], [], []>} : vector<2x1152xf32>, vector<1152x64xf32>, vector<2x64xf32> -> vector<2x64xf32>
    %5 = vector.broadcast %1 : vector<1x64xf32> to vector<2x64xf32>
    %6 = arith.addf %4, %5 : vector<2x64xf32>
    %cst_7 = arith.constant 0.000000e+00 : f32
    %7 = vector.broadcast %cst_7 : f32 to vector<2x64xf32>
    %8 = arith.maximumf %6, %7 : vector<2x64xf32>
    %c0_8 = arith.constant 0 : index
    %c1 = arith.constant 1 : index
    %c0_9 = arith.constant 0 : index
    %c0_10 = arith.constant 0 : index
    %9 = vector.load %arg1[%c0_8, %c1, %c0_9, %c0_10] : memref<1x2x2x1152xf32, #tpu.memory_space<vmem>>, vector<1x1x2x1152xf32>
    %10 = vector.shape_cast %9 : vector<1x1x2x1152xf32> to vector<2x1152xf32>
    %cst_11 = arith.constant dense<0.000000e+00> : vector<2x64xf32>
    %11 = tpu.matmul %10, %0, %cst_11 {dimension_numbers = #tpu.dot_dimension_numbers<[1], [0], [0], [1], [0, 0, 1, 1], [], []>} : vector<2x1152xf32>, vector<1152x64xf32>, vector<2x64xf32> -> vector<2x64xf32>
    %12 = vector.broadcast %1 : vector<1x64xf32> to vector<2x64xf32>
    %13 = arith.addf %11, %12 : vector<2x64xf32>
    %cst_12 = arith.constant 0.000000e+00 : f32
    %14 = vector.broadcast %cst_12 : f32 to vector<2x64xf32>
    %15 = arith.maximumf %13, %14 : vector<2x64xf32>
    %cst_13 = arith.constant 2.500000e-01 : f32
    %16 = vector.broadcast %cst_13 : f32 to vector<2x64xf32>
    %17 = arith.mulf %16, %8 : vector<2x64xf32>
    %cst_14 = arith.constant 7.500000e-01 : f32
    %18 = vector.broadcast %cst_14 : f32 to vector<2x64xf32>
    %19 = arith.mulf %18, %8 : vector<2x64xf32>
    %20 = arith.addf %17, %19 : vector<2x64xf32>
    %cst_15 = arith.constant 7.500000e-01 : f32
    %21 = vector.broadcast %cst_15 : f32 to vector<2x64xf32>
    %22 = arith.mulf %21, %8 : vector<2x64xf32>
    %cst_16 = arith.constant 2.500000e-01 : f32
    %23 = vector.broadcast %cst_16 : f32 to vector<2x64xf32>
    %24 = arith.mulf %23, %15 : vector<2x64xf32>
    %25 = arith.addf %22, %24 : vector<2x64xf32>
    %cst_17 = arith.constant 7.500000e-01 : f32
    %26 = vector.broadcast %cst_17 : f32 to vector<2x64xf32>
    %27 = arith.mulf %26, %20 : vector<2x64xf32>
    %28 = vector.extract_strided_slice %20 {offsets = [0, 0], sizes = [1, 64], strides = [1, 1]} : vector<2x64xf32> to vector<1x64xf32>
    %29 = vector.extract_strided_slice %20 {offsets = [0, 0], sizes = [1, 64], strides = [1, 1]} : vector<2x64xf32> to vector<1x64xf32>
    %30 = tpu.concatenate %28, %29 in 0 : vector<1x64xf32>, vector<1x64xf32> -> vector<2x64xf32>
    %cst_18 = arith.constant 2.500000e-01 : f32
    %31 = vector.broadcast %cst_18 : f32 to vector<2x64xf32>
    %32 = arith.mulf %31, %30 : vector<2x64xf32>
    %33 = arith.addf %27, %32 : vector<2x64xf32>
    %c0_19 = arith.constant 0 : index
    %c0_20 = arith.constant 0 : index
    %c0_21 = arith.constant 0 : index
    %c0_22 = arith.constant 0 : index
    %34 = vector.load %arg4[%c0_19, %c0_20, %c0_21, %c0_22] : memref<1x4x2x64xf32, #tpu.memory_space<vmem>>, vector<1x1x2x64xf32>
    %35 = vector.shape_cast %34 : vector<1x1x2x64xf32> to vector<2x64xf32>
    %36 = vector.shape_cast %33 : vector<2x64xf32> to vector<1x1x2x64xf32>
    tpu.vector_store %arg4[%c0_19, %c0_20, %c0_21, %c0_22], %36 {strides = array<i32>} : memref<1x4x2x64xf32, #tpu.memory_space<vmem>>, vector<1x1x2x64xf32>,
    %cst_23 = arith.constant 7.500000e-01 : f32
    %37 = vector.broadcast %cst_23 : f32 to vector<2x64xf32>
    %38 = arith.mulf %37, %20 : vector<2x64xf32>
    %39 = vector.extract_strided_slice %20 {offsets = [1, 0], sizes = [1, 64], strides = [1, 1]} : vector<2x64xf32> to vector<1x64xf32>
    %40 = vector.extract_strided_slice %20 {offsets = [1, 0], sizes = [1, 64], strides = [1, 1]} : vector<2x64xf32> to vector<1x64xf32>
    %41 = tpu.concatenate %39, %40 in 0 : vector<1x64xf32>, vector<1x64xf32> -> vector<2x64xf32>
    %cst_24 = arith.constant 2.500000e-01 : f32
    %42 = vector.broadcast %cst_24 : f32 to vector<2x64xf32>
    %43 = arith.mulf %42, %41 : vector<2x64xf32>
    %44 = arith.addf %38, %43 : vector<2x64xf32>
    %c0_25 = arith.constant 0 : index
    %c0_26 = arith.constant 0 : index
    %c0_27 = arith.constant 0 : index
    %c0_28 = arith.constant 0 : index
    %45 = vector.load %arg5[%c0_25, %c0_26, %c0_27, %c0_28] : memref<1x4x2x64xf32, #tpu.memory_space<vmem>>, vector<1x1x2x64xf32>
    %46 = vector.shape_cast %45 : vector<1x1x2x64xf32> to vector<2x64xf32>
    %47 = vector.shape_cast %44 : vector<2x64xf32> to vector<1x1x2x64xf32>
    tpu.vector_store %arg5[%c0_25, %c0_26, %c0_27, %c0_28], %47 {strides = array<i32>} : memref<1x4x2x64xf32, #tpu.memory_space<vmem>>, vector<1x1x2x64xf32>,
    %cst_29 = arith.constant 7.500000e-01 : f32
    %48 = vector.broadcast %cst_29 : f32 to vector<2x64xf32>
    %49 = arith.mulf %48, %25 : vector<2x64xf32>
    %50 = vector.extract_strided_slice %25 {offsets = [0, 0], sizes = [1, 64], strides = [1, 1]} : vector<2x64xf32> to vector<1x64xf32>
    %51 = vector.extract_strided_slice %25 {offsets = [0, 0], sizes = [1, 64], strides = [1, 1]} : vector<2x64xf32> to vector<1x64xf32>
    %52 = tpu.concatenate %50, %51 in 0 : vector<1x64xf32>, vector<1x64xf32> -> vector<2x64xf32>
    %cst_30 = arith.constant 2.500000e-01 : f32
    %53 = vector.broadcast %cst_30 : f32 to vector<2x64xf32>
    %54 = arith.mulf %53, %52 : vector<2x64xf32>
    %55 = arith.addf %49, %54 : vector<2x64xf32>
    %c0_31 = arith.constant 0 : index
    %c1_32 = arith.constant 1 : index
    %c0_33 = arith.constant 0 : index
    %c0_34 = arith.constant 0 : index
    %56 = vector.load %arg4[%c0_31, %c1_32, %c0_33, %c0_34] : memref<1x4x2x64xf32, #tpu.memory_space<vmem>>, vector<1x1x2x64xf32>
    %57 = vector.shape_cast %56 : vector<1x1x2x64xf32> to vector<2x64xf32>
    %58 = vector.shape_cast %55 : vector<2x64xf32> to vector<1x1x2x64xf32>
    tpu.vector_store %arg4[%c0_31, %c1_32, %c0_33, %c0_34], %58 {strides = array<i32>} : memref<1x4x2x64xf32, #tpu.memory_space<vmem>>, vector<1x1x2x64xf32>,
    %cst_35 = arith.constant 7.500000e-01 : f32
    %59 = vector.broadcast %cst_35 : f32 to vector<2x64xf32>
    %60 = arith.mulf %59, %25 : vector<2x64xf32>
    %61 = vector.extract_strided_slice %25 {offsets = [1, 0], sizes = [1, 64], strides = [1, 1]} : vector<2x64xf32> to vector<1x64xf32>
    %62 = vector.extract_strided_slice %25 {offsets = [1, 0], sizes = [1, 64], strides = [1, 1]} : vector<2x64xf32> to vector<1x64xf32>
    %63 = tpu.concatenate %61, %62 in 0 : vector<1x64xf32>, vector<1x64xf32> -> vector<2x64xf32>
    %cst_36 = arith.constant 2.500000e-01 : f32
    %64 = vector.broadcast %cst_36 : f32 to vector<2x64xf32>
    %65 = arith.mulf %64, %63 : vector<2x64xf32>
    %66 = arith.addf %60, %65 : vector<2x64xf32>
    %c0_37 = arith.constant 0 : index
    %c1_38 = arith.constant 1 : index
    %c0_39 = arith.constant 0 : index
    %c0_40 = arith.constant 0 : index
    %67 = vector.load %arg5[%c0_37, %c1_38, %c0_39, %c0_40] : memref<1x4x2x64xf32, #tpu.memory_space<vmem>>, vector<1x1x2x64xf32>
    %68 = vector.shape_cast %67 : vector<1x1x2x64xf32> to vector<2x64xf32>
    %69 = vector.shape_cast %66 : vector<2x64xf32> to vector<1x1x2x64xf32>
    tpu.vector_store %arg5[%c0_37, %c1_38, %c0_39, %c0_40], %69 {strides = array<i32>} : memref<1x4x2x64xf32, #tpu.memory_space<vmem>>, vector<1x1x2x64xf32>,
    %cst_41 = arith.constant 2.500000e-01 : f32
    %70 = vector.broadcast %cst_41 : f32 to vector<2x64xf32>
    %71 = arith.mulf %70, %8 : vector<2x64xf32>
    %cst_42 = arith.constant 7.500000e-01 : f32
    %72 = vector.broadcast %cst_42 : f32 to vector<2x64xf32>
    %73 = arith.mulf %72, %15 : vector<2x64xf32>
    %74 = arith.addf %71, %73 : vector<2x64xf32>
    %cst_43 = arith.constant 7.500000e-01 : f32
    %75 = vector.broadcast %cst_43 : f32 to vector<2x64xf32>
    %76 = arith.mulf %75, %15 : vector<2x64xf32>
    %cst_44 = arith.constant 2.500000e-01 : f32
    %77 = vector.broadcast %cst_44 : f32 to vector<2x64xf32>
    %78 = arith.mulf %77, %15 : vector<2x64xf32>
    %79 = arith.addf %76, %78 : vector<2x64xf32>
    %cst_45 = arith.constant 7.500000e-01 : f32
    %80 = vector.broadcast %cst_45 : f32 to vector<2x64xf32>
    %81 = arith.mulf %80, %74 : vector<2x64xf32>
    %82 = vector.extract_strided_slice %74 {offsets = [0, 0], sizes = [1, 64], strides = [1, 1]} : vector<2x64xf32> to vector<1x64xf32>
    %83 = vector.extract_strided_slice %74 {offsets = [0, 0], sizes = [1, 64], strides = [1, 1]} : vector<2x64xf32> to vector<1x64xf32>
    %84 = tpu.concatenate %82, %83 in 0 : vector<1x64xf32>, vector<1x64xf32> -> vector<2x64xf32>
    %cst_46 = arith.constant 2.500000e-01 : f32
    %85 = vector.broadcast %cst_46 : f32 to vector<2x64xf32>
    %86 = arith.mulf %85, %84 : vector<2x64xf32>
    %87 = arith.addf %81, %86 : vector<2x64xf32>
    %c0_47 = arith.constant 0 : index
    %c2 = arith.constant 2 : index
    %c0_48 = arith.constant 0 : index
    %c0_49 = arith.constant 0 : index
    %88 = vector.load %arg4[%c0_47, %c2, %c0_48, %c0_49] : memref<1x4x2x64xf32, #tpu.memory_space<vmem>>, vector<1x1x2x64xf32>
    %89 = vector.shape_cast %88 : vector<1x1x2x64xf32> to vector<2x64xf32>
    %90 = vector.shape_cast %87 : vector<2x64xf32> to vector<1x1x2x64xf32>
    tpu.vector_store %arg4[%c0_47, %c2, %c0_48, %c0_49], %90 {strides = array<i32>} : memref<1x4x2x64xf32, #tpu.memory_space<vmem>>, vector<1x1x2x64xf32>,
    %cst_50 = arith.constant 7.500000e-01 : f32
    %91 = vector.broadcast %cst_50 : f32 to vector<2x64xf32>
    %92 = arith.mulf %91, %74 : vector<2x64xf32>
    %93 = vector.extract_strided_slice %74 {offsets = [1, 0], sizes = [1, 64], strides = [1, 1]} : vector<2x64xf32> to vector<1x64xf32>
    %94 = vector.extract_strided_slice %74 {offsets = [1, 0], sizes = [1, 64], strides = [1, 1]} : vector<2x64xf32> to vector<1x64xf32>
    %95 = tpu.concatenate %93, %94 in 0 : vector<1x64xf32>, vector<1x64xf32> -> vector<2x64xf32>
    %cst_51 = arith.constant 2.500000e-01 : f32
    %96 = vector.broadcast %cst_51 : f32 to vector<2x64xf32>
    %97 = arith.mulf %96, %95 : vector<2x64xf32>
    %98 = arith.addf %92, %97 : vector<2x64xf32>
    %c0_52 = arith.constant 0 : index
    %c2_53 = arith.constant 2 : index
    %c0_54 = arith.constant 0 : index
    %c0_55 = arith.constant 0 : index
    %99 = vector.load %arg5[%c0_52, %c2_53, %c0_54, %c0_55] : memref<1x4x2x64xf32, #tpu.memory_space<vmem>>, vector<1x1x2x64xf32>
    %100 = vector.shape_cast %99 : vector<1x1x2x64xf32> to vector<2x64xf32>
    %101 = vector.shape_cast %98 : vector<2x64xf32> to vector<1x1x2x64xf32>
    tpu.vector_store %arg5[%c0_52, %c2_53, %c0_54, %c0_55], %101 {strides = array<i32>} : memref<1x4x2x64xf32, #tpu.memory_space<vmem>>, vector<1x1x2x64xf32>,
    %cst_56 = arith.constant 7.500000e-01 : f32
    %102 = vector.broadcast %cst_56 : f32 to vector<2x64xf32>
    %103 = arith.mulf %102, %79 : vector<2x64xf32>
    %104 = vector.extract_strided_slice %79 {offsets = [0, 0], sizes = [1, 64], strides = [1, 1]} : vector<2x64xf32> to vector<1x64xf32>
    %105 = vector.extract_strided_slice %79 {offsets = [0, 0], sizes = [1, 64], strides = [1, 1]} : vector<2x64xf32> to vector<1x64xf32>
    %106 = tpu.concatenate %104, %105 in 0 : vector<1x64xf32>, vector<1x64xf32> -> vector<2x64xf32>
    %cst_57 = arith.constant 2.500000e-01 : f32
    %107 = vector.broadcast %cst_57 : f32 to vector<2x64xf32>
    %108 = arith.mulf %107, %106 : vector<2x64xf32>
    %109 = arith.addf %103, %108 : vector<2x64xf32>
    %c0_58 = arith.constant 0 : index
    %c3 = arith.constant 3 : index
    %c0_59 = arith.constant 0 : index
    %c0_60 = arith.constant 0 : index
    %110 = vector.load %arg4[%c0_58, %c3, %c0_59, %c0_60] : memref<1x4x2x64xf32, #tpu.memory_space<vmem>>, vector<1x1x2x64xf32>
    %111 = vector.shape_cast %110 : vector<1x1x2x64xf32> to vector<2x64xf32>
    %112 = vector.shape_cast %109 : vector<2x64xf32> to vector<1x1x2x64xf32>
    tpu.vector_store %arg4[%c0_58, %c3, %c0_59, %c0_60], %112 {strides = array<i32>} : memref<1x4x2x64xf32, #tpu.memory_space<vmem>>, vector<1x1x2x64xf32>,
    %cst_61 = arith.constant 7.500000e-01 : f32
    %113 = vector.broadcast %cst_61 : f32 to vector<2x64xf32>
    %114 = arith.mulf %113, %79 : vector<2x64xf32>
    %115 = vector.extract_strided_slice %79 {offsets = [1, 0], sizes = [1, 64], strides = [1, 1]} : vector<2x64xf32> to vector<1x64xf32>
    %116 = vector.extract_strided_slice %79 {offsets = [1, 0], sizes = [1, 64], strides = [1, 1]} : vector<2x64xf32> to vector<1x64xf32>
    %117 = tpu.concatenate %115, %116 in 0 : vector<1x64xf32>, vector<1x64xf32> -> vector<2x64xf32>
    %cst_62 = arith.constant 2.500000e-01 : f32
    %118 = vector.broadcast %cst_62 : f32 to vector<2x64xf32>
    %119 = arith.mulf %118, %117 : vector<2x64xf32>
    %120 = arith.addf %114, %119 : vector<2x64xf32>
    %c0_63 = arith.constant 0 : index
    %c3_64 = arith.constant 3 : index
    %c0_65 = arith.constant 0 : index
    %c0_66 = arith.constant 0 : index
    %121 = vector.load %arg5[%c0_63, %c3_64, %c0_65, %c0_66] : memref<1x4x2x64xf32, #tpu.memory_space<vmem>>, vector<1x1x2x64xf32>
    %122 = vector.shape_cast %121 : vector<1x1x2x64xf32> to vector<2x64xf32>
    %123 = vector.shape_cast %120 : vector<2x64xf32> to vector<1x1x2x64xf32>
    tpu.vector_store %arg5[%c0_63, %c3_64, %c0_65, %c0_66], %123 {strides = array<i32>} : memref<1x4x2x64xf32, #tpu.memory_space<vmem>>, vector<1x1x2x64xf32>,
    return
  }
  func.func @transform_0(%arg0: i32) -> (i32, i32, i32, i32) {
    %c0_i32 = arith.constant 0 : i32
    %c0_i32_0 = arith.constant 0 : i32
    %c0_i32_1 = arith.constant 0 : i32
    %c0_i32_2 = arith.constant 0 : i32
    return %arg0, %c0_i32, %c0_i32_0, %c0_i32_1 : i32, i32, i32, i32
  }
  func.func @transform_1(%arg0: i32) -> (i32, i32) {
    %c0_i32 = arith.constant 0 : i32
    %c0_i32_0 = arith.constant 0 : i32
    %c0_i32_1 = arith.constant 0 : i32
    return %c0_i32, %c0_i32_0 : i32, i32
  }
  func.func @transform_2(%arg0: i32) -> (i32, i32) {
    %c0_i32 = arith.constant 0 : i32
    %c0_i32_0 = arith.constant 0 : i32
    %c0_i32_1 = arith.constant 0 : i32
    return %c0_i32, %c0_i32_0 : i32, i32
  }
  func.func @transform_3(%arg0: i32) -> (i32, i32, i32, i32) {
    %c0_i32 = arith.constant 0 : i32
    %c0_i32_0 = arith.constant 0 : i32
    %c0_i32_1 = arith.constant 0 : i32
    %c0_i32_2 = arith.constant 0 : i32
    return %arg0, %c0_i32, %c0_i32_0, %c0_i32_1 : i32, i32, i32, i32
  }
  func.func @transform_4(%arg0: i32) -> (i32, i32, i32, i32) {
    %c0_i32 = arith.constant 0 : i32
    %c0_i32_0 = arith.constant 0 : i32
    %c0_i32_1 = arith.constant 0 : i32
    %c0_i32_2 = arith.constant 0 : i32
    return %arg0, %c0_i32, %c0_i32_0, %c0_i32_1 : i32, i32, i32, i32
  }
}

module attributes {stable_mosaic.version = 11 : i64} {
  func.func @_decoder_block_kernel(%arg0: i32, %arg1: memref<1x4x4x576xf32, #tpu.memory_space<vmem>>, %arg2: memref<576x32xf32, #tpu.memory_space<vmem>>, %arg3: memref<1x32xf32, #tpu.memory_space<vmem>>, %arg4: memref<1x8x4x32xf32, #tpu.memory_space<vmem>>, %arg5: memref<1x8x4x32xf32, #tpu.memory_space<vmem>>) attributes {dimension_semantics = [#tpu.dimension_semantics<parallel>], iteration_bounds = array<i64: 2>, scalar_prefetch = 0 : i64, scratch_operands = 0 : i64, tpu.core_type = #tpu.core_type<tc>, window_params = [{transform_indices = @transform_0, window_bounds = array<i64: 1, 4, 4, 576>}, {pipeline_mode = #tpu.pipeline_mode<synchronous>, transform_indices = @transform_1, window_bounds = array<i64: 576, 32>}, {pipeline_mode = #tpu.pipeline_mode<synchronous>, transform_indices = @transform_2, window_bounds = array<i64: 1, 32>}, {transform_indices = @transform_3, window_bounds = array<i64: 1, 8, 4, 32>}, {transform_indices = @transform_4, window_bounds = array<i64: 1, 8, 4, 32>}]} {
    %c0 = arith.constant 0 : index
    %c0_0 = arith.constant 0 : index
    %0 = vector.load %arg2[%c0, %c0_0] : memref<576x32xf32, #tpu.memory_space<vmem>>, vector<576x32xf32>
    %c0_1 = arith.constant 0 : index
    %c0_2 = arith.constant 0 : index
    %1 = vector.load %arg3[%c0_1, %c0_2] : memref<1x32xf32, #tpu.memory_space<vmem>>, vector<1x32xf32>
    %c0_3 = arith.constant 0 : index
    %c0_4 = arith.constant 0 : index
    %c0_5 = arith.constant 0 : index
    %c0_6 = arith.constant 0 : index
    %2 = vector.load %arg1[%c0_3, %c0_4, %c0_5, %c0_6] : memref<1x4x4x576xf32, #tpu.memory_space<vmem>>, vector<1x1x4x576xf32>
    %3 = vector.shape_cast %2 : vector<1x1x4x576xf32> to vector<4x576xf32>
    %cst = arith.constant dense<0.000000e+00> : vector<4x32xf32>
    %4 = tpu.matmul %3, %0, %cst {dimension_numbers = #tpu.dot_dimension_numbers<[1], [0], [0], [1], [0, 0, 1, 1], [], []>} : vector<4x576xf32>, vector<576x32xf32>, vector<4x32xf32> -> vector<4x32xf32>
    %5 = vector.broadcast %1 : vector<1x32xf32> to vector<4x32xf32>
    %6 = arith.addf %4, %5 : vector<4x32xf32>
    %cst_7 = arith.constant 0.000000e+00 : f32
    %7 = vector.broadcast %cst_7 : f32 to vector<4x32xf32>
    %8 = arith.maximumf %6, %7 : vector<4x32xf32>
    %c0_8 = arith.constant 0 : index
    %c1 = arith.constant 1 : index
    %c0_9 = arith.constant 0 : index
    %c0_10 = arith.constant 0 : index
    %9 = vector.load %arg1[%c0_8, %c1, %c0_9, %c0_10] : memref<1x4x4x576xf32, #tpu.memory_space<vmem>>, vector<1x1x4x576xf32>
    %10 = vector.shape_cast %9 : vector<1x1x4x576xf32> to vector<4x576xf32>
    %cst_11 = arith.constant dense<0.000000e+00> : vector<4x32xf32>
    %11 = tpu.matmul %10, %0, %cst_11 {dimension_numbers = #tpu.dot_dimension_numbers<[1], [0], [0], [1], [0, 0, 1, 1], [], []>} : vector<4x576xf32>, vector<576x32xf32>, vector<4x32xf32> -> vector<4x32xf32>
    %12 = vector.broadcast %1 : vector<1x32xf32> to vector<4x32xf32>
    %13 = arith.addf %11, %12 : vector<4x32xf32>
    %cst_12 = arith.constant 0.000000e+00 : f32
    %14 = vector.broadcast %cst_12 : f32 to vector<4x32xf32>
    %15 = arith.maximumf %13, %14 : vector<4x32xf32>
    %c0_13 = arith.constant 0 : index
    %c2 = arith.constant 2 : index
    %c0_14 = arith.constant 0 : index
    %c0_15 = arith.constant 0 : index
    %16 = vector.load %arg1[%c0_13, %c2, %c0_14, %c0_15] : memref<1x4x4x576xf32, #tpu.memory_space<vmem>>, vector<1x1x4x576xf32>
    %17 = vector.shape_cast %16 : vector<1x1x4x576xf32> to vector<4x576xf32>
    %cst_16 = arith.constant dense<0.000000e+00> : vector<4x32xf32>
    %18 = tpu.matmul %17, %0, %cst_16 {dimension_numbers = #tpu.dot_dimension_numbers<[1], [0], [0], [1], [0, 0, 1, 1], [], []>} : vector<4x576xf32>, vector<576x32xf32>, vector<4x32xf32> -> vector<4x32xf32>
    %19 = vector.broadcast %1 : vector<1x32xf32> to vector<4x32xf32>
    %20 = arith.addf %18, %19 : vector<4x32xf32>
    %cst_17 = arith.constant 0.000000e+00 : f32
    %21 = vector.broadcast %cst_17 : f32 to vector<4x32xf32>
    %22 = arith.maximumf %20, %21 : vector<4x32xf32>
    %c0_18 = arith.constant 0 : index
    %c3 = arith.constant 3 : index
    %c0_19 = arith.constant 0 : index
    %c0_20 = arith.constant 0 : index
    %23 = vector.load %arg1[%c0_18, %c3, %c0_19, %c0_20] : memref<1x4x4x576xf32, #tpu.memory_space<vmem>>, vector<1x1x4x576xf32>
    %24 = vector.shape_cast %23 : vector<1x1x4x576xf32> to vector<4x576xf32>
    %cst_21 = arith.constant dense<0.000000e+00> : vector<4x32xf32>
    %25 = tpu.matmul %24, %0, %cst_21 {dimension_numbers = #tpu.dot_dimension_numbers<[1], [0], [0], [1], [0, 0, 1, 1], [], []>} : vector<4x576xf32>, vector<576x32xf32>, vector<4x32xf32> -> vector<4x32xf32>
    %26 = vector.broadcast %1 : vector<1x32xf32> to vector<4x32xf32>
    %27 = arith.addf %25, %26 : vector<4x32xf32>
    %cst_22 = arith.constant 0.000000e+00 : f32
    %28 = vector.broadcast %cst_22 : f32 to vector<4x32xf32>
    %29 = arith.maximumf %27, %28 : vector<4x32xf32>
    %cst_23 = arith.constant 2.500000e-01 : f32
    %30 = vector.broadcast %cst_23 : f32 to vector<4x32xf32>
    %31 = arith.mulf %30, %8 : vector<4x32xf32>
    %cst_24 = arith.constant 7.500000e-01 : f32
    %32 = vector.broadcast %cst_24 : f32 to vector<4x32xf32>
    %33 = arith.mulf %32, %8 : vector<4x32xf32>
    %34 = arith.addf %31, %33 : vector<4x32xf32>
    %cst_25 = arith.constant 7.500000e-01 : f32
    %35 = vector.broadcast %cst_25 : f32 to vector<4x32xf32>
    %36 = arith.mulf %35, %8 : vector<4x32xf32>
    %cst_26 = arith.constant 2.500000e-01 : f32
    %37 = vector.broadcast %cst_26 : f32 to vector<4x32xf32>
    %38 = arith.mulf %37, %15 : vector<4x32xf32>
    %39 = arith.addf %36, %38 : vector<4x32xf32>
    %cst_27 = arith.constant 7.500000e-01 : f32
    %40 = vector.broadcast %cst_27 : f32 to vector<4x32xf32>
    %41 = arith.mulf %40, %34 : vector<4x32xf32>
    %42 = vector.extract_strided_slice %34 {offsets = [0, 0], sizes = [1, 32], strides = [1, 1]} : vector<4x32xf32> to vector<1x32xf32>
    %43 = vector.extract_strided_slice %34 {offsets = [0, 0], sizes = [3, 32], strides = [1, 1]} : vector<4x32xf32> to vector<3x32xf32>
    %44 = tpu.concatenate %42, %43 in 0 : vector<1x32xf32>, vector<3x32xf32> -> vector<4x32xf32>
    %cst_28 = arith.constant 2.500000e-01 : f32
    %45 = vector.broadcast %cst_28 : f32 to vector<4x32xf32>
    %46 = arith.mulf %45, %44 : vector<4x32xf32>
    %47 = arith.addf %41, %46 : vector<4x32xf32>
    %c0_29 = arith.constant 0 : index
    %c0_30 = arith.constant 0 : index
    %c0_31 = arith.constant 0 : index
    %c0_32 = arith.constant 0 : index
    %48 = vector.load %arg4[%c0_29, %c0_30, %c0_31, %c0_32] : memref<1x8x4x32xf32, #tpu.memory_space<vmem>>, vector<1x1x4x32xf32>
    %49 = vector.shape_cast %48 : vector<1x1x4x32xf32> to vector<4x32xf32>
    %50 = vector.shape_cast %47 : vector<4x32xf32> to vector<1x1x4x32xf32>
    tpu.vector_store %arg4[%c0_29, %c0_30, %c0_31, %c0_32], %50 {strides = array<i32>} : memref<1x8x4x32xf32, #tpu.memory_space<vmem>>, vector<1x1x4x32xf32>,
    %cst_33 = arith.constant 7.500000e-01 : f32
    %51 = vector.broadcast %cst_33 : f32 to vector<4x32xf32>
    %52 = arith.mulf %51, %34 : vector<4x32xf32>
    %53 = vector.extract_strided_slice %34 {offsets = [1, 0], sizes = [3, 32], strides = [1, 1]} : vector<4x32xf32> to vector<3x32xf32>
    %54 = vector.extract_strided_slice %34 {offsets = [3, 0], sizes = [1, 32], strides = [1, 1]} : vector<4x32xf32> to vector<1x32xf32>
    %55 = tpu.concatenate %53, %54 in 0 : vector<3x32xf32>, vector<1x32xf32> -> vector<4x32xf32>
    %cst_34 = arith.constant 2.500000e-01 : f32
    %56 = vector.broadcast %cst_34 : f32 to vector<4x32xf32>
    %57 = arith.mulf %56, %55 : vector<4x32xf32>
    %58 = arith.addf %52, %57 : vector<4x32xf32>
    %c0_35 = arith.constant 0 : index
    %c0_36 = arith.constant 0 : index
    %c0_37 = arith.constant 0 : index
    %c0_38 = arith.constant 0 : index
    %59 = vector.load %arg5[%c0_35, %c0_36, %c0_37, %c0_38] : memref<1x8x4x32xf32, #tpu.memory_space<vmem>>, vector<1x1x4x32xf32>
    %60 = vector.shape_cast %59 : vector<1x1x4x32xf32> to vector<4x32xf32>
    %61 = vector.shape_cast %58 : vector<4x32xf32> to vector<1x1x4x32xf32>
    tpu.vector_store %arg5[%c0_35, %c0_36, %c0_37, %c0_38], %61 {strides = array<i32>} : memref<1x8x4x32xf32, #tpu.memory_space<vmem>>, vector<1x1x4x32xf32>,
    %cst_39 = arith.constant 7.500000e-01 : f32
    %62 = vector.broadcast %cst_39 : f32 to vector<4x32xf32>
    %63 = arith.mulf %62, %39 : vector<4x32xf32>
    %64 = vector.extract_strided_slice %39 {offsets = [0, 0], sizes = [1, 32], strides = [1, 1]} : vector<4x32xf32> to vector<1x32xf32>
    %65 = vector.extract_strided_slice %39 {offsets = [0, 0], sizes = [3, 32], strides = [1, 1]} : vector<4x32xf32> to vector<3x32xf32>
    %66 = tpu.concatenate %64, %65 in 0 : vector<1x32xf32>, vector<3x32xf32> -> vector<4x32xf32>
    %cst_40 = arith.constant 2.500000e-01 : f32
    %67 = vector.broadcast %cst_40 : f32 to vector<4x32xf32>
    %68 = arith.mulf %67, %66 : vector<4x32xf32>
    %69 = arith.addf %63, %68 : vector<4x32xf32>
    %c0_41 = arith.constant 0 : index
    %c1_42 = arith.constant 1 : index
    %c0_43 = arith.constant 0 : index
    %c0_44 = arith.constant 0 : index
    %70 = vector.load %arg4[%c0_41, %c1_42, %c0_43, %c0_44] : memref<1x8x4x32xf32, #tpu.memory_space<vmem>>, vector<1x1x4x32xf32>
    %71 = vector.shape_cast %70 : vector<1x1x4x32xf32> to vector<4x32xf32>
    %72 = vector.shape_cast %69 : vector<4x32xf32> to vector<1x1x4x32xf32>
    tpu.vector_store %arg4[%c0_41, %c1_42, %c0_43, %c0_44], %72 {strides = array<i32>} : memref<1x8x4x32xf32, #tpu.memory_space<vmem>>, vector<1x1x4x32xf32>,
    %cst_45 = arith.constant 7.500000e-01 : f32
    %73 = vector.broadcast %cst_45 : f32 to vector<4x32xf32>
    %74 = arith.mulf %73, %39 : vector<4x32xf32>
    %75 = vector.extract_strided_slice %39 {offsets = [1, 0], sizes = [3, 32], strides = [1, 1]} : vector<4x32xf32> to vector<3x32xf32>
    %76 = vector.extract_strided_slice %39 {offsets = [3, 0], sizes = [1, 32], strides = [1, 1]} : vector<4x32xf32> to vector<1x32xf32>
    %77 = tpu.concatenate %75, %76 in 0 : vector<3x32xf32>, vector<1x32xf32> -> vector<4x32xf32>
    %cst_46 = arith.constant 2.500000e-01 : f32
    %78 = vector.broadcast %cst_46 : f32 to vector<4x32xf32>
    %79 = arith.mulf %78, %77 : vector<4x32xf32>
    %80 = arith.addf %74, %79 : vector<4x32xf32>
    %c0_47 = arith.constant 0 : index
    %c1_48 = arith.constant 1 : index
    %c0_49 = arith.constant 0 : index
    %c0_50 = arith.constant 0 : index
    %81 = vector.load %arg5[%c0_47, %c1_48, %c0_49, %c0_50] : memref<1x8x4x32xf32, #tpu.memory_space<vmem>>, vector<1x1x4x32xf32>
    %82 = vector.shape_cast %81 : vector<1x1x4x32xf32> to vector<4x32xf32>
    %83 = vector.shape_cast %80 : vector<4x32xf32> to vector<1x1x4x32xf32>
    tpu.vector_store %arg5[%c0_47, %c1_48, %c0_49, %c0_50], %83 {strides = array<i32>} : memref<1x8x4x32xf32, #tpu.memory_space<vmem>>, vector<1x1x4x32xf32>,
    %cst_51 = arith.constant 2.500000e-01 : f32
    %84 = vector.broadcast %cst_51 : f32 to vector<4x32xf32>
    %85 = arith.mulf %84, %8 : vector<4x32xf32>
    %cst_52 = arith.constant 7.500000e-01 : f32
    %86 = vector.broadcast %cst_52 : f32 to vector<4x32xf32>
    %87 = arith.mulf %86, %15 : vector<4x32xf32>
    %88 = arith.addf %85, %87 : vector<4x32xf32>
    %cst_53 = arith.constant 7.500000e-01 : f32
    %89 = vector.broadcast %cst_53 : f32 to vector<4x32xf32>
    %90 = arith.mulf %89, %15 : vector<4x32xf32>
    %cst_54 = arith.constant 2.500000e-01 : f32
    %91 = vector.broadcast %cst_54 : f32 to vector<4x32xf32>
    %92 = arith.mulf %91, %22 : vector<4x32xf32>
    %93 = arith.addf %90, %92 : vector<4x32xf32>
    %cst_55 = arith.constant 7.500000e-01 : f32
    %94 = vector.broadcast %cst_55 : f32 to vector<4x32xf32>
    %95 = arith.mulf %94, %88 : vector<4x32xf32>
    %96 = vector.extract_strided_slice %88 {offsets = [0, 0], sizes = [1, 32], strides = [1, 1]} : vector<4x32xf32> to vector<1x32xf32>
    %97 = vector.extract_strided_slice %88 {offsets = [0, 0], sizes = [3, 32], strides = [1, 1]} : vector<4x32xf32> to vector<3x32xf32>
    %98 = tpu.concatenate %96, %97 in 0 : vector<1x32xf32>, vector<3x32xf32> -> vector<4x32xf32>
    %cst_56 = arith.constant 2.500000e-01 : f32
    %99 = vector.broadcast %cst_56 : f32 to vector<4x32xf32>
    %100 = arith.mulf %99, %98 : vector<4x32xf32>
    %101 = arith.addf %95, %100 : vector<4x32xf32>
    %c0_57 = arith.constant 0 : index
    %c2_58 = arith.constant 2 : index
    %c0_59 = arith.constant 0 : index
    %c0_60 = arith.constant 0 : index
    %102 = vector.load %arg4[%c0_57, %c2_58, %c0_59, %c0_60] : memref<1x8x4x32xf32, #tpu.memory_space<vmem>>, vector<1x1x4x32xf32>
    %103 = vector.shape_cast %102 : vector<1x1x4x32xf32> to vector<4x32xf32>
    %104 = vector.shape_cast %101 : vector<4x32xf32> to vector<1x1x4x32xf32>
    tpu.vector_store %arg4[%c0_57, %c2_58, %c0_59, %c0_60], %104 {strides = array<i32>} : memref<1x8x4x32xf32, #tpu.memory_space<vmem>>, vector<1x1x4x32xf32>,
    %cst_61 = arith.constant 7.500000e-01 : f32
    %105 = vector.broadcast %cst_61 : f32 to vector<4x32xf32>
    %106 = arith.mulf %105, %88 : vector<4x32xf32>
    %107 = vector.extract_strided_slice %88 {offsets = [1, 0], sizes = [3, 32], strides = [1, 1]} : vector<4x32xf32> to vector<3x32xf32>
    %108 = vector.extract_strided_slice %88 {offsets = [3, 0], sizes = [1, 32], strides = [1, 1]} : vector<4x32xf32> to vector<1x32xf32>
    %109 = tpu.concatenate %107, %108 in 0 : vector<3x32xf32>, vector<1x32xf32> -> vector<4x32xf32>
    %cst_62 = arith.constant 2.500000e-01 : f32
    %110 = vector.broadcast %cst_62 : f32 to vector<4x32xf32>
    %111 = arith.mulf %110, %109 : vector<4x32xf32>
    %112 = arith.addf %106, %111 : vector<4x32xf32>
    %c0_63 = arith.constant 0 : index
    %c2_64 = arith.constant 2 : index
    %c0_65 = arith.constant 0 : index
    %c0_66 = arith.constant 0 : index
    %113 = vector.load %arg5[%c0_63, %c2_64, %c0_65, %c0_66] : memref<1x8x4x32xf32, #tpu.memory_space<vmem>>, vector<1x1x4x32xf32>
    %114 = vector.shape_cast %113 : vector<1x1x4x32xf32> to vector<4x32xf32>
    %115 = vector.shape_cast %112 : vector<4x32xf32> to vector<1x1x4x32xf32>
    tpu.vector_store %arg5[%c0_63, %c2_64, %c0_65, %c0_66], %115 {strides = array<i32>} : memref<1x8x4x32xf32, #tpu.memory_space<vmem>>, vector<1x1x4x32xf32>,
    %cst_67 = arith.constant 7.500000e-01 : f32
    %116 = vector.broadcast %cst_67 : f32 to vector<4x32xf32>
    %117 = arith.mulf %116, %93 : vector<4x32xf32>
    %118 = vector.extract_strided_slice %93 {offsets = [0, 0], sizes = [1, 32], strides = [1, 1]} : vector<4x32xf32> to vector<1x32xf32>
    %119 = vector.extract_strided_slice %93 {offsets = [0, 0], sizes = [3, 32], strides = [1, 1]} : vector<4x32xf32> to vector<3x32xf32>
    %120 = tpu.concatenate %118, %119 in 0 : vector<1x32xf32>, vector<3x32xf32> -> vector<4x32xf32>
    %cst_68 = arith.constant 2.500000e-01 : f32
    %121 = vector.broadcast %cst_68 : f32 to vector<4x32xf32>
    %122 = arith.mulf %121, %120 : vector<4x32xf32>
    %123 = arith.addf %117, %122 : vector<4x32xf32>
    %c0_69 = arith.constant 0 : index
    %c3_70 = arith.constant 3 : index
    %c0_71 = arith.constant 0 : index
    %c0_72 = arith.constant 0 : index
    %124 = vector.load %arg4[%c0_69, %c3_70, %c0_71, %c0_72] : memref<1x8x4x32xf32, #tpu.memory_space<vmem>>, vector<1x1x4x32xf32>
    %125 = vector.shape_cast %124 : vector<1x1x4x32xf32> to vector<4x32xf32>
    %126 = vector.shape_cast %123 : vector<4x32xf32> to vector<1x1x4x32xf32>
    tpu.vector_store %arg4[%c0_69, %c3_70, %c0_71, %c0_72], %126 {strides = array<i32>} : memref<1x8x4x32xf32, #tpu.memory_space<vmem>>, vector<1x1x4x32xf32>,
    %cst_73 = arith.constant 7.500000e-01 : f32
    %127 = vector.broadcast %cst_73 : f32 to vector<4x32xf32>
    %128 = arith.mulf %127, %93 : vector<4x32xf32>
    %129 = vector.extract_strided_slice %93 {offsets = [1, 0], sizes = [3, 32], strides = [1, 1]} : vector<4x32xf32> to vector<3x32xf32>
    %130 = vector.extract_strided_slice %93 {offsets = [3, 0], sizes = [1, 32], strides = [1, 1]} : vector<4x32xf32> to vector<1x32xf32>
    %131 = tpu.concatenate %129, %130 in 0 : vector<3x32xf32>, vector<1x32xf32> -> vector<4x32xf32>
    %cst_74 = arith.constant 2.500000e-01 : f32
    %132 = vector.broadcast %cst_74 : f32 to vector<4x32xf32>
    %133 = arith.mulf %132, %131 : vector<4x32xf32>
    %134 = arith.addf %128, %133 : vector<4x32xf32>
    %c0_75 = arith.constant 0 : index
    %c3_76 = arith.constant 3 : index
    %c0_77 = arith.constant 0 : index
    %c0_78 = arith.constant 0 : index
    %135 = vector.load %arg5[%c0_75, %c3_76, %c0_77, %c0_78] : memref<1x8x4x32xf32, #tpu.memory_space<vmem>>, vector<1x1x4x32xf32>
    %136 = vector.shape_cast %135 : vector<1x1x4x32xf32> to vector<4x32xf32>
    %137 = vector.shape_cast %134 : vector<4x32xf32> to vector<1x1x4x32xf32>
    tpu.vector_store %arg5[%c0_75, %c3_76, %c0_77, %c0_78], %137 {strides = array<i32>} : memref<1x8x4x32xf32, #tpu.memory_space<vmem>>, vector<1x1x4x32xf32>,
    %cst_79 = arith.constant 2.500000e-01 : f32
    %138 = vector.broadcast %cst_79 : f32 to vector<4x32xf32>
    %139 = arith.mulf %138, %15 : vector<4x32xf32>
    %cst_80 = arith.constant 7.500000e-01 : f32
    %140 = vector.broadcast %cst_80 : f32 to vector<4x32xf32>
    %141 = arith.mulf %140, %22 : vector<4x32xf32>
    %142 = arith.addf %139, %141 : vector<4x32xf32>
    %cst_81 = arith.constant 7.500000e-01 : f32
    %143 = vector.broadcast %cst_81 : f32 to vector<4x32xf32>
    %144 = arith.mulf %143, %22 : vector<4x32xf32>
    %cst_82 = arith.constant 2.500000e-01 : f32
    %145 = vector.broadcast %cst_82 : f32 to vector<4x32xf32>
    %146 = arith.mulf %145, %29 : vector<4x32xf32>
    %147 = arith.addf %144, %146 : vector<4x32xf32>
    %cst_83 = arith.constant 7.500000e-01 : f32
    %148 = vector.broadcast %cst_83 : f32 to vector<4x32xf32>
    %149 = arith.mulf %148, %142 : vector<4x32xf32>
    %150 = vector.extract_strided_slice %142 {offsets = [0, 0], sizes = [1, 32], strides = [1, 1]} : vector<4x32xf32> to vector<1x32xf32>
    %151 = vector.extract_strided_slice %142 {offsets = [0, 0], sizes = [3, 32], strides = [1, 1]} : vector<4x32xf32> to vector<3x32xf32>
    %152 = tpu.concatenate %150, %151 in 0 : vector<1x32xf32>, vector<3x32xf32> -> vector<4x32xf32>
    %cst_84 = arith.constant 2.500000e-01 : f32
    %153 = vector.broadcast %cst_84 : f32 to vector<4x32xf32>
    %154 = arith.mulf %153, %152 : vector<4x32xf32>
    %155 = arith.addf %149, %154 : vector<4x32xf32>
    %c0_85 = arith.constant 0 : index
    %c4 = arith.constant 4 : index
    %c0_86 = arith.constant 0 : index
    %c0_87 = arith.constant 0 : index
    %156 = vector.load %arg4[%c0_85, %c4, %c0_86, %c0_87] : memref<1x8x4x32xf32, #tpu.memory_space<vmem>>, vector<1x1x4x32xf32>
    %157 = vector.shape_cast %156 : vector<1x1x4x32xf32> to vector<4x32xf32>
    %158 = vector.shape_cast %155 : vector<4x32xf32> to vector<1x1x4x32xf32>
    tpu.vector_store %arg4[%c0_85, %c4, %c0_86, %c0_87], %158 {strides = array<i32>} : memref<1x8x4x32xf32, #tpu.memory_space<vmem>>, vector<1x1x4x32xf32>,
    %cst_88 = arith.constant 7.500000e-01 : f32
    %159 = vector.broadcast %cst_88 : f32 to vector<4x32xf32>
    %160 = arith.mulf %159, %142 : vector<4x32xf32>
    %161 = vector.extract_strided_slice %142 {offsets = [1, 0], sizes = [3, 32], strides = [1, 1]} : vector<4x32xf32> to vector<3x32xf32>
    %162 = vector.extract_strided_slice %142 {offsets = [3, 0], sizes = [1, 32], strides = [1, 1]} : vector<4x32xf32> to vector<1x32xf32>
    %163 = tpu.concatenate %161, %162 in 0 : vector<3x32xf32>, vector<1x32xf32> -> vector<4x32xf32>
    %cst_89 = arith.constant 2.500000e-01 : f32
    %164 = vector.broadcast %cst_89 : f32 to vector<4x32xf32>
    %165 = arith.mulf %164, %163 : vector<4x32xf32>
    %166 = arith.addf %160, %165 : vector<4x32xf32>
    %c0_90 = arith.constant 0 : index
    %c4_91 = arith.constant 4 : index
    %c0_92 = arith.constant 0 : index
    %c0_93 = arith.constant 0 : index
    %167 = vector.load %arg5[%c0_90, %c4_91, %c0_92, %c0_93] : memref<1x8x4x32xf32, #tpu.memory_space<vmem>>, vector<1x1x4x32xf32>
    %168 = vector.shape_cast %167 : vector<1x1x4x32xf32> to vector<4x32xf32>
    %169 = vector.shape_cast %166 : vector<4x32xf32> to vector<1x1x4x32xf32>
    tpu.vector_store %arg5[%c0_90, %c4_91, %c0_92, %c0_93], %169 {strides = array<i32>} : memref<1x8x4x32xf32, #tpu.memory_space<vmem>>, vector<1x1x4x32xf32>,
    %cst_94 = arith.constant 7.500000e-01 : f32
    %170 = vector.broadcast %cst_94 : f32 to vector<4x32xf32>
    %171 = arith.mulf %170, %147 : vector<4x32xf32>
    %172 = vector.extract_strided_slice %147 {offsets = [0, 0], sizes = [1, 32], strides = [1, 1]} : vector<4x32xf32> to vector<1x32xf32>
    %173 = vector.extract_strided_slice %147 {offsets = [0, 0], sizes = [3, 32], strides = [1, 1]} : vector<4x32xf32> to vector<3x32xf32>
    %174 = tpu.concatenate %172, %173 in 0 : vector<1x32xf32>, vector<3x32xf32> -> vector<4x32xf32>
    %cst_95 = arith.constant 2.500000e-01 : f32
    %175 = vector.broadcast %cst_95 : f32 to vector<4x32xf32>
    %176 = arith.mulf %175, %174 : vector<4x32xf32>
    %177 = arith.addf %171, %176 : vector<4x32xf32>
    %c0_96 = arith.constant 0 : index
    %c5 = arith.constant 5 : index
    %c0_97 = arith.constant 0 : index
    %c0_98 = arith.constant 0 : index
    %178 = vector.load %arg4[%c0_96, %c5, %c0_97, %c0_98] : memref<1x8x4x32xf32, #tpu.memory_space<vmem>>, vector<1x1x4x32xf32>
    %179 = vector.shape_cast %178 : vector<1x1x4x32xf32> to vector<4x32xf32>
    %180 = vector.shape_cast %177 : vector<4x32xf32> to vector<1x1x4x32xf32>
    tpu.vector_store %arg4[%c0_96, %c5, %c0_97, %c0_98], %180 {strides = array<i32>} : memref<1x8x4x32xf32, #tpu.memory_space<vmem>>, vector<1x1x4x32xf32>,
    %cst_99 = arith.constant 7.500000e-01 : f32
    %181 = vector.broadcast %cst_99 : f32 to vector<4x32xf32>
    %182 = arith.mulf %181, %147 : vector<4x32xf32>
    %183 = vector.extract_strided_slice %147 {offsets = [1, 0], sizes = [3, 32], strides = [1, 1]} : vector<4x32xf32> to vector<3x32xf32>
    %184 = vector.extract_strided_slice %147 {offsets = [3, 0], sizes = [1, 32], strides = [1, 1]} : vector<4x32xf32> to vector<1x32xf32>
    %185 = tpu.concatenate %183, %184 in 0 : vector<3x32xf32>, vector<1x32xf32> -> vector<4x32xf32>
    %cst_100 = arith.constant 2.500000e-01 : f32
    %186 = vector.broadcast %cst_100 : f32 to vector<4x32xf32>
    %187 = arith.mulf %186, %185 : vector<4x32xf32>
    %188 = arith.addf %182, %187 : vector<4x32xf32>
    %c0_101 = arith.constant 0 : index
    %c5_102 = arith.constant 5 : index
    %c0_103 = arith.constant 0 : index
    %c0_104 = arith.constant 0 : index
    %189 = vector.load %arg5[%c0_101, %c5_102, %c0_103, %c0_104] : memref<1x8x4x32xf32, #tpu.memory_space<vmem>>, vector<1x1x4x32xf32>
    %190 = vector.shape_cast %189 : vector<1x1x4x32xf32> to vector<4x32xf32>
    %191 = vector.shape_cast %188 : vector<4x32xf32> to vector<1x1x4x32xf32>
    tpu.vector_store %arg5[%c0_101, %c5_102, %c0_103, %c0_104], %191 {strides = array<i32>} : memref<1x8x4x32xf32, #tpu.memory_space<vmem>>, vector<1x1x4x32xf32>,
    %cst_105 = arith.constant 2.500000e-01 : f32
    %192 = vector.broadcast %cst_105 : f32 to vector<4x32xf32>
    %193 = arith.mulf %192, %22 : vector<4x32xf32>
    %cst_106 = arith.constant 7.500000e-01 : f32
    %194 = vector.broadcast %cst_106 : f32 to vector<4x32xf32>
    %195 = arith.mulf %194, %29 : vector<4x32xf32>
    %196 = arith.addf %193, %195 : vector<4x32xf32>
    %cst_107 = arith.constant 7.500000e-01 : f32
    %197 = vector.broadcast %cst_107 : f32 to vector<4x32xf32>
    %198 = arith.mulf %197, %29 : vector<4x32xf32>
    %cst_108 = arith.constant 2.500000e-01 : f32
    %199 = vector.broadcast %cst_108 : f32 to vector<4x32xf32>
    %200 = arith.mulf %199, %29 : vector<4x32xf32>
    %201 = arith.addf %198, %200 : vector<4x32xf32>
    %cst_109 = arith.constant 7.500000e-01 : f32
    %202 = vector.broadcast %cst_109 : f32 to vector<4x32xf32>
    %203 = arith.mulf %202, %196 : vector<4x32xf32>
    %204 = vector.extract_strided_slice %196 {offsets = [0, 0], sizes = [1, 32], strides = [1, 1]} : vector<4x32xf32> to vector<1x32xf32>
    %205 = vector.extract_strided_slice %196 {offsets = [0, 0], sizes = [3, 32], strides = [1, 1]} : vector<4x32xf32> to vector<3x32xf32>
    %206 = tpu.concatenate %204, %205 in 0 : vector<1x32xf32>, vector<3x32xf32> -> vector<4x32xf32>
    %cst_110 = arith.constant 2.500000e-01 : f32
    %207 = vector.broadcast %cst_110 : f32 to vector<4x32xf32>
    %208 = arith.mulf %207, %206 : vector<4x32xf32>
    %209 = arith.addf %203, %208 : vector<4x32xf32>
    %c0_111 = arith.constant 0 : index
    %c6 = arith.constant 6 : index
    %c0_112 = arith.constant 0 : index
    %c0_113 = arith.constant 0 : index
    %210 = vector.load %arg4[%c0_111, %c6, %c0_112, %c0_113] : memref<1x8x4x32xf32, #tpu.memory_space<vmem>>, vector<1x1x4x32xf32>
    %211 = vector.shape_cast %210 : vector<1x1x4x32xf32> to vector<4x32xf32>
    %212 = vector.shape_cast %209 : vector<4x32xf32> to vector<1x1x4x32xf32>
    tpu.vector_store %arg4[%c0_111, %c6, %c0_112, %c0_113], %212 {strides = array<i32>} : memref<1x8x4x32xf32, #tpu.memory_space<vmem>>, vector<1x1x4x32xf32>,
    %cst_114 = arith.constant 7.500000e-01 : f32
    %213 = vector.broadcast %cst_114 : f32 to vector<4x32xf32>
    %214 = arith.mulf %213, %196 : vector<4x32xf32>
    %215 = vector.extract_strided_slice %196 {offsets = [1, 0], sizes = [3, 32], strides = [1, 1]} : vector<4x32xf32> to vector<3x32xf32>
    %216 = vector.extract_strided_slice %196 {offsets = [3, 0], sizes = [1, 32], strides = [1, 1]} : vector<4x32xf32> to vector<1x32xf32>
    %217 = tpu.concatenate %215, %216 in 0 : vector<3x32xf32>, vector<1x32xf32> -> vector<4x32xf32>
    %cst_115 = arith.constant 2.500000e-01 : f32
    %218 = vector.broadcast %cst_115 : f32 to vector<4x32xf32>
    %219 = arith.mulf %218, %217 : vector<4x32xf32>
    %220 = arith.addf %214, %219 : vector<4x32xf32>
    %c0_116 = arith.constant 0 : index
    %c6_117 = arith.constant 6 : index
    %c0_118 = arith.constant 0 : index
    %c0_119 = arith.constant 0 : index
    %221 = vector.load %arg5[%c0_116, %c6_117, %c0_118, %c0_119] : memref<1x8x4x32xf32, #tpu.memory_space<vmem>>, vector<1x1x4x32xf32>
    %222 = vector.shape_cast %221 : vector<1x1x4x32xf32> to vector<4x32xf32>
    %223 = vector.shape_cast %220 : vector<4x32xf32> to vector<1x1x4x32xf32>
    tpu.vector_store %arg5[%c0_116, %c6_117, %c0_118, %c0_119], %223 {strides = array<i32>} : memref<1x8x4x32xf32, #tpu.memory_space<vmem>>, vector<1x1x4x32xf32>,
    %cst_120 = arith.constant 7.500000e-01 : f32
    %224 = vector.broadcast %cst_120 : f32 to vector<4x32xf32>
    %225 = arith.mulf %224, %201 : vector<4x32xf32>
    %226 = vector.extract_strided_slice %201 {offsets = [0, 0], sizes = [1, 32], strides = [1, 1]} : vector<4x32xf32> to vector<1x32xf32>
    %227 = vector.extract_strided_slice %201 {offsets = [0, 0], sizes = [3, 32], strides = [1, 1]} : vector<4x32xf32> to vector<3x32xf32>
    %228 = tpu.concatenate %226, %227 in 0 : vector<1x32xf32>, vector<3x32xf32> -> vector<4x32xf32>
    %cst_121 = arith.constant 2.500000e-01 : f32
    %229 = vector.broadcast %cst_121 : f32 to vector<4x32xf32>
    %230 = arith.mulf %229, %228 : vector<4x32xf32>
    %231 = arith.addf %225, %230 : vector<4x32xf32>
    %c0_122 = arith.constant 0 : index
    %c7 = arith.constant 7 : index
    %c0_123 = arith.constant 0 : index
    %c0_124 = arith.constant 0 : index
    %232 = vector.load %arg4[%c0_122, %c7, %c0_123, %c0_124] : memref<1x8x4x32xf32, #tpu.memory_space<vmem>>, vector<1x1x4x32xf32>
    %233 = vector.shape_cast %232 : vector<1x1x4x32xf32> to vector<4x32xf32>
    %234 = vector.shape_cast %231 : vector<4x32xf32> to vector<1x1x4x32xf32>
    tpu.vector_store %arg4[%c0_122, %c7, %c0_123, %c0_124], %234 {strides = array<i32>} : memref<1x8x4x32xf32, #tpu.memory_space<vmem>>, vector<1x1x4x32xf32>,
    %cst_125 = arith.constant 7.500000e-01 : f32
    %235 = vector.broadcast %cst_125 : f32 to vector<4x32xf32>
    %236 = arith.mulf %235, %201 : vector<4x32xf32>
    %237 = vector.extract_strided_slice %201 {offsets = [1, 0], sizes = [3, 32], strides = [1, 1]} : vector<4x32xf32> to vector<3x32xf32>
    %238 = vector.extract_strided_slice %201 {offsets = [3, 0], sizes = [1, 32], strides = [1, 1]} : vector<4x32xf32> to vector<1x32xf32>
    %239 = tpu.concatenate %237, %238 in 0 : vector<3x32xf32>, vector<1x32xf32> -> vector<4x32xf32>
    %cst_126 = arith.constant 2.500000e-01 : f32
    %240 = vector.broadcast %cst_126 : f32 to vector<4x32xf32>
    %241 = arith.mulf %240, %239 : vector<4x32xf32>
    %242 = arith.addf %236, %241 : vector<4x32xf32>
    %c0_127 = arith.constant 0 : index
    %c7_128 = arith.constant 7 : index
    %c0_129 = arith.constant 0 : index
    %c0_130 = arith.constant 0 : index
    %243 = vector.load %arg5[%c0_127, %c7_128, %c0_129, %c0_130] : memref<1x8x4x32xf32, #tpu.memory_space<vmem>>, vector<1x1x4x32xf32>
    %244 = vector.shape_cast %243 : vector<1x1x4x32xf32> to vector<4x32xf32>
    %245 = vector.shape_cast %242 : vector<4x32xf32> to vector<1x1x4x32xf32>
    tpu.vector_store %arg5[%c0_127, %c7_128, %c0_129, %c0_130], %245 {strides = array<i32>} : memref<1x8x4x32xf32, #tpu.memory_space<vmem>>, vector<1x1x4x32xf32>,
    return
  }
  func.func @transform_0(%arg0: i32) -> (i32, i32, i32, i32) {
    %c0_i32 = arith.constant 0 : i32
    %c0_i32_0 = arith.constant 0 : i32
    %c0_i32_1 = arith.constant 0 : i32
    %c0_i32_2 = arith.constant 0 : i32
    return %arg0, %c0_i32, %c0_i32_0, %c0_i32_1 : i32, i32, i32, i32
  }
  func.func @transform_1(%arg0: i32) -> (i32, i32) {
    %c0_i32 = arith.constant 0 : i32
    %c0_i32_0 = arith.constant 0 : i32
    %c0_i32_1 = arith.constant 0 : i32
    return %c0_i32, %c0_i32_0 : i32, i32
  }
  func.func @transform_2(%arg0: i32) -> (i32, i32) {
    %c0_i32 = arith.constant 0 : i32
    %c0_i32_0 = arith.constant 0 : i32
    %c0_i32_1 = arith.constant 0 : i32
    return %c0_i32, %c0_i32_0 : i32, i32
  }
  func.func @transform_3(%arg0: i32) -> (i32, i32, i32, i32) {
    %c0_i32 = arith.constant 0 : i32
    %c0_i32_0 = arith.constant 0 : i32
    %c0_i32_1 = arith.constant 0 : i32
    %c0_i32_2 = arith.constant 0 : i32
    return %arg0, %c0_i32, %c0_i32_0, %c0_i32_1 : i32, i32, i32, i32
  }
  func.func @transform_4(%arg0: i32) -> (i32, i32, i32, i32) {
    %c0_i32 = arith.constant 0 : i32
    %c0_i32_0 = arith.constant 0 : i32
    %c0_i32_1 = arith.constant 0 : i32
    %c0_i32_2 = arith.constant 0 : i32
    return %arg0, %c0_i32, %c0_i32_0, %c0_i32_1 : i32, i32, i32, i32
  }
}

module attributes {stable_mosaic.version = 11 : i64} {
  func.func @_decoder_block_kernel(%arg0: i32, %arg1: memref<1x8x8x288xf32, #tpu.memory_space<vmem>>, %arg2: memref<288x3xf32, #tpu.memory_space<vmem>>, %arg3: memref<1x3xf32, #tpu.memory_space<vmem>>, %arg4: memref<1x16x8x3xf32, #tpu.memory_space<vmem>>, %arg5: memref<1x16x8x3xf32, #tpu.memory_space<vmem>>) attributes {dimension_semantics = [#tpu.dimension_semantics<parallel>], iteration_bounds = array<i64: 2>, scalar_prefetch = 0 : i64, scratch_operands = 0 : i64, tpu.core_type = #tpu.core_type<tc>, window_params = [{transform_indices = @transform_0, window_bounds = array<i64: 1, 8, 8, 288>}, {pipeline_mode = #tpu.pipeline_mode<synchronous>, transform_indices = @transform_1, window_bounds = array<i64: 288, 3>}, {pipeline_mode = #tpu.pipeline_mode<synchronous>, transform_indices = @transform_2, window_bounds = array<i64: 1, 3>}, {transform_indices = @transform_3, window_bounds = array<i64: 1, 16, 8, 3>}, {transform_indices = @transform_4, window_bounds = array<i64: 1, 16, 8, 3>}]} {
    %c0 = arith.constant 0 : index
    %c0_0 = arith.constant 0 : index
    %0 = vector.load %arg2[%c0, %c0_0] : memref<288x3xf32, #tpu.memory_space<vmem>>, vector<288x3xf32>
    %c0_1 = arith.constant 0 : index
    %c0_2 = arith.constant 0 : index
    %1 = vector.load %arg3[%c0_1, %c0_2] : memref<1x3xf32, #tpu.memory_space<vmem>>, vector<1x3xf32>
    %c0_3 = arith.constant 0 : index
    %c0_4 = arith.constant 0 : index
    %c0_5 = arith.constant 0 : index
    %c0_6 = arith.constant 0 : index
    %2 = vector.load %arg1[%c0_3, %c0_4, %c0_5, %c0_6] : memref<1x8x8x288xf32, #tpu.memory_space<vmem>>, vector<1x1x8x288xf32>
    %3 = vector.shape_cast %2 : vector<1x1x8x288xf32> to vector<8x288xf32>
    %cst = arith.constant dense<0.000000e+00> : vector<8x3xf32>
    %4 = tpu.matmul %3, %0, %cst {dimension_numbers = #tpu.dot_dimension_numbers<[1], [0], [0], [1], [0, 0, 1, 1], [], []>} : vector<8x288xf32>, vector<288x3xf32>, vector<8x3xf32> -> vector<8x3xf32>
    %5 = vector.broadcast %1 : vector<1x3xf32> to vector<8x3xf32>
    %6 = arith.addf %4, %5 : vector<8x3xf32>
    %cst_7 = arith.constant 0.000000e+00 : f32
    %7 = vector.broadcast %cst_7 : f32 to vector<8x3xf32>
    %8 = arith.maximumf %6, %7 : vector<8x3xf32>
    %c0_8 = arith.constant 0 : index
    %c1 = arith.constant 1 : index
    %c0_9 = arith.constant 0 : index
    %c0_10 = arith.constant 0 : index
    %9 = vector.load %arg1[%c0_8, %c1, %c0_9, %c0_10] : memref<1x8x8x288xf32, #tpu.memory_space<vmem>>, vector<1x1x8x288xf32>
    %10 = vector.shape_cast %9 : vector<1x1x8x288xf32> to vector<8x288xf32>
    %cst_11 = arith.constant dense<0.000000e+00> : vector<8x3xf32>
    %11 = tpu.matmul %10, %0, %cst_11 {dimension_numbers = #tpu.dot_dimension_numbers<[1], [0], [0], [1], [0, 0, 1, 1], [], []>} : vector<8x288xf32>, vector<288x3xf32>, vector<8x3xf32> -> vector<8x3xf32>
    %12 = vector.broadcast %1 : vector<1x3xf32> to vector<8x3xf32>
    %13 = arith.addf %11, %12 : vector<8x3xf32>
    %cst_12 = arith.constant 0.000000e+00 : f32
    %14 = vector.broadcast %cst_12 : f32 to vector<8x3xf32>
    %15 = arith.maximumf %13, %14 : vector<8x3xf32>
    %c0_13 = arith.constant 0 : index
    %c2 = arith.constant 2 : index
    %c0_14 = arith.constant 0 : index
    %c0_15 = arith.constant 0 : index
    %16 = vector.load %arg1[%c0_13, %c2, %c0_14, %c0_15] : memref<1x8x8x288xf32, #tpu.memory_space<vmem>>, vector<1x1x8x288xf32>
    %17 = vector.shape_cast %16 : vector<1x1x8x288xf32> to vector<8x288xf32>
    %cst_16 = arith.constant dense<0.000000e+00> : vector<8x3xf32>
    %18 = tpu.matmul %17, %0, %cst_16 {dimension_numbers = #tpu.dot_dimension_numbers<[1], [0], [0], [1], [0, 0, 1, 1], [], []>} : vector<8x288xf32>, vector<288x3xf32>, vector<8x3xf32> -> vector<8x3xf32>
    %19 = vector.broadcast %1 : vector<1x3xf32> to vector<8x3xf32>
    %20 = arith.addf %18, %19 : vector<8x3xf32>
    %cst_17 = arith.constant 0.000000e+00 : f32
    %21 = vector.broadcast %cst_17 : f32 to vector<8x3xf32>
    %22 = arith.maximumf %20, %21 : vector<8x3xf32>
    %c0_18 = arith.constant 0 : index
    %c3 = arith.constant 3 : index
    %c0_19 = arith.constant 0 : index
    %c0_20 = arith.constant 0 : index
    %23 = vector.load %arg1[%c0_18, %c3, %c0_19, %c0_20] : memref<1x8x8x288xf32, #tpu.memory_space<vmem>>, vector<1x1x8x288xf32>
    %24 = vector.shape_cast %23 : vector<1x1x8x288xf32> to vector<8x288xf32>
    %cst_21 = arith.constant dense<0.000000e+00> : vector<8x3xf32>
    %25 = tpu.matmul %24, %0, %cst_21 {dimension_numbers = #tpu.dot_dimension_numbers<[1], [0], [0], [1], [0, 0, 1, 1], [], []>} : vector<8x288xf32>, vector<288x3xf32>, vector<8x3xf32> -> vector<8x3xf32>
    %26 = vector.broadcast %1 : vector<1x3xf32> to vector<8x3xf32>
    %27 = arith.addf %25, %26 : vector<8x3xf32>
    %cst_22 = arith.constant 0.000000e+00 : f32
    %28 = vector.broadcast %cst_22 : f32 to vector<8x3xf32>
    %29 = arith.maximumf %27, %28 : vector<8x3xf32>
    %c0_23 = arith.constant 0 : index
    %c4 = arith.constant 4 : index
    %c0_24 = arith.constant 0 : index
    %c0_25 = arith.constant 0 : index
    %30 = vector.load %arg1[%c0_23, %c4, %c0_24, %c0_25] : memref<1x8x8x288xf32, #tpu.memory_space<vmem>>, vector<1x1x8x288xf32>
    %31 = vector.shape_cast %30 : vector<1x1x8x288xf32> to vector<8x288xf32>
    %cst_26 = arith.constant dense<0.000000e+00> : vector<8x3xf32>
    %32 = tpu.matmul %31, %0, %cst_26 {dimension_numbers = #tpu.dot_dimension_numbers<[1], [0], [0], [1], [0, 0, 1, 1], [], []>} : vector<8x288xf32>, vector<288x3xf32>, vector<8x3xf32> -> vector<8x3xf32>
    %33 = vector.broadcast %1 : vector<1x3xf32> to vector<8x3xf32>
    %34 = arith.addf %32, %33 : vector<8x3xf32>
    %cst_27 = arith.constant 0.000000e+00 : f32
    %35 = vector.broadcast %cst_27 : f32 to vector<8x3xf32>
    %36 = arith.maximumf %34, %35 : vector<8x3xf32>
    %c0_28 = arith.constant 0 : index
    %c5 = arith.constant 5 : index
    %c0_29 = arith.constant 0 : index
    %c0_30 = arith.constant 0 : index
    %37 = vector.load %arg1[%c0_28, %c5, %c0_29, %c0_30] : memref<1x8x8x288xf32, #tpu.memory_space<vmem>>, vector<1x1x8x288xf32>
    %38 = vector.shape_cast %37 : vector<1x1x8x288xf32> to vector<8x288xf32>
    %cst_31 = arith.constant dense<0.000000e+00> : vector<8x3xf32>
    %39 = tpu.matmul %38, %0, %cst_31 {dimension_numbers = #tpu.dot_dimension_numbers<[1], [0], [0], [1], [0, 0, 1, 1], [], []>} : vector<8x288xf32>, vector<288x3xf32>, vector<8x3xf32> -> vector<8x3xf32>
    %40 = vector.broadcast %1 : vector<1x3xf32> to vector<8x3xf32>
    %41 = arith.addf %39, %40 : vector<8x3xf32>
    %cst_32 = arith.constant 0.000000e+00 : f32
    %42 = vector.broadcast %cst_32 : f32 to vector<8x3xf32>
    %43 = arith.maximumf %41, %42 : vector<8x3xf32>
    %c0_33 = arith.constant 0 : index
    %c6 = arith.constant 6 : index
    %c0_34 = arith.constant 0 : index
    %c0_35 = arith.constant 0 : index
    %44 = vector.load %arg1[%c0_33, %c6, %c0_34, %c0_35] : memref<1x8x8x288xf32, #tpu.memory_space<vmem>>, vector<1x1x8x288xf32>
    %45 = vector.shape_cast %44 : vector<1x1x8x288xf32> to vector<8x288xf32>
    %cst_36 = arith.constant dense<0.000000e+00> : vector<8x3xf32>
    %46 = tpu.matmul %45, %0, %cst_36 {dimension_numbers = #tpu.dot_dimension_numbers<[1], [0], [0], [1], [0, 0, 1, 1], [], []>} : vector<8x288xf32>, vector<288x3xf32>, vector<8x3xf32> -> vector<8x3xf32>
    %47 = vector.broadcast %1 : vector<1x3xf32> to vector<8x3xf32>
    %48 = arith.addf %46, %47 : vector<8x3xf32>
    %cst_37 = arith.constant 0.000000e+00 : f32
    %49 = vector.broadcast %cst_37 : f32 to vector<8x3xf32>
    %50 = arith.maximumf %48, %49 : vector<8x3xf32>
    %c0_38 = arith.constant 0 : index
    %c7 = arith.constant 7 : index
    %c0_39 = arith.constant 0 : index
    %c0_40 = arith.constant 0 : index
    %51 = vector.load %arg1[%c0_38, %c7, %c0_39, %c0_40] : memref<1x8x8x288xf32, #tpu.memory_space<vmem>>, vector<1x1x8x288xf32>
    %52 = vector.shape_cast %51 : vector<1x1x8x288xf32> to vector<8x288xf32>
    %cst_41 = arith.constant dense<0.000000e+00> : vector<8x3xf32>
    %53 = tpu.matmul %52, %0, %cst_41 {dimension_numbers = #tpu.dot_dimension_numbers<[1], [0], [0], [1], [0, 0, 1, 1], [], []>} : vector<8x288xf32>, vector<288x3xf32>, vector<8x3xf32> -> vector<8x3xf32>
    %54 = vector.broadcast %1 : vector<1x3xf32> to vector<8x3xf32>
    %55 = arith.addf %53, %54 : vector<8x3xf32>
    %cst_42 = arith.constant 0.000000e+00 : f32
    %56 = vector.broadcast %cst_42 : f32 to vector<8x3xf32>
    %57 = arith.maximumf %55, %56 : vector<8x3xf32>
    %cst_43 = arith.constant 2.500000e-01 : f32
    %58 = vector.broadcast %cst_43 : f32 to vector<8x3xf32>
    %59 = arith.mulf %58, %8 : vector<8x3xf32>
    %cst_44 = arith.constant 7.500000e-01 : f32
    %60 = vector.broadcast %cst_44 : f32 to vector<8x3xf32>
    %61 = arith.mulf %60, %8 : vector<8x3xf32>
    %62 = arith.addf %59, %61 : vector<8x3xf32>
    %cst_45 = arith.constant 7.500000e-01 : f32
    %63 = vector.broadcast %cst_45 : f32 to vector<8x3xf32>
    %64 = arith.mulf %63, %8 : vector<8x3xf32>
    %cst_46 = arith.constant 2.500000e-01 : f32
    %65 = vector.broadcast %cst_46 : f32 to vector<8x3xf32>
    %66 = arith.mulf %65, %15 : vector<8x3xf32>
    %67 = arith.addf %64, %66 : vector<8x3xf32>
    %cst_47 = arith.constant 7.500000e-01 : f32
    %68 = vector.broadcast %cst_47 : f32 to vector<8x3xf32>
    %69 = arith.mulf %68, %62 : vector<8x3xf32>
    %70 = vector.extract_strided_slice %62 {offsets = [0, 0], sizes = [1, 3], strides = [1, 1]} : vector<8x3xf32> to vector<1x3xf32>
    %71 = vector.extract_strided_slice %62 {offsets = [0, 0], sizes = [7, 3], strides = [1, 1]} : vector<8x3xf32> to vector<7x3xf32>
    %72 = tpu.concatenate %70, %71 in 0 : vector<1x3xf32>, vector<7x3xf32> -> vector<8x3xf32>
    %cst_48 = arith.constant 2.500000e-01 : f32
    %73 = vector.broadcast %cst_48 : f32 to vector<8x3xf32>
    %74 = arith.mulf %73, %72 : vector<8x3xf32>
    %75 = arith.addf %69, %74 : vector<8x3xf32>
    %c0_49 = arith.constant 0 : index
    %c0_50 = arith.constant 0 : index
    %c0_51 = arith.constant 0 : index
    %c0_52 = arith.constant 0 : index
    %76 = vector.load %arg4[%c0_49, %c0_50, %c0_51, %c0_52] : memref<1x16x8x3xf32, #tpu.memory_space<vmem>>, vector<1x1x8x3xf32>
    %77 = vector.shape_cast %76 : vector<1x1x8x3xf32> to vector<8x3xf32>
    %78 = vector.shape_cast %75 : vector<8x3xf32> to vector<1x1x8x3xf32>
    tpu.vector_store %arg4[%c0_49, %c0_50, %c0_51, %c0_52], %78 {strides = array<i32>} : memref<1x16x8x3xf32, #tpu.memory_space<vmem>>, vector<1x1x8x3xf32>,
    %cst_53 = arith.constant 7.500000e-01 : f32
    %79 = vector.broadcast %cst_53 : f32 to vector<8x3xf32>
    %80 = arith.mulf %79, %62 : vector<8x3xf32>
    %81 = vector.extract_strided_slice %62 {offsets = [1, 0], sizes = [7, 3], strides = [1, 1]} : vector<8x3xf32> to vector<7x3xf32>
    %82 = vector.extract_strided_slice %62 {offsets = [7, 0], sizes = [1, 3], strides = [1, 1]} : vector<8x3xf32> to vector<1x3xf32>
    %83 = tpu.concatenate %81, %82 in 0 : vector<7x3xf32>, vector<1x3xf32> -> vector<8x3xf32>
    %cst_54 = arith.constant 2.500000e-01 : f32
    %84 = vector.broadcast %cst_54 : f32 to vector<8x3xf32>
    %85 = arith.mulf %84, %83 : vector<8x3xf32>
    %86 = arith.addf %80, %85 : vector<8x3xf32>
    %c0_55 = arith.constant 0 : index
    %c0_56 = arith.constant 0 : index
    %c0_57 = arith.constant 0 : index
    %c0_58 = arith.constant 0 : index
    %87 = vector.load %arg5[%c0_55, %c0_56, %c0_57, %c0_58] : memref<1x16x8x3xf32, #tpu.memory_space<vmem>>, vector<1x1x8x3xf32>
    %88 = vector.shape_cast %87 : vector<1x1x8x3xf32> to vector<8x3xf32>
    %89 = vector.shape_cast %86 : vector<8x3xf32> to vector<1x1x8x3xf32>
    tpu.vector_store %arg5[%c0_55, %c0_56, %c0_57, %c0_58], %89 {strides = array<i32>} : memref<1x16x8x3xf32, #tpu.memory_space<vmem>>, vector<1x1x8x3xf32>,
    %cst_59 = arith.constant 7.500000e-01 : f32
    %90 = vector.broadcast %cst_59 : f32 to vector<8x3xf32>
    %91 = arith.mulf %90, %67 : vector<8x3xf32>
    %92 = vector.extract_strided_slice %67 {offsets = [0, 0], sizes = [1, 3], strides = [1, 1]} : vector<8x3xf32> to vector<1x3xf32>
    %93 = vector.extract_strided_slice %67 {offsets = [0, 0], sizes = [7, 3], strides = [1, 1]} : vector<8x3xf32> to vector<7x3xf32>
    %94 = tpu.concatenate %92, %93 in 0 : vector<1x3xf32>, vector<7x3xf32> -> vector<8x3xf32>
    %cst_60 = arith.constant 2.500000e-01 : f32
    %95 = vector.broadcast %cst_60 : f32 to vector<8x3xf32>
    %96 = arith.mulf %95, %94 : vector<8x3xf32>
    %97 = arith.addf %91, %96 : vector<8x3xf32>
    %c0_61 = arith.constant 0 : index
    %c1_62 = arith.constant 1 : index
    %c0_63 = arith.constant 0 : index
    %c0_64 = arith.constant 0 : index
    %98 = vector.load %arg4[%c0_61, %c1_62, %c0_63, %c0_64] : memref<1x16x8x3xf32, #tpu.memory_space<vmem>>, vector<1x1x8x3xf32>
    %99 = vector.shape_cast %98 : vector<1x1x8x3xf32> to vector<8x3xf32>
    %100 = vector.shape_cast %97 : vector<8x3xf32> to vector<1x1x8x3xf32>
    tpu.vector_store %arg4[%c0_61, %c1_62, %c0_63, %c0_64], %100 {strides = array<i32>} : memref<1x16x8x3xf32, #tpu.memory_space<vmem>>, vector<1x1x8x3xf32>,
    %cst_65 = arith.constant 7.500000e-01 : f32
    %101 = vector.broadcast %cst_65 : f32 to vector<8x3xf32>
    %102 = arith.mulf %101, %67 : vector<8x3xf32>
    %103 = vector.extract_strided_slice %67 {offsets = [1, 0], sizes = [7, 3], strides = [1, 1]} : vector<8x3xf32> to vector<7x3xf32>
    %104 = vector.extract_strided_slice %67 {offsets = [7, 0], sizes = [1, 3], strides = [1, 1]} : vector<8x3xf32> to vector<1x3xf32>
    %105 = tpu.concatenate %103, %104 in 0 : vector<7x3xf32>, vector<1x3xf32> -> vector<8x3xf32>
    %cst_66 = arith.constant 2.500000e-01 : f32
    %106 = vector.broadcast %cst_66 : f32 to vector<8x3xf32>
    %107 = arith.mulf %106, %105 : vector<8x3xf32>
    %108 = arith.addf %102, %107 : vector<8x3xf32>
    %c0_67 = arith.constant 0 : index
    %c1_68 = arith.constant 1 : index
    %c0_69 = arith.constant 0 : index
    %c0_70 = arith.constant 0 : index
    %109 = vector.load %arg5[%c0_67, %c1_68, %c0_69, %c0_70] : memref<1x16x8x3xf32, #tpu.memory_space<vmem>>, vector<1x1x8x3xf32>
    %110 = vector.shape_cast %109 : vector<1x1x8x3xf32> to vector<8x3xf32>
    %111 = vector.shape_cast %108 : vector<8x3xf32> to vector<1x1x8x3xf32>
    tpu.vector_store %arg5[%c0_67, %c1_68, %c0_69, %c0_70], %111 {strides = array<i32>} : memref<1x16x8x3xf32, #tpu.memory_space<vmem>>, vector<1x1x8x3xf32>,
    %cst_71 = arith.constant 2.500000e-01 : f32
    %112 = vector.broadcast %cst_71 : f32 to vector<8x3xf32>
    %113 = arith.mulf %112, %8 : vector<8x3xf32>
    %cst_72 = arith.constant 7.500000e-01 : f32
    %114 = vector.broadcast %cst_72 : f32 to vector<8x3xf32>
    %115 = arith.mulf %114, %15 : vector<8x3xf32>
    %116 = arith.addf %113, %115 : vector<8x3xf32>
    %cst_73 = arith.constant 7.500000e-01 : f32
    %117 = vector.broadcast %cst_73 : f32 to vector<8x3xf32>
    %118 = arith.mulf %117, %15 : vector<8x3xf32>
    %cst_74 = arith.constant 2.500000e-01 : f32
    %119 = vector.broadcast %cst_74 : f32 to vector<8x3xf32>
    %120 = arith.mulf %119, %22 : vector<8x3xf32>
    %121 = arith.addf %118, %120 : vector<8x3xf32>
    %cst_75 = arith.constant 7.500000e-01 : f32
    %122 = vector.broadcast %cst_75 : f32 to vector<8x3xf32>
    %123 = arith.mulf %122, %116 : vector<8x3xf32>
    %124 = vector.extract_strided_slice %116 {offsets = [0, 0], sizes = [1, 3], strides = [1, 1]} : vector<8x3xf32> to vector<1x3xf32>
    %125 = vector.extract_strided_slice %116 {offsets = [0, 0], sizes = [7, 3], strides = [1, 1]} : vector<8x3xf32> to vector<7x3xf32>
    %126 = tpu.concatenate %124, %125 in 0 : vector<1x3xf32>, vector<7x3xf32> -> vector<8x3xf32>
    %cst_76 = arith.constant 2.500000e-01 : f32
    %127 = vector.broadcast %cst_76 : f32 to vector<8x3xf32>
    %128 = arith.mulf %127, %126 : vector<8x3xf32>
    %129 = arith.addf %123, %128 : vector<8x3xf32>
    %c0_77 = arith.constant 0 : index
    %c2_78 = arith.constant 2 : index
    %c0_79 = arith.constant 0 : index
    %c0_80 = arith.constant 0 : index
    %130 = vector.load %arg4[%c0_77, %c2_78, %c0_79, %c0_80] : memref<1x16x8x3xf32, #tpu.memory_space<vmem>>, vector<1x1x8x3xf32>
    %131 = vector.shape_cast %130 : vector<1x1x8x3xf32> to vector<8x3xf32>
    %132 = vector.shape_cast %129 : vector<8x3xf32> to vector<1x1x8x3xf32>
    tpu.vector_store %arg4[%c0_77, %c2_78, %c0_79, %c0_80], %132 {strides = array<i32>} : memref<1x16x8x3xf32, #tpu.memory_space<vmem>>, vector<1x1x8x3xf32>,
    %cst_81 = arith.constant 7.500000e-01 : f32
    %133 = vector.broadcast %cst_81 : f32 to vector<8x3xf32>
    %134 = arith.mulf %133, %116 : vector<8x3xf32>
    %135 = vector.extract_strided_slice %116 {offsets = [1, 0], sizes = [7, 3], strides = [1, 1]} : vector<8x3xf32> to vector<7x3xf32>
    %136 = vector.extract_strided_slice %116 {offsets = [7, 0], sizes = [1, 3], strides = [1, 1]} : vector<8x3xf32> to vector<1x3xf32>
    %137 = tpu.concatenate %135, %136 in 0 : vector<7x3xf32>, vector<1x3xf32> -> vector<8x3xf32>
    %cst_82 = arith.constant 2.500000e-01 : f32
    %138 = vector.broadcast %cst_82 : f32 to vector<8x3xf32>
    %139 = arith.mulf %138, %137 : vector<8x3xf32>
    %140 = arith.addf %134, %139 : vector<8x3xf32>
    %c0_83 = arith.constant 0 : index
    %c2_84 = arith.constant 2 : index
    %c0_85 = arith.constant 0 : index
    %c0_86 = arith.constant 0 : index
    %141 = vector.load %arg5[%c0_83, %c2_84, %c0_85, %c0_86] : memref<1x16x8x3xf32, #tpu.memory_space<vmem>>, vector<1x1x8x3xf32>
    %142 = vector.shape_cast %141 : vector<1x1x8x3xf32> to vector<8x3xf32>
    %143 = vector.shape_cast %140 : vector<8x3xf32> to vector<1x1x8x3xf32>
    tpu.vector_store %arg5[%c0_83, %c2_84, %c0_85, %c0_86], %143 {strides = array<i32>} : memref<1x16x8x3xf32, #tpu.memory_space<vmem>>, vector<1x1x8x3xf32>,
    %cst_87 = arith.constant 7.500000e-01 : f32
    %144 = vector.broadcast %cst_87 : f32 to vector<8x3xf32>
    %145 = arith.mulf %144, %121 : vector<8x3xf32>
    %146 = vector.extract_strided_slice %121 {offsets = [0, 0], sizes = [1, 3], strides = [1, 1]} : vector<8x3xf32> to vector<1x3xf32>
    %147 = vector.extract_strided_slice %121 {offsets = [0, 0], sizes = [7, 3], strides = [1, 1]} : vector<8x3xf32> to vector<7x3xf32>
    %148 = tpu.concatenate %146, %147 in 0 : vector<1x3xf32>, vector<7x3xf32> -> vector<8x3xf32>
    %cst_88 = arith.constant 2.500000e-01 : f32
    %149 = vector.broadcast %cst_88 : f32 to vector<8x3xf32>
    %150 = arith.mulf %149, %148 : vector<8x3xf32>
    %151 = arith.addf %145, %150 : vector<8x3xf32>
    %c0_89 = arith.constant 0 : index
    %c3_90 = arith.constant 3 : index
    %c0_91 = arith.constant 0 : index
    %c0_92 = arith.constant 0 : index
    %152 = vector.load %arg4[%c0_89, %c3_90, %c0_91, %c0_92] : memref<1x16x8x3xf32, #tpu.memory_space<vmem>>, vector<1x1x8x3xf32>
    %153 = vector.shape_cast %152 : vector<1x1x8x3xf32> to vector<8x3xf32>
    %154 = vector.shape_cast %151 : vector<8x3xf32> to vector<1x1x8x3xf32>
    tpu.vector_store %arg4[%c0_89, %c3_90, %c0_91, %c0_92], %154 {strides = array<i32>} : memref<1x16x8x3xf32, #tpu.memory_space<vmem>>, vector<1x1x8x3xf32>,
    %cst_93 = arith.constant 7.500000e-01 : f32
    %155 = vector.broadcast %cst_93 : f32 to vector<8x3xf32>
    %156 = arith.mulf %155, %121 : vector<8x3xf32>
    %157 = vector.extract_strided_slice %121 {offsets = [1, 0], sizes = [7, 3], strides = [1, 1]} : vector<8x3xf32> to vector<7x3xf32>
    %158 = vector.extract_strided_slice %121 {offsets = [7, 0], sizes = [1, 3], strides = [1, 1]} : vector<8x3xf32> to vector<1x3xf32>
    %159 = tpu.concatenate %157, %158 in 0 : vector<7x3xf32>, vector<1x3xf32> -> vector<8x3xf32>
    %cst_94 = arith.constant 2.500000e-01 : f32
    %160 = vector.broadcast %cst_94 : f32 to vector<8x3xf32>
    %161 = arith.mulf %160, %159 : vector<8x3xf32>
    %162 = arith.addf %156, %161 : vector<8x3xf32>
    %c0_95 = arith.constant 0 : index
    %c3_96 = arith.constant 3 : index
    %c0_97 = arith.constant 0 : index
    %c0_98 = arith.constant 0 : index
    %163 = vector.load %arg5[%c0_95, %c3_96, %c0_97, %c0_98] : memref<1x16x8x3xf32, #tpu.memory_space<vmem>>, vector<1x1x8x3xf32>
    %164 = vector.shape_cast %163 : vector<1x1x8x3xf32> to vector<8x3xf32>
    %165 = vector.shape_cast %162 : vector<8x3xf32> to vector<1x1x8x3xf32>
    tpu.vector_store %arg5[%c0_95, %c3_96, %c0_97, %c0_98], %165 {strides = array<i32>} : memref<1x16x8x3xf32, #tpu.memory_space<vmem>>, vector<1x1x8x3xf32>,
    %cst_99 = arith.constant 2.500000e-01 : f32
    %166 = vector.broadcast %cst_99 : f32 to vector<8x3xf32>
    %167 = arith.mulf %166, %15 : vector<8x3xf32>
    %cst_100 = arith.constant 7.500000e-01 : f32
    %168 = vector.broadcast %cst_100 : f32 to vector<8x3xf32>
    %169 = arith.mulf %168, %22 : vector<8x3xf32>
    %170 = arith.addf %167, %169 : vector<8x3xf32>
    %cst_101 = arith.constant 7.500000e-01 : f32
    %171 = vector.broadcast %cst_101 : f32 to vector<8x3xf32>
    %172 = arith.mulf %171, %22 : vector<8x3xf32>
    %cst_102 = arith.constant 2.500000e-01 : f32
    %173 = vector.broadcast %cst_102 : f32 to vector<8x3xf32>
    %174 = arith.mulf %173, %29 : vector<8x3xf32>
    %175 = arith.addf %172, %174 : vector<8x3xf32>
    %cst_103 = arith.constant 7.500000e-01 : f32
    %176 = vector.broadcast %cst_103 : f32 to vector<8x3xf32>
    %177 = arith.mulf %176, %170 : vector<8x3xf32>
    %178 = vector.extract_strided_slice %170 {offsets = [0, 0], sizes = [1, 3], strides = [1, 1]} : vector<8x3xf32> to vector<1x3xf32>
    %179 = vector.extract_strided_slice %170 {offsets = [0, 0], sizes = [7, 3], strides = [1, 1]} : vector<8x3xf32> to vector<7x3xf32>
    %180 = tpu.concatenate %178, %179 in 0 : vector<1x3xf32>, vector<7x3xf32> -> vector<8x3xf32>
    %cst_104 = arith.constant 2.500000e-01 : f32
    %181 = vector.broadcast %cst_104 : f32 to vector<8x3xf32>
    %182 = arith.mulf %181, %180 : vector<8x3xf32>
    %183 = arith.addf %177, %182 : vector<8x3xf32>
    %c0_105 = arith.constant 0 : index
    %c4_106 = arith.constant 4 : index
    %c0_107 = arith.constant 0 : index
    %c0_108 = arith.constant 0 : index
    %184 = vector.load %arg4[%c0_105, %c4_106, %c0_107, %c0_108] : memref<1x16x8x3xf32, #tpu.memory_space<vmem>>, vector<1x1x8x3xf32>
    %185 = vector.shape_cast %184 : vector<1x1x8x3xf32> to vector<8x3xf32>
    %186 = vector.shape_cast %183 : vector<8x3xf32> to vector<1x1x8x3xf32>
    tpu.vector_store %arg4[%c0_105, %c4_106, %c0_107, %c0_108], %186 {strides = array<i32>} : memref<1x16x8x3xf32, #tpu.memory_space<vmem>>, vector<1x1x8x3xf32>,
    %cst_109 = arith.constant 7.500000e-01 : f32
    %187 = vector.broadcast %cst_109 : f32 to vector<8x3xf32>
    %188 = arith.mulf %187, %170 : vector<8x3xf32>
    %189 = vector.extract_strided_slice %170 {offsets = [1, 0], sizes = [7, 3], strides = [1, 1]} : vector<8x3xf32> to vector<7x3xf32>
    %190 = vector.extract_strided_slice %170 {offsets = [7, 0], sizes = [1, 3], strides = [1, 1]} : vector<8x3xf32> to vector<1x3xf32>
    %191 = tpu.concatenate %189, %190 in 0 : vector<7x3xf32>, vector<1x3xf32> -> vector<8x3xf32>
    %cst_110 = arith.constant 2.500000e-01 : f32
    %192 = vector.broadcast %cst_110 : f32 to vector<8x3xf32>
    %193 = arith.mulf %192, %191 : vector<8x3xf32>
    %194 = arith.addf %188, %193 : vector<8x3xf32>
    %c0_111 = arith.constant 0 : index
    %c4_112 = arith.constant 4 : index
    %c0_113 = arith.constant 0 : index
    %c0_114 = arith.constant 0 : index
    %195 = vector.load %arg5[%c0_111, %c4_112, %c0_113, %c0_114] : memref<1x16x8x3xf32, #tpu.memory_space<vmem>>, vector<1x1x8x3xf32>
    %196 = vector.shape_cast %195 : vector<1x1x8x3xf32> to vector<8x3xf32>
    %197 = vector.shape_cast %194 : vector<8x3xf32> to vector<1x1x8x3xf32>
    tpu.vector_store %arg5[%c0_111, %c4_112, %c0_113, %c0_114], %197 {strides = array<i32>} : memref<1x16x8x3xf32, #tpu.memory_space<vmem>>, vector<1x1x8x3xf32>,
    %cst_115 = arith.constant 7.500000e-01 : f32
    %198 = vector.broadcast %cst_115 : f32 to vector<8x3xf32>
    %199 = arith.mulf %198, %175 : vector<8x3xf32>
    %200 = vector.extract_strided_slice %175 {offsets = [0, 0], sizes = [1, 3], strides = [1, 1]} : vector<8x3xf32> to vector<1x3xf32>
    %201 = vector.extract_strided_slice %175 {offsets = [0, 0], sizes = [7, 3], strides = [1, 1]} : vector<8x3xf32> to vector<7x3xf32>
    %202 = tpu.concatenate %200, %201 in 0 : vector<1x3xf32>, vector<7x3xf32> -> vector<8x3xf32>
    %cst_116 = arith.constant 2.500000e-01 : f32
    %203 = vector.broadcast %cst_116 : f32 to vector<8x3xf32>
    %204 = arith.mulf %203, %202 : vector<8x3xf32>
    %205 = arith.addf %199, %204 : vector<8x3xf32>
    %c0_117 = arith.constant 0 : index
    %c5_118 = arith.constant 5 : index
    %c0_119 = arith.constant 0 : index
    %c0_120 = arith.constant 0 : index
    %206 = vector.load %arg4[%c0_117, %c5_118, %c0_119, %c0_120] : memref<1x16x8x3xf32, #tpu.memory_space<vmem>>, vector<1x1x8x3xf32>
    %207 = vector.shape_cast %206 : vector<1x1x8x3xf32> to vector<8x3xf32>
    %208 = vector.shape_cast %205 : vector<8x3xf32> to vector<1x1x8x3xf32>
    tpu.vector_store %arg4[%c0_117, %c5_118, %c0_119, %c0_120], %208 {strides = array<i32>} : memref<1x16x8x3xf32, #tpu.memory_space<vmem>>, vector<1x1x8x3xf32>,
    %cst_121 = arith.constant 7.500000e-01 : f32
    %209 = vector.broadcast %cst_121 : f32 to vector<8x3xf32>
    %210 = arith.mulf %209, %175 : vector<8x3xf32>
    %211 = vector.extract_strided_slice %175 {offsets = [1, 0], sizes = [7, 3], strides = [1, 1]} : vector<8x3xf32> to vector<7x3xf32>
    %212 = vector.extract_strided_slice %175 {offsets = [7, 0], sizes = [1, 3], strides = [1, 1]} : vector<8x3xf32> to vector<1x3xf32>
    %213 = tpu.concatenate %211, %212 in 0 : vector<7x3xf32>, vector<1x3xf32> -> vector<8x3xf32>
    %cst_122 = arith.constant 2.500000e-01 : f32
    %214 = vector.broadcast %cst_122 : f32 to vector<8x3xf32>
    %215 = arith.mulf %214, %213 : vector<8x3xf32>
    %216 = arith.addf %210, %215 : vector<8x3xf32>
    %c0_123 = arith.constant 0 : index
    %c5_124 = arith.constant 5 : index
    %c0_125 = arith.constant 0 : index
    %c0_126 = arith.constant 0 : index
    %217 = vector.load %arg5[%c0_123, %c5_124, %c0_125, %c0_126] : memref<1x16x8x3xf32, #tpu.memory_space<vmem>>, vector<1x1x8x3xf32>
    %218 = vector.shape_cast %217 : vector<1x1x8x3xf32> to vector<8x3xf32>
    %219 = vector.shape_cast %216 : vector<8x3xf32> to vector<1x1x8x3xf32>
    tpu.vector_store %arg5[%c0_123, %c5_124, %c0_125, %c0_126], %219 {strides = array<i32>} : memref<1x16x8x3xf32, #tpu.memory_space<vmem>>, vector<1x1x8x3xf32>,
    %cst_127 = arith.constant 2.500000e-01 : f32
    %220 = vector.broadcast %cst_127 : f32 to vector<8x3xf32>
    %221 = arith.mulf %220, %22 : vector<8x3xf32>
    %cst_128 = arith.constant 7.500000e-01 : f32
    %222 = vector.broadcast %cst_128 : f32 to vector<8x3xf32>
    %223 = arith.mulf %222, %29 : vector<8x3xf32>
    %224 = arith.addf %221, %223 : vector<8x3xf32>
    %cst_129 = arith.constant 7.500000e-01 : f32
    %225 = vector.broadcast %cst_129 : f32 to vector<8x3xf32>
    %226 = arith.mulf %225, %29 : vector<8x3xf32>
    %cst_130 = arith.constant 2.500000e-01 : f32
    %227 = vector.broadcast %cst_130 : f32 to vector<8x3xf32>
    %228 = arith.mulf %227, %36 : vector<8x3xf32>
    %229 = arith.addf %226, %228 : vector<8x3xf32>
    %cst_131 = arith.constant 7.500000e-01 : f32
    %230 = vector.broadcast %cst_131 : f32 to vector<8x3xf32>
    %231 = arith.mulf %230, %224 : vector<8x3xf32>
    %232 = vector.extract_strided_slice %224 {offsets = [0, 0], sizes = [1, 3], strides = [1, 1]} : vector<8x3xf32> to vector<1x3xf32>
    %233 = vector.extract_strided_slice %224 {offsets = [0, 0], sizes = [7, 3], strides = [1, 1]} : vector<8x3xf32> to vector<7x3xf32>
    %234 = tpu.concatenate %232, %233 in 0 : vector<1x3xf32>, vector<7x3xf32> -> vector<8x3xf32>
    %cst_132 = arith.constant 2.500000e-01 : f32
    %235 = vector.broadcast %cst_132 : f32 to vector<8x3xf32>
    %236 = arith.mulf %235, %234 : vector<8x3xf32>
    %237 = arith.addf %231, %236 : vector<8x3xf32>
    %c0_133 = arith.constant 0 : index
    %c6_134 = arith.constant 6 : index
    %c0_135 = arith.constant 0 : index
    %c0_136 = arith.constant 0 : index
    %238 = vector.load %arg4[%c0_133, %c6_134, %c0_135, %c0_136] : memref<1x16x8x3xf32, #tpu.memory_space<vmem>>, vector<1x1x8x3xf32>
    %239 = vector.shape_cast %238 : vector<1x1x8x3xf32> to vector<8x3xf32>
    %240 = vector.shape_cast %237 : vector<8x3xf32> to vector<1x1x8x3xf32>
    tpu.vector_store %arg4[%c0_133, %c6_134, %c0_135, %c0_136], %240 {strides = array<i32>} : memref<1x16x8x3xf32, #tpu.memory_space<vmem>>, vector<1x1x8x3xf32>,
    %cst_137 = arith.constant 7.500000e-01 : f32
    %241 = vector.broadcast %cst_137 : f32 to vector<8x3xf32>
    %242 = arith.mulf %241, %224 : vector<8x3xf32>
    %243 = vector.extract_strided_slice %224 {offsets = [1, 0], sizes = [7, 3], strides = [1, 1]} : vector<8x3xf32> to vector<7x3xf32>
    %244 = vector.extract_strided_slice %224 {offsets = [7, 0], sizes = [1, 3], strides = [1, 1]} : vector<8x3xf32> to vector<1x3xf32>
    %245 = tpu.concatenate %243, %244 in 0 : vector<7x3xf32>, vector<1x3xf32> -> vector<8x3xf32>
    %cst_138 = arith.constant 2.500000e-01 : f32
    %246 = vector.broadcast %cst_138 : f32 to vector<8x3xf32>
    %247 = arith.mulf %246, %245 : vector<8x3xf32>
    %248 = arith.addf %242, %247 : vector<8x3xf32>
    %c0_139 = arith.constant 0 : index
    %c6_140 = arith.constant 6 : index
    %c0_141 = arith.constant 0 : index
    %c0_142 = arith.constant 0 : index
    %249 = vector.load %arg5[%c0_139, %c6_140, %c0_141, %c0_142] : memref<1x16x8x3xf32, #tpu.memory_space<vmem>>, vector<1x1x8x3xf32>
    %250 = vector.shape_cast %249 : vector<1x1x8x3xf32> to vector<8x3xf32>
    %251 = vector.shape_cast %248 : vector<8x3xf32> to vector<1x1x8x3xf32>
    tpu.vector_store %arg5[%c0_139, %c6_140, %c0_141, %c0_142], %251 {strides = array<i32>} : memref<1x16x8x3xf32, #tpu.memory_space<vmem>>, vector<1x1x8x3xf32>,
    %cst_143 = arith.constant 7.500000e-01 : f32
    %252 = vector.broadcast %cst_143 : f32 to vector<8x3xf32>
    %253 = arith.mulf %252, %229 : vector<8x3xf32>
    %254 = vector.extract_strided_slice %229 {offsets = [0, 0], sizes = [1, 3], strides = [1, 1]} : vector<8x3xf32> to vector<1x3xf32>
    %255 = vector.extract_strided_slice %229 {offsets = [0, 0], sizes = [7, 3], strides = [1, 1]} : vector<8x3xf32> to vector<7x3xf32>
    %256 = tpu.concatenate %254, %255 in 0 : vector<1x3xf32>, vector<7x3xf32> -> vector<8x3xf32>
    %cst_144 = arith.constant 2.500000e-01 : f32
    %257 = vector.broadcast %cst_144 : f32 to vector<8x3xf32>
    %258 = arith.mulf %257, %256 : vector<8x3xf32>
    %259 = arith.addf %253, %258 : vector<8x3xf32>
    %c0_145 = arith.constant 0 : index
    %c7_146 = arith.constant 7 : index
    %c0_147 = arith.constant 0 : index
    %c0_148 = arith.constant 0 : index
    %260 = vector.load %arg4[%c0_145, %c7_146, %c0_147, %c0_148] : memref<1x16x8x3xf32, #tpu.memory_space<vmem>>, vector<1x1x8x3xf32>
    %261 = vector.shape_cast %260 : vector<1x1x8x3xf32> to vector<8x3xf32>
    %262 = vector.shape_cast %259 : vector<8x3xf32> to vector<1x1x8x3xf32>
    tpu.vector_store %arg4[%c0_145, %c7_146, %c0_147, %c0_148], %262 {strides = array<i32>} : memref<1x16x8x3xf32, #tpu.memory_space<vmem>>, vector<1x1x8x3xf32>,
    %cst_149 = arith.constant 7.500000e-01 : f32
    %263 = vector.broadcast %cst_149 : f32 to vector<8x3xf32>
    %264 = arith.mulf %263, %229 : vector<8x3xf32>
    %265 = vector.extract_strided_slice %229 {offsets = [1, 0], sizes = [7, 3], strides = [1, 1]} : vector<8x3xf32> to vector<7x3xf32>
    %266 = vector.extract_strided_slice %229 {offsets = [7, 0], sizes = [1, 3], strides = [1, 1]} : vector<8x3xf32> to vector<1x3xf32>
    %267 = tpu.concatenate %265, %266 in 0 : vector<7x3xf32>, vector<1x3xf32> -> vector<8x3xf32>
    %cst_150 = arith.constant 2.500000e-01 : f32
    %268 = vector.broadcast %cst_150 : f32 to vector<8x3xf32>
    %269 = arith.mulf %268, %267 : vector<8x3xf32>
    %270 = arith.addf %264, %269 : vector<8x3xf32>
    %c0_151 = arith.constant 0 : index
    %c7_152 = arith.constant 7 : index
    %c0_153 = arith.constant 0 : index
    %c0_154 = arith.constant 0 : index
    %271 = vector.load %arg5[%c0_151, %c7_152, %c0_153, %c0_154] : memref<1x16x8x3xf32, #tpu.memory_space<vmem>>, vector<1x1x8x3xf32>
    %272 = vector.shape_cast %271 : vector<1x1x8x3xf32> to vector<8x3xf32>
    %273 = vector.shape_cast %270 : vector<8x3xf32> to vector<1x1x8x3xf32>
    tpu.vector_store %arg5[%c0_151, %c7_152, %c0_153, %c0_154], %273 {strides = array<i32>} : memref<1x16x8x3xf32, #tpu.memory_space<vmem>>, vector<1x1x8x3xf32>,
    %cst_155 = arith.constant 2.500000e-01 : f32
    %274 = vector.broadcast %cst_155 : f32 to vector<8x3xf32>
    %275 = arith.mulf %274, %29 : vector<8x3xf32>
    %cst_156 = arith.constant 7.500000e-01 : f32
    %276 = vector.broadcast %cst_156 : f32 to vector<8x3xf32>
    %277 = arith.mulf %276, %36 : vector<8x3xf32>
    %278 = arith.addf %275, %277 : vector<8x3xf32>
    %cst_157 = arith.constant 7.500000e-01 : f32
    %279 = vector.broadcast %cst_157 : f32 to vector<8x3xf32>
    %280 = arith.mulf %279, %36 : vector<8x3xf32>
    %cst_158 = arith.constant 2.500000e-01 : f32
    %281 = vector.broadcast %cst_158 : f32 to vector<8x3xf32>
    %282 = arith.mulf %281, %43 : vector<8x3xf32>
    %283 = arith.addf %280, %282 : vector<8x3xf32>
    %cst_159 = arith.constant 7.500000e-01 : f32
    %284 = vector.broadcast %cst_159 : f32 to vector<8x3xf32>
    %285 = arith.mulf %284, %278 : vector<8x3xf32>
    %286 = vector.extract_strided_slice %278 {offsets = [0, 0], sizes = [1, 3], strides = [1, 1]} : vector<8x3xf32> to vector<1x3xf32>
    %287 = vector.extract_strided_slice %278 {offsets = [0, 0], sizes = [7, 3], strides = [1, 1]} : vector<8x3xf32> to vector<7x3xf32>
    %288 = tpu.concatenate %286, %287 in 0 : vector<1x3xf32>, vector<7x3xf32> -> vector<8x3xf32>
    %cst_160 = arith.constant 2.500000e-01 : f32
    %289 = vector.broadcast %cst_160 : f32 to vector<8x3xf32>
    %290 = arith.mulf %289, %288 : vector<8x3xf32>
    %291 = arith.addf %285, %290 : vector<8x3xf32>
    %c0_161 = arith.constant 0 : index
    %c8 = arith.constant 8 : index
    %c0_162 = arith.constant 0 : index
    %c0_163 = arith.constant 0 : index
    %292 = vector.load %arg4[%c0_161, %c8, %c0_162, %c0_163] : memref<1x16x8x3xf32, #tpu.memory_space<vmem>>, vector<1x1x8x3xf32>
    %293 = vector.shape_cast %292 : vector<1x1x8x3xf32> to vector<8x3xf32>
    %294 = vector.shape_cast %291 : vector<8x3xf32> to vector<1x1x8x3xf32>
    tpu.vector_store %arg4[%c0_161, %c8, %c0_162, %c0_163], %294 {strides = array<i32>} : memref<1x16x8x3xf32, #tpu.memory_space<vmem>>, vector<1x1x8x3xf32>,
    %cst_164 = arith.constant 7.500000e-01 : f32
    %295 = vector.broadcast %cst_164 : f32 to vector<8x3xf32>
    %296 = arith.mulf %295, %278 : vector<8x3xf32>
    %297 = vector.extract_strided_slice %278 {offsets = [1, 0], sizes = [7, 3], strides = [1, 1]} : vector<8x3xf32> to vector<7x3xf32>
    %298 = vector.extract_strided_slice %278 {offsets = [7, 0], sizes = [1, 3], strides = [1, 1]} : vector<8x3xf32> to vector<1x3xf32>
    %299 = tpu.concatenate %297, %298 in 0 : vector<7x3xf32>, vector<1x3xf32> -> vector<8x3xf32>
    %cst_165 = arith.constant 2.500000e-01 : f32
    %300 = vector.broadcast %cst_165 : f32 to vector<8x3xf32>
    %301 = arith.mulf %300, %299 : vector<8x3xf32>
    %302 = arith.addf %296, %301 : vector<8x3xf32>
    %c0_166 = arith.constant 0 : index
    %c8_167 = arith.constant 8 : index
    %c0_168 = arith.constant 0 : index
    %c0_169 = arith.constant 0 : index
    %303 = vector.load %arg5[%c0_166, %c8_167, %c0_168, %c0_169] : memref<1x16x8x3xf32, #tpu.memory_space<vmem>>, vector<1x1x8x3xf32>
    %304 = vector.shape_cast %303 : vector<1x1x8x3xf32> to vector<8x3xf32>
    %305 = vector.shape_cast %302 : vector<8x3xf32> to vector<1x1x8x3xf32>
    tpu.vector_store %arg5[%c0_166, %c8_167, %c0_168, %c0_169], %305 {strides = array<i32>} : memref<1x16x8x3xf32, #tpu.memory_space<vmem>>, vector<1x1x8x3xf32>,
    %cst_170 = arith.constant 7.500000e-01 : f32
    %306 = vector.broadcast %cst_170 : f32 to vector<8x3xf32>
    %307 = arith.mulf %306, %283 : vector<8x3xf32>
    %308 = vector.extract_strided_slice %283 {offsets = [0, 0], sizes = [1, 3], strides = [1, 1]} : vector<8x3xf32> to vector<1x3xf32>
    %309 = vector.extract_strided_slice %283 {offsets = [0, 0], sizes = [7, 3], strides = [1, 1]} : vector<8x3xf32> to vector<7x3xf32>
    %310 = tpu.concatenate %308, %309 in 0 : vector<1x3xf32>, vector<7x3xf32> -> vector<8x3xf32>
    %cst_171 = arith.constant 2.500000e-01 : f32
    %311 = vector.broadcast %cst_171 : f32 to vector<8x3xf32>
    %312 = arith.mulf %311, %310 : vector<8x3xf32>
    %313 = arith.addf %307, %312 : vector<8x3xf32>
    %c0_172 = arith.constant 0 : index
    %c9 = arith.constant 9 : index
    %c0_173 = arith.constant 0 : index
    %c0_174 = arith.constant 0 : index
    %314 = vector.load %arg4[%c0_172, %c9, %c0_173, %c0_174] : memref<1x16x8x3xf32, #tpu.memory_space<vmem>>, vector<1x1x8x3xf32>
    %315 = vector.shape_cast %314 : vector<1x1x8x3xf32> to vector<8x3xf32>
    %316 = vector.shape_cast %313 : vector<8x3xf32> to vector<1x1x8x3xf32>
    tpu.vector_store %arg4[%c0_172, %c9, %c0_173, %c0_174], %316 {strides = array<i32>} : memref<1x16x8x3xf32, #tpu.memory_space<vmem>>, vector<1x1x8x3xf32>,
    %cst_175 = arith.constant 7.500000e-01 : f32
    %317 = vector.broadcast %cst_175 : f32 to vector<8x3xf32>
    %318 = arith.mulf %317, %283 : vector<8x3xf32>
    %319 = vector.extract_strided_slice %283 {offsets = [1, 0], sizes = [7, 3], strides = [1, 1]} : vector<8x3xf32> to vector<7x3xf32>
    %320 = vector.extract_strided_slice %283 {offsets = [7, 0], sizes = [1, 3], strides = [1, 1]} : vector<8x3xf32> to vector<1x3xf32>
    %321 = tpu.concatenate %319, %320 in 0 : vector<7x3xf32>, vector<1x3xf32> -> vector<8x3xf32>
    %cst_176 = arith.constant 2.500000e-01 : f32
    %322 = vector.broadcast %cst_176 : f32 to vector<8x3xf32>
    %323 = arith.mulf %322, %321 : vector<8x3xf32>
    %324 = arith.addf %318, %323 : vector<8x3xf32>
    %c0_177 = arith.constant 0 : index
    %c9_178 = arith.constant 9 : index
    %c0_179 = arith.constant 0 : index
    %c0_180 = arith.constant 0 : index
    %325 = vector.load %arg5[%c0_177, %c9_178, %c0_179, %c0_180] : memref<1x16x8x3xf32, #tpu.memory_space<vmem>>, vector<1x1x8x3xf32>
    %326 = vector.shape_cast %325 : vector<1x1x8x3xf32> to vector<8x3xf32>
    %327 = vector.shape_cast %324 : vector<8x3xf32> to vector<1x1x8x3xf32>
    tpu.vector_store %arg5[%c0_177, %c9_178, %c0_179, %c0_180], %327 {strides = array<i32>} : memref<1x16x8x3xf32, #tpu.memory_space<vmem>>, vector<1x1x8x3xf32>,
    %cst_181 = arith.constant 2.500000e-01 : f32
    %328 = vector.broadcast %cst_181 : f32 to vector<8x3xf32>
    %329 = arith.mulf %328, %36 : vector<8x3xf32>
    %cst_182 = arith.constant 7.500000e-01 : f32
    %330 = vector.broadcast %cst_182 : f32 to vector<8x3xf32>
    %331 = arith.mulf %330, %43 : vector<8x3xf32>
    %332 = arith.addf %329, %331 : vector<8x3xf32>
    %cst_183 = arith.constant 7.500000e-01 : f32
    %333 = vector.broadcast %cst_183 : f32 to vector<8x3xf32>
    %334 = arith.mulf %333, %43 : vector<8x3xf32>
    %cst_184 = arith.constant 2.500000e-01 : f32
    %335 = vector.broadcast %cst_184 : f32 to vector<8x3xf32>
    %336 = arith.mulf %335, %50 : vector<8x3xf32>
    %337 = arith.addf %334, %336 : vector<8x3xf32>
    %cst_185 = arith.constant 7.500000e-01 : f32
    %338 = vector.broadcast %cst_185 : f32 to vector<8x3xf32>
    %339 = arith.mulf %338, %332 : vector<8x3xf32>
    %340 = vector.extract_strided_slice %332 {offsets = [0, 0], sizes = [1, 3], strides = [1, 1]} : vector<8x3xf32> to vector<1x3xf32>
    %341 = vector.extract_strided_slice %332 {offsets = [0, 0], sizes = [7, 3], strides = [1, 1]} : vector<8x3xf32> to vector<7x3xf32>
    %342 = tpu.concatenate %340, %341 in 0 : vector<1x3xf32>, vector<7x3xf32> -> vector<8x3xf32>
    %cst_186 = arith.constant 2.500000e-01 : f32
    %343 = vector.broadcast %cst_186 : f32 to vector<8x3xf32>
    %344 = arith.mulf %343, %342 : vector<8x3xf32>
    %345 = arith.addf %339, %344 : vector<8x3xf32>
    %c0_187 = arith.constant 0 : index
    %c10 = arith.constant 10 : index
    %c0_188 = arith.constant 0 : index
    %c0_189 = arith.constant 0 : index
    %346 = vector.load %arg4[%c0_187, %c10, %c0_188, %c0_189] : memref<1x16x8x3xf32, #tpu.memory_space<vmem>>, vector<1x1x8x3xf32>
    %347 = vector.shape_cast %346 : vector<1x1x8x3xf32> to vector<8x3xf32>
    %348 = vector.shape_cast %345 : vector<8x3xf32> to vector<1x1x8x3xf32>
    tpu.vector_store %arg4[%c0_187, %c10, %c0_188, %c0_189], %348 {strides = array<i32>} : memref<1x16x8x3xf32, #tpu.memory_space<vmem>>, vector<1x1x8x3xf32>,
    %cst_190 = arith.constant 7.500000e-01 : f32
    %349 = vector.broadcast %cst_190 : f32 to vector<8x3xf32>
    %350 = arith.mulf %349, %332 : vector<8x3xf32>
    %351 = vector.extract_strided_slice %332 {offsets = [1, 0], sizes = [7, 3], strides = [1, 1]} : vector<8x3xf32> to vector<7x3xf32>
    %352 = vector.extract_strided_slice %332 {offsets = [7, 0], sizes = [1, 3], strides = [1, 1]} : vector<8x3xf32> to vector<1x3xf32>
    %353 = tpu.concatenate %351, %352 in 0 : vector<7x3xf32>, vector<1x3xf32> -> vector<8x3xf32>
    %cst_191 = arith.constant 2.500000e-01 : f32
    %354 = vector.broadcast %cst_191 : f32 to vector<8x3xf32>
    %355 = arith.mulf %354, %353 : vector<8x3xf32>
    %356 = arith.addf %350, %355 : vector<8x3xf32>
    %c0_192 = arith.constant 0 : index
    %c10_193 = arith.constant 10 : index
    %c0_194 = arith.constant 0 : index
    %c0_195 = arith.constant 0 : index
    %357 = vector.load %arg5[%c0_192, %c10_193, %c0_194, %c0_195] : memref<1x16x8x3xf32, #tpu.memory_space<vmem>>, vector<1x1x8x3xf32>
    %358 = vector.shape_cast %357 : vector<1x1x8x3xf32> to vector<8x3xf32>
    %359 = vector.shape_cast %356 : vector<8x3xf32> to vector<1x1x8x3xf32>
    tpu.vector_store %arg5[%c0_192, %c10_193, %c0_194, %c0_195], %359 {strides = array<i32>} : memref<1x16x8x3xf32, #tpu.memory_space<vmem>>, vector<1x1x8x3xf32>,
    %cst_196 = arith.constant 7.500000e-01 : f32
    %360 = vector.broadcast %cst_196 : f32 to vector<8x3xf32>
    %361 = arith.mulf %360, %337 : vector<8x3xf32>
    %362 = vector.extract_strided_slice %337 {offsets = [0, 0], sizes = [1, 3], strides = [1, 1]} : vector<8x3xf32> to vector<1x3xf32>
    %363 = vector.extract_strided_slice %337 {offsets = [0, 0], sizes = [7, 3], strides = [1, 1]} : vector<8x3xf32> to vector<7x3xf32>
    %364 = tpu.concatenate %362, %363 in 0 : vector<1x3xf32>, vector<7x3xf32> -> vector<8x3xf32>
    %cst_197 = arith.constant 2.500000e-01 : f32
    %365 = vector.broadcast %cst_197 : f32 to vector<8x3xf32>
    %366 = arith.mulf %365, %364 : vector<8x3xf32>
    %367 = arith.addf %361, %366 : vector<8x3xf32>
    %c0_198 = arith.constant 0 : index
    %c11 = arith.constant 11 : index
    %c0_199 = arith.constant 0 : index
    %c0_200 = arith.constant 0 : index
    %368 = vector.load %arg4[%c0_198, %c11, %c0_199, %c0_200] : memref<1x16x8x3xf32, #tpu.memory_space<vmem>>, vector<1x1x8x3xf32>
    %369 = vector.shape_cast %368 : vector<1x1x8x3xf32> to vector<8x3xf32>
    %370 = vector.shape_cast %367 : vector<8x3xf32> to vector<1x1x8x3xf32>
    tpu.vector_store %arg4[%c0_198, %c11, %c0_199, %c0_200], %370 {strides = array<i32>} : memref<1x16x8x3xf32, #tpu.memory_space<vmem>>, vector<1x1x8x3xf32>,
    %cst_201 = arith.constant 7.500000e-01 : f32
    %371 = vector.broadcast %cst_201 : f32 to vector<8x3xf32>
    %372 = arith.mulf %371, %337 : vector<8x3xf32>
    %373 = vector.extract_strided_slice %337 {offsets = [1, 0], sizes = [7, 3], strides = [1, 1]} : vector<8x3xf32> to vector<7x3xf32>
    %374 = vector.extract_strided_slice %337 {offsets = [7, 0], sizes = [1, 3], strides = [1, 1]} : vector<8x3xf32> to vector<1x3xf32>
    %375 = tpu.concatenate %373, %374 in 0 : vector<7x3xf32>, vector<1x3xf32> -> vector<8x3xf32>
    %cst_202 = arith.constant 2.500000e-01 : f32
    %376 = vector.broadcast %cst_202 : f32 to vector<8x3xf32>
    %377 = arith.mulf %376, %375 : vector<8x3xf32>
    %378 = arith.addf %372, %377 : vector<8x3xf32>
    %c0_203 = arith.constant 0 : index
    %c11_204 = arith.constant 11 : index
    %c0_205 = arith.constant 0 : index
    %c0_206 = arith.constant 0 : index
    %379 = vector.load %arg5[%c0_203, %c11_204, %c0_205, %c0_206] : memref<1x16x8x3xf32, #tpu.memory_space<vmem>>, vector<1x1x8x3xf32>
    %380 = vector.shape_cast %379 : vector<1x1x8x3xf32> to vector<8x3xf32>
    %381 = vector.shape_cast %378 : vector<8x3xf32> to vector<1x1x8x3xf32>
    tpu.vector_store %arg5[%c0_203, %c11_204, %c0_205, %c0_206], %381 {strides = array<i32>} : memref<1x16x8x3xf32, #tpu.memory_space<vmem>>, vector<1x1x8x3xf32>,
    %cst_207 = arith.constant 2.500000e-01 : f32
    %382 = vector.broadcast %cst_207 : f32 to vector<8x3xf32>
    %383 = arith.mulf %382, %43 : vector<8x3xf32>
    %cst_208 = arith.constant 7.500000e-01 : f32
    %384 = vector.broadcast %cst_208 : f32 to vector<8x3xf32>
    %385 = arith.mulf %384, %50 : vector<8x3xf32>
    %386 = arith.addf %383, %385 : vector<8x3xf32>
    %cst_209 = arith.constant 7.500000e-01 : f32
    %387 = vector.broadcast %cst_209 : f32 to vector<8x3xf32>
    %388 = arith.mulf %387, %50 : vector<8x3xf32>
    %cst_210 = arith.constant 2.500000e-01 : f32
    %389 = vector.broadcast %cst_210 : f32 to vector<8x3xf32>
    %390 = arith.mulf %389, %57 : vector<8x3xf32>
    %391 = arith.addf %388, %390 : vector<8x3xf32>
    %cst_211 = arith.constant 7.500000e-01 : f32
    %392 = vector.broadcast %cst_211 : f32 to vector<8x3xf32>
    %393 = arith.mulf %392, %386 : vector<8x3xf32>
    %394 = vector.extract_strided_slice %386 {offsets = [0, 0], sizes = [1, 3], strides = [1, 1]} : vector<8x3xf32> to vector<1x3xf32>
    %395 = vector.extract_strided_slice %386 {offsets = [0, 0], sizes = [7, 3], strides = [1, 1]} : vector<8x3xf32> to vector<7x3xf32>
    %396 = tpu.concatenate %394, %395 in 0 : vector<1x3xf32>, vector<7x3xf32> -> vector<8x3xf32>
    %cst_212 = arith.constant 2.500000e-01 : f32
    %397 = vector.broadcast %cst_212 : f32 to vector<8x3xf32>
    %398 = arith.mulf %397, %396 : vector<8x3xf32>
    %399 = arith.addf %393, %398 : vector<8x3xf32>
    %c0_213 = arith.constant 0 : index
    %c12 = arith.constant 12 : index
    %c0_214 = arith.constant 0 : index
    %c0_215 = arith.constant 0 : index
    %400 = vector.load %arg4[%c0_213, %c12, %c0_214, %c0_215] : memref<1x16x8x3xf32, #tpu.memory_space<vmem>>, vector<1x1x8x3xf32>
    %401 = vector.shape_cast %400 : vector<1x1x8x3xf32> to vector<8x3xf32>
    %402 = vector.shape_cast %399 : vector<8x3xf32> to vector<1x1x8x3xf32>
    tpu.vector_store %arg4[%c0_213, %c12, %c0_214, %c0_215], %402 {strides = array<i32>} : memref<1x16x8x3xf32, #tpu.memory_space<vmem>>, vector<1x1x8x3xf32>,
    %cst_216 = arith.constant 7.500000e-01 : f32
    %403 = vector.broadcast %cst_216 : f32 to vector<8x3xf32>
    %404 = arith.mulf %403, %386 : vector<8x3xf32>
    %405 = vector.extract_strided_slice %386 {offsets = [1, 0], sizes = [7, 3], strides = [1, 1]} : vector<8x3xf32> to vector<7x3xf32>
    %406 = vector.extract_strided_slice %386 {offsets = [7, 0], sizes = [1, 3], strides = [1, 1]} : vector<8x3xf32> to vector<1x3xf32>
    %407 = tpu.concatenate %405, %406 in 0 : vector<7x3xf32>, vector<1x3xf32> -> vector<8x3xf32>
    %cst_217 = arith.constant 2.500000e-01 : f32
    %408 = vector.broadcast %cst_217 : f32 to vector<8x3xf32>
    %409 = arith.mulf %408, %407 : vector<8x3xf32>
    %410 = arith.addf %404, %409 : vector<8x3xf32>
    %c0_218 = arith.constant 0 : index
    %c12_219 = arith.constant 12 : index
    %c0_220 = arith.constant 0 : index
    %c0_221 = arith.constant 0 : index
    %411 = vector.load %arg5[%c0_218, %c12_219, %c0_220, %c0_221] : memref<1x16x8x3xf32, #tpu.memory_space<vmem>>, vector<1x1x8x3xf32>
    %412 = vector.shape_cast %411 : vector<1x1x8x3xf32> to vector<8x3xf32>
    %413 = vector.shape_cast %410 : vector<8x3xf32> to vector<1x1x8x3xf32>
    tpu.vector_store %arg5[%c0_218, %c12_219, %c0_220, %c0_221], %413 {strides = array<i32>} : memref<1x16x8x3xf32, #tpu.memory_space<vmem>>, vector<1x1x8x3xf32>,
    %cst_222 = arith.constant 7.500000e-01 : f32
    %414 = vector.broadcast %cst_222 : f32 to vector<8x3xf32>
    %415 = arith.mulf %414, %391 : vector<8x3xf32>
    %416 = vector.extract_strided_slice %391 {offsets = [0, 0], sizes = [1, 3], strides = [1, 1]} : vector<8x3xf32> to vector<1x3xf32>
    %417 = vector.extract_strided_slice %391 {offsets = [0, 0], sizes = [7, 3], strides = [1, 1]} : vector<8x3xf32> to vector<7x3xf32>
    %418 = tpu.concatenate %416, %417 in 0 : vector<1x3xf32>, vector<7x3xf32> -> vector<8x3xf32>
    %cst_223 = arith.constant 2.500000e-01 : f32
    %419 = vector.broadcast %cst_223 : f32 to vector<8x3xf32>
    %420 = arith.mulf %419, %418 : vector<8x3xf32>
    %421 = arith.addf %415, %420 : vector<8x3xf32>
    %c0_224 = arith.constant 0 : index
    %c13 = arith.constant 13 : index
    %c0_225 = arith.constant 0 : index
    %c0_226 = arith.constant 0 : index
    %422 = vector.load %arg4[%c0_224, %c13, %c0_225, %c0_226] : memref<1x16x8x3xf32, #tpu.memory_space<vmem>>, vector<1x1x8x3xf32>
    %423 = vector.shape_cast %422 : vector<1x1x8x3xf32> to vector<8x3xf32>
    %424 = vector.shape_cast %421 : vector<8x3xf32> to vector<1x1x8x3xf32>
    tpu.vector_store %arg4[%c0_224, %c13, %c0_225, %c0_226], %424 {strides = array<i32>} : memref<1x16x8x3xf32, #tpu.memory_space<vmem>>, vector<1x1x8x3xf32>,
    %cst_227 = arith.constant 7.500000e-01 : f32
    %425 = vector.broadcast %cst_227 : f32 to vector<8x3xf32>
    %426 = arith.mulf %425, %391 : vector<8x3xf32>
    %427 = vector.extract_strided_slice %391 {offsets = [1, 0], sizes = [7, 3], strides = [1, 1]} : vector<8x3xf32> to vector<7x3xf32>
    %428 = vector.extract_strided_slice %391 {offsets = [7, 0], sizes = [1, 3], strides = [1, 1]} : vector<8x3xf32> to vector<1x3xf32>
    %429 = tpu.concatenate %427, %428 in 0 : vector<7x3xf32>, vector<1x3xf32> -> vector<8x3xf32>
    %cst_228 = arith.constant 2.500000e-01 : f32
    %430 = vector.broadcast %cst_228 : f32 to vector<8x3xf32>
    %431 = arith.mulf %430, %429 : vector<8x3xf32>
    %432 = arith.addf %426, %431 : vector<8x3xf32>
    %c0_229 = arith.constant 0 : index
    %c13_230 = arith.constant 13 : index
    %c0_231 = arith.constant 0 : index
    %c0_232 = arith.constant 0 : index
    %433 = vector.load %arg5[%c0_229, %c13_230, %c0_231, %c0_232] : memref<1x16x8x3xf32, #tpu.memory_space<vmem>>, vector<1x1x8x3xf32>
    %434 = vector.shape_cast %433 : vector<1x1x8x3xf32> to vector<8x3xf32>
    %435 = vector.shape_cast %432 : vector<8x3xf32> to vector<1x1x8x3xf32>
    tpu.vector_store %arg5[%c0_229, %c13_230, %c0_231, %c0_232], %435 {strides = array<i32>} : memref<1x16x8x3xf32, #tpu.memory_space<vmem>>, vector<1x1x8x3xf32>,
    %cst_233 = arith.constant 2.500000e-01 : f32
    %436 = vector.broadcast %cst_233 : f32 to vector<8x3xf32>
    %437 = arith.mulf %436, %50 : vector<8x3xf32>
    %cst_234 = arith.constant 7.500000e-01 : f32
    %438 = vector.broadcast %cst_234 : f32 to vector<8x3xf32>
    %439 = arith.mulf %438, %57 : vector<8x3xf32>
    %440 = arith.addf %437, %439 : vector<8x3xf32>
    %cst_235 = arith.constant 7.500000e-01 : f32
    %441 = vector.broadcast %cst_235 : f32 to vector<8x3xf32>
    %442 = arith.mulf %441, %57 : vector<8x3xf32>
    %cst_236 = arith.constant 2.500000e-01 : f32
    %443 = vector.broadcast %cst_236 : f32 to vector<8x3xf32>
    %444 = arith.mulf %443, %57 : vector<8x3xf32>
    %445 = arith.addf %442, %444 : vector<8x3xf32>
    %cst_237 = arith.constant 7.500000e-01 : f32
    %446 = vector.broadcast %cst_237 : f32 to vector<8x3xf32>
    %447 = arith.mulf %446, %440 : vector<8x3xf32>
    %448 = vector.extract_strided_slice %440 {offsets = [0, 0], sizes = [1, 3], strides = [1, 1]} : vector<8x3xf32> to vector<1x3xf32>
    %449 = vector.extract_strided_slice %440 {offsets = [0, 0], sizes = [7, 3], strides = [1, 1]} : vector<8x3xf32> to vector<7x3xf32>
    %450 = tpu.concatenate %448, %449 in 0 : vector<1x3xf32>, vector<7x3xf32> -> vector<8x3xf32>
    %cst_238 = arith.constant 2.500000e-01 : f32
    %451 = vector.broadcast %cst_238 : f32 to vector<8x3xf32>
    %452 = arith.mulf %451, %450 : vector<8x3xf32>
    %453 = arith.addf %447, %452 : vector<8x3xf32>
    %c0_239 = arith.constant 0 : index
    %c14 = arith.constant 14 : index
    %c0_240 = arith.constant 0 : index
    %c0_241 = arith.constant 0 : index
    %454 = vector.load %arg4[%c0_239, %c14, %c0_240, %c0_241] : memref<1x16x8x3xf32, #tpu.memory_space<vmem>>, vector<1x1x8x3xf32>
    %455 = vector.shape_cast %454 : vector<1x1x8x3xf32> to vector<8x3xf32>
    %456 = vector.shape_cast %453 : vector<8x3xf32> to vector<1x1x8x3xf32>
    tpu.vector_store %arg4[%c0_239, %c14, %c0_240, %c0_241], %456 {strides = array<i32>} : memref<1x16x8x3xf32, #tpu.memory_space<vmem>>, vector<1x1x8x3xf32>,
    %cst_242 = arith.constant 7.500000e-01 : f32
    %457 = vector.broadcast %cst_242 : f32 to vector<8x3xf32>
    %458 = arith.mulf %457, %440 : vector<8x3xf32>
    %459 = vector.extract_strided_slice %440 {offsets = [1, 0], sizes = [7, 3], strides = [1, 1]} : vector<8x3xf32> to vector<7x3xf32>
    %460 = vector.extract_strided_slice %440 {offsets = [7, 0], sizes = [1, 3], strides = [1, 1]} : vector<8x3xf32> to vector<1x3xf32>
    %461 = tpu.concatenate %459, %460 in 0 : vector<7x3xf32>, vector<1x3xf32> -> vector<8x3xf32>
    %cst_243 = arith.constant 2.500000e-01 : f32
    %462 = vector.broadcast %cst_243 : f32 to vector<8x3xf32>
    %463 = arith.mulf %462, %461 : vector<8x3xf32>
    %464 = arith.addf %458, %463 : vector<8x3xf32>
    %c0_244 = arith.constant 0 : index
    %c14_245 = arith.constant 14 : index
    %c0_246 = arith.constant 0 : index
    %c0_247 = arith.constant 0 : index
    %465 = vector.load %arg5[%c0_244, %c14_245, %c0_246, %c0_247] : memref<1x16x8x3xf32, #tpu.memory_space<vmem>>, vector<1x1x8x3xf32>
    %466 = vector.shape_cast %465 : vector<1x1x8x3xf32> to vector<8x3xf32>
    %467 = vector.shape_cast %464 : vector<8x3xf32> to vector<1x1x8x3xf32>
    tpu.vector_store %arg5[%c0_244, %c14_245, %c0_246, %c0_247], %467 {strides = array<i32>} : memref<1x16x8x3xf32, #tpu.memory_space<vmem>>, vector<1x1x8x3xf32>,
    %cst_248 = arith.constant 7.500000e-01 : f32
    %468 = vector.broadcast %cst_248 : f32 to vector<8x3xf32>
    %469 = arith.mulf %468, %445 : vector<8x3xf32>
    %470 = vector.extract_strided_slice %445 {offsets = [0, 0], sizes = [1, 3], strides = [1, 1]} : vector<8x3xf32> to vector<1x3xf32>
    %471 = vector.extract_strided_slice %445 {offsets = [0, 0], sizes = [7, 3], strides = [1, 1]} : vector<8x3xf32> to vector<7x3xf32>
    %472 = tpu.concatenate %470, %471 in 0 : vector<1x3xf32>, vector<7x3xf32> -> vector<8x3xf32>
    %cst_249 = arith.constant 2.500000e-01 : f32
    %473 = vector.broadcast %cst_249 : f32 to vector<8x3xf32>
    %474 = arith.mulf %473, %472 : vector<8x3xf32>
    %475 = arith.addf %469, %474 : vector<8x3xf32>
    %c0_250 = arith.constant 0 : index
    %c15 = arith.constant 15 : index
    %c0_251 = arith.constant 0 : index
    %c0_252 = arith.constant 0 : index
    %476 = vector.load %arg4[%c0_250, %c15, %c0_251, %c0_252] : memref<1x16x8x3xf32, #tpu.memory_space<vmem>>, vector<1x1x8x3xf32>
    %477 = vector.shape_cast %476 : vector<1x1x8x3xf32> to vector<8x3xf32>
    %478 = vector.shape_cast %475 : vector<8x3xf32> to vector<1x1x8x3xf32>
    tpu.vector_store %arg4[%c0_250, %c15, %c0_251, %c0_252], %478 {strides = array<i32>} : memref<1x16x8x3xf32, #tpu.memory_space<vmem>>, vector<1x1x8x3xf32>,
    %cst_253 = arith.constant 7.500000e-01 : f32
    %479 = vector.broadcast %cst_253 : f32 to vector<8x3xf32>
    %480 = arith.mulf %479, %445 : vector<8x3xf32>
    %481 = vector.extract_strided_slice %445 {offsets = [1, 0], sizes = [7, 3], strides = [1, 1]} : vector<8x3xf32> to vector<7x3xf32>
    %482 = vector.extract_strided_slice %445 {offsets = [7, 0], sizes = [1, 3], strides = [1, 1]} : vector<8x3xf32> to vector<1x3xf32>
    %483 = tpu.concatenate %481, %482 in 0 : vector<7x3xf32>, vector<1x3xf32> -> vector<8x3xf32>
    %cst_254 = arith.constant 2.500000e-01 : f32
    %484 = vector.broadcast %cst_254 : f32 to vector<8x3xf32>
    %485 = arith.mulf %484, %483 : vector<8x3xf32>
    %486 = arith.addf %480, %485 : vector<8x3xf32>
    %c0_255 = arith.constant 0 : index
    %c15_256 = arith.constant 15 : index
    %c0_257 = arith.constant 0 : index
    %c0_258 = arith.constant 0 : index
    %487 = vector.load %arg5[%c0_255, %c15_256, %c0_257, %c0_258] : memref<1x16x8x3xf32, #tpu.memory_space<vmem>>, vector<1x1x8x3xf32>
    %488 = vector.shape_cast %487 : vector<1x1x8x3xf32> to vector<8x3xf32>
    %489 = vector.shape_cast %486 : vector<8x3xf32> to vector<1x1x8x3xf32>
    tpu.vector_store %arg5[%c0_255, %c15_256, %c0_257, %c0_258], %489 {strides = array<i32>} : memref<1x16x8x3xf32, #tpu.memory_space<vmem>>, vector<1x1x8x3xf32>,
    return
  }
  func.func @transform_0(%arg0: i32) -> (i32, i32, i32, i32) {
    %c0_i32 = arith.constant 0 : i32
    %c0_i32_0 = arith.constant 0 : i32
    %c0_i32_1 = arith.constant 0 : i32
    %c0_i32_2 = arith.constant 0 : i32
    return %arg0, %c0_i32, %c0_i32_0, %c0_i32_1 : i32, i32, i32, i32
  }
  func.func @transform_1(%arg0: i32) -> (i32, i32) {
    %c0_i32 = arith.constant 0 : i32
    %c0_i32_0 = arith.constant 0 : i32
    %c0_i32_1 = arith.constant 0 : i32
    return %c0_i32, %c0_i32_0 : i32, i32
  }
  func.func @transform_2(%arg0: i32) -> (i32, i32) {
    %c0_i32 = arith.constant 0 : i32
    %c0_i32_0 = arith.constant 0 : i32
    %c0_i32_1 = arith.constant 0 : i32
    return %c0_i32, %c0_i32_0 : i32, i32
  }
  func.func @transform_3(%arg0: i32) -> (i32, i32, i32, i32) {
    %c0_i32 = arith.constant 0 : i32
    %c0_i32_0 = arith.constant 0 : i32
    %c0_i32_1 = arith.constant 0 : i32
    %c0_i32_2 = arith.constant 0 : i32
    return %arg0, %c0_i32, %c0_i32_0, %c0_i32_1 : i32, i32, i32, i32
  }
  func.func @transform_4(%arg0: i32) -> (i32, i32, i32, i32) {
    %c0_i32 = arith.constant 0 : i32
    %c0_i32_0 = arith.constant 0 : i32
    %c0_i32_1 = arith.constant 0 : i32
    %c0_i32_2 = arith.constant 0 : i32
    return %arg0, %c0_i32, %c0_i32_0, %c0_i32_1 : i32, i32, i32, i32
  }
}

</mosaic_0001>

<llo_original>
// kernel: autoencoder_forward.7
$region0: #{autoencoder_forward.7}
  #allocation0 [shape = 'u32[]', space=smem, size = 0x4, offset = 0x4, fixed_abs, tag = 'smem constant byte address 0x4 - core index']
  #allocation1 [shape = 'u32[72,128]{1,0:T(1,128)}', space=vmem, size = 0x9000, scoped, tag = 'internal scratch']
  %s0 = inlined_call_operand.vmem [shape: f32[4,32,288], index: 0, kind: input, shape index: {}]
  %s1 = inlined_call_operand.vmem [shape: f32[288,64], index: 1, kind: input, shape index: {}]
  %s2 = inlined_call_operand.vmem [shape: f32[32,64], index: 2, kind: output, shape index: {}]
  %s3 = sld [smem:[#allocation0]]
  $region18: #{autoencoder_forward.7} parent=0
    _
  %s5 = ssub.s32 1, %s3
  %s6 = scalar_select 0, %s5, %s3
  // Predicated region
  $region2: #{autoencoder_forward.7} parent=0 // pred_check
    _
  $region3: #{autoencoder_forward.7} parent=0 // pred_check_branch
    %8 = sbr.rel (0) target = $region5
  $region4: #{autoencoder_forward.7} parent=0 // pred_region
    _
  $region5: #{autoencoder_forward.7} parent=0 // pred_fallthru
    _
  // Predicated region
  $region6: #{autoencoder_forward.7} parent=0 // pred_check
    _
  $region7: #{autoencoder_forward.7} parent=0 // pred_check_branch
    %10 = sbr.rel (0) target = $region9
  $region8: #{autoencoder_forward.7} parent=0 // pred_region
    _
  $region9: #{autoencoder_forward.7} parent=0 // pred_fallthru
    _
  %v11 = vld [vmem:[%s1] sm:$0xff]
  %v12 = vld [vmem:[%s1 + $0x8] sm:$0xff]
  %v13 = vld [vmem:[%s1 + $0x10] sm:$0xff]
  %v14 = vld [vmem:[%s1 + $0x18] sm:$0xff]
  %v15 = vld [vmem:[%s1 + $0x20] sm:$0xff]
  %v16 = vld [vmem:[%s1 + $0x28] sm:$0xff]
  %v17 = vld [vmem:[%s1 + $0x30] sm:$0xff]
  %v18 = vld [vmem:[%s1 + $0x38] sm:$0xff]
  %v19 = vld [vmem:[%s1 + $0x40] sm:$0xff]
  %v20 = vld [vmem:[%s1 + $0x48] sm:$0xff]
  %v21 = vld [vmem:[%s1 + $0x50] sm:$0xff]
  %v22 = vld [vmem:[%s1 + $0x58] sm:$0xff]
  %v23 = vld [vmem:[%s1 + $0x60] sm:$0xff]
  %v24 = vld [vmem:[%s1 + $0x68] sm:$0xff]
  %v25 = vld [vmem:[%s1 + $0x70] sm:$0xff]
  %v26 = vld [vmem:[%s1 + $0x78] sm:$0xff]
  %v27 = vld [vmem:[%s1 + $0x80] sm:$0xff]
  %v28 = vld [vmem:[%s1 + $0x88] sm:$0xff]
  %v29 = vld [vmem:[%s1 + $0x90] sm:$0xff]
  %v30 = vld [vmem:[%s1 + $0x98] sm:$0xff]
  %v31 = vld [vmem:[%s1 + $0xa0] sm:$0xff]
  %v32 = vld [vmem:[%s1 + $0xa8] sm:$0xff]
  %v33 = vld [vmem:[%s1 + $0xb0] sm:$0xff]
  %v34 = vld [vmem:[%s1 + $0xb8] sm:$0xff]
  %v35 = vld [vmem:[%s1 + $0xc0] sm:$0xff]
  %v36 = vld [vmem:[%s1 + $0xc8] sm:$0xff]
  %v37 = vld [vmem:[%s1 + $0xd0] sm:$0xff]
  %v38 = vld [vmem:[%s1 + $0xd8] sm:$0xff]
  %v39 = vld [vmem:[%s1 + $0xe0] sm:$0xff]
  %v40 = vld [vmem:[%s1 + $0xe8] sm:$0xff]
  %v41 = vld [vmem:[%s1 + $0xf0] sm:$0xff]
  %v42 = vld [vmem:[%s1 + $0xf8] sm:$0xff]
  %v43 = vld [vmem:[%s1 + $0x100] sm:$0xff]
  %v44 = vld [vmem:[%s1 + $0x108] sm:$0xff]
  %v45 = vld [vmem:[%s1 + $0x110] sm:$0xff]
  %v46 = vld [vmem:[%s1 + $0x118] sm:$0xff]
  %v47 = vld [vmem:[%s0] sm:$0xff]
  %v48 = vld [vmem:[%s0 + $0x8] sm:$0xff]
  %v49 = vld [vmem:[%s0 + $0x10] sm:$0xff]
  %v50 = vld [vmem:[%s0 + $0x18] sm:$0xff]
  %v51 = vld [vmem:[%s0 + $0x20] sm:$0xff]
  %v52 = vld [vmem:[%s0 + $0x28] sm:$0xff]
  %v53 = vld [vmem:[%s0 + $0x30] sm:$0xff]
  %v54 = vld [vmem:[%s0 + $0x38] sm:$0xff]
  %v55 = vld [vmem:[%s0 + $0x40] sm:$0xff]
  %v56 = vld [vmem:[%s0 + $0x48] sm:$0xff]
  %v57 = vld [vmem:[%s0 + $0x50] sm:$0xff]
  %v58 = vld [vmem:[%s0 + $0x58] sm:$0xff]
  %vm59 = vcmask 261120
  %v61 = vsel %vm59, %v49, 0
  %v64 = vsel %vm59, %v52, 0
  %v67 = vsel %vm59, %v55, 0
  %v70 = vsel %vm59, %v58, 0
  %72 = vmatpush.msra.mxu0 %v26
  %73 = vmatpush.msra.mxu0 %v25
  %74 = vmatpush.msra.mxu0 %v24
  %75 = vmatpush.msra.mxu0 %v23
  %76 = vmatpush.msra.mxu0 %v22
  %77 = vmatpush.msra.mxu0 %v21
  %78 = vmatpush.msra.mxu0 %v20
  %79 = vmatpush.msra.mxu0 %v19
  %80 = vmatpush.msra.mxu0 %v18
  %81 = vmatpush.msra.mxu0 %v17
  %82 = vmatpush.msra.mxu0 %v16
  %83 = vmatpush.msra.mxu0 %v15
  %84 = vmatpush.msra.mxu0 %v14
  %85 = vmatpush.msra.mxu0 %v13
  %86 = vmatpush.msra.mxu0 %v12
  %87 = vmatpush.msra.mxu0 %v11
  %88 = vmatmul.f32.gmra.mxu0 %v47
  %v89 = vpop.f32.mrf.mxu0
  %v90 = vadd.f32 0.0, %v89
  %91 = vmatmul.f32.gmra.mxu0 %v50
  %v92 = vpop.f32.mrf.mxu0
  %v93 = vadd.f32 0.0, %v92
  %94 = vmatmul.f32.gmra.mxu0 %v53
  %v95 = vpop.f32.mrf.mxu0
  %v96 = vadd.f32 0.0, %v95
  %97 = vmatmul.f32.gmra.mxu0 %v56
  %v98 = vpop.f32.mrf.mxu0
  %v99 = vadd.f32 0.0, %v98
  %100 = vdwg.mxu0
  %101 = vmatpush.msra.mxu0 %v42
  %102 = vmatpush.msra.mxu0 %v41
  %103 = vmatpush.msra.mxu0 %v40
  %104 = vmatpush.msra.mxu0 %v39
  %105 = vmatpush.msra.mxu0 %v38
  %106 = vmatpush.msra.mxu0 %v37
  %107 = vmatpush.msra.mxu0 %v36
  %108 = vmatpush.msra.mxu0 %v35
  %109 = vmatpush.msra.mxu0 %v34
  %110 = vmatpush.msra.mxu0 %v33
  %111 = vmatpush.msra.mxu0 %v32
  %112 = vmatpush.msra.mxu0 %v31
  %113 = vmatpush.msra.mxu0 %v30
  %114 = vmatpush.msra.mxu0 %v29
  %115 = vmatpush.msra.mxu0 %v28
  %116 = vmatpush.msra.mxu0 %v27
  %117 = vmatmul.f32.gmra.mxu0 %v48
  %v118 = vpop.f32.mrf.mxu0
  %v119 = vadd.f32 %v90, %v118
  %120 = vmatmul.f32.gmra.mxu0 %v51
  %v121 = vpop.f32.mrf.mxu0
  %v122 = vadd.f32 %v93, %v121
  %123 = vmatmul.f32.gmra.mxu0 %v54
  %v124 = vpop.f32.mrf.mxu0
  %v125 = vadd.f32 %v96, %v124
  %126 = vmatmul.f32.gmra.mxu0 %v57
  %v127 = vpop.f32.mrf.mxu0
  %v128 = vadd.f32 %v99, %v127
  %129 = vdwg.mxu0
  %130 = vmatpush.msra.mxu0 0.0
  %131 = vmatpush.msra.mxu0 0.0
  %132 = vmatpush.msra.mxu0 0.0
  %133 = vmatpush.msra.mxu0 0.0
  %134 = vmatpush.msra.mxu0 0.0
  %135 = vmatpush.msra.mxu0 0.0
  %136 = vmatpush.msra.mxu0 0.0
  %137 = vmatpush.msra.mxu0 0.0
  %138 = vmatpush.msra.mxu0 0.0
  %139 = vmatpush.msra.mxu0 0.0
  %140 = vmatpush.msra.mxu0 0.0
  %141 = vmatpush.msra.mxu0 0.0
  %142 = vmatpush.msra.mxu0 %v46
  %143 = vmatpush.msra.mxu0 %v45
  %144 = vmatpush.msra.mxu0 %v44
  %145 = vmatpush.msra.mxu0 %v43
  %146 = vmatmul.f32.gmra.mxu0 %v61
  %v147 = vpop.f32.mrf.mxu0
  %v148 = vadd.f32 %v119, %v147
  %149 = vmatmul.f32.gmra.mxu0 %v64
  %v150 = vpop.f32.mrf.mxu0
  %v151 = vadd.f32 %v122, %v150
  %152 = vmatmul.f32.gmra.mxu0 %v67
  %v153 = vpop.f32.mrf.mxu0
  %v154 = vadd.f32 %v125, %v153
  %155 = vmatmul.f32.gmra.mxu0 %v70
  %v156 = vpop.f32.mrf.mxu0
  %v157 = vadd.f32 %v128, %v156
  %158 = vdwg.mxu0
  %s159 = scalar_lea.vmem %s0, 96
  %v160 = vld [vmem:[%s159] sm:$0xff]
  %v161 = vld [vmem:[%s159 + $0x8] sm:$0xff]
  %v162 = vld [vmem:[%s159 + $0x10] sm:$0xff]
  %v163 = vld [vmem:[%s159 + $0x18] sm:$0xff]
  %v164 = vld [vmem:[%s159 + $0x20] sm:$0xff]
  %v165 = vld [vmem:[%s159 + $0x28] sm:$0xff]
  %v166 = vld [vmem:[%s159 + $0x30] sm:$0xff]
  %v167 = vld [vmem:[%s159 + $0x38] sm:$0xff]
  %v168 = vld [vmem:[%s159 + $0x40] sm:$0xff]
  %v169 = vld [vmem:[%s159 + $0x48] sm:$0xff]
  %v170 = vld [vmem:[%s159 + $0x50] sm:$0xff]
  %v171 = vld [vmem:[%s159 + $0x58] sm:$0xff]
  %v173 = vsel %vm59, %v162, 0
  %v176 = vsel %vm59, %v165, 0
  %v179 = vsel %vm59, %v168, 0
  %v182 = vsel %vm59, %v171, 0
  %184 = vmatpush.msra.mxu0 %v26
  %185 = vmatpush.msra.mxu0 %v25
  %186 = vmatpush.msra.mxu0 %v24
  %187 = vmatpush.msra.mxu0 %v23
  %188 = vmatpush.msra.mxu0 %v22
  %189 = vmatpush.msra.mxu0 %v21
  %190 = vmatpush.msra.mxu0 %v20
  %191 = vmatpush.msra.mxu0 %v19
  %192 = vmatpush.msra.mxu0 %v18
  %193 = vmatpush.msra.mxu0 %v17
  %194 = vmatpush.msra.mxu0 %v16
  %195 = vmatpush.msra.mxu0 %v15
  %196 = vmatpush.msra.mxu0 %v14
  %197 = vmatpush.msra.mxu0 %v13
  %198 = vmatpush.msra.mxu0 %v12
  %199 = vmatpush.msra.mxu0 %v11
  %200 = vmatmul.f32.gmra.mxu0 %v160
  %v201 = vpop.f32.mrf.mxu0
  %v202 = vadd.f32 0.0, %v201
  %203 = vmatmul.f32.gmra.mxu0 %v163
  %v204 = vpop.f32.mrf.mxu0
  %v205 = vadd.f32 0.0, %v204
  %206 = vmatmul.f32.gmra.mxu0 %v166
  %v207 = vpop.f32.mrf.mxu0
  %v208 = vadd.f32 0.0, %v207
  %209 = vmatmul.f32.gmra.mxu0 %v169
  %v210 = vpop.f32.mrf.mxu0
  %v211 = vadd.f32 0.0, %v210
  %212 = vdwg.mxu0
  %213 = vmatpush.msra.mxu0 %v42
  %214 = vmatpush.msra.mxu0 %v41
  %215 = vmatpush.msra.mxu0 %v40
  %216 = vmatpush.msra.mxu0 %v39
  %217 = vmatpush.msra.mxu0 %v38
  %218 = vmatpush.msra.mxu0 %v37
  %219 = vmatpush.msra.mxu0 %v36
  %220 = vmatpush.msra.mxu0 %v35
  %221 = vmatpush.msra.mxu0 %v34
  %222 = vmatpush.msra.mxu0 %v33
  %223 = vmatpush.msra.mxu0 %v32
  %224 = vmatpush.msra.mxu0 %v31
  %225 = vmatpush.msra.mxu0 %v30
  %226 = vmatpush.msra.mxu0 %v29
  %227 = vmatpush.msra.mxu0 %v28
  %228 = vmatpush.msra.mxu0 %v27
  %229 = vmatmul.f32.gmra.mxu0 %v161
  %v230 = vpop.f32.mrf.mxu0
  %v231 = vadd.f32 %v202, %v230
  %232 = vmatmul.f32.gmra.mxu0 %v164
  %v233 = vpop.f32.mrf.mxu0
  %v234 = vadd.f32 %v205, %v233
  %235 = vmatmul.f32.gmra.mxu0 %v167
  %v236 = vpop.f32.mrf.mxu0
  %v237 = vadd.f32 %v208, %v236
  %238 = vmatmul.f32.gmra.mxu0 %v170
  %v239 = vpop.f32.mrf.mxu0
  %v240 = vadd.f32 %v211, %v239
  %241 = vdwg.mxu0
  %242 = vmatpush.msra.mxu0 0.0
  %243 = vmatpush.msra.mxu0 0.0
  %244 = vmatpush.msra.mxu0 0.0
  %245 = vmatpush.msra.mxu0 0.0
  %246 = vmatpush.msra.mxu0 0.0
  %247 = vmatpush.msra.mxu0 0.0
  %248 = vmatpush.msra.mxu0 0.0
  %249 = vmatpush.msra.mxu0 0.0
  %250 = vmatpush.msra.mxu0 0.0
  %251 = vmatpush.msra.mxu0 0.0
  %252 = vmatpush.msra.mxu0 0.0
  %253 = vmatpush.msra.mxu0 0.0
  %254 = vmatpush.msra.mxu0 %v46
  %255 = vmatpush.msra.mxu0 %v45
  %256 = vmatpush.msra.mxu0 %v44
  %257 = vmatpush.msra.mxu0 %v43
  %258 = vmatmul.f32.gmra.mxu0 %v173
  %v259 = vpop.f32.mrf.mxu0
  %v260 = vadd.f32 %v231, %v259
  %261 = vmatmul.f32.gmra.mxu0 %v176
  %v262 = vpop.f32.mrf.mxu0
  %v263 = vadd.f32 %v234, %v262
  %264 = vmatmul.f32.gmra.mxu0 %v179
  %v265 = vpop.f32.mrf.mxu0
  %v266 = vadd.f32 %v237, %v265
  %267 = vmatmul.f32.gmra.mxu0 %v182
  %v268 = vpop.f32.mrf.mxu0
  %v269 = vadd.f32 %v240, %v268
  %270 = vdwg.mxu0
  %s271 = scalar_lea.vmem %s0, 192
  %v272 = vld [vmem:[%s271] sm:$0xff]
  %v273 = vld [vmem:[%s271 + $0x8] sm:$0xff]
  %v274 = vld [vmem:[%s271 + $0x10] sm:$0xff]
  %v275 = vld [vmem:[%s271 + $0x18] sm:$0xff]
  %v276 = vld [vmem:[%s271 + $0x20] sm:$0xff]
  %v277 = vld [vmem:[%s271 + $0x28] sm:$0xff]
  %v278 = vld [vmem:[%s271 + $0x30] sm:$0xff]
  %v279 = vld [vmem:[%s271 + $0x38] sm:$0xff]
  %v280 = vld [vmem:[%s271 + $0x40] sm:$0xff]
  %v281 = vld [vmem:[%s271 + $0x48] sm:$0xff]
  %v282 = vld [vmem:[%s271 + $0x50] sm:$0xff]
  %v283 = vld [vmem:[%s271 + $0x58] sm:$0xff]
  %v285 = vsel %vm59, %v274, 0
  %v288 = vsel %vm59, %v277, 0
  %v291 = vsel %vm59, %v280, 0
  %v294 = vsel %vm59, %v283, 0
  %296 = vmatpush.msra.mxu0 %v26
  %297 = vmatpush.msra.mxu0 %v25
  %298 = vmatpush.msra.mxu0 %v24
  %299 = vmatpush.msra.mxu0 %v23
  %300 = vmatpush.msra.mxu0 %v22
  %301 = vmatpush.msra.mxu0 %v21
  %302 = vmatpush.msra.mxu0 %v20
  %303 = vmatpush.msra.mxu0 %v19
  %304 = vmatpush.msra.mxu0 %v18
  %305 = vmatpush.msra.mxu0 %v17
  %306 = vmatpush.msra.mxu0 %v16
  %307 = vmatpush.msra.mxu0 %v15
  %308 = vmatpush.msra.mxu0 %v14
  %309 = vmatpush.msra.mxu0 %v13
  %310 = vmatpush.msra.mxu0 %v12
  %311 = vmatpush.msra.mxu0 %v11
  %312 = vmatmul.f32.gmra.mxu0 %v272
  %v313 = vpop.f32.mrf.mxu0
  %v314 = vadd.f32 0.0, %v313
  %315 = vmatmul.f32.gmra.mxu0 %v275
  %v316 = vpop.f32.mrf.mxu0
  %v317 = vadd.f32 0.0, %v316
  %318 = vmatmul.f32.gmra.mxu0 %v278
  %v319 = vpop.f32.mrf.mxu0
  %v320 = vadd.f32 0.0, %v319
  %321 = vmatmul.f32.gmra.mxu0 %v281
  %v322 = vpop.f32.mrf.mxu0
  %v323 = vadd.f32 0.0, %v322
  %324 = vdwg.mxu0
  %325 = vmatpush.msra.mxu0 %v42
  %326 = vmatpush.msra.mxu0 %v41
  %327 = vmatpush.msra.mxu0 %v40
  %328 = vmatpush.msra.mxu0 %v39
  %329 = vmatpush.msra.mxu0 %v38
  %330 = vmatpush.msra.mxu0 %v37
  %331 = vmatpush.msra.mxu0 %v36
  %332 = vmatpush.msra.mxu0 %v35
  %333 = vmatpush.msra.mxu0 %v34
  %334 = vmatpush.msra.mxu0 %v33
  %335 = vmatpush.msra.mxu0 %v32
  %336 = vmatpush.msra.mxu0 %v31
  %337 = vmatpush.msra.mxu0 %v30
  %338 = vmatpush.msra.mxu0 %v29
  %339 = vmatpush.msra.mxu0 %v28
  %340 = vmatpush.msra.mxu0 %v27
  %341 = vmatmul.f32.gmra.mxu0 %v273
  %v342 = vpop.f32.mrf.mxu0
  %v343 = vadd.f32 %v314, %v342
  %344 = vmatmul.f32.gmra.mxu0 %v276
  %v345 = vpop.f32.mrf.mxu0
  %v346 = vadd.f32 %v317, %v345
  %347 = vmatmul.f32.gmra.mxu0 %v279
  %v348 = vpop.f32.mrf.mxu0
  %v349 = vadd.f32 %v320, %v348
  %350 = vmatmul.f32.gmra.mxu0 %v282
  %v351 = vpop.f32.mrf.mxu0
  %v352 = vadd.f32 %v323, %v351
  %353 = vdwg.mxu0
  %354 = vmatpush.msra.mxu0 0.0
  %355 = vmatpush.msra.mxu0 0.0
  %356 = vmatpush.msra.mxu0 0.0
  %357 = vmatpush.msra.mxu0 0.0
  %358 = vmatpush.msra.mxu0 0.0
  %359 = vmatpush.msra.mxu0 0.0
  %360 = vmatpush.msra.mxu0 0.0
  %361 = vmatpush.msra.mxu0 0.0
  %362 = vmatpush.msra.mxu0 0.0
  %363 = vmatpush.msra.mxu0 0.0
  %364 = vmatpush.msra.mxu0 0.0
  %365 = vmatpush.msra.mxu0 0.0
  %366 = vmatpush.msra.mxu0 %v46
  %367 = vmatpush.msra.mxu0 %v45
  %368 = vmatpush.msra.mxu0 %v44
  %369 = vmatpush.msra.mxu0 %v43
  %370 = vmatmul.f32.gmra.mxu0 %v285
  %v371 = vpop.f32.mrf.mxu0
  %v372 = vadd.f32 %v343, %v371
  %373 = vmatmul.f32.gmra.mxu0 %v288
  %v374 = vpop.f32.mrf.mxu0
  %v375 = vadd.f32 %v346, %v374
  %376 = vmatmul.f32.gmra.mxu0 %v291
  %v377 = vpop.f32.mrf.mxu0
  %v378 = vadd.f32 %v349, %v377
  %379 = vmatmul.f32.gmra.mxu0 %v294
  %v380 = vpop.f32.mrf.mxu0
  %v381 = vadd.f32 %v352, %v380
  %382 = vdwg.mxu0
  %s383 = scalar_lea.vmem %s0, 288
  %v384 = vld [vmem:[%s383] sm:$0xff]
  %v385 = vld [vmem:[%s383 + $0x8] sm:$0xff]
  %v386 = vld [vmem:[%s383 + $0x10] sm:$0xff]
  %v387 = vld [vmem:[%s383 + $0x18] sm:$0xff]
  %v388 = vld [vmem:[%s383 + $0x20] sm:$0xff]
  %v389 = vld [vmem:[%s383 + $0x28] sm:$0xff]
  %v390 = vld [vmem:[%s383 + $0x30] sm:$0xff]
  %v391 = vld [vmem:[%s383 + $0x38] sm:$0xff]
  %v392 = vld [vmem:[%s383 + $0x40] sm:$0xff]
  %v393 = vld [vmem:[%s383 + $0x48] sm:$0xff]
  %v394 = vld [vmem:[%s383 + $0x50] sm:$0xff]
  %v395 = vld [vmem:[%s383 + $0x58] sm:$0xff]
  %v397 = vsel %vm59, %v386, 0
  %v400 = vsel %vm59, %v389, 0
  %v403 = vsel %vm59, %v392, 0
  %v406 = vsel %vm59, %v395, 0
  %408 = vmatpush.msra.mxu0 %v26
  %409 = vmatpush.msra.mxu0 %v25
  %410 = vmatpush.msra.mxu0 %v24
  %411 = vmatpush.msra.mxu0 %v23
  %412 = vmatpush.msra.mxu0 %v22
  %413 = vmatpush.msra.mxu0 %v21
  %414 = vmatpush.msra.mxu0 %v20
  %415 = vmatpush.msra.mxu0 %v19
  %416 = vmatpush.msra.mxu0 %v18
  %417 = vmatpush.msra.mxu0 %v17
  %418 = vmatpush.msra.mxu0 %v16
  %419 = vmatpush.msra.mxu0 %v15
  %420 = vmatpush.msra.mxu0 %v14
  %421 = vmatpush.msra.mxu0 %v13
  %422 = vmatpush.msra.mxu0 %v12
  %423 = vmatpush.msra.mxu0 %v11
  %424 = vmatmul.f32.gmra.mxu0 %v384
  %v425 = vpop.f32.mrf.mxu0
  %v426 = vadd.f32 0.0, %v425
  %427 = vmatmul.f32.gmra.mxu0 %v387
  %v428 = vpop.f32.mrf.mxu0
  %v429 = vadd.f32 0.0, %v428
  %430 = vmatmul.f32.gmra.mxu0 %v390
  %v431 = vpop.f32.mrf.mxu0
  %v432 = vadd.f32 0.0, %v431
  %433 = vmatmul.f32.gmra.mxu0 %v393
  %v434 = vpop.f32.mrf.mxu0
  %v435 = vadd.f32 0.0, %v434
  %436 = vdwg.mxu0
  %437 = vmatpush.msra.mxu0 %v42
  %438 = vmatpush.msra.mxu0 %v41
  %439 = vmatpush.msra.mxu0 %v40
  %440 = vmatpush.msra.mxu0 %v39
  %441 = vmatpush.msra.mxu0 %v38
  %442 = vmatpush.msra.mxu0 %v37
  %443 = vmatpush.msra.mxu0 %v36
  %444 = vmatpush.msra.mxu0 %v35
  %445 = vmatpush.msra.mxu0 %v34
  %446 = vmatpush.msra.mxu0 %v33
  %447 = vmatpush.msra.mxu0 %v32
  %448 = vmatpush.msra.mxu0 %v31
  %449 = vmatpush.msra.mxu0 %v30
  %450 = vmatpush.msra.mxu0 %v29
  %451 = vmatpush.msra.mxu0 %v28
  %452 = vmatpush.msra.mxu0 %v27
  %453 = vmatmul.f32.gmra.mxu0 %v385
  %v454 = vpop.f32.mrf.mxu0
  %v455 = vadd.f32 %v426, %v454
  %456 = vmatmul.f32.gmra.mxu0 %v388
  %v457 = vpop.f32.mrf.mxu0
  %v458 = vadd.f32 %v429, %v457
  %459 = vmatmul.f32.gmra.mxu0 %v391
  %v460 = vpop.f32.mrf.mxu0
  %v461 = vadd.f32 %v432, %v460
  %462 = vmatmul.f32.gmra.mxu0 %v394
  %v463 = vpop.f32.mrf.mxu0
  %v464 = vadd.f32 %v435, %v463
  %465 = vdwg.mxu0
  %466 = vmatpush.msra.mxu0 0.0
  %467 = vmatpush.msra.mxu0 0.0
  %468 = vmatpush.msra.mxu0 0.0
  %469 = vmatpush.msra.mxu0 0.0
  %470 = vmatpush.msra.mxu0 0.0
  %471 = vmatpush.msra.mxu0 0.0
  %472 = vmatpush.msra.mxu0 0.0
  %473 = vmatpush.msra.mxu0 0.0
  %474 = vmatpush.msra.mxu0 0.0
  %475 = vmatpush.msra.mxu0 0.0
  %476 = vmatpush.msra.mxu0 0.0
  %477 = vmatpush.msra.mxu0 0.0
  %478 = vmatpush.msra.mxu0 %v46
  %479 = vmatpush.msra.mxu0 %v45
  %480 = vmatpush.msra.mxu0 %v44
  %481 = vmatpush.msra.mxu0 %v43
  %482 = vmatmul.f32.gmra.mxu0 %v397
  %v483 = vpop.f32.mrf.mxu0
  %v484 = vadd.f32 %v455, %v483
  %485 = vmatmul.f32.gmra.mxu0 %v400
  %v486 = vpop.f32.mrf.mxu0
  %v487 = vadd.f32 %v458, %v486
  %488 = vmatmul.f32.gmra.mxu0 %v403
  %v489 = vpop.f32.mrf.mxu0
  %v490 = vadd.f32 %v461, %v489
  %491 = vmatmul.f32.gmra.mxu0 %v406
  %v492 = vpop.f32.mrf.mxu0
  %v493 = vadd.f32 %v464, %v492
  %494 = vdwg.mxu0
  %v495 = vadd.f32 %v148, %v260
  %v496 = vadd.f32 %v151, %v263
  %v497 = vadd.f32 %v154, %v266
  %v498 = vadd.f32 %v157, %v269
  %v499 = vadd.f32 %v495, %v372
  %v500 = vadd.f32 %v496, %v375
  %v501 = vadd.f32 %v497, %v378
  %v502 = vadd.f32 %v498, %v381
  %v503 = vadd.f32 %v499, %v484
  %v504 = vadd.f32 %v500, %v487
  %v505 = vadd.f32 %v501, %v490
  %v506 = vadd.f32 %v502, %v493
  %vm507 = vcmask 523264
  %v508 = vsel %vm507, %v503, 0.0
  %v509 = vsel %vm507, %v504, 0.0
  %v510 = vadd.f32 %v508, %v509
  %v511 = vsel %vm507, %v505, 0.0
  %v512 = vadd.f32 %v510, %v511
  %v513 = vsel %vm507, %v506, 0.0
  %v514 = vadd.f32 %v512, %v513
  %v515 = vrot.slane %v514, 4
  %v516 = vadd.f32 %v514, %v515
  %v517 = vrot.slane %v516, 2
  %v518 = vadd.f32 %v516, %v517
  %v519 = vrot.slane %v518, 1
  %v520 = vadd.f32 %v518, %v519
  %v521 = vrcp.pop 128.0
  %v522 = vmul.f32 128.0, %v521
  %v523 = vsub.f32 1.0, %v522
  %v524 = vmul.f32 %v521, %v523
  %v525 = vadd.f32 %v521, %v524
  %vm526 = vweird.f32 %v521
  %v527 = vsel %vm526, %v521, %v525
  %v528 = vmul.f32 %v520, %v527
  %v529 = vsub.f32 %v148, %v528
  %v530 = vsub.f32 %v151, %v528
  %v531 = vsub.f32 %v154, %v528
  %v532 = vsub.f32 %v157, %v528
  %v533 = vmul.f32 %v529, %v529
  %v534 = vmul.f32 %v530, %v530
  %v535 = vmul.f32 %v531, %v531
  %v536 = vmul.f32 %v532, %v532
  %v537 = vsel %vm507, %v533, 0.0
  %v538 = vsel %vm507, %v534, 0.0
  %v539 = vadd.f32 %v537, %v538
  %v540 = vsel %vm507, %v535, 0.0
  %v541 = vadd.f32 %v539, %v540
  %v542 = vsel %vm507, %v536, 0.0
  %v543 = vadd.f32 %v541, %v542
  %v544 = vrot.slane %v543, 4
  %v545 = vadd.f32 %v543, %v544
  %v546 = vrot.slane %v545, 2
  %v547 = vadd.f32 %v545, %v546
  %v548 = vrot.slane %v547, 1
  %v549 = vadd.f32 %v547, %v548
  %v550 = vsub.f32 %v260, %v528
  %v551 = vsub.f32 %v263, %v528
  %v552 = vsub.f32 %v266, %v528
  %v553 = vsub.f32 %v269, %v528
  %v554 = vmul.f32 %v550, %v550
  %v555 = vmul.f32 %v551, %v551
  %v556 = vmul.f32 %v552, %v552
  %v557 = vmul.f32 %v553, %v553
  %v558 = vsel %vm507, %v554, 0.0
  %v559 = vsel %vm507, %v555, 0.0
  %v560 = vadd.f32 %v558, %v559
  %v561 = vsel %vm507, %v556, 0.0
  %v562 = vadd.f32 %v560, %v561
  %v563 = vsel %vm507, %v557, 0.0
  %v564 = vadd.f32 %v562, %v563
  %v565 = vrot.slane %v564, 4
  %v566 = vadd.f32 %v564, %v565
  %v567 = vrot.slane %v566, 2
  %v568 = vadd.f32 %v566, %v567
  %v569 = vrot.slane %v568, 1
  %v570 = vadd.f32 %v568, %v569
  %v571 = vadd.f32 %v549, %v570
  %v572 = vsub.f32 %v372, %v528
  %v573 = vsub.f32 %v375, %v528
  %v574 = vsub.f32 %v378, %v528
  %v575 = vsub.f32 %v381, %v528
  %v576 = vmul.f32 %v572, %v572
  %v577 = vmul.f32 %v573, %v573
  %v578 = vmul.f32 %v574, %v574
  %v579 = vmul.f32 %v575, %v575
  %v580 = vsel %vm507, %v576, 0.0
  %v581 = vsel %vm507, %v577, 0.0
  %v582 = vadd.f32 %v580, %v581
  %v583 = vsel %vm507, %v578, 0.0
  %v584 = vadd.f32 %v582, %v583
  %v585 = vsel %vm507, %v579, 0.0
  %v586 = vadd.f32 %v584, %v585
  %v587 = vrot.slane %v586, 4
  %v588 = vadd.f32 %v586, %v587
  %v589 = vrot.slane %v588, 2
  %v590 = vadd.f32 %v588, %v589
  %v591 = vrot.slane %v590, 1
  %v592 = vadd.f32 %v590, %v591
  %v593 = vadd.f32 %v571, %v592
  %v594 = vsub.f32 %v484, %v528
  %v595 = vsub.f32 %v487, %v528
  %v596 = vsub.f32 %v490, %v528
  %v597 = vsub.f32 %v493, %v528
  %v598 = vmul.f32 %v594, %v594
  %v599 = vmul.f32 %v595, %v595
  %v600 = vmul.f32 %v596, %v596
  %v601 = vmul.f32 %v597, %v597
  %v602 = vsel %vm507, %v598, 0.0
  %v603 = vsel %vm507, %v599, 0.0
  %v604 = vadd.f32 %v602, %v603
  %v605 = vsel %vm507, %v600, 0.0
  %v606 = vadd.f32 %v604, %v605
  %v607 = vsel %vm507, %v601, 0.0
  %v608 = vadd.f32 %v606, %v607
  %v609 = vrot.slane %v608, 4
  %v610 = vadd.f32 %v608, %v609
  %v611 = vrot.slane %v610, 2
  %v612 = vadd.f32 %v610, %v611
  %v613 = vrot.slane %v612, 1
  %v614 = vadd.f32 %v612, %v613
  %v615 = vadd.f32 %v593, %v614
  %v616 = vmul.f32 %v615, %v527
  %v617 = vadd.f32 %v616, 1e-05
  %v618 = vrsqrt.pop %v617
  %v619 = vmul.f32 %v618, %v617
  %v620 = vmul.f32 %v619, %v618
  %v621 = vmul.f32 0.5, %v620
  %v622 = vsub.f32 1.5, %v621
  %v623 = vmul.f32 %v618, %v622
  %vm624 = vweird.f32 %v617
  %vm625 = vweird.f32 %v618
  %vm626 = vmor %vm624, %vm625
  %v627 = vsel %vm626, %v618, %v623
  %v628 = vsub.f32 0.0, %v528
  %v629 = vmul.f32 %v628, %v627
  %v630 = vmax.f32 %v148, %v260
  %v631 = vmax.f32 %v151, %v263
  %v632 = vmax.f32 %v154, %v266
  %v633 = vmax.f32 %v157, %v269
  %v634 = vmax.f32 %v372, %v484
  %v635 = vmax.f32 %v375, %v487
  %v636 = vmax.f32 %v378, %v490
  %v637 = vmax.f32 %v381, %v493
  %v638 = vmax.f32 %v630, %v634
  %v639 = vmax.f32 %v631, %v635
  %v640 = vmax.f32 %v632, %v636
  %v641 = vmax.f32 %v633, %v637
  %v642 = vmul.f32 %v638, %v627
  %v643 = vmul.f32 %v639, %v627
  %v644 = vmul.f32 %v640, %v627
  %v645 = vmul.f32 %v641, %v627
  %v646 = vadd.f32 %v642, %v629
  %v647 = vadd.f32 %v643, %v629
  %v648 = vadd.f32 %v644, %v629
  %v649 = vadd.f32 %v645, %v629
  %v650 = vmax.f32 %v646, 0.0
  %v651 = vmax.f32 %v647, 0.0
  %v652 = vmax.f32 %v648, 0.0
  %v653 = vmax.f32 %v649, 0.0
  %654 = vst.msk [vmem:[%s2] sm:$0xff] %vm507, %v650
  %655 = vst.msk [vmem:[%s2 + $0x8] sm:$0xff] %vm507, %v651
  %656 = vst.msk [vmem:[%s2 + $0x10] sm:$0xff] %vm507, %v652
  %657 = vst.msk [vmem:[%s2 + $0x18] sm:$0xff] %vm507, %v653
  // Predicated region
  $region10: #{autoencoder_forward.7} parent=0 // pred_check
    _
  $region11: #{autoencoder_forward.7} parent=0 // pred_check_branch
    %659 = sbr.rel (0) target = $region13
  $region12: #{autoencoder_forward.7} parent=0 // pred_region
    _
  $region13: #{autoencoder_forward.7} parent=0 // pred_fallthru
    _
  // Predicated region
  $region14: #{autoencoder_forward.7} parent=0 // pred_check
    _
  $region15: #{autoencoder_forward.7} parent=0 // pred_check_branch
    %661 = sbr.rel (0) target = $region17
  $region16: #{autoencoder_forward.7} parent=0 // pred_region
    _
  $region17: #{autoencoder_forward.7} parent=0 // pred_fallthru
    _

// kernel: autoencoder_forward.6
$region0: #{autoencoder_forward.6}
  #allocation0 [shape = 'u32[]', space=smem, size = 0x4, offset = 0x4, fixed_abs, tag = 'smem constant byte address 0x4 - core index']
  #allocation1 [shape = 'u32[72,128]{1,0:T(1,128)}', space=vmem, size = 0x9000, scoped, tag = 'internal scratch']
  %s0 = inlined_call_operand.vmem [shape: f32[4,128,147], index: 0, kind: input, shape index: {}]
  %s1 = inlined_call_operand.vmem [shape: f32[147,32], index: 1, kind: input, shape index: {}]
  %s2 = inlined_call_operand.vmem [shape: f32[128,32], index: 2, kind: output, shape index: {}]
  %s3 = sld [smem:[#allocation0]]
  $region18: #{autoencoder_forward.6} parent=0
    _
  %s5 = ssub.s32 1, %s3
  %s6 = scalar_select 0, %s5, %s3
  // Predicated region
  $region2: #{autoencoder_forward.6} parent=0 // pred_check
    _
  $region3: #{autoencoder_forward.6} parent=0 // pred_check_branch
    %8 = sbr.rel (0) target = $region5
  $region4: #{autoencoder_forward.6} parent=0 // pred_region
    _
  $region5: #{autoencoder_forward.6} parent=0 // pred_fallthru
    _
  // Predicated region
  $region6: #{autoencoder_forward.6} parent=0 // pred_check
    _
  $region7: #{autoencoder_forward.6} parent=0 // pred_check_branch
    %10 = sbr.rel (0) target = $region9
  $region8: #{autoencoder_forward.6} parent=0 // pred_region
    _
  $region9: #{autoencoder_forward.6} parent=0 // pred_fallthru
    _
  %v11 = vld [vmem:[%s1] sm:$0xff]
  %v12 = vld [vmem:[%s1 + $0x8] sm:$0xff]
  %v13 = vld [vmem:[%s1 + $0x10] sm:$0xff]
  %v14 = vld [vmem:[%s1 + $0x18] sm:$0xff]
  %v15 = vld [vmem:[%s1 + $0x20] sm:$0xff]
  %v16 = vld [vmem:[%s1 + $0x28] sm:$0xff]
  %v17 = vld [vmem:[%s1 + $0x30] sm:$0xff]
  %v18 = vld [vmem:[%s1 + $0x38] sm:$0xff]
  %v19 = vld [vmem:[%s1 + $0x40] sm:$0xff]
  %v20 = vld [vmem:[%s1 + $0x48] sm:$0xff]
  %v21 = vld [vmem:[%s1 + $0x50] sm:$0xff]
  %v22 = vld [vmem:[%s1 + $0x58] sm:$0xff]
  %v23 = vld [vmem:[%s1 + $0x60] sm:$0xff]
  %v24 = vld [vmem:[%s1 + $0x68] sm:$0xff]
  %v25 = vld [vmem:[%s1 + $0x70] sm:$0xff]
  %v26 = vld [vmem:[%s1 + $0x78] sm:$0xff]
  %v27 = vld [vmem:[%s1 + $0x80] sm:$0xff]
  %v28 = vld [vmem:[%s1 + $0x88] sm:$0xff]
  %v29 = vld [vmem:[%s1 + $0x90] sm:$0x7]
  %v30 = vld [vmem:[%s0] sm:$0xff]
  %v31 = vld [vmem:[%s0 + $0x8] sm:$0xff]
  %v32 = vld [vmem:[%s0 + $0x10] sm:$0xff]
  %v33 = vld [vmem:[%s0 + $0x18] sm:$0xff]
  %v34 = vld [vmem:[%s0 + $0x20] sm:$0xff]
  %v35 = vld [vmem:[%s0 + $0x28] sm:$0xff]
  %v36 = vld [vmem:[%s0 + $0x30] sm:$0xff]
  %v37 = vld [vmem:[%s0 + $0x38] sm:$0xff]
  %v38 = vld [vmem:[%s0 + $0x40] sm:$0xff]
  %v39 = vld [vmem:[%s0 + $0x48] sm:$0xff]
  %v40 = vld [vmem:[%s0 + $0x50] sm:$0xff]
  %v41 = vld [vmem:[%s0 + $0x58] sm:$0xff]
  %v42 = vld [vmem:[%s0 + $0x60] sm:$0xff]
  %v43 = vld [vmem:[%s0 + $0x68] sm:$0xff]
  %v44 = vld [vmem:[%s0 + $0x70] sm:$0xff]
  %v45 = vld [vmem:[%s0 + $0x78] sm:$0xff]
  %v46 = vld [vmem:[%s0 + $0x80] sm:$0xff]
  %v47 = vld [vmem:[%s0 + $0x88] sm:$0xff]
  %v48 = vld [vmem:[%s0 + $0x90] sm:$0xff]
  %v49 = vld [vmem:[%s0 + $0x98] sm:$0xff]
  %v50 = vld [vmem:[%s0 + $0xa0] sm:$0xff]
  %v51 = vld [vmem:[%s0 + $0xa8] sm:$0xff]
  %v52 = vld [vmem:[%s0 + $0xb0] sm:$0xff]
  %v53 = vld [vmem:[%s0 + $0xb8] sm:$0xff]
  %v54 = vld [vmem:[%s0 + $0xc0] sm:$0xff]
  %v55 = vld [vmem:[%s0 + $0xc8] sm:$0xff]
  %v56 = vld [vmem:[%s0 + $0xd0] sm:$0xff]
  %v57 = vld [vmem:[%s0 + $0xd8] sm:$0xff]
  %v58 = vld [vmem:[%s0 + $0xe0] sm:$0xff]
  %v59 = vld [vmem:[%s0 + $0xe8] sm:$0xff]
  %v60 = vld [vmem:[%s0 + $0xf0] sm:$0xff]
  %v61 = vld [vmem:[%s0 + $0xf8] sm:$0xff]
  %vm62 = vcmask 154624
  %v64 = vsel %vm62, %v31, 0
  %v67 = vsel %vm62, %v33, 0
  %v70 = vsel %vm62, %v35, 0
  %v73 = vsel %vm62, %v37, 0
  %v76 = vsel %vm62, %v39, 0
  %v79 = vsel %vm62, %v41, 0
  %v82 = vsel %vm62, %v43, 0
  %v85 = vsel %vm62, %v45, 0
  %v88 = vsel %vm62, %v47, 0
  %v91 = vsel %vm62, %v49, 0
  %v94 = vsel %vm62, %v51, 0
  %v97 = vsel %vm62, %v53, 0
  %v100 = vsel %vm62, %v55, 0
  %v103 = vsel %vm62, %v57, 0
  %v106 = vsel %vm62, %v59, 0
  %v109 = vsel %vm62, %v61, 0
  %vm111 = vcmask 1042432
  %v113 = vsel %vm111, %v29, 0
  %115 = vmatpush.msra.mxu0 %v26
  %116 = vmatpush.msra.mxu0 %v25
  %117 = vmatpush.msra.mxu0 %v24
  %118 = vmatpush.msra.mxu0 %v23
  %119 = vmatpush.msra.mxu0 %v22
  %120 = vmatpush.msra.mxu0 %v21
  %121 = vmatpush.msra.mxu0 %v20
  %122 = vmatpush.msra.mxu0 %v19
  %123 = vmatpush.msra.mxu0 %v18
  %124 = vmatpush.msra.mxu0 %v17
  %125 = vmatpush.msra.mxu0 %v16
  %126 = vmatpush.msra.mxu0 %v15
  %127 = vmatpush.msra.mxu0 %v14
  %128 = vmatpush.msra.mxu0 %v13
  %129 = vmatpush.msra.mxu0 %v12
  %130 = vmatpush.msra.mxu0 %v11
  %131 = vmatmul.f32.gmra.mxu0 %v30
  %v132 = vpop.f32.mrf.mxu0
  %v133 = vadd.f32 0.0, %v132
  %134 = vmatmul.f32.gmra.mxu0 %v32
  %v135 = vpop.f32.mrf.mxu0
  %v136 = vadd.f32 0.0, %v135
  %137 = vmatmul.f32.gmra.mxu0 %v34
  %v138 = vpop.f32.mrf.mxu0
  %v139 = vadd.f32 0.0, %v138
  %140 = vmatmul.f32.gmra.mxu0 %v36
  %v141 = vpop.f32.mrf.mxu0
  %v142 = vadd.f32 0.0, %v141
  %143 = vmatmul.f32.gmra.mxu0 %v38
  %v144 = vpop.f32.mrf.mxu0
  %v145 = vadd.f32 0.0, %v144
  %146 = vmatmul.f32.gmra.mxu0 %v40
  %v147 = vpop.f32.mrf.mxu0
  %v148 = vadd.f32 0.0, %v147
  %149 = vmatmul.f32.gmra.mxu0 %v42
  %v150 = vpop.f32.mrf.mxu0
  %v151 = vadd.f32 0.0, %v150
  %152 = vmatmul.f32.gmra.mxu0 %v44
  %v153 = vpop.f32.mrf.mxu0
  %v154 = vadd.f32 0.0, %v153
  %155 = vmatmul.f32.gmra.mxu0 %v46
  %v156 = vpop.f32.mrf.mxu0
  %v157 = vadd.f32 0.0, %v156
  %158 = vmatmul.f32.gmra.mxu0 %v48
  %v159 = vpop.f32.mrf.mxu0
  %v160 = vadd.f32 0.0, %v159
  %161 = vmatmul.f32.gmra.mxu0 %v50
  %v162 = vpop.f32.mrf.mxu0
  %v163 = vadd.f32 0.0, %v162
  %164 = vmatmul.f32.gmra.mxu0 %v52
  %v165 = vpop.f32.mrf.mxu0
  %v166 = vadd.f32 0.0, %v165
  %167 = vmatmul.f32.gmra.mxu0 %v54
  %v168 = vpop.f32.mrf.mxu0
  %v169 = vadd.f32 0.0, %v168
  %170 = vmatmul.f32.gmra.mxu0 %v56
  %v171 = vpop.f32.mrf.mxu0
  %v172 = vadd.f32 0.0, %v171
  %173 = vmatmul.f32.gmra.mxu0 %v58
  %v174 = vpop.f32.mrf.mxu0
  %v175 = vadd.f32 0.0, %v174
  %176 = vmatmul.f32.gmra.mxu0 %v60
  %v177 = vpop.f32.mrf.mxu0
  %v178 = vadd.f32 0.0, %v177
  %179 = vdwg.mxu0
  %180 = vmatpush.msra.mxu0 0.0
  %181 = vmatpush.msra.mxu0 0.0
  %182 = vmatpush.msra.mxu0 0.0
  %183 = vmatpush.msra.mxu0 0.0
  %184 = vmatpush.msra.mxu0 0.0
  %185 = vmatpush.msra.mxu0 0.0
  %186 = vmatpush.msra.mxu0 0.0
  %187 = vmatpush.msra.mxu0 0.0
  %188 = vmatpush.msra.mxu0 0.0
  %189 = vmatpush.msra.mxu0 0.0
  %190 = vmatpush.msra.mxu0 0.0
  %191 = vmatpush.msra.mxu0 0.0
  %192 = vmatpush.msra.mxu0 0.0
  %193 = vmatpush.msra.mxu0 %v113
  %194 = vmatpush.msra.mxu0 %v28
  %195 = vmatpush.msra.mxu0 %v27
  %196 = vmatmul.f32.gmra.mxu0 %v64
  %v197 = vpop.f32.mrf.mxu0
  %v198 = vadd.f32 %v133, %v197
  %199 = vmatmul.f32.gmra.mxu0 %v67
  %v200 = vpop.f32.mrf.mxu0
  %v201 = vadd.f32 %v136, %v200
  %202 = vmatmul.f32.gmra.mxu0 %v70
  %v203 = vpop.f32.mrf.mxu0
  %v204 = vadd.f32 %v139, %v203
  %205 = vmatmul.f32.gmra.mxu0 %v73
  %v206 = vpop.f32.mrf.mxu0
  %v207 = vadd.f32 %v142, %v206
  %208 = vmatmul.f32.gmra.mxu0 %v76
  %v209 = vpop.f32.mrf.mxu0
  %v210 = vadd.f32 %v145, %v209
  %211 = vmatmul.f32.gmra.mxu0 %v79
  %v212 = vpop.f32.mrf.mxu0
  %v213 = vadd.f32 %v148, %v212
  %214 = vmatmul.f32.gmra.mxu0 %v82
  %v215 = vpop.f32.mrf.mxu0
  %v216 = vadd.f32 %v151, %v215
  %217 = vmatmul.f32.gmra.mxu0 %v85
  %v218 = vpop.f32.mrf.mxu0
  %v219 = vadd.f32 %v154, %v218
  %220 = vmatmul.f32.gmra.mxu0 %v88
  %v221 = vpop.f32.mrf.mxu0
  %v222 = vadd.f32 %v157, %v221
  %223 = vmatmul.f32.gmra.mxu0 %v91
  %v224 = vpop.f32.mrf.mxu0
  %v225 = vadd.f32 %v160, %v224
  %226 = vmatmul.f32.gmra.mxu0 %v94
  %v227 = vpop.f32.mrf.mxu0
  %v228 = vadd.f32 %v163, %v227
  %229 = vmatmul.f32.gmra.mxu0 %v97
  %v230 = vpop.f32.mrf.mxu0
  %v231 = vadd.f32 %v166, %v230
  %232 = vmatmul.f32.gmra.mxu0 %v100
  %v233 = vpop.f32.mrf.mxu0
  %v234 = vadd.f32 %v169, %v233
  %235 = vmatmul.f32.gmra.mxu0 %v103
  %v236 = vpop.f32.mrf.mxu0
  %v237 = vadd.f32 %v172, %v236
  %238 = vmatmul.f32.gmra.mxu0 %v106
  %v239 = vpop.f32.mrf.mxu0
  %v240 = vadd.f32 %v175, %v239
  %241 = vmatmul.f32.gmra.mxu0 %v109
  %v242 = vpop.f32.mrf.mxu0
  %v243 = vadd.f32 %v178, %v242
  %244 = vdwg.mxu0
  %s245 = scalar_lea.vmem %s0, 256
  %v246 = vld [vmem:[%s245] sm:$0xff]
  %v247 = vld [vmem:[%s245 + $0x8] sm:$0xff]
  %v248 = vld [vmem:[%s245 + $0x10] sm:$0xff]
  %v249 = vld [vmem:[%s245 + $0x18] sm:$0xff]
  %v250 = vld [vmem:[%s245 + $0x20] sm:$0xff]
  %v251 = vld [vmem:[%s245 + $0x28] sm:$0xff]
  %v252 = vld [vmem:[%s245 + $0x30] sm:$0xff]
  %v253 = vld [vmem:[%s245 + $0x38] sm:$0xff]
  %v254 = vld [vmem:[%s245 + $0x40] sm:$0xff]
  %v255 = vld [vmem:[%s245 + $0x48] sm:$0xff]
  %v256 = vld [vmem:[%s245 + $0x50] sm:$0xff]
  %v257 = vld [vmem:[%s245 + $0x58] sm:$0xff]
  %v258 = vld [vmem:[%s245 + $0x60] sm:$0xff]
  %v259 = vld [vmem:[%s245 + $0x68] sm:$0xff]
  %v260 = vld [vmem:[%s245 + $0x70] sm:$0xff]
  %v261 = vld [vmem:[%s245 + $0x78] sm:$0xff]
  %v262 = vld [vmem:[%s245 + $0x80] sm:$0xff]
  %v263 = vld [vmem:[%s245 + $0x88] sm:$0xff]
  %v264 = vld [vmem:[%s245 + $0x90] sm:$0xff]
  %v265 = vld [vmem:[%s245 + $0x98] sm:$0xff]
  %v266 = vld [vmem:[%s245 + $0xa0] sm:$0xff]
  %v267 = vld [vmem:[%s245 + $0xa8] sm:$0xff]
  %v268 = vld [vmem:[%s245 + $0xb0] sm:$0xff]
  %v269 = vld [vmem:[%s245 + $0xb8] sm:$0xff]
  %v270 = vld [vmem:[%s245 + $0xc0] sm:$0xff]
  %v271 = vld [vmem:[%s245 + $0xc8] sm:$0xff]
  %v272 = vld [vmem:[%s245 + $0xd0] sm:$0xff]
  %v273 = vld [vmem:[%s245 + $0xd8] sm:$0xff]
  %v274 = vld [vmem:[%s245 + $0xe0] sm:$0xff]
  %v275 = vld [vmem:[%s245 + $0xe8] sm:$0xff]
  %v276 = vld [vmem:[%s245 + $0xf0] sm:$0xff]
  %v277 = vld [vmem:[%s245 + $0xf8] sm:$0xff]
  %v279 = vsel %vm62, %v247, 0
  %v282 = vsel %vm62, %v249, 0
  %v285 = vsel %vm62, %v251, 0
  %v288 = vsel %vm62, %v253, 0
  %v291 = vsel %vm62, %v255, 0
  %v294 = vsel %vm62, %v257, 0
  %v297 = vsel %vm62, %v259, 0
  %v300 = vsel %vm62, %v261, 0
  %v303 = vsel %vm62, %v263, 0
  %v306 = vsel %vm62, %v265, 0
  %v309 = vsel %vm62, %v267, 0
  %v312 = vsel %vm62, %v269, 0
  %v315 = vsel %vm62, %v271, 0
  %v318 = vsel %vm62, %v273, 0
  %v321 = vsel %vm62, %v275, 0
  %v324 = vsel %vm62, %v277, 0
  %326 = vmatpush.msra.mxu0 %v26
  %327 = vmatpush.msra.mxu0 %v25
  %328 = vmatpush.msra.mxu0 %v24
  %329 = vmatpush.msra.mxu0 %v23
  %330 = vmatpush.msra.mxu0 %v22
  %331 = vmatpush.msra.mxu0 %v21
  %332 = vmatpush.msra.mxu0 %v20
  %333 = vmatpush.msra.mxu0 %v19
  %334 = vmatpush.msra.mxu0 %v18
  %335 = vmatpush.msra.mxu0 %v17
  %336 = vmatpush.msra.mxu0 %v16
  %337 = vmatpush.msra.mxu0 %v15
  %338 = vmatpush.msra.mxu0 %v14
  %339 = vmatpush.msra.mxu0 %v13
  %340 = vmatpush.msra.mxu0 %v12
  %341 = vmatpush.msra.mxu0 %v11
  %342 = vmatmul.f32.gmra.mxu0 %v246
  %v343 = vpop.f32.mrf.mxu0
  %v344 = vadd.f32 0.0, %v343
  %345 = vmatmul.f32.gmra.mxu0 %v248
  %v346 = vpop.f32.mrf.mxu0
  %v347 = vadd.f32 0.0, %v346
  %348 = vmatmul.f32.gmra.mxu0 %v250
  %v349 = vpop.f32.mrf.mxu0
  %v350 = vadd.f32 0.0, %v349
  %351 = vmatmul.f32.gmra.mxu0 %v252
  %v352 = vpop.f32.mrf.mxu0
  %v353 = vadd.f32 0.0, %v352
  %354 = vmatmul.f32.gmra.mxu0 %v254
  %v355 = vpop.f32.mrf.mxu0
  %v356 = vadd.f32 0.0, %v355
  %357 = vmatmul.f32.gmra.mxu0 %v256
  %v358 = vpop.f32.mrf.mxu0
  %v359 = vadd.f32 0.0, %v358
  %360 = vmatmul.f32.gmra.mxu0 %v258
  %v361 = vpop.f32.mrf.mxu0
  %v362 = vadd.f32 0.0, %v361
  %363 = vmatmul.f32.gmra.mxu0 %v260
  %v364 = vpop.f32.mrf.mxu0
  %v365 = vadd.f32 0.0, %v364
  %366 = vmatmul.f32.gmra.mxu0 %v262
  %v367 = vpop.f32.mrf.mxu0
  %v368 = vadd.f32 0.0, %v367
  %369 = vmatmul.f32.gmra.mxu0 %v264
  %v370 = vpop.f32.mrf.mxu0
  %v371 = vadd.f32 0.0, %v370
  %372 = vmatmul.f32.gmra.mxu0 %v266
  %v373 = vpop.f32.mrf.mxu0
  %v374 = vadd.f32 0.0, %v373
  %375 = vmatmul.f32.gmra.mxu0 %v268
  %v376 = vpop.f32.mrf.mxu0
  %v377 = vadd.f32 0.0, %v376
  %378 = vmatmul.f32.gmra.mxu0 %v270
  %v379 = vpop.f32.mrf.mxu0
  %v380 = vadd.f32 0.0, %v379
  %381 = vmatmul.f32.gmra.mxu0 %v272
  %v382 = vpop.f32.mrf.mxu0
  %v383 = vadd.f32 0.0, %v382
  %384 = vmatmul.f32.gmra.mxu0 %v274
  %v385 = vpop.f32.mrf.mxu0
  %v386 = vadd.f32 0.0, %v385
  %387 = vmatmul.f32.gmra.mxu0 %v276
  %v388 = vpop.f32.mrf.mxu0
  %v389 = vadd.f32 0.0, %v388
  %390 = vdwg.mxu0
  %391 = vmatpush.msra.mxu0 0.0
  %392 = vmatpush.msra.mxu0 0.0
  %393 = vmatpush.msra.mxu0 0.0
  %394 = vmatpush.msra.mxu0 0.0
  %395 = vmatpush.msra.mxu0 0.0
  %396 = vmatpush.msra.mxu0 0.0
  %397 = vmatpush.msra.mxu0 0.0
  %398 = vmatpush.msra.mxu0 0.0
  %399 = vmatpush.msra.mxu0 0.0
  %400 = vmatpush.msra.mxu0 0.0
  %401 = vmatpush.msra.mxu0 0.0
  %402 = vmatpush.msra.mxu0 0.0
  %403 = vmatpush.msra.mxu0 0.0
  %404 = vmatpush.msra.mxu0 %v113
  %405 = vmatpush.msra.mxu0 %v28
  %406 = vmatpush.msra.mxu0 %v27
  %407 = vmatmul.f32.gmra.mxu0 %v279
  %v408 = vpop.f32.mrf.mxu0
  %v409 = vadd.f32 %v344, %v408
  %410 = vmatmul.f32.gmra.mxu0 %v282
  %v411 = vpop.f32.mrf.mxu0
  %v412 = vadd.f32 %v347, %v411
  %413 = vmatmul.f32.gmra.mxu0 %v285
  %v414 = vpop.f32.mrf.mxu0
  %v415 = vadd.f32 %v350, %v414
  %416 = vmatmul.f32.gmra.mxu0 %v288
  %v417 = vpop.f32.mrf.mxu0
  %v418 = vadd.f32 %v353, %v417
  %419 = vmatmul.f32.gmra.mxu0 %v291
  %v420 = vpop.f32.mrf.mxu0
  %v421 = vadd.f32 %v356, %v420
  %422 = vmatmul.f32.gmra.mxu0 %v294
  %v423 = vpop.f32.mrf.mxu0
  %v424 = vadd.f32 %v359, %v423
  %425 = vmatmul.f32.gmra.mxu0 %v297
  %v426 = vpop.f32.mrf.mxu0
  %v427 = vadd.f32 %v362, %v426
  %428 = vmatmul.f32.gmra.mxu0 %v300
  %v429 = vpop.f32.mrf.mxu0
  %v430 = vadd.f32 %v365, %v429
  %431 = vmatmul.f32.gmra.mxu0 %v303
  %v432 = vpop.f32.mrf.mxu0
  %v433 = vadd.f32 %v368, %v432
  %434 = vmatmul.f32.gmra.mxu0 %v306
  %v435 = vpop.f32.mrf.mxu0
  %v436 = vadd.f32 %v371, %v435
  %437 = vmatmul.f32.gmra.mxu0 %v309
  %v438 = vpop.f32.mrf.mxu0
  %v439 = vadd.f32 %v374, %v438
  %440 = vmatmul.f32.gmra.mxu0 %v312
  %v441 = vpop.f32.mrf.mxu0
  %v442 = vadd.f32 %v377, %v441
  %443 = vmatmul.f32.gmra.mxu0 %v315
  %v444 = vpop.f32.mrf.mxu0
  %v445 = vadd.f32 %v380, %v444
  %446 = vmatmul.f32.gmra.mxu0 %v318
  %v447 = vpop.f32.mrf.mxu0
  %v448 = vadd.f32 %v383, %v447
  %449 = vmatmul.f32.gmra.mxu0 %v321
  %v450 = vpop.f32.mrf.mxu0
  %v451 = vadd.f32 %v386, %v450
  %452 = vmatmul.f32.gmra.mxu0 %v324
  %v453 = vpop.f32.mrf.mxu0
  %v454 = vadd.f32 %v389, %v453
  %455 = vdwg.mxu0
  %s456 = scalar_lea.vmem %s0, 512
  %v457 = vld [vmem:[%s456] sm:$0xff]
  %v458 = vld [vmem:[%s456 + $0x8] sm:$0xff]
  %v459 = vld [vmem:[%s456 + $0x10] sm:$0xff]
  %v460 = vld [vmem:[%s456 + $0x18] sm:$0xff]
  %v461 = vld [vmem:[%s456 + $0x20] sm:$0xff]
  %v462 = vld [vmem:[%s456 + $0x28] sm:$0xff]
  %v463 = vld [vmem:[%s456 + $0x30] sm:$0xff]
  %v464 = vld [vmem:[%s456 + $0x38] sm:$0xff]
  %v465 = vld [vmem:[%s456 + $0x40] sm:$0xff]
  %v466 = vld [vmem:[%s456 + $0x48] sm:$0xff]
  %v467 = vld [vmem:[%s456 + $0x50] sm:$0xff]
  %v468 = vld [vmem:[%s456 + $0x58] sm:$0xff]
  %v469 = vld [vmem:[%s456 + $0x60] sm:$0xff]
  %v470 = vld [vmem:[%s456 + $0x68] sm:$0xff]
  %v471 = vld [vmem:[%s456 + $0x70] sm:$0xff]
  %v472 = vld [vmem:[%s456 + $0x78] sm:$0xff]
  %v473 = vld [vmem:[%s456 + $0x80] sm:$0xff]
  %v474 = vld [vmem:[%s456 + $0x88] sm:$0xff]
  %v475 = vld [vmem:[%s456 + $0x90] sm:$0xff]
  %v476 = vld [vmem:[%s456 + $0x98] sm:$0xff]
  %v477 = vld [vmem:[%s456 + $0xa0] sm:$0xff]
  %v478 = vld [vmem:[%s456 + $0xa8] sm:$0xff]
  %v479 = vld [vmem:[%s456 + $0xb0] sm:$0xff]
  %v480 = vld [vmem:[%s456 + $0xb8] sm:$0xff]
  %v481 = vld [vmem:[%s456 + $0xc0] sm:$0xff]
  %v482 = vld [vmem:[%s456 + $0xc8] sm:$0xff]
  %v483 = vld [vmem:[%s456 + $0xd0] sm:$0xff]
  %v484 = vld [vmem:[%s456 + $0xd8] sm:$0xff]
  %v485 = vld [vmem:[%s456 + $0xe0] sm:$0xff]
  %v486 = vld [vmem:[%s456 + $0xe8] sm:$0xff]
  %v487 = vld [vmem:[%s456 + $0xf0] sm:$0xff]
  %v488 = vld [vmem:[%s456 + $0xf8] sm:$0xff]
  %v490 = vsel %vm62, %v458, 0
  %v493 = vsel %vm62, %v460, 0
  %v496 = vsel %vm62, %v462, 0
  %v499 = vsel %vm62, %v464, 0
  %v502 = vsel %vm62, %v466, 0
  %v505 = vsel %vm62, %v468, 0
  %v508 = vsel %vm62, %v470, 0
  %v511 = vsel %vm62, %v472, 0
  %v514 = vsel %vm62, %v474, 0
  %v517 = vsel %vm62, %v476, 0
  %v520 = vsel %vm62, %v478, 0
  %v523 = vsel %vm62, %v480, 0
  %v526 = vsel %vm62, %v482, 0
  %v529 = vsel %vm62, %v484, 0
  %v532 = vsel %vm62, %v486, 0
  %v535 = vsel %vm62, %v488, 0
  %537 = vmatpush.msra.mxu0 %v26
  %538 = vmatpush.msra.mxu0 %v25
  %539 = vmatpush.msra.mxu0 %v24
  %540 = vmatpush.msra.mxu0 %v23
  %541 = vmatpush.msra.mxu0 %v22
  %542 = vmatpush.msra.mxu0 %v21
  %543 = vmatpush.msra.mxu0 %v20
  %544 = vmatpush.msra.mxu0 %v19
  %545 = vmatpush.msra.mxu0 %v18
  %546 = vmatpush.msra.mxu0 %v17
  %547 = vmatpush.msra.mxu0 %v16
  %548 = vmatpush.msra.mxu0 %v15
  %549 = vmatpush.msra.mxu0 %v14
  %550 = vmatpush.msra.mxu0 %v13
  %551 = vmatpush.msra.mxu0 %v12
  %552 = vmatpush.msra.mxu0 %v11
  %553 = vmatmul.f32.gmra.mxu0 %v457
  %v554 = vpop.f32.mrf.mxu0
  %v555 = vadd.f32 0.0, %v554
  %556 = vmatmul.f32.gmra.mxu0 %v459
  %v557 = vpop.f32.mrf.mxu0
  %v558 = vadd.f32 0.0, %v557
  %559 = vmatmul.f32.gmra.mxu0 %v461
  %v560 = vpop.f32.mrf.mxu0
  %v561 = vadd.f32 0.0, %v560
  %562 = vmatmul.f32.gmra.mxu0 %v463
  %v563 = vpop.f32.mrf.mxu0
  %v564 = vadd.f32 0.0, %v563
  %565 = vmatmul.f32.gmra.mxu0 %v465
  %v566 = vpop.f32.mrf.mxu0
  %v567 = vadd.f32 0.0, %v566
  %568 = vmatmul.f32.gmra.mxu0 %v467
  %v569 = vpop.f32.mrf.mxu0
  %v570 = vadd.f32 0.0, %v569
  %571 = vmatmul.f32.gmra.mxu0 %v469
  %v572 = vpop.f32.mrf.mxu0
  %v573 = vadd.f32 0.0, %v572
  %574 = vmatmul.f32.gmra.mxu0 %v471
  %v575 = vpop.f32.mrf.mxu0
  %v576 = vadd.f32 0.0, %v575
  %577 = vmatmul.f32.gmra.mxu0 %v473
  %v578 = vpop.f32.mrf.mxu0
  %v579 = vadd.f32 0.0, %v578
  %580 = vmatmul.f32.gmra.mxu0 %v475
  %v581 = vpop.f32.mrf.mxu0
  %v582 = vadd.f32 0.0, %v581
  %583 = vmatmul.f32.gmra.mxu0 %v477
  %v584 = vpop.f32.mrf.mxu0
  %v585 = vadd.f32 0.0, %v584
  %586 = vmatmul.f32.gmra.mxu0 %v479
  %v587 = vpop.f32.mrf.mxu0
  %v588 = vadd.f32 0.0, %v587
  %589 = vmatmul.f32.gmra.mxu0 %v481
  %v590 = vpop.f32.mrf.mxu0
  %v591 = vadd.f32 0.0, %v590
  %592 = vmatmul.f32.gmra.mxu0 %v483
  %v593 = vpop.f32.mrf.mxu0
  %v594 = vadd.f32 0.0, %v593
  %595 = vmatmul.f32.gmra.mxu0 %v485
  %v596 = vpop.f32.mrf.mxu0
  %v597 = vadd.f32 0.0, %v596
  %598 = vmatmul.f32.gmra.mxu0 %v487
  %v599 = vpop.f32.mrf.mxu0
  %v600 = vadd.f32 0.0, %v599
  %601 = vdwg.mxu0
  %602 = vmatpush.msra.mxu0 0.0
  %603 = vmatpush.msra.mxu0 0.0
  %604 = vmatpush.msra.mxu0 0.0
  %605 = vmatpush.msra.mxu0 0.0
  %606 = vmatpush.msra.mxu0 0.0
  %607 = vmatpush.msra.mxu0 0.0
  %608 = vmatpush.msra.mxu0 0.0
  %609 = vmatpush.msra.mxu0 0.0
  %610 = vmatpush.msra.mxu0 0.0
  %611 = vmatpush.msra.mxu0 0.0
  %612 = vmatpush.msra.mxu0 0.0
  %613 = vmatpush.msra.mxu0 0.0
  %614 = vmatpush.msra.mxu0 0.0
  %615 = vmatpush.msra.mxu0 %v113
  %616 = vmatpush.msra.mxu0 %v28
  %617 = vmatpush.msra.mxu0 %v27
  %618 = vmatmul.f32.gmra.mxu0 %v490
  %v619 = vpop.f32.mrf.mxu0
  %v620 = vadd.f32 %v555, %v619
  %621 = vmatmul.f32.gmra.mxu0 %v493
  %v622 = vpop.f32.mrf.mxu0
  %v623 = vadd.f32 %v558, %v622
  %624 = vmatmul.f32.gmra.mxu0 %v496
  %v625 = vpop.f32.mrf.mxu0
  %v626 = vadd.f32 %v561, %v625
  %627 = vmatmul.f32.gmra.mxu0 %v499
  %v628 = vpop.f32.mrf.mxu0
  %v629 = vadd.f32 %v564, %v628
  %630 = vmatmul.f32.gmra.mxu0 %v502
  %v631 = vpop.f32.mrf.mxu0
  %v632 = vadd.f32 %v567, %v631
  %633 = vmatmul.f32.gmra.mxu0 %v505
  %v634 = vpop.f32.mrf.mxu0
  %v635 = vadd.f32 %v570, %v634
  %636 = vmatmul.f32.gmra.mxu0 %v508
  %v637 = vpop.f32.mrf.mxu0
  %v638 = vadd.f32 %v573, %v637
  %639 = vmatmul.f32.gmra.mxu0 %v511
  %v640 = vpop.f32.mrf.mxu0
  %v641 = vadd.f32 %v576, %v640
  %642 = vmatmul.f32.gmra.mxu0 %v514
  %v643 = vpop.f32.mrf.mxu0
  %v644 = vadd.f32 %v579, %v643
  %645 = vmatmul.f32.gmra.mxu0 %v517
  %v646 = vpop.f32.mrf.mxu0
  %v647 = vadd.f32 %v582, %v646
  %648 = vmatmul.f32.gmra.mxu0 %v520
  %v649 = vpop.f32.mrf.mxu0
  %v650 = vadd.f32 %v585, %v649
  %651 = vmatmul.f32.gmra.mxu0 %v523
  %v652 = vpop.f32.mrf.mxu0
  %v653 = vadd.f32 %v588, %v652
  %654 = vmatmul.f32.gmra.mxu0 %v526
  %v655 = vpop.f32.mrf.mxu0
  %v656 = vadd.f32 %v591, %v655
  %657 = vmatmul.f32.gmra.mxu0 %v529
  %v658 = vpop.f32.mrf.mxu0
  %v659 = vadd.f32 %v594, %v658
  %660 = vmatmul.f32.gmra.mxu0 %v532
  %v661 = vpop.f32.mrf.mxu0
  %v662 = vadd.f32 %v597, %v661
  %663 = vmatmul.f32.gmra.mxu0 %v535
  %v664 = vpop.f32.mrf.mxu0
  %v665 = vadd.f32 %v600, %v664
  %666 = vdwg.mxu0
  %s667 = scalar_lea.vmem %s0, 768
  %v668 = vld [vmem:[%s667] sm:$0xff]
  %v669 = vld [vmem:[%s667 + $0x8] sm:$0xff]
  %v670 = vld [vmem:[%s667 + $0x10] sm:$0xff]
  %v671 = vld [vmem:[%s667 + $0x18] sm:$0xff]
  %v672 = vld [vmem:[%s667 + $0x20] sm:$0xff]
  %v673 = vld [vmem:[%s667 + $0x28] sm:$0xff]
  %v674 = vld [vmem:[%s667 + $0x30] sm:$0xff]
  %v675 = vld [vmem:[%s667 + $0x38] sm:$0xff]
  %v676 = vld [vmem:[%s667 + $0x40] sm:$0xff]
  %v677 = vld [vmem:[%s667 + $0x48] sm:$0xff]
  %v678 = vld [vmem:[%s667 + $0x50] sm:$0xff]
  %v679 = vld [vmem:[%s667 + $0x58] sm:$0xff]
  %v680 = vld [vmem:[%s667 + $0x60] sm:$0xff]
  %v681 = vld [vmem:[%s667 + $0x68] sm:$0xff]
  %v682 = vld [vmem:[%s667 + $0x70] sm:$0xff]
  %v683 = vld [vmem:[%s667 + $0x78] sm:$0xff]
  %v684 = vld [vmem:[%s667 + $0x80] sm:$0xff]
  %v685 = vld [vmem:[%s667 + $0x88] sm:$0xff]
  %v686 = vld [vmem:[%s667 + $0x90] sm:$0xff]
  %v687 = vld [vmem:[%s667 + $0x98] sm:$0xff]
  %v688 = vld [vmem:[%s667 + $0xa0] sm:$0xff]
  %v689 = vld [vmem:[%s667 + $0xa8] sm:$0xff]
  %v690 = vld [vmem:[%s667 + $0xb0] sm:$0xff]
  %v691 = vld [vmem:[%s667 + $0xb8] sm:$0xff]
  %v692 = vld [vmem:[%s667 + $0xc0] sm:$0xff]
  %v693 = vld [vmem:[%s667 + $0xc8] sm:$0xff]
  %v694 = vld [vmem:[%s667 + $0xd0] sm:$0xff]
  %v695 = vld [vmem:[%s667 + $0xd8] sm:$0xff]
  %v696 = vld [vmem:[%s667 + $0xe0] sm:$0xff]
  %v697 = vld [vmem:[%s667 + $0xe8] sm:$0xff]
  %v698 = vld [vmem:[%s667 + $0xf0] sm:$0xff]
  %v699 = vld [vmem:[%s667 + $0xf8] sm:$0xff]
  %v701 = vsel %vm62, %v669, 0
  %v704 = vsel %vm62, %v671, 0
  %v707 = vsel %vm62, %v673, 0
  %v710 = vsel %vm62, %v675, 0
  %v713 = vsel %vm62, %v677, 0
  %v716 = vsel %vm62, %v679, 0
  %v719 = vsel %vm62, %v681, 0
  %v722 = vsel %vm62, %v683, 0
  %v725 = vsel %vm62, %v685, 0
  %v728 = vsel %vm62, %v687, 0
  %v731 = vsel %vm62, %v689, 0
  %v734 = vsel %vm62, %v691, 0
  %v737 = vsel %vm62, %v693, 0
  %v740 = vsel %vm62, %v695, 0
  %v743 = vsel %vm62, %v697, 0
  %v746 = vsel %vm62, %v699, 0
  %748 = vmatpush.msra.mxu0 %v26
  %749 = vmatpush.msra.mxu0 %v25
  %750 = vmatpush.msra.mxu0 %v24
  %751 = vmatpush.msra.mxu0 %v23
  %752 = vmatpush.msra.mxu0 %v22
  %753 = vmatpush.msra.mxu0 %v21
  %754 = vmatpush.msra.mxu0 %v20
  %755 = vmatpush.msra.mxu0 %v19
  %756 = vmatpush.msra.mxu0 %v18
  %757 = vmatpush.msra.mxu0 %v17
  %758 = vmatpush.msra.mxu0 %v16
  %759 = vmatpush.msra.mxu0 %v15
  %760 = vmatpush.msra.mxu0 %v14
  %761 = vmatpush.msra.mxu0 %v13
  %762 = vmatpush.msra.mxu0 %v12
  %763 = vmatpush.msra.mxu0 %v11
  %764 = vmatmul.f32.gmra.mxu0 %v668
  %v765 = vpop.f32.mrf.mxu0
  %v766 = vadd.f32 0.0, %v765
  %767 = vmatmul.f32.gmra.mxu0 %v670
  %v768 = vpop.f32.mrf.mxu0
  %v769 = vadd.f32 0.0, %v768
  %770 = vmatmul.f32.gmra.mxu0 %v672
  %v771 = vpop.f32.mrf.mxu0
  %v772 = vadd.f32 0.0, %v771
  %773 = vmatmul.f32.gmra.mxu0 %v674
  %v774 = vpop.f32.mrf.mxu0
  %v775 = vadd.f32 0.0, %v774
  %776 = vmatmul.f32.gmra.mxu0 %v676
  %v777 = vpop.f32.mrf.mxu0
  %v778 = vadd.f32 0.0, %v777
  %779 = vmatmul.f32.gmra.mxu0 %v678
  %v780 = vpop.f32.mrf.mxu0
  %v781 = vadd.f32 0.0, %v780
  %782 = vmatmul.f32.gmra.mxu0 %v680
  %v783 = vpop.f32.mrf.mxu0
  %v784 = vadd.f32 0.0, %v783
  %785 = vmatmul.f32.gmra.mxu0 %v682
  %v786 = vpop.f32.mrf.mxu0
  %v787 = vadd.f32 0.0, %v786
  %788 = vmatmul.f32.gmra.mxu0 %v684
  %v789 = vpop.f32.mrf.mxu0
  %v790 = vadd.f32 0.0, %v789
  %791 = vmatmul.f32.gmra.mxu0 %v686
  %v792 = vpop.f32.mrf.mxu0
  %v793 = vadd.f32 0.0, %v792
  %794 = vmatmul.f32.gmra.mxu0 %v688
  %v795 = vpop.f32.mrf.mxu0
  %v796 = vadd.f32 0.0, %v795
  %797 = vmatmul.f32.gmra.mxu0 %v690
  %v798 = vpop.f32.mrf.mxu0
  %v799 = vadd.f32 0.0, %v798
  %800 = vmatmul.f32.gmra.mxu0 %v692
  %v801 = vpop.f32.mrf.mxu0
  %v802 = vadd.f32 0.0, %v801
  %803 = vmatmul.f32.gmra.mxu0 %v694
  %v804 = vpop.f32.mrf.mxu0
  %v805 = vadd.f32 0.0, %v804
  %806 = vmatmul.f32.gmra.mxu0 %v696
  %v807 = vpop.f32.mrf.mxu0
  %v808 = vadd.f32 0.0, %v807
  %809 = vmatmul.f32.gmra.mxu0 %v698
  %v810 = vpop.f32.mrf.mxu0
  %v811 = vadd.f32 0.0, %v810
  %812 = vdwg.mxu0
  %813 = vmatpush.msra.mxu0 0.0
  %814 = vmatpush.msra.mxu0 0.0
  %815 = vmatpush.msra.mxu0 0.0
  %816 = vmatpush.msra.mxu0 0.0
  %817 = vmatpush.msra.mxu0 0.0
  %818 = vmatpush.msra.mxu0 0.0
  %819 = vmatpush.msra.mxu0 0.0
  %820 = vmatpush.msra.mxu0 0.0
  %821 = vmatpush.msra.mxu0 0.0
  %822 = vmatpush.msra.mxu0 0.0
  %823 = vmatpush.msra.mxu0 0.0
  %824 = vmatpush.msra.mxu0 0.0
  %825 = vmatpush.msra.mxu0 0.0
  %826 = vmatpush.msra.mxu0 %v113
  %827 = vmatpush.msra.mxu0 %v28
  %828 = vmatpush.msra.mxu0 %v27
  %829 = vmatmul.f32.gmra.mxu0 %v701
  %v830 = vpop.f32.mrf.mxu0
  %v831 = vadd.f32 %v766, %v830
  %832 = vmatmul.f32.gmra.mxu0 %v704
  %v833 = vpop.f32.mrf.mxu0
  %v834 = vadd.f32 %v769, %v833
  %835 = vmatmul.f32.gmra.mxu0 %v707
  %v836 = vpop.f32.mrf.mxu0
  %v837 = vadd.f32 %v772, %v836
  %838 = vmatmul.f32.gmra.mxu0 %v710
  %v839 = vpop.f32.mrf.mxu0
  %v840 = vadd.f32 %v775, %v839
  %841 = vmatmul.f32.gmra.mxu0 %v713
  %v842 = vpop.f32.mrf.mxu0
  %v843 = vadd.f32 %v778, %v842
  %844 = vmatmul.f32.gmra.mxu0 %v716
  %v845 = vpop.f32.mrf.mxu0
  %v846 = vadd.f32 %v781, %v845
  %847 = vmatmul.f32.gmra.mxu0 %v719
  %v848 = vpop.f32.mrf.mxu0
  %v849 = vadd.f32 %v784, %v848
  %850 = vmatmul.f32.gmra.mxu0 %v722
  %v851 = vpop.f32.mrf.mxu0
  %v852 = vadd.f32 %v787, %v851
  %853 = vmatmul.f32.gmra.mxu0 %v725
  %v854 = vpop.f32.mrf.mxu0
  %v855 = vadd.f32 %v790, %v854
  %856 = vmatmul.f32.gmra.mxu0 %v728
  %v857 = vpop.f32.mrf.mxu0
  %v858 = vadd.f32 %v793, %v857
  %859 = vmatmul.f32.gmra.mxu0 %v731
  %v860 = vpop.f32.mrf.mxu0
  %v861 = vadd.f32 %v796, %v860
  %862 = vmatmul.f32.gmra.mxu0 %v734
  %v863 = vpop.f32.mrf.mxu0
  %v864 = vadd.f32 %v799, %v863
  %865 = vmatmul.f32.gmra.mxu0 %v737
  %v866 = vpop.f32.mrf.mxu0
  %v867 = vadd.f32 %v802, %v866
  %868 = vmatmul.f32.gmra.mxu0 %v740
  %v869 = vpop.f32.mrf.mxu0
  %v870 = vadd.f32 %v805, %v869
  %871 = vmatmul.f32.gmra.mxu0 %v743
  %v872 = vpop.f32.mrf.mxu0
  %v873 = vadd.f32 %v808, %v872
  %874 = vmatmul.f32.gmra.mxu0 %v746
  %v875 = vpop.f32.mrf.mxu0
  %v876 = vadd.f32 %v811, %v875
  %877 = vdwg.mxu0
  %v878 = vadd.f32 %v198, %v409
  %v879 = vadd.f32 %v201, %v412
  %v880 = vadd.f32 %v204, %v415
  %v881 = vadd.f32 %v207, %v418
  %v882 = vadd.f32 %v210, %v421
  %v883 = vadd.f32 %v213, %v424
  %v884 = vadd.f32 %v216, %v427
  %v885 = vadd.f32 %v219, %v430
  %v886 = vadd.f32 %v222, %v433
  %v887 = vadd.f32 %v225, %v436
  %v888 = vadd.f32 %v228, %v439
  %v889 = vadd.f32 %v231, %v442
  %v890 = vadd.f32 %v234, %v445
  %v891 = vadd.f32 %v237, %v448
  %v892 = vadd.f32 %v240, %v451
  %v893 = vadd.f32 %v243, %v454
  %v894 = vadd.f32 %v878, %v620
  %v895 = vadd.f32 %v879, %v623
  %v896 = vadd.f32 %v880, %v626
  %v897 = vadd.f32 %v881, %v629
  %v898 = vadd.f32 %v882, %v632
  %v899 = vadd.f32 %v883, %v635
  %v900 = vadd.f32 %v884, %v638
  %v901 = vadd.f32 %v885, %v641
  %v902 = vadd.f32 %v886, %v644
  %v903 = vadd.f32 %v887, %v647
  %v904 = vadd.f32 %v888, %v650
  %v905 = vadd.f32 %v889, %v653
  %v906 = vadd.f32 %v890, %v656
  %v907 = vadd.f32 %v891, %v659
  %v908 = vadd.f32 %v892, %v662
  %v909 = vadd.f32 %v893, %v665
  %v910 = vadd.f32 %v894, %v831
  %v911 = vadd.f32 %v895, %v834
  %v912 = vadd.f32 %v896, %v837
  %v913 = vadd.f32 %v897, %v840
  %v914 = vadd.f32 %v898, %v843
  %v915 = vadd.f32 %v899, %v846
  %v916 = vadd.f32 %v900, %v849
  %v917 = vadd.f32 %v901, %v852
  %v918 = vadd.f32 %v902, %v855
  %v919 = vadd.f32 %v903, %v858
  %v920 = vadd.f32 %v904, %v861
  %v921 = vadd.f32 %v905, %v864
  %v922 = vadd.f32 %v906, %v867
  %v923 = vadd.f32 %v907, %v870
  %v924 = vadd.f32 %v908, %v873
  %v925 = vadd.f32 %v909, %v876
  %vm926 = vcmask 261120
  %v927 = vsel %vm926, %v910, 0.0
  %v928 = vsel %vm926, %v911, 0.0
  %v929 = vadd.f32 %v927, %v928
  %v930 = vsel %vm926, %v912, 0.0
  %v931 = vadd.f32 %v929, %v930
  %v932 = vsel %vm926, %v913, 0.0
  %v933 = vadd.f32 %v931, %v932
  %v934 = vsel %vm926, %v914, 0.0
  %v935 = vadd.f32 %v933, %v934
  %v936 = vsel %vm926, %v915, 0.0
  %v937 = vadd.f32 %v935, %v936
  %v938 = vsel %vm926, %v916, 0.0
  %v939 = vadd.f32 %v937, %v938
  %v940 = vsel %vm926, %v917, 0.0
  %v941 = vadd.f32 %v939, %v940
  %v942 = vsel %vm926, %v918, 0.0
  %v943 = vadd.f32 %v941, %v942
  %v944 = vsel %vm926, %v919, 0.0
  %v945 = vadd.f32 %v943, %v944
  %v946 = vsel %vm926, %v920, 0.0
  %v947 = vadd.f32 %v945, %v946
  %v948 = vsel %vm926, %v921, 0.0
  %v949 = vadd.f32 %v947, %v948
  %v950 = vsel %vm926, %v922, 0.0
  %v951 = vadd.f32 %v949, %v950
  %v952 = vsel %vm926, %v923, 0.0
  %v953 = vadd.f32 %v951, %v952
  %v954 = vsel %vm926, %v924, 0.0
  %v955 = vadd.f32 %v953, %v954
  %v956 = vsel %vm926, %v925, 0.0
  %v957 = vadd.f32 %v955, %v956
  %v958 = vrot.slane %v957, 4
  %v959 = vadd.f32 %v957, %v958
  %v960 = vrot.slane %v959, 2
  %v961 = vadd.f32 %v959, %v960
  %v962 = vrot.slane %v961, 1
  %v963 = vadd.f32 %v961, %v962
  %v964 = vrcp.pop 512.0
  %v965 = vmul.f32 512.0, %v964
  %v966 = vsub.f32 1.0, %v965
  %v967 = vmul.f32 %v964, %v966
  %v968 = vadd.f32 %v964, %v967
  %vm969 = vweird.f32 %v964
  %v970 = vsel %vm969, %v964, %v968
  %v971 = vmul.f32 %v963, %v970
  %v972 = vsub.f32 %v198, %v971
  %v973 = vsub.f32 %v201, %v971
  %v974 = vsub.f32 %v204, %v971
  %v975 = vsub.f32 %v207, %v971
  %v976 = vsub.f32 %v210, %v971
  %v977 = vsub.f32 %v213, %v971
  %v978 = vsub.f32 %v216, %v971
  %v979 = vsub.f32 %v219, %v971
  %v980 = vsub.f32 %v222, %v971
  %v981 = vsub.f32 %v225, %v971
  %v982 = vsub.f32 %v228, %v971
  %v983 = vsub.f32 %v231, %v971
  %v984 = vsub.f32 %v234, %v971
  %v985 = vsub.f32 %v237, %v971
  %v986 = vsub.f32 %v240, %v971
  %v987 = vsub.f32 %v243, %v971
  %v988 = vmul.f32 %v972, %v972
  %v989 = vmul.f32 %v973, %v973
  %v990 = vmul.f32 %v974, %v974
  %v991 = vmul.f32 %v975, %v975
  %v992 = vmul.f32 %v976, %v976
  %v993 = vmul.f32 %v977, %v977
  %v994 = vmul.f32 %v978, %v978
  %v995 = vmul.f32 %v979, %v979
  %v996 = vmul.f32 %v980, %v980
  %v997 = vmul.f32 %v981, %v981
  %v998 = vmul.f32 %v982, %v982
  %v999 = vmul.f32 %v983, %v983
  %v1000 = vmul.f32 %v984, %v984
  %v1001 = vmul.f32 %v985, %v985
  %v1002 = vmul.f32 %v986, %v986
  %v1003 = vmul.f32 %v987, %v987
  %v1004 = vsel %vm926, %v988, 0.0
  %v1005 = vsel %vm926, %v989, 0.0
  %v1006 = vadd.f32 %v1004, %v1005
  %v1007 = vsel %vm926, %v990, 0.0
  %v1008 = vadd.f32 %v1006, %v1007
  %v1009 = vsel %vm926, %v991, 0.0
  %v1010 = vadd.f32 %v1008, %v1009
  %v1011 = vsel %vm926, %v992, 0.0
  %v1012 = vadd.f32 %v1010, %v1011
  %v1013 = vsel %vm926, %v993, 0.0
  %v1014 = vadd.f32 %v1012, %v1013
  %v1015 = vsel %vm926, %v994, 0.0
  %v1016 = vadd.f32 %v1014, %v1015
  %v1017 = vsel %vm926, %v995, 0.0
  %v1018 = vadd.f32 %v1016, %v1017
  %v1019 = vsel %vm926, %v996, 0.0
  %v1020 = vadd.f32 %v1018, %v1019
  %v1021 = vsel %vm926, %v997, 0.0
  %v1022 = vadd.f32 %v1020, %v1021
  %v1023 = vsel %vm926, %v998, 0.0
  %v1024 = vadd.f32 %v1022, %v1023
  %v1025 = vsel %vm926, %v999, 0.0
  %v1026 = vadd.f32 %v1024, %v1025
  %v1027 = vsel %vm926, %v1000, 0.0
  %v1028 = vadd.f32 %v1026, %v1027
  %v1029 = vsel %vm926, %v1001, 0.0
  %v1030 = vadd.f32 %v1028, %v1029
  %v1031 = vsel %vm926, %v1002, 0.0
  %v1032 = vadd.f32 %v1030, %v1031
  %v1033 = vsel %vm926, %v1003, 0.0
  %v1034 = vadd.f32 %v1032, %v1033
  %v1035 = vrot.slane %v1034, 4
  %v1036 = vadd.f32 %v1034, %v1035
  %v1037 = vrot.slane %v1036, 2
  %v1038 = vadd.f32 %v1036, %v1037
  %v1039 = vrot.slane %v1038, 1
  %v1040 = vadd.f32 %v1038, %v1039
  %v1041 = vsub.f32 %v409, %v971
  %v1042 = vsub.f32 %v412, %v971
  %v1043 = vsub.f32 %v415, %v971
  %v1044 = vsub.f32 %v418, %v971
  %v1045 = vsub.f32 %v421, %v971
  %v1046 = vsub.f32 %v424, %v971
  %v1047 = vsub.f32 %v427, %v971
  %v1048 = vsub.f32 %v430, %v971
  %v1049 = vsub.f32 %v433, %v971
  %v1050 = vsub.f32 %v436, %v971
  %v1051 = vsub.f32 %v439, %v971
  %v1052 = vsub.f32 %v442, %v971
  %v1053 = vsub.f32 %v445, %v971
  %v1054 = vsub.f32 %v448, %v971
  %v1055 = vsub.f32 %v451, %v971
  %v1056 = vsub.f32 %v454, %v971
  %v1057 = vmul.f32 %v1041, %v1041
  %v1058 = vmul.f32 %v1042, %v1042
  %v1059 = vmul.f32 %v1043, %v1043
  %v1060 = vmul.f32 %v1044, %v1044
  %v1061 = vmul.f32 %v1045, %v1045
  %v1062 = vmul.f32 %v1046, %v1046
  %v1063 = vmul.f32 %v1047, %v1047
  %v1064 = vmul.f32 %v1048, %v1048
  %v1065 = vmul.f32 %v1049, %v1049
  %v1066 = vmul.f32 %v1050, %v1050
  %v1067 = vmul.f32 %v1051, %v1051
  %v1068 = vmul.f32 %v1052, %v1052
  %v1069 = vmul.f32 %v1053, %v1053
  %v1070 = vmul.f32 %v1054, %v1054
  %v1071 = vmul.f32 %v1055, %v1055
  %v1072 = vmul.f32 %v1056, %v1056
  %v1073 = vsel %vm926, %v1057, 0.0
  %v1074 = vsel %vm926, %v1058, 0.0
  %v1075 = vadd.f32 %v1073, %v1074
  %v1076 = vsel %vm926, %v1059, 0.0
  %v1077 = vadd.f32 %v1075, %v1076
  %v1078 = vsel %vm926, %v1060, 0.0
  %v1079 = vadd.f32 %v1077, %v1078
  %v1080 = vsel %vm926, %v1061, 0.0
  %v1081 = vadd.f32 %v1079, %v1080
  %v1082 = vsel %vm926, %v1062, 0.0
  %v1083 = vadd.f32 %v1081, %v1082
  %v1084 = vsel %vm926, %v1063, 0.0
  %v1085 = vadd.f32 %v1083, %v1084
  %v1086 = vsel %vm926, %v1064, 0.0
  %v1087 = vadd.f32 %v1085, %v1086
  %v1088 = vsel %vm926, %v1065, 0.0
  %v1089 = vadd.f32 %v1087, %v1088
  %v1090 = vsel %vm926, %v1066, 0.0
  %v1091 = vadd.f32 %v1089, %v1090
  %v1092 = vsel %vm926, %v1067, 0.0
  %v1093 = vadd.f32 %v1091, %v1092
  %v1094 = vsel %vm926, %v1068, 0.0
  %v1095 = vadd.f32 %v1093, %v1094
  %v1096 = vsel %vm926, %v1069, 0.0
  %v1097 = vadd.f32 %v1095, %v1096
  %v1098 = vsel %vm926, %v1070, 0.0
  %v1099 = vadd.f32 %v1097, %v1098
  %v1100 = vsel %vm926, %v1071, 0.0
  %v1101 = vadd.f32 %v1099, %v1100
  %v1102 = vsel %vm926, %v1072, 0.0
  %v1103 = vadd.f32 %v1101, %v1102
  %v1104 = vrot.slane %v1103, 4
  %v1105 = vadd.f32 %v1103, %v1104
  %v1106 = vrot.slane %v1105, 2
  %v1107 = vadd.f32 %v1105, %v1106
  %v1108 = vrot.slane %v1107, 1
  %v1109 = vadd.f32 %v1107, %v1108
  %v1110 = vadd.f32 %v1040, %v1109
  %v1111 = vsub.f32 %v620, %v971
  %v1112 = vsub.f32 %v623, %v971
  %v1113 = vsub.f32 %v626, %v971
  %v1114 = vsub.f32 %v629, %v971
  %v1115 = vsub.f32 %v632, %v971
  %v1116 = vsub.f32 %v635, %v971
  %v1117 = vsub.f32 %v638, %v971
  %v1118 = vsub.f32 %v641, %v971
  %v1119 = vsub.f32 %v644, %v971
  %v1120 = vsub.f32 %v647, %v971
  %v1121 = vsub.f32 %v650, %v971
  %v1122 = vsub.f32 %v653, %v971
  %v1123 = vsub.f32 %v656, %v971
  %v1124 = vsub.f32 %v659, %v971
  %v1125 = vsub.f32 %v662, %v971
  %v1126 = vsub.f32 %v665, %v971
  %v1127 = vmul.f32 %v1111, %v1111
  %v1128 = vmul.f32 %v1112, %v1112
  %v1129 = vmul.f32 %v1113, %v1113
  %v1130 = vmul.f32 %v1114, %v1114
  %v1131 = vmul.f32 %v1115, %v1115
  %v1132 = vmul.f32 %v1116, %v1116
  %v1133 = vmul.f32 %v1117, %v1117
  %v1134 = vmul.f32 %v1118, %v1118
  %v1135 = vmul.f32 %v1119, %v1119
  %v1136 = vmul.f32 %v1120, %v1120
  %v1137 = vmul.f32 %v1121, %v1121
  %v1138 = vmul.f32 %v1122, %v1122
  %v1139 = vmul.f32 %v1123, %v1123
  %v1140 = vmul.f32 %v1124, %v1124
  %v1141 = vmul.f32 %v1125, %v1125
  %v1142 = vmul.f32 %v1126, %v1126
  %v1143 = vsel %vm926, %v1127, 0.0
  %v1144 = vsel %vm926, %v1128, 0.0
  %v1145 = vadd.f32 %v1143, %v1144
  %v1146 = vsel %vm926, %v1129, 0.0
  %v1147 = vadd.f32 %v1145, %v1146
  %v1148 = vsel %vm926, %v1130, 0.0
  %v1149 = vadd.f32 %v1147, %v1148
  %v1150 = vsel %vm926, %v1131, 0.0
  %v1151 = vadd.f32 %v1149, %v1150
  %v1152 = vsel %vm926, %v1132, 0.0
  %v1153 = vadd.f32 %v1151, %v1152
  %v1154 = vsel %vm926, %v1133, 0.0
  %v1155 = vadd.f32 %v1153, %v1154
  %v1156 = vsel %vm926, %v1134, 0.0
  %v1157 = vadd.f32 %v1155, %v1156
  %v1158 = vsel %vm926, %v1135, 0.0
  %v1159 = vadd.f32 %v1157, %v1158
  %v1160 = vsel %vm926, %v1136, 0.0
  %v1161 = vadd.f32 %v1159, %v1160
  %v1162 = vsel %vm926, %v1137, 0.0
  %v1163 = vadd.f32 %v1161, %v1162
  %v1164 = vsel %vm926, %v1138, 0.0
  %v1165 = vadd.f32 %v1163, %v1164
  %v1166 = vsel %vm926, %v1139, 0.0
  %v1167 = vadd.f32 %v1165, %v1166
  %v1168 = vsel %vm926, %v1140, 0.0
  %v1169 = vadd.f32 %v1167, %v1168
  %v1170 = vsel %vm926, %v1141, 0.0
  %v1171 = vadd.f32 %v1169, %v1170
  %v1172 = vsel %vm926, %v1142, 0.0
  %v1173 = vadd.f32 %v1171, %v1172
  %v1174 = vrot.slane %v1173, 4
  %v1175 = vadd.f32 %v1173, %v1174
  %v1176 = vrot.slane %v1175, 2
  %v1177 = vadd.f32 %v1175, %v1176
  %v1178 = vrot.slane %v1177, 1
  %v1179 = vadd.f32 %v1177, %v1178
  %v1180 = vadd.f32 %v1110, %v1179
  %v1181 = vsub.f32 %v831, %v971
  %v1182 = vsub.f32 %v834, %v971
  %v1183 = vsub.f32 %v837, %v971
  %v1184 = vsub.f32 %v840, %v971
  %v1185 = vsub.f32 %v843, %v971
  %v1186 = vsub.f32 %v846, %v971
  %v1187 = vsub.f32 %v849, %v971
  %v1188 = vsub.f32 %v852, %v971
  %v1189 = vsub.f32 %v855, %v971
  %v1190 = vsub.f32 %v858, %v971
  %v1191 = vsub.f32 %v861, %v971
  %v1192 = vsub.f32 %v864, %v971
  %v1193 = vsub.f32 %v867, %v971
  %v1194 = vsub.f32 %v870, %v971
  %v1195 = vsub.f32 %v873, %v971
  %v1196 = vsub.f32 %v876, %v971
  %v1197 = vmul.f32 %v1181, %v1181
  %v1198 = vmul.f32 %v1182, %v1182
  %v1199 = vmul.f32 %v1183, %v1183
  %v1200 = vmul.f32 %v1184, %v1184
  %v1201 = vmul.f32 %v1185, %v1185
  %v1202 = vmul.f32 %v1186, %v1186
  %v1203 = vmul.f32 %v1187, %v1187
  %v1204 = vmul.f32 %v1188, %v1188
  %v1205 = vmul.f32 %v1189, %v1189
  %v1206 = vmul.f32 %v1190, %v1190
  %v1207 = vmul.f32 %v1191, %v1191
  %v1208 = vmul.f32 %v1192, %v1192
  %v1209 = vmul.f32 %v1193, %v1193
  %v1210 = vmul.f32 %v1194, %v1194
  %v1211 = vmul.f32 %v1195, %v1195
  %v1212 = vmul.f32 %v1196, %v1196
  %v1213 = vsel %vm926, %v1197, 0.0
  %v1214 = vsel %vm926, %v1198, 0.0
  %v1215 = vadd.f32 %v1213, %v1214
  %v1216 = vsel %vm926, %v1199, 0.0
  %v1217 = vadd.f32 %v1215, %v1216
  %v1218 = vsel %vm926, %v1200, 0.0
  %v1219 = vadd.f32 %v1217, %v1218
  %v1220 = vsel %vm926, %v1201, 0.0
  %v1221 = vadd.f32 %v1219, %v1220
  %v1222 = vsel %vm926, %v1202, 0.0
  %v1223 = vadd.f32 %v1221, %v1222
  %v1224 = vsel %vm926, %v1203, 0.0
  %v1225 = vadd.f32 %v1223, %v1224
  %v1226 = vsel %vm926, %v1204, 0.0
  %v1227 = vadd.f32 %v1225, %v1226
  %v1228 = vsel %vm926, %v1205, 0.0
  %v1229 = vadd.f32 %v1227, %v1228
  %v1230 = vsel %vm926, %v1206, 0.0
  %v1231 = vadd.f32 %v1229, %v1230
  %v1232 = vsel %vm926, %v1207, 0.0
  %v1233 = vadd.f32 %v1231, %v1232
  %v1234 = vsel %vm926, %v1208, 0.0
  %v1235 = vadd.f32 %v1233, %v1234
  %v1236 = vsel %vm926, %v1209, 0.0
  %v1237 = vadd.f32 %v1235, %v1236
  %v1238 = vsel %vm926, %v1210, 0.0
  %v1239 = vadd.f32 %v1237, %v1238
  %v1240 = vsel %vm926, %v1211, 0.0
  %v1241 = vadd.f32 %v1239, %v1240
  %v1242 = vsel %vm926, %v1212, 0.0
  %v1243 = vadd.f32 %v1241, %v1242
  %v1244 = vrot.slane %v1243, 4
  %v1245 = vadd.f32 %v1243, %v1244
  %v1246 = vrot.slane %v1245, 2
  %v1247 = vadd.f32 %v1245, %v1246
  %v1248 = vrot.slane %v1247, 1
  %v1249 = vadd.f32 %v1247, %v1248
  %v1250 = vadd.f32 %v1180, %v1249
  %v1251 = vmul.f32 %v1250, %v970
  %v1252 = vadd.f32 %v1251, 1e-05
  %v1253 = vrsqrt.pop %v1252
  %v1254 = vmul.f32 %v1253, %v1252
  %v1255 = vmul.f32 %v1254, %v1253
  %v1256 = vmul.f32 0.5, %v1255
  %v1257 = vsub.f32 1.5, %v1256
  %v1258 = vmul.f32 %v1253, %v1257
  %vm1259 = vweird.f32 %v1252
  %vm1260 = vweird.f32 %v1253
  %vm1261 = vmor %vm1259, %vm1260
  %v1262 = vsel %vm1261, %v1253, %v1258
  %v1263 = vsub.f32 0.0, %v971
  %v1264 = vmul.f32 %v1263, %v1262
  %v1265 = vmax.f32 %v198, %v409
  %v1266 = vmax.f32 %v201, %v412
  %v1267 = vmax.f32 %v204, %v415
  %v1268 = vmax.f32 %v207, %v418
  %v1269 = vmax.f32 %v210, %v421
  %v1270 = vmax.f32 %v213, %v424
  %v1271 = vmax.f32 %v216, %v427
  %v1272 = vmax.f32 %v219, %v430
  %v1273 = vmax.f32 %v222, %v433
  %v1274 = vmax.f32 %v225, %v436
  %v1275 = vmax.f32 %v228, %v439
  %v1276 = vmax.f32 %v231, %v442
  %v1277 = vmax.f32 %v234, %v445
  %v1278 = vmax.f32 %v237, %v448
  %v1279 = vmax.f32 %v240, %v451
  %v1280 = vmax.f32 %v243, %v454
  %v1281 = vmax.f32 %v620, %v831
  %v1282 = vmax.f32 %v623, %v834
  %v1283 = vmax.f32 %v626, %v837
  %v1284 = vmax.f32 %v629, %v840
  %v1285 = vmax.f32 %v632, %v843
  %v1286 = vmax.f32 %v635, %v846
  %v1287 = vmax.f32 %v638, %v849
  %v1288 = vmax.f32 %v641, %v852
  %v1289 = vmax.f32 %v644, %v855
  %v1290 = vmax.f32 %v647, %v858
  %v1291 = vmax.f32 %v650, %v861
  %v1292 = vmax.f32 %v653, %v864
  %v1293 = vmax.f32 %v656, %v867
  %v1294 = vmax.f32 %v659, %v870
  %v1295 = vmax.f32 %v662, %v873
  %v1296 = vmax.f32 %v665, %v876
  %v1297 = vmax.f32 %v1265, %v1281
  %v1298 = vmax.f32 %v1266, %v1282
  %v1299 = vmax.f32 %v1267, %v1283
  %v1300 = vmax.f32 %v1268, %v1284
  %v1301 = vmax.f32 %v1269, %v1285
  %v1302 = vmax.f32 %v1270, %v1286
  %v1303 = vmax.f32 %v1271, %v1287
  %v1304 = vmax.f32 %v1272, %v1288
  %v1305 = vmax.f32 %v1273, %v1289
  %v1306 = vmax.f32 %v1274, %v1290
  %v1307 = vmax.f32 %v1275, %v1291
  %v1308 = vmax.f32 %v1276, %v1292
  %v1309 = vmax.f32 %v1277, %v1293
  %v1310 = vmax.f32 %v1278, %v1294
  %v1311 = vmax.f32 %v1279, %v1295
  %v1312 = vmax.f32 %v1280, %v1296
  %v1313 = vmul.f32 %v1297, %v1262
  %v1314 = vmul.f32 %v1298, %v1262
  %v1315 = vmul.f32 %v1299, %v1262
  %v1316 = vmul.f32 %v1300, %v1262
  %v1317 = vmul.f32 %v1301, %v1262
  %v1318 = vmul.f32 %v1302, %v1262
  %v1319 = vmul.f32 %v1303, %v1262
  %v1320 = vmul.f32 %v1304, %v1262
  %v1321 = vmul.f32 %v1305, %v1262
  %v1322 = vmul.f32 %v1306, %v1262
  %v1323 = vmul.f32 %v1307, %v1262
  %v1324 = vmul.f32 %v1308, %v1262
  %v1325 = vmul.f32 %v1309, %v1262
  %v1326 = vmul.f32 %v1310, %v1262
  %v1327 = vmul.f32 %v1311, %v1262
  %v1328 = vmul.f32 %v1312, %v1262
  %v1329 = vadd.f32 %v1313, %v1264
  %v1330 = vadd.f32 %v1314, %v1264
  %v1331 = vadd.f32 %v1315, %v1264
  %v1332 = vadd.f32 %v1316, %v1264
  %v1333 = vadd.f32 %v1317, %v1264
  %v1334 = vadd.f32 %v1318, %v1264
  %v1335 = vadd.f32 %v1319, %v1264
  %v1336 = vadd.f32 %v1320, %v1264
  %v1337 = vadd.f32 %v1321, %v1264
  %v1338 = vadd.f32 %v1322, %v1264
  %v1339 = vadd.f32 %v1323, %v1264
  %v1340 = vadd.f32 %v1324, %v1264
  %v1341 = vadd.f32 %v1325, %v1264
  %v1342 = vadd.f32 %v1326, %v1264
  %v1343 = vadd.f32 %v1327, %v1264
  %v1344 = vadd.f32 %v1328, %v1264
  %v1345 = vmax.f32 %v1329, 0.0
  %v1346 = vmax.f32 %v1330, 0.0
  %v1347 = vmax.f32 %v1331, 0.0
  %v1348 = vmax.f32 %v1332, 0.0
  %v1349 = vmax.f32 %v1333, 0.0
  %v1350 = vmax.f32 %v1334, 0.0
  %v1351 = vmax.f32 %v1335, 0.0
  %v1352 = vmax.f32 %v1336, 0.0
  %v1353 = vmax.f32 %v1337, 0.0
  %v1354 = vmax.f32 %v1338, 0.0
  %v1355 = vmax.f32 %v1339, 0.0
  %v1356 = vmax.f32 %v1340, 0.0
  %v1357 = vmax.f32 %v1341, 0.0
  %v1358 = vmax.f32 %v1342, 0.0
  %v1359 = vmax.f32 %v1343, 0.0
  %v1360 = vmax.f32 %v1344, 0.0
  %1361 = vst.msk [vmem:[%s2] sm:$0xff] %vm926, %v1345
  %1362 = vst.msk [vmem:[%s2 + $0x8] sm:$0xff] %vm926, %v1346
  %1363 = vst.msk [vmem:[%s2 + $0x10] sm:$0xff] %vm926, %v1347
  %1364 = vst.msk [vmem:[%s2 + $0x18] sm:$0xff] %vm926, %v1348
  %1365 = vst.msk [vmem:[%s2 + $0x20] sm:$0xff] %vm926, %v1349
  %1366 = vst.msk [vmem:[%s2 + $0x28] sm:$0xff] %vm926, %v1350
  %1367 = vst.msk [vmem:[%s2 + $0x30] sm:$0xff] %vm926, %v1351
  %1368 = vst.msk [vmem:[%s2 + $0x38] sm:$0xff] %vm926, %v1352
  %1369 = vst.msk [vmem:[%s2 + $0x40] sm:$0xff] %vm926, %v1353
  %1370 = vst.msk [vmem:[%s2 + $0x48] sm:$0xff] %vm926, %v1354
  %1371 = vst.msk [vmem:[%s2 + $0x50] sm:$0xff] %vm926, %v1355
  %1372 = vst.msk [vmem:[%s2 + $0x58] sm:$0xff] %vm926, %v1356
  %1373 = vst.msk [vmem:[%s2 + $0x60] sm:$0xff] %vm926, %v1357
  %1374 = vst.msk [vmem:[%s2 + $0x68] sm:$0xff] %vm926, %v1358
  %1375 = vst.msk [vmem:[%s2 + $0x70] sm:$0xff] %vm926, %v1359
  %1376 = vst.msk [vmem:[%s2 + $0x78] sm:$0xff] %vm926, %v1360
  // Predicated region
  $region10: #{autoencoder_forward.6} parent=0 // pred_check
    _
  $region11: #{autoencoder_forward.6} parent=0 // pred_check_branch
    %1378 = sbr.rel (0) target = $region13
  $region12: #{autoencoder_forward.6} parent=0 // pred_region
    _
  $region13: #{autoencoder_forward.6} parent=0 // pred_fallthru
    _
  // Predicated region
  $region14: #{autoencoder_forward.6} parent=0 // pred_check
    _
  $region15: #{autoencoder_forward.6} parent=0 // pred_check_branch
    %1380 = sbr.rel (0) target = $region17
  $region16: #{autoencoder_forward.6} parent=0 // pred_region
    _
  $region17: #{autoencoder_forward.6} parent=0 // pred_fallthru
    _

// kernel: autoencoder_forward.8
$region0: #{autoencoder_forward.8}
  #allocation0 [shape = 'u32[]', space=smem, size = 0x4, offset = 0x4, fixed_abs, tag = 'smem constant byte address 0x4 - core index']
  #allocation1 [shape = 'u32[72,128]{1,0:T(1,128)}', space=vmem, size = 0x9000, scoped, tag = 'internal scratch']
  %s0 = inlined_call_operand.vmem [shape: f32[4,8,576], index: 0, kind: input, shape index: {}]
  %s1 = inlined_call_operand.vmem [shape: f32[576,128], index: 1, kind: input, shape index: {}]
  %s2 = inlined_call_operand.vmem [shape: f32[8,128], index: 2, kind: output, shape index: {}]
  %s3 = sld [smem:[#allocation0]]
  $region18: #{autoencoder_forward.8} parent=0
    _
  %s5 = ssub.s32 1, %s3
  %s6 = scalar_select 0, %s5, %s3
  // Predicated region
  $region2: #{autoencoder_forward.8} parent=0 // pred_check
    _
  $region3: #{autoencoder_forward.8} parent=0 // pred_check_branch
    %8 = sbr.rel (0) target = $region5
  $region4: #{autoencoder_forward.8} parent=0 // pred_region
    _
  $region5: #{autoencoder_forward.8} parent=0 // pred_fallthru
    _
  // Predicated region
  $region6: #{autoencoder_forward.8} parent=0 // pred_check
    _
  $region7: #{autoencoder_forward.8} parent=0 // pred_check_branch
    %10 = sbr.rel (0) target = $region9
  $region8: #{autoencoder_forward.8} parent=0 // pred_region
    _
  $region9: #{autoencoder_forward.8} parent=0 // pred_fallthru
    _
  %v11 = vld [vmem:[%s1] sm:$0xff]
  %v12 = vld [vmem:[%s1 + $0x8] sm:$0xff]
  %v13 = vld [vmem:[%s1 + $0x10] sm:$0xff]
  %v14 = vld [vmem:[%s1 + $0x18] sm:$0xff]
  %v15 = vld [vmem:[%s1 + $0x20] sm:$0xff]
  %v16 = vld [vmem:[%s1 + $0x28] sm:$0xff]
  %v17 = vld [vmem:[%s1 + $0x30] sm:$0xff]
  %v18 = vld [vmem:[%s1 + $0x38] sm:$0xff]
  %v19 = vld [vmem:[%s1 + $0x40] sm:$0xff]
  %v20 = vld [vmem:[%s1 + $0x48] sm:$0xff]
  %v21 = vld [vmem:[%s1 + $0x50] sm:$0xff]
  %v22 = vld [vmem:[%s1 + $0x58] sm:$0xff]
  %v23 = vld [vmem:[%s1 + $0x60] sm:$0xff]
  %v24 = vld [vmem:[%s1 + $0x68] sm:$0xff]
  %v25 = vld [vmem:[%s1 + $0x70] sm:$0xff]
  %v26 = vld [vmem:[%s1 + $0x78] sm:$0xff]
  %v27 = vld [vmem:[%s1 + $0x80] sm:$0xff]
  %v28 = vld [vmem:[%s1 + $0x88] sm:$0xff]
  %v29 = vld [vmem:[%s1 + $0x90] sm:$0xff]
  %v30 = vld [vmem:[%s1 + $0x98] sm:$0xff]
  %v31 = vld [vmem:[%s1 + $0xa0] sm:$0xff]
  %v32 = vld [vmem:[%s1 + $0xa8] sm:$0xff]
  %v33 = vld [vmem:[%s1 + $0xb0] sm:$0xff]
  %v34 = vld [vmem:[%s1 + $0xb8] sm:$0xff]
  %v35 = vld [vmem:[%s1 + $0xc0] sm:$0xff]
  %v36 = vld [vmem:[%s1 + $0xc8] sm:$0xff]
  %v37 = vld [vmem:[%s1 + $0xd0] sm:$0xff]
  %v38 = vld [vmem:[%s1 + $0xd8] sm:$0xff]
  %v39 = vld [vmem:[%s1 + $0xe0] sm:$0xff]
  %v40 = vld [vmem:[%s1 + $0xe8] sm:$0xff]
  %v41 = vld [vmem:[%s1 + $0xf0] sm:$0xff]
  %v42 = vld [vmem:[%s1 + $0xf8] sm:$0xff]
  %v43 = vld [vmem:[%s1 + $0x100] sm:$0xff]
  %v44 = vld [vmem:[%s1 + $0x108] sm:$0xff]
  %v45 = vld [vmem:[%s1 + $0x110] sm:$0xff]
  %v46 = vld [vmem:[%s1 + $0x118] sm:$0xff]
  %v47 = vld [vmem:[%s1 + $0x120] sm:$0xff]
  %v48 = vld [vmem:[%s1 + $0x128] sm:$0xff]
  %v49 = vld [vmem:[%s1 + $0x130] sm:$0xff]
  %v50 = vld [vmem:[%s1 + $0x138] sm:$0xff]
  %v51 = vld [vmem:[%s1 + $0x140] sm:$0xff]
  %v52 = vld [vmem:[%s1 + $0x148] sm:$0xff]
  %v53 = vld [vmem:[%s1 + $0x150] sm:$0xff]
  %v54 = vld [vmem:[%s1 + $0x158] sm:$0xff]
  %v55 = vld [vmem:[%s1 + $0x160] sm:$0xff]
  %v56 = vld [vmem:[%s1 + $0x168] sm:$0xff]
  %v57 = vld [vmem:[%s1 + $0x170] sm:$0xff]
  %v58 = vld [vmem:[%s1 + $0x178] sm:$0xff]
  %v59 = vld [vmem:[%s1 + $0x180] sm:$0xff]
  %v60 = vld [vmem:[%s1 + $0x188] sm:$0xff]
  %v61 = vld [vmem:[%s1 + $0x190] sm:$0xff]
  %v62 = vld [vmem:[%s1 + $0x198] sm:$0xff]
  %v63 = vld [vmem:[%s1 + $0x1a0] sm:$0xff]
  %v64 = vld [vmem:[%s1 + $0x1a8] sm:$0xff]
  %v65 = vld [vmem:[%s1 + $0x1b0] sm:$0xff]
  %v66 = vld [vmem:[%s1 + $0x1b8] sm:$0xff]
  %v67 = vld [vmem:[%s1 + $0x1c0] sm:$0xff]
  %v68 = vld [vmem:[%s1 + $0x1c8] sm:$0xff]
  %v69 = vld [vmem:[%s1 + $0x1d0] sm:$0xff]
  %v70 = vld [vmem:[%s1 + $0x1d8] sm:$0xff]
  %v71 = vld [vmem:[%s1 + $0x1e0] sm:$0xff]
  %v72 = vld [vmem:[%s1 + $0x1e8] sm:$0xff]
  %v73 = vld [vmem:[%s1 + $0x1f0] sm:$0xff]
  %v74 = vld [vmem:[%s1 + $0x1f8] sm:$0xff]
  %v75 = vld [vmem:[%s1 + $0x200] sm:$0xff]
  %v76 = vld [vmem:[%s1 + $0x208] sm:$0xff]
  %v77 = vld [vmem:[%s1 + $0x210] sm:$0xff]
  %v78 = vld [vmem:[%s1 + $0x218] sm:$0xff]
  %v79 = vld [vmem:[%s1 + $0x220] sm:$0xff]
  %v80 = vld [vmem:[%s1 + $0x228] sm:$0xff]
  %v81 = vld [vmem:[%s1 + $0x230] sm:$0xff]
  %v82 = vld [vmem:[%s1 + $0x238] sm:$0xff]
  %v83 = vld [vmem:[%s0] sm:$0xff]
  %v84 = vld [vmem:[%s0 + $0x8] sm:$0xff]
  %v85 = vld [vmem:[%s0 + $0x10] sm:$0xff]
  %v86 = vld [vmem:[%s0 + $0x18] sm:$0xff]
  %v87 = vld [vmem:[%s0 + $0x20] sm:$0xff]
  %vm88 = vcmask 523264
  %v90 = vsel %vm88, %v87, 0
  %92 = vmatpush.msra.mxu0 %v26
  %93 = vmatpush.msra.mxu0 %v25
  %94 = vmatpush.msra.mxu0 %v24
  %95 = vmatpush.msra.mxu0 %v23
  %96 = vmatpush.msra.mxu0 %v22
  %97 = vmatpush.msra.mxu0 %v21
  %98 = vmatpush.msra.mxu0 %v20
  %99 = vmatpush.msra.mxu0 %v19
  %100 = vmatpush.msra.mxu0 %v18
  %101 = vmatpush.msra.mxu0 %v17
  %102 = vmatpush.msra.mxu0 %v16
  %103 = vmatpush.msra.mxu0 %v15
  %104 = vmatpush.msra.mxu0 %v14
  %105 = vmatpush.msra.mxu0 %v13
  %106 = vmatpush.msra.mxu0 %v12
  %107 = vmatpush.msra.mxu0 %v11
  %108 = vmatmul.f32.gmra.mxu0 %v83
  %v109 = vpop.f32.mrf.mxu0
  %v110 = vadd.f32 0.0, %v109
  %111 = vdwg.mxu0
  %112 = vmatpush.msra.mxu0 %v42
  %113 = vmatpush.msra.mxu0 %v41
  %114 = vmatpush.msra.mxu0 %v40
  %115 = vmatpush.msra.mxu0 %v39
  %116 = vmatpush.msra.mxu0 %v38
  %117 = vmatpush.msra.mxu0 %v37
  %118 = vmatpush.msra.mxu0 %v36
  %119 = vmatpush.msra.mxu0 %v35
  %120 = vmatpush.msra.mxu0 %v34
  %121 = vmatpush.msra.mxu0 %v33
  %122 = vmatpush.msra.mxu0 %v32
  %123 = vmatpush.msra.mxu0 %v31
  %124 = vmatpush.msra.mxu0 %v30
  %125 = vmatpush.msra.mxu0 %v29
  %126 = vmatpush.msra.mxu0 %v28
  %127 = vmatpush.msra.mxu0 %v27
  %128 = vmatmul.f32.gmra.mxu0 %v84
  %v129 = vpop.f32.mrf.mxu0
  %v130 = vadd.f32 %v110, %v129
  %131 = vdwg.mxu0
  %132 = vmatpush.msra.mxu0 %v58
  %133 = vmatpush.msra.mxu0 %v57
  %134 = vmatpush.msra.mxu0 %v56
  %135 = vmatpush.msra.mxu0 %v55
  %136 = vmatpush.msra.mxu0 %v54
  %137 = vmatpush.msra.mxu0 %v53
  %138 = vmatpush.msra.mxu0 %v52
  %139 = vmatpush.msra.mxu0 %v51
  %140 = vmatpush.msra.mxu0 %v50
  %141 = vmatpush.msra.mxu0 %v49
  %142 = vmatpush.msra.mxu0 %v48
  %143 = vmatpush.msra.mxu0 %v47
  %144 = vmatpush.msra.mxu0 %v46
  %145 = vmatpush.msra.mxu0 %v45
  %146 = vmatpush.msra.mxu0 %v44
  %147 = vmatpush.msra.mxu0 %v43
  %148 = vmatmul.f32.gmra.mxu0 %v85
  %v149 = vpop.f32.mrf.mxu0
  %v150 = vadd.f32 %v130, %v149
  %151 = vdwg.mxu0
  %152 = vmatpush.msra.mxu0 %v74
  %153 = vmatpush.msra.mxu0 %v73
  %154 = vmatpush.msra.mxu0 %v72
  %155 = vmatpush.msra.mxu0 %v71
  %156 = vmatpush.msra.mxu0 %v70
  %157 = vmatpush.msra.mxu0 %v69
  %158 = vmatpush.msra.mxu0 %v68
  %159 = vmatpush.msra.mxu0 %v67
  %160 = vmatpush.msra.mxu0 %v66
  %161 = vmatpush.msra.mxu0 %v65
  %162 = vmatpush.msra.mxu0 %v64
  %163 = vmatpush.msra.mxu0 %v63
  %164 = vmatpush.msra.mxu0 %v62
  %165 = vmatpush.msra.mxu0 %v61
  %166 = vmatpush.msra.mxu0 %v60
  %167 = vmatpush.msra.mxu0 %v59
  %168 = vmatmul.f32.gmra.mxu0 %v86
  %v169 = vpop.f32.mrf.mxu0
  %v170 = vadd.f32 %v150, %v169
  %171 = vdwg.mxu0
  %172 = vmatpush.msra.mxu0 0.0
  %173 = vmatpush.msra.mxu0 0.0
  %174 = vmatpush.msra.mxu0 0.0
  %175 = vmatpush.msra.mxu0 0.0
  %176 = vmatpush.msra.mxu0 0.0
  %177 = vmatpush.msra.mxu0 0.0
  %178 = vmatpush.msra.mxu0 0.0
  %179 = vmatpush.msra.mxu0 0.0
  %180 = vmatpush.msra.mxu0 %v82
  %181 = vmatpush.msra.mxu0 %v81
  %182 = vmatpush.msra.mxu0 %v80
  %183 = vmatpush.msra.mxu0 %v79
  %184 = vmatpush.msra.mxu0 %v78
  %185 = vmatpush.msra.mxu0 %v77
  %186 = vmatpush.msra.mxu0 %v76
  %187 = vmatpush.msra.mxu0 %v75
  %188 = vmatmul.f32.gmra.mxu0 %v90
  %v189 = vpop.f32.mrf.mxu0
  %v190 = vadd.f32 %v170, %v189
  %191 = vdwg.mxu0
  %s192 = scalar_lea.vmem %s0, 40
  %v193 = vld [vmem:[%s192] sm:$0xff]
  %v194 = vld [vmem:[%s192 + $0x8] sm:$0xff]
  %v195 = vld [vmem:[%s192 + $0x10] sm:$0xff]
  %v196 = vld [vmem:[%s192 + $0x18] sm:$0xff]
  %v197 = vld [vmem:[%s192 + $0x20] sm:$0xff]
  %v199 = vsel %vm88, %v197, 0
  %201 = vmatpush.msra.mxu0 %v26
  %202 = vmatpush.msra.mxu0 %v25
  %203 = vmatpush.msra.mxu0 %v24
  %204 = vmatpush.msra.mxu0 %v23
  %205 = vmatpush.msra.mxu0 %v22
  %206 = vmatpush.msra.mxu0 %v21
  %207 = vmatpush.msra.mxu0 %v20
  %208 = vmatpush.msra.mxu0 %v19
  %209 = vmatpush.msra.mxu0 %v18
  %210 = vmatpush.msra.mxu0 %v17
  %211 = vmatpush.msra.mxu0 %v16
  %212 = vmatpush.msra.mxu0 %v15
  %213 = vmatpush.msra.mxu0 %v14
  %214 = vmatpush.msra.mxu0 %v13
  %215 = vmatpush.msra.mxu0 %v12
  %216 = vmatpush.msra.mxu0 %v11
  %217 = vmatmul.f32.gmra.mxu0 %v193
  %v218 = vpop.f32.mrf.mxu0
  %v219 = vadd.f32 0.0, %v218
  %220 = vdwg.mxu0
  %221 = vmatpush.msra.mxu0 %v42
  %222 = vmatpush.msra.mxu0 %v41
  %223 = vmatpush.msra.mxu0 %v40
  %224 = vmatpush.msra.mxu0 %v39
  %225 = vmatpush.msra.mxu0 %v38
  %226 = vmatpush.msra.mxu0 %v37
  %227 = vmatpush.msra.mxu0 %v36
  %228 = vmatpush.msra.mxu0 %v35
  %229 = vmatpush.msra.mxu0 %v34
  %230 = vmatpush.msra.mxu0 %v33
  %231 = vmatpush.msra.mxu0 %v32
  %232 = vmatpush.msra.mxu0 %v31
  %233 = vmatpush.msra.mxu0 %v30
  %234 = vmatpush.msra.mxu0 %v29
  %235 = vmatpush.msra.mxu0 %v28
  %236 = vmatpush.msra.mxu0 %v27
  %237 = vmatmul.f32.gmra.mxu0 %v194
  %v238 = vpop.f32.mrf.mxu0
  %v239 = vadd.f32 %v219, %v238
  %240 = vdwg.mxu0
  %241 = vmatpush.msra.mxu0 %v58
  %242 = vmatpush.msra.mxu0 %v57
  %243 = vmatpush.msra.mxu0 %v56
  %244 = vmatpush.msra.mxu0 %v55
  %245 = vmatpush.msra.mxu0 %v54
  %246 = vmatpush.msra.mxu0 %v53
  %247 = vmatpush.msra.mxu0 %v52
  %248 = vmatpush.msra.mxu0 %v51
  %249 = vmatpush.msra.mxu0 %v50
  %250 = vmatpush.msra.mxu0 %v49
  %251 = vmatpush.msra.mxu0 %v48
  %252 = vmatpush.msra.mxu0 %v47
  %253 = vmatpush.msra.mxu0 %v46
  %254 = vmatpush.msra.mxu0 %v45
  %255 = vmatpush.msra.mxu0 %v44
  %256 = vmatpush.msra.mxu0 %v43
  %257 = vmatmul.f32.gmra.mxu0 %v195
  %v258 = vpop.f32.mrf.mxu0
  %v259 = vadd.f32 %v239, %v258
  %260 = vdwg.mxu0
  %261 = vmatpush.msra.mxu0 %v74
  %262 = vmatpush.msra.mxu0 %v73
  %263 = vmatpush.msra.mxu0 %v72
  %264 = vmatpush.msra.mxu0 %v71
  %265 = vmatpush.msra.mxu0 %v70
  %266 = vmatpush.msra.mxu0 %v69
  %267 = vmatpush.msra.mxu0 %v68
  %268 = vmatpush.msra.mxu0 %v67
  %269 = vmatpush.msra.mxu0 %v66
  %270 = vmatpush.msra.mxu0 %v65
  %271 = vmatpush.msra.mxu0 %v64
  %272 = vmatpush.msra.mxu0 %v63
  %273 = vmatpush.msra.mxu0 %v62
  %274 = vmatpush.msra.mxu0 %v61
  %275 = vmatpush.msra.mxu0 %v60
  %276 = vmatpush.msra.mxu0 %v59
  %277 = vmatmul.f32.gmra.mxu0 %v196
  %v278 = vpop.f32.mrf.mxu0
  %v279 = vadd.f32 %v259, %v278
  %280 = vdwg.mxu0
  %281 = vmatpush.msra.mxu0 0.0
  %282 = vmatpush.msra.mxu0 0.0
  %283 = vmatpush.msra.mxu0 0.0
  %284 = vmatpush.msra.mxu0 0.0
  %285 = vmatpush.msra.mxu0 0.0
  %286 = vmatpush.msra.mxu0 0.0
  %287 = vmatpush.msra.mxu0 0.0
  %288 = vmatpush.msra.mxu0 0.0
  %289 = vmatpush.msra.mxu0 %v82
  %290 = vmatpush.msra.mxu0 %v81
  %291 = vmatpush.msra.mxu0 %v80
  %292 = vmatpush.msra.mxu0 %v79
  %293 = vmatpush.msra.mxu0 %v78
  %294 = vmatpush.msra.mxu0 %v77
  %295 = vmatpush.msra.mxu0 %v76
  %296 = vmatpush.msra.mxu0 %v75
  %297 = vmatmul.f32.gmra.mxu0 %v199
  %v298 = vpop.f32.mrf.mxu0
  %v299 = vadd.f32 %v279, %v298
  %300 = vdwg.mxu0
  %s301 = scalar_lea.vmem %s0, 80
  %v302 = vld [vmem:[%s301] sm:$0xff]
  %v303 = vld [vmem:[%s301 + $0x8] sm:$0xff]
  %v304 = vld [vmem:[%s301 + $0x10] sm:$0xff]
  %v305 = vld [vmem:[%s301 + $0x18] sm:$0xff]
  %v306 = vld [vmem:[%s301 + $0x20] sm:$0xff]
  %v308 = vsel %vm88, %v306, 0
  %310 = vmatpush.msra.mxu0 %v26
  %311 = vmatpush.msra.mxu0 %v25
  %312 = vmatpush.msra.mxu0 %v24
  %313 = vmatpush.msra.mxu0 %v23
  %314 = vmatpush.msra.mxu0 %v22
  %315 = vmatpush.msra.mxu0 %v21
  %316 = vmatpush.msra.mxu0 %v20
  %317 = vmatpush.msra.mxu0 %v19
  %318 = vmatpush.msra.mxu0 %v18
  %319 = vmatpush.msra.mxu0 %v17
  %320 = vmatpush.msra.mxu0 %v16
  %321 = vmatpush.msra.mxu0 %v15
  %322 = vmatpush.msra.mxu0 %v14
  %323 = vmatpush.msra.mxu0 %v13
  %324 = vmatpush.msra.mxu0 %v12
  %325 = vmatpush.msra.mxu0 %v11
  %326 = vmatmul.f32.gmra.mxu0 %v302
  %v327 = vpop.f32.mrf.mxu0
  %v328 = vadd.f32 0.0, %v327
  %329 = vdwg.mxu0
  %330 = vmatpush.msra.mxu0 %v42
  %331 = vmatpush.msra.mxu0 %v41
  %332 = vmatpush.msra.mxu0 %v40
  %333 = vmatpush.msra.mxu0 %v39
  %334 = vmatpush.msra.mxu0 %v38
  %335 = vmatpush.msra.mxu0 %v37
  %336 = vmatpush.msra.mxu0 %v36
  %337 = vmatpush.msra.mxu0 %v35
  %338 = vmatpush.msra.mxu0 %v34
  %339 = vmatpush.msra.mxu0 %v33
  %340 = vmatpush.msra.mxu0 %v32
  %341 = vmatpush.msra.mxu0 %v31
  %342 = vmatpush.msra.mxu0 %v30
  %343 = vmatpush.msra.mxu0 %v29
  %344 = vmatpush.msra.mxu0 %v28
  %345 = vmatpush.msra.mxu0 %v27
  %346 = vmatmul.f32.gmra.mxu0 %v303
  %v347 = vpop.f32.mrf.mxu0
  %v348 = vadd.f32 %v328, %v347
  %349 = vdwg.mxu0
  %350 = vmatpush.msra.mxu0 %v58
  %351 = vmatpush.msra.mxu0 %v57
  %352 = vmatpush.msra.mxu0 %v56
  %353 = vmatpush.msra.mxu0 %v55
  %354 = vmatpush.msra.mxu0 %v54
  %355 = vmatpush.msra.mxu0 %v53
  %356 = vmatpush.msra.mxu0 %v52
  %357 = vmatpush.msra.mxu0 %v51
  %358 = vmatpush.msra.mxu0 %v50
  %359 = vmatpush.msra.mxu0 %v49
  %360 = vmatpush.msra.mxu0 %v48
  %361 = vmatpush.msra.mxu0 %v47
  %362 = vmatpush.msra.mxu0 %v46
  %363 = vmatpush.msra.mxu0 %v45
  %364 = vmatpush.msra.mxu0 %v44
  %365 = vmatpush.msra.mxu0 %v43
  %366 = vmatmul.f32.gmra.mxu0 %v304
  %v367 = vpop.f32.mrf.mxu0
  %v368 = vadd.f32 %v348, %v367
  %369 = vdwg.mxu0
  %370 = vmatpush.msra.mxu0 %v74
  %371 = vmatpush.msra.mxu0 %v73
  %372 = vmatpush.msra.mxu0 %v72
  %373 = vmatpush.msra.mxu0 %v71
  %374 = vmatpush.msra.mxu0 %v70
  %375 = vmatpush.msra.mxu0 %v69
  %376 = vmatpush.msra.mxu0 %v68
  %377 = vmatpush.msra.mxu0 %v67
  %378 = vmatpush.msra.mxu0 %v66
  %379 = vmatpush.msra.mxu0 %v65
  %380 = vmatpush.msra.mxu0 %v64
  %381 = vmatpush.msra.mxu0 %v63
  %382 = vmatpush.msra.mxu0 %v62
  %383 = vmatpush.msra.mxu0 %v61
  %384 = vmatpush.msra.mxu0 %v60
  %385 = vmatpush.msra.mxu0 %v59
  %386 = vmatmul.f32.gmra.mxu0 %v305
  %v387 = vpop.f32.mrf.mxu0
  %v388 = vadd.f32 %v368, %v387
  %389 = vdwg.mxu0
  %390 = vmatpush.msra.mxu0 0.0
  %391 = vmatpush.msra.mxu0 0.0
  %392 = vmatpush.msra.mxu0 0.0
  %393 = vmatpush.msra.mxu0 0.0
  %394 = vmatpush.msra.mxu0 0.0
  %395 = vmatpush.msra.mxu0 0.0
  %396 = vmatpush.msra.mxu0 0.0
  %397 = vmatpush.msra.mxu0 0.0
  %398 = vmatpush.msra.mxu0 %v82
  %399 = vmatpush.msra.mxu0 %v81
  %400 = vmatpush.msra.mxu0 %v80
  %401 = vmatpush.msra.mxu0 %v79
  %402 = vmatpush.msra.mxu0 %v78
  %403 = vmatpush.msra.mxu0 %v77
  %404 = vmatpush.msra.mxu0 %v76
  %405 = vmatpush.msra.mxu0 %v75
  %406 = vmatmul.f32.gmra.mxu0 %v308
  %v407 = vpop.f32.mrf.mxu0
  %v408 = vadd.f32 %v388, %v407
  %409 = vdwg.mxu0
  %s410 = scalar_lea.vmem %s0, 120
  %v411 = vld [vmem:[%s410] sm:$0xff]
  %v412 = vld [vmem:[%s410 + $0x8] sm:$0xff]
  %v413 = vld [vmem:[%s410 + $0x10] sm:$0xff]
  %v414 = vld [vmem:[%s410 + $0x18] sm:$0xff]
  %v415 = vld [vmem:[%s410 + $0x20] sm:$0xff]
  %v417 = vsel %vm88, %v415, 0
  %419 = vmatpush.msra.mxu0 %v26
  %420 = vmatpush.msra.mxu0 %v25
  %421 = vmatpush.msra.mxu0 %v24
  %422 = vmatpush.msra.mxu0 %v23
  %423 = vmatpush.msra.mxu0 %v22
  %424 = vmatpush.msra.mxu0 %v21
  %425 = vmatpush.msra.mxu0 %v20
  %426 = vmatpush.msra.mxu0 %v19
  %427 = vmatpush.msra.mxu0 %v18
  %428 = vmatpush.msra.mxu0 %v17
  %429 = vmatpush.msra.mxu0 %v16
  %430 = vmatpush.msra.mxu0 %v15
  %431 = vmatpush.msra.mxu0 %v14
  %432 = vmatpush.msra.mxu0 %v13
  %433 = vmatpush.msra.mxu0 %v12
  %434 = vmatpush.msra.mxu0 %v11
  %435 = vmatmul.f32.gmra.mxu0 %v411
  %v436 = vpop.f32.mrf.mxu0
  %v437 = vadd.f32 0.0, %v436
  %438 = vdwg.mxu0
  %439 = vmatpush.msra.mxu0 %v42
  %440 = vmatpush.msra.mxu0 %v41
  %441 = vmatpush.msra.mxu0 %v40
  %442 = vmatpush.msra.mxu0 %v39
  %443 = vmatpush.msra.mxu0 %v38
  %444 = vmatpush.msra.mxu0 %v37
  %445 = vmatpush.msra.mxu0 %v36
  %446 = vmatpush.msra.mxu0 %v35
  %447 = vmatpush.msra.mxu0 %v34
  %448 = vmatpush.msra.mxu0 %v33
  %449 = vmatpush.msra.mxu0 %v32
  %450 = vmatpush.msra.mxu0 %v31
  %451 = vmatpush.msra.mxu0 %v30
  %452 = vmatpush.msra.mxu0 %v29
  %453 = vmatpush.msra.mxu0 %v28
  %454 = vmatpush.msra.mxu0 %v27
  %455 = vmatmul.f32.gmra.mxu0 %v412
  %v456 = vpop.f32.mrf.mxu0
  %v457 = vadd.f32 %v437, %v456
  %458 = vdwg.mxu0
  %459 = vmatpush.msra.mxu0 %v58
  %460 = vmatpush.msra.mxu0 %v57
  %461 = vmatpush.msra.mxu0 %v56
  %462 = vmatpush.msra.mxu0 %v55
  %463 = vmatpush.msra.mxu0 %v54
  %464 = vmatpush.msra.mxu0 %v53
  %465 = vmatpush.msra.mxu0 %v52
  %466 = vmatpush.msra.mxu0 %v51
  %467 = vmatpush.msra.mxu0 %v50
  %468 = vmatpush.msra.mxu0 %v49
  %469 = vmatpush.msra.mxu0 %v48
  %470 = vmatpush.msra.mxu0 %v47
  %471 = vmatpush.msra.mxu0 %v46
  %472 = vmatpush.msra.mxu0 %v45
  %473 = vmatpush.msra.mxu0 %v44
  %474 = vmatpush.msra.mxu0 %v43
  %475 = vmatmul.f32.gmra.mxu0 %v413
  %v476 = vpop.f32.mrf.mxu0
  %v477 = vadd.f32 %v457, %v476
  %478 = vdwg.mxu0
  %479 = vmatpush.msra.mxu0 %v74
  %480 = vmatpush.msra.mxu0 %v73
  %481 = vmatpush.msra.mxu0 %v72
  %482 = vmatpush.msra.mxu0 %v71
  %483 = vmatpush.msra.mxu0 %v70
  %484 = vmatpush.msra.mxu0 %v69
  %485 = vmatpush.msra.mxu0 %v68
  %486 = vmatpush.msra.mxu0 %v67
  %487 = vmatpush.msra.mxu0 %v66
  %488 = vmatpush.msra.mxu0 %v65
  %489 = vmatpush.msra.mxu0 %v64
  %490 = vmatpush.msra.mxu0 %v63
  %491 = vmatpush.msra.mxu0 %v62
  %492 = vmatpush.msra.mxu0 %v61
  %493 = vmatpush.msra.mxu0 %v60
  %494 = vmatpush.msra.mxu0 %v59
  %495 = vmatmul.f32.gmra.mxu0 %v414
  %v496 = vpop.f32.mrf.mxu0
  %v497 = vadd.f32 %v477, %v496
  %498 = vdwg.mxu0
  %499 = vmatpush.msra.mxu0 0.0
  %500 = vmatpush.msra.mxu0 0.0
  %501 = vmatpush.msra.mxu0 0.0
  %502 = vmatpush.msra.mxu0 0.0
  %503 = vmatpush.msra.mxu0 0.0
  %504 = vmatpush.msra.mxu0 0.0
  %505 = vmatpush.msra.mxu0 0.0
  %506 = vmatpush.msra.mxu0 0.0
  %507 = vmatpush.msra.mxu0 %v82
  %508 = vmatpush.msra.mxu0 %v81
  %509 = vmatpush.msra.mxu0 %v80
  %510 = vmatpush.msra.mxu0 %v79
  %511 = vmatpush.msra.mxu0 %v78
  %512 = vmatpush.msra.mxu0 %v77
  %513 = vmatpush.msra.mxu0 %v76
  %514 = vmatpush.msra.mxu0 %v75
  %515 = vmatmul.f32.gmra.mxu0 %v417
  %v516 = vpop.f32.mrf.mxu0
  %v517 = vadd.f32 %v497, %v516
  %518 = vdwg.mxu0
  %v519 = vadd.f32 %v190, %v299
  %v520 = vadd.f32 %v519, %v408
  %v521 = vadd.f32 %v520, %v517
  %v522 = vrot.slane %v521, 4
  %v523 = vadd.f32 %v521, %v522
  %v524 = vrot.slane %v523, 2
  %v525 = vadd.f32 %v523, %v524
  %v526 = vrot.slane %v525, 1
  %v527 = vadd.f32 %v525, %v526
  %v528 = vrcp.pop 32.0
  %v529 = vmul.f32 32.0, %v528
  %v530 = vsub.f32 1.0, %v529
  %v531 = vmul.f32 %v528, %v530
  %v532 = vadd.f32 %v528, %v531
  %vm533 = vweird.f32 %v528
  %v534 = vsel %vm533, %v528, %v532
  %v535 = vmul.f32 %v527, %v534
  %v536 = vsub.f32 %v190, %v535
  %v537 = vmul.f32 %v536, %v536
  %v538 = vrot.slane %v537, 4
  %v539 = vadd.f32 %v537, %v538
  %v540 = vrot.slane %v539, 2
  %v541 = vadd.f32 %v539, %v540
  %v542 = vrot.slane %v541, 1
  %v543 = vadd.f32 %v541, %v542
  %v544 = vsub.f32 %v299, %v535
  %v545 = vmul.f32 %v544, %v544
  %v546 = vrot.slane %v545, 4
  %v547 = vadd.f32 %v545, %v546
  %v548 = vrot.slane %v547, 2
  %v549 = vadd.f32 %v547, %v548
  %v550 = vrot.slane %v549, 1
  %v551 = vadd.f32 %v549, %v550
  %v552 = vadd.f32 %v543, %v551
  %v553 = vsub.f32 %v408, %v535
  %v554 = vmul.f32 %v553, %v553
  %v555 = vrot.slane %v554, 4
  %v556 = vadd.f32 %v554, %v555
  %v557 = vrot.slane %v556, 2
  %v558 = vadd.f32 %v556, %v557
  %v559 = vrot.slane %v558, 1
  %v560 = vadd.f32 %v558, %v559
  %v561 = vadd.f32 %v552, %v560
  %v562 = vsub.f32 %v517, %v535
  %v563 = vmul.f32 %v562, %v562
  %v564 = vrot.slane %v563, 4
  %v565 = vadd.f32 %v563, %v564
  %v566 = vrot.slane %v565, 2
  %v567 = vadd.f32 %v565, %v566
  %v568 = vrot.slane %v567, 1
  %v569 = vadd.f32 %v567, %v568
  %v570 = vadd.f32 %v561, %v569
  %v571 = vmul.f32 %v570, %v534
  %v572 = vadd.f32 %v571, 1e-05
  %v573 = vrsqrt.pop %v572
  %v574 = vmul.f32 %v573, %v572
  %v575 = vmul.f32 %v574, %v573
  %v576 = vmul.f32 0.5, %v575
  %v577 = vsub.f32 1.5, %v576
  %v578 = vmul.f32 %v573, %v577
  %vm579 = vweird.f32 %v572
  %vm580 = vweird.f32 %v573
  %vm581 = vmor %vm579, %vm580
  %v582 = vsel %vm581, %v573, %v578
  %v583 = vsub.f32 0.0, %v535
  %v584 = vmul.f32 %v583, %v582
  %v585 = vmax.f32 %v190, %v299
  %v586 = vmax.f32 %v408, %v517
  %v587 = vmax.f32 %v585, %v586
  %v588 = vmul.f32 %v587, %v582
  %v589 = vadd.f32 %v588, %v584
  %v590 = vmax.f32 %v589, 0.0
  %591 = vst [vmem:[%s2] sm:$0xff] %v590
  // Predicated region
  $region10: #{autoencoder_forward.8} parent=0 // pred_check
    _
  $region11: #{autoencoder_forward.8} parent=0 // pred_check_branch
    %593 = sbr.rel (0) target = $region13
  $region12: #{autoencoder_forward.8} parent=0 // pred_region
    _
  $region13: #{autoencoder_forward.8} parent=0 // pred_fallthru
    _
  // Predicated region
  $region14: #{autoencoder_forward.8} parent=0 // pred_check
    _
  $region15: #{autoencoder_forward.8} parent=0 // pred_check_branch
    %595 = sbr.rel (0) target = $region17
  $region16: #{autoencoder_forward.8} parent=0 // pred_region
    _
  $region17: #{autoencoder_forward.8} parent=0 // pred_fallthru
    _

// kernel: autoencoder_forward.9
$region0: #{autoencoder_forward.9}
  #allocation0 [shape = 'u32[]', space=smem, size = 0x4, offset = 0x4, fixed_abs, tag = 'smem constant byte address 0x4 - core index']
  #allocation1 [shape = 'u32[72,128]{1,0:T(1,128)}', space=vmem, size = 0x9000, scoped, tag = 'internal scratch']
  %s0 = inlined_call_operand.vmem [shape: f32[2,2,2,1152], index: 0, kind: input, shape index: {}]
  %s1 = inlined_call_operand.vmem [shape: f32[1152,64], index: 1, kind: input, shape index: {}]
  %s2 = inlined_call_operand.vmem [shape: f32[1,64], index: 2, kind: input, shape index: {}]
  %s3 = inlined_call_operand.vmem [shape: f32[2,4,2,64], index: 3, kind: output, shape index: {0}]
  %s4 = inlined_call_operand.vmem [shape: f32[2,4,2,64], index: 4, kind: output, shape index: {1}]
  %5 = xla_tuple %s3, %s4
  %s6 = sld [smem:[#allocation0]]
  $region53: #{autoencoder_forward.9} parent=0
    _
  %s8 = ssub.s32 1, %s6
  %s9 = scalar_select 0, %s8, %s6
  loop: start=0, step=1, limit=4
  $region2: #{autoencoder_forward.9} parent=0 // loop_pre_header
    _
  $region3: #{autoencoder_forward.9} parent=0 // loop_header
    %s11 = sphi 0, %s15
    %p12 = scmp.ge.s32.totalorder %s11, 4
    %s21 = sphi 0, %s23
    %s24 = sphi 0, %s21
    %s25 = sphi 0, %s24
    %s41 = sphi 0, %s25
    %s45 = sphi 0, %s45
    %s47 = sphi 0, %s45
    %s48 = sphi 0, %s47
    %s62 = sphi 0, %s48
    %s66 = sphi 0, %s66
    %s68 = sphi 0, %s66
    %s69 = sphi 0, %s68
    %s83 = sphi 0, %s69
    %s89 = sphi 0, %s91
    %s92 = sphi 0, %s89
    %s93 = sphi 0, %s92
    %s109 = sphi 0, %s93
    %s115 = sphi 0, %s117
    %s118 = sphi 0, %s115
    %s119 = sphi 0, %s118
    %s135 = sphi 0, %s119
  $region4: #{autoencoder_forward.9} parent=0 // loop_header_branch
    %14 = sbr.rel (%p12) target = $region8
  $region5: #{autoencoder_forward.9} parent=0 // loop_body
    %s16 = ssub.s32 %s11, 1
    %s17 = ssub.s32 %s11, 2
    %s18 = sadd.s32 %s11, 1
    %s19 = ssub.s32 %s11, %s18
    %p20 = scmp.eq.s32.totalorder %s19, 0
    %s22 = sadd.s32 %s21, 1
    %s23 = scalar_select %p20, %s21, %s22
    %p26 = pneg %p20
    %p27 = scmp.eq.s32.totalorder %s11, 1
    %p28 = por %p26, %p27
    %p29 = scmp.ne.s32.totalorder %s21, %s24
    %p30 = scmp.eq.s32.totalorder %s11, 0
    %p31 = por %p29, %p30
    %p32 = scmp.ne.s32.totalorder %s21, %s24
    %p33 = scmp.eq.s32.totalorder %s16, 1
    %p34 = por %p32, %p33
    %p35 = scmp.ne.s32.totalorder %s24, %s25
    %p36 = scmp.eq.s32.totalorder %s16, 0
    %p37 = por %p35, %p36
    %p38 = scmp.ne.s32.totalorder %s24, %s25
    %p39 = scmp.eq.s32.totalorder %s17, 1
    %p40 = por %p38, %p39
    %p42 = scmp.ne.s32.totalorder %s25, %s41
    %p43 = scmp.eq.s32.totalorder %s17, 0
    %p44 = por %p42, %p43
    %s46 = sadd.s32 %s45, 1
    %p49 = scmp.eq.s32.totalorder %s11, 1
    %p50 = scmp.ne.s32.totalorder %s45, %s47
    %p51 = scmp.eq.s32.totalorder %s11, 0
    %p52 = por %p50, %p51
    %p53 = scmp.ne.s32.totalorder %s45, %s47
    %p54 = scmp.eq.s32.totalorder %s16, 1
    %p55 = por %p53, %p54
    %p56 = scmp.ne.s32.totalorder %s47, %s48
    %p57 = scmp.eq.s32.totalorder %s16, 0
    %p58 = por %p56, %p57
    %p59 = scmp.ne.s32.totalorder %s47, %s48
    %p60 = scmp.eq.s32.totalorder %s17, 1
    %p61 = por %p59, %p60
    %p63 = scmp.ne.s32.totalorder %s48, %s62
    %p64 = scmp.eq.s32.totalorder %s17, 0
    %p65 = por %p63, %p64
    %s67 = sadd.s32 %s66, 1
    %p70 = scmp.eq.s32.totalorder %s11, 1
    %p71 = scmp.ne.s32.totalorder %s66, %s68
    %p72 = scmp.eq.s32.totalorder %s11, 0
    %p73 = por %p71, %p72
    %p74 = scmp.ne.s32.totalorder %s66, %s68
    %p75 = scmp.eq.s32.totalorder %s16, 1
    %p76 = por %p74, %p75
    %p77 = scmp.ne.s32.totalorder %s68, %s69
    %p78 = scmp.eq.s32.totalorder %s16, 0
    %p79 = por %p77, %p78
    %p80 = scmp.ne.s32.totalorder %s68, %s69
    %p81 = scmp.eq.s32.totalorder %s17, 1
    %p82 = por %p80, %p81
    %p84 = scmp.ne.s32.totalorder %s69, %s83
    %p85 = scmp.eq.s32.totalorder %s17, 0
    %p86 = por %p84, %p85
    %s87 = ssub.s32 %s11, %s18
    %p88 = scmp.eq.s32.totalorder %s87, 0
    %s90 = sadd.s32 %s89, 1
    %s91 = scalar_select %p88, %s89, %s90
    %p94 = pneg %p88
    %p95 = scmp.eq.s32.totalorder %s11, 1
    %p96 = por %p94, %p95
    %p97 = scmp.ne.s32.totalorder %s89, %s92
    %p98 = scmp.eq.s32.totalorder %s11, 0
    %p99 = por %p97, %p98
    %p100 = scmp.ne.s32.totalorder %s89, %s92
    %p101 = scmp.eq.s32.totalorder %s16, 1
    %p102 = por %p100, %p101
    %p103 = scmp.ne.s32.totalorder %s92, %s93
    %p104 = scmp.eq.s32.totalorder %s16, 0
    %p105 = por %p103, %p104
    %p106 = scmp.ne.s32.totalorder %s92, %s93
    %p107 = scmp.eq.s32.totalorder %s17, 1
    %p108 = por %p106, %p107
    %p110 = scmp.ne.s32.totalorder %s93, %s109
    %p111 = scmp.eq.s32.totalorder %s17, 0
    %p112 = por %p110, %p111
    %s113 = ssub.s32 %s11, %s18
    %p114 = scmp.eq.s32.totalorder %s113, 0
    %s116 = sadd.s32 %s115, 1
    %s117 = scalar_select %p114, %s115, %s116
    %p120 = pneg %p114
    %p121 = scmp.eq.s32.totalorder %s11, 1
    %p122 = por %p120, %p121
    %p123 = scmp.ne.s32.totalorder %s115, %s118
    %p124 = scmp.eq.s32.totalorder %s11, 0
    %p125 = por %p123, %p124
    %p126 = scmp.ne.s32.totalorder %s115, %s118
    %p127 = scmp.eq.s32.totalorder %s16, 1
    %p128 = por %p126, %p127
    %p129 = scmp.ne.s32.totalorder %s118, %s119
    %p130 = scmp.eq.s32.totalorder %s16, 0
    %p131 = por %p129, %p130
    %p132 = scmp.ne.s32.totalorder %s118, %s119
    %p133 = scmp.eq.s32.totalorder %s17, 1
    %p134 = por %p132, %p133
    %p136 = scmp.ne.s32.totalorder %s119, %s135
    %p137 = scmp.eq.s32.totalorder %s17, 0
    %p138 = por %p136, %p137
    %p139 = scmp.le.s32.totalorder 1, %s11
    %p140 = scmp.lt.s32.totalorder %s11, 3
    %p141 = pnand %p139, %p140
    %p142 = pneg %p141
    // Predicated region
    $region9: #{autoencoder_forward.9} parent=5 // pred_check
      _
    $region10: #{autoencoder_forward.9} parent=5 // pred_check_branch
      %144 = sbr.rel (%p141) target = $region12
    $region11: #{autoencoder_forward.9} parent=5 // pred_region
      %s145 = ssub.s32 %s11, 1
      // Predicated region
      $region13: #{autoencoder_forward.9} parent=11 // pred_check
        %p146 = pneg %p58
      $region14: #{autoencoder_forward.9} parent=11 // pred_check_branch
        %148 = sbr.rel (%p146) target = $region16
      $region15: #{autoencoder_forward.9} parent=11 // pred_region
        _
      $region16: #{autoencoder_forward.9} parent=11 // pred_fallthru
        _
      // Predicated region
      $region17: #{autoencoder_forward.9} parent=11 // pred_check
        %p149 = pneg %p79
      $region18: #{autoencoder_forward.9} parent=11 // pred_check_branch
        %151 = sbr.rel (%p149) target = $region20
      $region19: #{autoencoder_forward.9} parent=11 // pred_region
        _
      $region20: #{autoencoder_forward.9} parent=11 // pred_fallthru
        _
    $region12: #{autoencoder_forward.9} parent=5 // pred_fallthru
      _
    %p152 = scmp.lt.s32.totalorder %s11, 2
    // Predicated region
    $region21: #{autoencoder_forward.9} parent=5 // pred_check
      %p153 = pneg %p152
    $region22: #{autoencoder_forward.9} parent=5 // pred_check_branch
      %155 = sbr.rel (%p153) target = $region24
    $region23: #{autoencoder_forward.9} parent=5 // pred_region
      // Predicated region
      $region25: #{autoencoder_forward.9} parent=23 // pred_check
        %p156 = pneg %p31
      $region26: #{autoencoder_forward.9} parent=23 // pred_check_branch
        %158 = sbr.rel (%p156) target = $region28
      $region27: #{autoencoder_forward.9} parent=23 // pred_region
        %p159 = scmp.lt.s32.totalorder %s11, 1
        %s160 = scalar_select %p159, %s11, 1
        %s161 = smul.addr %s160, 18
        %s162 = smul.addr %s161, 2
        %s163 = scalar_lea.vmem %s0, %s162
      $region28: #{autoencoder_forward.9} parent=23 // pred_fallthru
        _
    $region24: #{autoencoder_forward.9} parent=5 // pred_fallthru
      _
    %p164 = scmp.le.s32.totalorder 1, %s11
    %p165 = scmp.lt.s32.totalorder %s11, 3
    %p166 = pnand %p164, %p165
    %p167 = pneg %p166
    // Predicated region
    $region29: #{autoencoder_forward.9} parent=5 // pred_check
      _
    $region30: #{autoencoder_forward.9} parent=5 // pred_check_branch
      %169 = sbr.rel (%p166) target = $region32
    $region31: #{autoencoder_forward.9} parent=5 // pred_region
      %s170 = ssub.s32 %s11, 1
      %p171 = scmp.lt.s32.totalorder %s16, 1
      %s172 = scalar_select %p171, %s16, 1
      %s173 = smul.addr %s172, 18
      %s174 = smul.addr %s173, 2
      %s175 = scalar_lea.vmem %s0, %s174
      %p176 = pneg %p37
      %p177 = pneg %p34
      %p178 = pneg %p58
      %p179 = pneg %p55
      %p180 = pneg %p79
      %p181 = pneg %p76
      %p182 = pneg %p105
      %p183 = pneg %p102
      %p184 = scmp.lt.s32.totalorder %s16, 1
      %s185 = scalar_select %p184, %s16, 1
      %s186 = smul.addr %s185, 4
      %s187 = smul.addr %s186, 2
      %s188 = scalar_lea.vmem %s3, %s187
      %p189 = pneg %p131
      %p190 = pneg %p128
      %p191 = scmp.lt.s32.totalorder %s16, 1
      %s192 = scalar_select %p191, %s16, 1
      %s193 = smul.addr %s192, 4
      %s194 = smul.addr %s193, 2
      %s195 = scalar_lea.vmem %s4, %s194
      %p196 = scmp.lt.s32.totalorder %s16, 1
      %s197 = scalar_select %p196, %s16, 1
      %s198 = smul.addr %s197, 18
      %s199 = smul.addr %s198, 2
      %s200 = scalar_lea.vmem %s0, %s199
      %p201 = scmp.lt.s32.totalorder %s16, 1
      %s202 = scalar_select %p201, %s16, 1
      %s203 = smul.addr %s202, 4
      %s204 = smul.addr %s203, 2
      %s205 = scalar_lea.vmem %s3, %s204
      %p206 = scmp.lt.s32.totalorder %s16, 1
      %s207 = scalar_select %p206, %s16, 1
      %s208 = smul.addr %s207, 4
      %s209 = smul.addr %s208, 2
      %s210 = scalar_lea.vmem %s4, %s209
      %v211 = vld [vmem:[%s1] sm:$0xff]
      %v212 = vld [vmem:[%s1 + $0x8] sm:$0xff]
      %v213 = vld [vmem:[%s1 + $0x10] sm:$0xff]
      %v214 = vld [vmem:[%s1 + $0x18] sm:$0xff]
      %v215 = vld [vmem:[%s1 + $0x20] sm:$0xff]
      %v216 = vld [vmem:[%s1 + $0x28] sm:$0xff]
      %v217 = vld [vmem:[%s1 + $0x30] sm:$0xff]
      %v218 = vld [vmem:[%s1 + $0x38] sm:$0xff]
      %v219 = vld [vmem:[%s1 + $0x40] sm:$0xff]
      %v220 = vld [vmem:[%s1 + $0x48] sm:$0xff]
      %v221 = vld [vmem:[%s1 + $0x50] sm:$0xff]
      %v222 = vld [vmem:[%s1 + $0x58] sm:$0xff]
      %v223 = vld [vmem:[%s1 + $0x60] sm:$0xff]
      %v224 = vld [vmem:[%s1 + $0x68] sm:$0xff]
      %v225 = vld [vmem:[%s1 + $0x70] sm:$0xff]
      %v226 = vld [vmem:[%s1 + $0x78] sm:$0xff]
      %v227 = vld [vmem:[%s1 + $0x80] sm:$0xff]
      %v228 = vld [vmem:[%s1 + $0x88] sm:$0xff]
      %v229 = vld [vmem:[%s1 + $0x90] sm:$0xff]
      %v230 = vld [vmem:[%s1 + $0x98] sm:$0xff]
      %v231 = vld [vmem:[%s1 + $0xa0] sm:$0xff]
      %v232 = vld [vmem:[%s1 + $0xa8] sm:$0xff]
      %v233 = vld [vmem:[%s1 + $0xb0] sm:$0xff]
      %v234 = vld [vmem:[%s1 + $0xb8] sm:$0xff]
      %v235 = vld [vmem:[%s1 + $0xc0] sm:$0xff]
      %v236 = vld [vmem:[%s1 + $0xc8] sm:$0xff]
      %v237 = vld [vmem:[%s1 + $0xd0] sm:$0xff]
      %v238 = vld [vmem:[%s1 + $0xd8] sm:$0xff]
      %v239 = vld [vmem:[%s1 + $0xe0] sm:$0xff]
      %v240 = vld [vmem:[%s1 + $0xe8] sm:$0xff]
      %v241 = vld [vmem:[%s1 + $0xf0] sm:$0xff]
      %v242 = vld [vmem:[%s1 + $0xf8] sm:$0xff]
      %v243 = vld [vmem:[%s1 + $0x100] sm:$0xff]
      %v244 = vld [vmem:[%s1 + $0x108] sm:$0xff]
      %v245 = vld [vmem:[%s1 + $0x110] sm:$0xff]
      %v246 = vld [vmem:[%s1 + $0x118] sm:$0xff]
      %v247 = vld [vmem:[%s1 + $0x120] sm:$0xff]
      %v248 = vld [vmem:[%s1 + $0x128] sm:$0xff]
      %v249 = vld [vmem:[%s1 + $0x130] sm:$0xff]
      %v250 = vld [vmem:[%s1 + $0x138] sm:$0xff]
      %v251 = vld [vmem:[%s1 + $0x140] sm:$0xff]
      %v252 = vld [vmem:[%s1 + $0x148] sm:$0xff]
      %v253 = vld [vmem:[%s1 + $0x150] sm:$0xff]
      %v254 = vld [vmem:[%s1 + $0x158] sm:$0xff]
      %v255 = vld [vmem:[%s1 + $0x160] sm:$0xff]
      %v256 = vld [vmem:[%s1 + $0x168] sm:$0xff]
      %v257 = vld [vmem:[%s1 + $0x170] sm:$0xff]
      %v258 = vld [vmem:[%s1 + $0x178] sm:$0xff]
      %v259 = vld [vmem:[%s1 + $0x180] sm:$0xff]
      %v260 = vld [vmem:[%s1 + $0x188] sm:$0xff]
      %v261 = vld [vmem:[%s1 + $0x190] sm:$0xff]
      %v262 = vld [vmem:[%s1 + $0x198] sm:$0xff]
      %v263 = vld [vmem:[%s1 + $0x1a0] sm:$0xff]
      %v264 = vld [vmem:[%s1 + $0x1a8] sm:$0xff]
      %v265 = vld [vmem:[%s1 + $0x1b0] sm:$0xff]
      %v266 = vld [vmem:[%s1 + $0x1b8] sm:$0xff]
      %v267 = vld [vmem:[%s1 + $0x1c0] sm:$0xff]
      %v268 = vld [vmem:[%s1 + $0x1c8] sm:$0xff]
      %v269 = vld [vmem:[%s1 + $0x1d0] sm:$0xff]
      %v270 = vld [vmem:[%s1 + $0x1d8] sm:$0xff]
      %v271 = vld [vmem:[%s1 + $0x1e0] sm:$0xff]
      %v272 = vld [vmem:[%s1 + $0x1e8] sm:$0xff]
      %v273 = vld [vmem:[%s1 + $0x1f0] sm:$0xff]
      %v274 = vld [vmem:[%s1 + $0x1f8] sm:$0xff]
      %v275 = vld [vmem:[%s1 + $0x200] sm:$0xff]
      %v276 = vld [vmem:[%s1 + $0x208] sm:$0xff]
      %v277 = vld [vmem:[%s1 + $0x210] sm:$0xff]
      %v278 = vld [vmem:[%s1 + $0x218] sm:$0xff]
      %v279 = vld [vmem:[%s1 + $0x220] sm:$0xff]
      %v280 = vld [vmem:[%s1 + $0x228] sm:$0xff]
      %v281 = vld [vmem:[%s1 + $0x230] sm:$0xff]
      %v282 = vld [vmem:[%s1 + $0x238] sm:$0xff]
      %v283 = vld [vmem:[%s1 + $0x240] sm:$0xff]
      %v284 = vld [vmem:[%s1 + $0x248] sm:$0xff]
      %v285 = vld [vmem:[%s1 + $0x250] sm:$0xff]
      %v286 = vld [vmem:[%s1 + $0x258] sm:$0xff]
      %v287 = vld [vmem:[%s1 + $0x260] sm:$0xff]
      %v288 = vld [vmem:[%s1 + $0x268] sm:$0xff]
      %v289 = vld [vmem:[%s1 + $0x270] sm:$0xff]
      %v290 = vld [vmem:[%s1 + $0x278] sm:$0xff]
      %v291 = vld [vmem:[%s1 + $0x280] sm:$0xff]
      %v292 = vld [vmem:[%s1 + $0x288] sm:$0xff]
      %v293 = vld [vmem:[%s1 + $0x290] sm:$0xff]
      %v294 = vld [vmem:[%s1 + $0x298] sm:$0xff]
      %v295 = vld [vmem:[%s1 + $0x2a0] sm:$0xff]
      %v296 = vld [vmem:[%s1 + $0x2a8] sm:$0xff]
      %v297 = vld [vmem:[%s1 + $0x2b0] sm:$0xff]
      %v298 = vld [vmem:[%s1 + $0x2b8] sm:$0xff]
      %v299 = vld [vmem:[%s1 + $0x2c0] sm:$0xff]
      %v300 = vld [vmem:[%s1 + $0x2c8] sm:$0xff]
      %v301 = vld [vmem:[%s1 + $0x2d0] sm:$0xff]
      %v302 = vld [vmem:[%s1 + $0x2d8] sm:$0xff]
      %v303 = vld [vmem:[%s1 + $0x2e0] sm:$0xff]
      %v304 = vld [vmem:[%s1 + $0x2e8] sm:$0xff]
      %v305 = vld [vmem:[%s1 + $0x2f0] sm:$0xff]
      %v306 = vld [vmem:[%s1 + $0x2f8] sm:$0xff]
      %v307 = vld [vmem:[%s1 + $0x300] sm:$0xff]
      %v308 = vld [vmem:[%s1 + $0x308] sm:$0xff]
      %v309 = vld [vmem:[%s1 + $0x310] sm:$0xff]
      %v310 = vld [vmem:[%s1 + $0x318] sm:$0xff]
      %v311 = vld [vmem:[%s1 + $0x320] sm:$0xff]
      %v312 = vld [vmem:[%s1 + $0x328] sm:$0xff]
      %v313 = vld [vmem:[%s1 + $0x330] sm:$0xff]
      %v314 = vld [vmem:[%s1 + $0x338] sm:$0xff]
      %v315 = vld [vmem:[%s1 + $0x340] sm:$0xff]
      %v316 = vld [vmem:[%s1 + $0x348] sm:$0xff]
      %v317 = vld [vmem:[%s1 + $0x350] sm:$0xff]
      %v318 = vld [vmem:[%s1 + $0x358] sm:$0xff]
      %v319 = vld [vmem:[%s1 + $0x360] sm:$0xff]
      %v320 = vld [vmem:[%s1 + $0x368] sm:$0xff]
      %v321 = vld [vmem:[%s1 + $0x370] sm:$0xff]
      %v322 = vld [vmem:[%s1 + $0x378] sm:$0xff]
      %v323 = vld [vmem:[%s1 + $0x380] sm:$0xff]
      %v324 = vld [vmem:[%s1 + $0x388] sm:$0xff]
      %v325 = vld [vmem:[%s1 + $0x390] sm:$0xff]
      %v326 = vld [vmem:[%s1 + $0x398] sm:$0xff]
      %v327 = vld [vmem:[%s1 + $0x3a0] sm:$0xff]
      %v328 = vld [vmem:[%s1 + $0x3a8] sm:$0xff]
      %v329 = vld [vmem:[%s1 + $0x3b0] sm:$0xff]
      %v330 = vld [vmem:[%s1 + $0x3b8] sm:$0xff]
      %v331 = vld [vmem:[%s1 + $0x3c0] sm:$0xff]
      %v332 = vld [vmem:[%s1 + $0x3c8] sm:$0xff]
      %v333 = vld [vmem:[%s1 + $0x3d0] sm:$0xff]
      %v334 = vld [vmem:[%s1 + $0x3d8] sm:$0xff]
      %v335 = vld [vmem:[%s1 + $0x3e0] sm:$0xff]
      %v336 = vld [vmem:[%s1 + $0x3e8] sm:$0xff]
      %v337 = vld [vmem:[%s1 + $0x3f0] sm:$0xff]
      %v338 = vld [vmem:[%s1 + $0x3f8] sm:$0xff]
      %v339 = vld [vmem:[%s1 + $0x400] sm:$0xff]
      %v340 = vld [vmem:[%s1 + $0x408] sm:$0xff]
      %v341 = vld [vmem:[%s1 + $0x410] sm:$0xff]
      %v342 = vld [vmem:[%s1 + $0x418] sm:$0xff]
      %v343 = vld [vmem:[%s1 + $0x420] sm:$0xff]
      %v344 = vld [vmem:[%s1 + $0x428] sm:$0xff]
      %v345 = vld [vmem:[%s1 + $0x430] sm:$0xff]
      %v346 = vld [vmem:[%s1 + $0x438] sm:$0xff]
      %v347 = vld [vmem:[%s1 + $0x440] sm:$0xff]
      %v348 = vld [vmem:[%s1 + $0x448] sm:$0xff]
      %v349 = vld [vmem:[%s1 + $0x450] sm:$0xff]
      %v350 = vld [vmem:[%s1 + $0x458] sm:$0xff]
      %v351 = vld [vmem:[%s1 + $0x460] sm:$0xff]
      %v352 = vld [vmem:[%s1 + $0x468] sm:$0xff]
      %v353 = vld [vmem:[%s1 + $0x470] sm:$0xff]
      %v354 = vld [vmem:[%s1 + $0x478] sm:$0xff]
      %v355 = vld [vmem:[%s2] sm:$0x1]
      %v356 = vld [vmem:[%s200] sm:$0xff]
      %v357 = vld [vmem:[%s200 + $0x8] sm:$0xff]
      %v358 = vld [vmem:[%s200 + $0x10] sm:$0x3]
      %v360 = vperm.slane %v355, 0
      %365 = vst [vmem:[#allocation1] ss:$4 sm:$0xff] %v356
      %s366 = scalar_lea.vmem [#allocation1], 32
      %367 = vst [vmem:[%s366] ss:$4 sm:$0xff] %v357
      %v368 = vld.sshfl [vmem:[#allocation1] sm:$0xff pattern:$0x73625140]
      %v369 = vld.sshfl [vmem:[#allocation1 + $0x8] sm:$0xff pattern:$0x73625140]
      %v370 = vld.sshfl [vmem:[#allocation1 + $0x10] sm:$0xff pattern:$0x73625140]
      %v371 = vld.sshfl [vmem:[#allocation1 + $0x18] sm:$0xff pattern:$0x73625140]
      %v372 = vld.sshfl [vmem:[#allocation1 + $0x20] sm:$0xff pattern:$0x73625140]
      %v373 = vld.sshfl [vmem:[#allocation1 + $0x28] sm:$0xff pattern:$0x73625140]
      %v374 = vld.sshfl [vmem:[#allocation1 + $0x30] sm:$0xff pattern:$0x73625140]
      %v375 = vld.sshfl [vmem:[#allocation1 + $0x38] sm:$0xff pattern:$0x73625140]
      %376 = vst [vmem:[#allocation1] ss:$4 sm:$0xff] %v358
      %v377 = vld.sshfl [vmem:[#allocation1] sm:$0xff pattern:$0x73625140]
      %387 = vmatpush.msra.mxu0 %v226
      %388 = vmatpush.msra.mxu0 %v225
      %389 = vmatpush.msra.mxu0 %v224
      %390 = vmatpush.msra.mxu0 %v223
      %391 = vmatpush.msra.mxu0 %v222
      %392 = vmatpush.msra.mxu0 %v221
      %393 = vmatpush.msra.mxu0 %v220
      %394 = vmatpush.msra.mxu0 %v219
      %395 = vmatpush.msra.mxu0 %v218
      %396 = vmatpush.msra.mxu0 %v217
      %397 = vmatpush.msra.mxu0 %v216
      %398 = vmatpush.msra.mxu0 %v215
      %399 = vmatpush.msra.mxu0 %v214
      %400 = vmatpush.msra.mxu0 %v213
      %401 = vmatpush.msra.mxu0 %v212
      %402 = vmatpush.msra.mxu0 %v211
      %403 = vmatmul.f32.gmra.mxu0 %v368
      %v404 = vpop.f32.mrf.mxu0
      %v405 = vadd.f32 %v360, %v404
      %406 = vdwg.mxu0
      %407 = vmatpush.msra.mxu0 %v242
      %408 = vmatpush.msra.mxu0 %v241
      %409 = vmatpush.msra.mxu0 %v240
      %410 = vmatpush.msra.mxu0 %v239
      %411 = vmatpush.msra.mxu0 %v238
      %412 = vmatpush.msra.mxu0 %v237
      %413 = vmatpush.msra.mxu0 %v236
      %414 = vmatpush.msra.mxu0 %v235
      %415 = vmatpush.msra.mxu0 %v234
      %416 = vmatpush.msra.mxu0 %v233
      %417 = vmatpush.msra.mxu0 %v232
      %418 = vmatpush.msra.mxu0 %v231
      %419 = vmatpush.msra.mxu0 %v230
      %420 = vmatpush.msra.mxu0 %v229
      %421 = vmatpush.msra.mxu0 %v228
      %422 = vmatpush.msra.mxu0 %v227
      %423 = vmatmul.f32.gmra.mxu0 %v369
      %v424 = vpop.f32.mrf.mxu0
      %v425 = vadd.f32 %v405, %v424
      %426 = vdwg.mxu0
      %427 = vmatpush.msra.mxu0 %v258
      %428 = vmatpush.msra.mxu0 %v257
      %429 = vmatpush.msra.mxu0 %v256
      %430 = vmatpush.msra.mxu0 %v255
      %431 = vmatpush.msra.mxu0 %v254
      %432 = vmatpush.msra.mxu0 %v253
      %433 = vmatpush.msra.mxu0 %v252
      %434 = vmatpush.msra.mxu0 %v251
      %435 = vmatpush.msra.mxu0 %v250
      %436 = vmatpush.msra.mxu0 %v249
      %437 = vmatpush.msra.mxu0 %v248
      %438 = vmatpush.msra.mxu0 %v247
      %439 = vmatpush.msra.mxu0 %v246
      %440 = vmatpush.msra.mxu0 %v245
      %441 = vmatpush.msra.mxu0 %v244
      %442 = vmatpush.msra.mxu0 %v243
      %443 = vmatmul.f32.gmra.mxu0 %v370
      %v444 = vpop.f32.mrf.mxu0
      %v445 = vadd.f32 %v425, %v444
      %446 = vdwg.mxu0
      %447 = vmatpush.msra.mxu0 %v274
      %448 = vmatpush.msra.mxu0 %v273
      %449 = vmatpush.msra.mxu0 %v272
      %450 = vmatpush.msra.mxu0 %v271
      %451 = vmatpush.msra.mxu0 %v270
      %452 = vmatpush.msra.mxu0 %v269
      %453 = vmatpush.msra.mxu0 %v268
      %454 = vmatpush.msra.mxu0 %v267
      %455 = vmatpush.msra.mxu0 %v266
      %456 = vmatpush.msra.mxu0 %v265
      %457 = vmatpush.msra.mxu0 %v264
      %458 = vmatpush.msra.mxu0 %v263
      %459 = vmatpush.msra.mxu0 %v262
      %460 = vmatpush.msra.mxu0 %v261
      %461 = vmatpush.msra.mxu0 %v260
      %462 = vmatpush.msra.mxu0 %v259
      %463 = vmatmul.f32.gmra.mxu0 %v371
      %v464 = vpop.f32.mrf.mxu0
      %v465 = vadd.f32 %v445, %v464
      %466 = vdwg.mxu0
      %467 = vmatpush.msra.mxu0 %v290
      %468 = vmatpush.msra.mxu0 %v289
      %469 = vmatpush.msra.mxu0 %v288
      %470 = vmatpush.msra.mxu0 %v287
      %471 = vmatpush.msra.mxu0 %v286
      %472 = vmatpush.msra.mxu0 %v285
      %473 = vmatpush.msra.mxu0 %v284
      %474 = vmatpush.msra.mxu0 %v283
      %475 = vmatpush.msra.mxu0 %v282
      %476 = vmatpush.msra.mxu0 %v281
      %477 = vmatpush.msra.mxu0 %v280
      %478 = vmatpush.msra.mxu0 %v279
      %479 = vmatpush.msra.mxu0 %v278
      %480 = vmatpush.msra.mxu0 %v277
      %481 = vmatpush.msra.mxu0 %v276
      %482 = vmatpush.msra.mxu0 %v275
      %483 = vmatmul.f32.gmra.mxu0 %v372
      %v484 = vpop.f32.mrf.mxu0
      %v485 = vadd.f32 %v465, %v484
      %486 = vdwg.mxu0
      %487 = vmatpush.msra.mxu0 %v306
      %488 = vmatpush.msra.mxu0 %v305
      %489 = vmatpush.msra.mxu0 %v304
      %490 = vmatpush.msra.mxu0 %v303
      %491 = vmatpush.msra.mxu0 %v302
      %492 = vmatpush.msra.mxu0 %v301
      %493 = vmatpush.msra.mxu0 %v300
      %494 = vmatpush.msra.mxu0 %v299
      %495 = vmatpush.msra.mxu0 %v298
      %496 = vmatpush.msra.mxu0 %v297
      %497 = vmatpush.msra.mxu0 %v296
      %498 = vmatpush.msra.mxu0 %v295
      %499 = vmatpush.msra.mxu0 %v294
      %500 = vmatpush.msra.mxu0 %v293
      %501 = vmatpush.msra.mxu0 %v292
      %502 = vmatpush.msra.mxu0 %v291
      %503 = vmatmul.f32.gmra.mxu0 %v373
      %v504 = vpop.f32.mrf.mxu0
      %v505 = vadd.f32 %v485, %v504
      %506 = vdwg.mxu0
      %507 = vmatpush.msra.mxu0 %v322
      %508 = vmatpush.msra.mxu0 %v321
      %509 = vmatpush.msra.mxu0 %v320
      %510 = vmatpush.msra.mxu0 %v319
      %511 = vmatpush.msra.mxu0 %v318
      %512 = vmatpush.msra.mxu0 %v317
      %513 = vmatpush.msra.mxu0 %v316
      %514 = vmatpush.msra.mxu0 %v315
      %515 = vmatpush.msra.mxu0 %v314
      %516 = vmatpush.msra.mxu0 %v313
      %517 = vmatpush.msra.mxu0 %v312
      %518 = vmatpush.msra.mxu0 %v311
      %519 = vmatpush.msra.mxu0 %v310
      %520 = vmatpush.msra.mxu0 %v309
      %521 = vmatpush.msra.mxu0 %v308
      %522 = vmatpush.msra.mxu0 %v307
      %523 = vmatmul.f32.gmra.mxu0 %v374
      %v524 = vpop.f32.mrf.mxu0
      %v525 = vadd.f32 %v505, %v524
      %526 = vdwg.mxu0
      %527 = vmatpush.msra.mxu0 %v338
      %528 = vmatpush.msra.mxu0 %v337
      %529 = vmatpush.msra.mxu0 %v336
      %530 = vmatpush.msra.mxu0 %v335
      %531 = vmatpush.msra.mxu0 %v334
      %532 = vmatpush.msra.mxu0 %v333
      %533 = vmatpush.msra.mxu0 %v332
      %534 = vmatpush.msra.mxu0 %v331
      %535 = vmatpush.msra.mxu0 %v330
      %536 = vmatpush.msra.mxu0 %v329
      %537 = vmatpush.msra.mxu0 %v328
      %538 = vmatpush.msra.mxu0 %v327
      %539 = vmatpush.msra.mxu0 %v326
      %540 = vmatpush.msra.mxu0 %v325
      %541 = vmatpush.msra.mxu0 %v324
      %542 = vmatpush.msra.mxu0 %v323
      %543 = vmatmul.f32.gmra.mxu0 %v375
      %v544 = vpop.f32.mrf.mxu0
      %v545 = vadd.f32 %v525, %v544
      %546 = vdwg.mxu0
      %547 = vmatpush.msra.mxu0 %v354
      %548 = vmatpush.msra.mxu0 %v353
      %549 = vmatpush.msra.mxu0 %v352
      %550 = vmatpush.msra.mxu0 %v351
      %551 = vmatpush.msra.mxu0 %v350
      %552 = vmatpush.msra.mxu0 %v349
      %553 = vmatpush.msra.mxu0 %v348
      %554 = vmatpush.msra.mxu0 %v347
      %555 = vmatpush.msra.mxu0 %v346
      %556 = vmatpush.msra.mxu0 %v345
      %557 = vmatpush.msra.mxu0 %v344
      %558 = vmatpush.msra.mxu0 %v343
      %559 = vmatpush.msra.mxu0 %v342
      %560 = vmatpush.msra.mxu0 %v341
      %561 = vmatpush.msra.mxu0 %v340
      %562 = vmatpush.msra.mxu0 %v339
      %563 = vmatmul.f32.gmra.mxu0 %v377
      %v564 = vpop.f32.mrf.mxu0
      %v565 = vadd.f32 %v545, %v564
      %566 = vdwg.mxu0
      %v567 = vmax.f32 %v565, 0.0
      %s568 = scalar_lea.vmem %s200, 18
      %v569 = vld [vmem:[%s568] sm:$0xff]
      %v570 = vld [vmem:[%s568 + $0x8] sm:$0xff]
      %v571 = vld [vmem:[%s568 + $0x10] sm:$0x3]
      %575 = vst [vmem:[#allocation1] ss:$4 sm:$0xff] %v569
      %s576 = scalar_lea.vmem [#allocation1], 32
      %577 = vst [vmem:[%s576] ss:$4 sm:$0xff] %v570
      %v578 = vld.sshfl [vmem:[#allocation1] sm:$0xff pattern:$0x73625140]
      %v579 = vld.sshfl [vmem:[#allocation1 + $0x8] sm:$0xff pattern:$0x73625140]
      %v580 = vld.sshfl [vmem:[#allocation1 + $0x10] sm:$0xff pattern:$0x73625140]
      %v581 = vld.sshfl [vmem:[#allocation1 + $0x18] sm:$0xff pattern:$0x73625140]
      %v582 = vld.sshfl [vmem:[#allocation1 + $0x20] sm:$0xff pattern:$0x73625140]
      %v583 = vld.sshfl [vmem:[#allocation1 + $0x28] sm:$0xff pattern:$0x73625140]
      %v584 = vld.sshfl [vmem:[#allocation1 + $0x30] sm:$0xff pattern:$0x73625140]
      %v585 = vld.sshfl [vmem:[#allocation1 + $0x38] sm:$0xff pattern:$0x73625140]
      %586 = vst [vmem:[#allocation1] ss:$4 sm:$0xff] %v571
      %v587 = vld.sshfl [vmem:[#allocation1] sm:$0xff pattern:$0x73625140]
      %597 = vmatpush.msra.mxu0 %v226
      %598 = vmatpush.msra.mxu0 %v225
      %599 = vmatpush.msra.mxu0 %v224
      %600 = vmatpush.msra.mxu0 %v223
      %601 = vmatpush.msra.mxu0 %v222
      %602 = vmatpush.msra.mxu0 %v221
      %603 = vmatpush.msra.mxu0 %v220
      %604 = vmatpush.msra.mxu0 %v219
      %605 = vmatpush.msra.mxu0 %v218
      %606 = vmatpush.msra.mxu0 %v217
      %607 = vmatpush.msra.mxu0 %v216
      %608 = vmatpush.msra.mxu0 %v215
      %609 = vmatpush.msra.mxu0 %v214
      %610 = vmatpush.msra.mxu0 %v213
      %611 = vmatpush.msra.mxu0 %v212
      %612 = vmatpush.msra.mxu0 %v211
      %613 = vmatmul.f32.gmra.mxu0 %v578
      %v614 = vpop.f32.mrf.mxu0
      %v615 = vadd.f32 %v360, %v614
      %616 = vdwg.mxu0
      %617 = vmatpush.msra.mxu0 %v242
      %618 = vmatpush.msra.mxu0 %v241
      %619 = vmatpush.msra.mxu0 %v240
      %620 = vmatpush.msra.mxu0 %v239
      %621 = vmatpush.msra.mxu0 %v238
      %622 = vmatpush.msra.mxu0 %v237
      %623 = vmatpush.msra.mxu0 %v236
      %624 = vmatpush.msra.mxu0 %v235
      %625 = vmatpush.msra.mxu0 %v234
      %626 = vmatpush.msra.mxu0 %v233
      %627 = vmatpush.msra.mxu0 %v232
      %628 = vmatpush.msra.mxu0 %v231
      %629 = vmatpush.msra.mxu0 %v230
      %630 = vmatpush.msra.mxu0 %v229
      %631 = vmatpush.msra.mxu0 %v228
      %632 = vmatpush.msra.mxu0 %v227
      %633 = vmatmul.f32.gmra.mxu0 %v579
      %v634 = vpop.f32.mrf.mxu0
      %v635 = vadd.f32 %v615, %v634
      %636 = vdwg.mxu0
      %637 = vmatpush.msra.mxu0 %v258
      %638 = vmatpush.msra.mxu0 %v257
      %639 = vmatpush.msra.mxu0 %v256
      %640 = vmatpush.msra.mxu0 %v255
      %641 = vmatpush.msra.mxu0 %v254
      %642 = vmatpush.msra.mxu0 %v253
      %643 = vmatpush.msra.mxu0 %v252
      %644 = vmatpush.msra.mxu0 %v251
      %645 = vmatpush.msra.mxu0 %v250
      %646 = vmatpush.msra.mxu0 %v249
      %647 = vmatpush.msra.mxu0 %v248
      %648 = vmatpush.msra.mxu0 %v247
      %649 = vmatpush.msra.mxu0 %v246
      %650 = vmatpush.msra.mxu0 %v245
      %651 = vmatpush.msra.mxu0 %v244
      %652 = vmatpush.msra.mxu0 %v243
      %653 = vmatmul.f32.gmra.mxu0 %v580
      %v654 = vpop.f32.mrf.mxu0
      %v655 = vadd.f32 %v635, %v654
      %656 = vdwg.mxu0
      %657 = vmatpush.msra.mxu0 %v274
      %658 = vmatpush.msra.mxu0 %v273
      %659 = vmatpush.msra.mxu0 %v272
      %660 = vmatpush.msra.mxu0 %v271
      %661 = vmatpush.msra.mxu0 %v270
      %662 = vmatpush.msra.mxu0 %v269
      %663 = vmatpush.msra.mxu0 %v268
      %664 = vmatpush.msra.mxu0 %v267
      %665 = vmatpush.msra.mxu0 %v266
      %666 = vmatpush.msra.mxu0 %v265
      %667 = vmatpush.msra.mxu0 %v264
      %668 = vmatpush.msra.mxu0 %v263
      %669 = vmatpush.msra.mxu0 %v262
      %670 = vmatpush.msra.mxu0 %v261
      %671 = vmatpush.msra.mxu0 %v260
      %672 = vmatpush.msra.mxu0 %v259
      %673 = vmatmul.f32.gmra.mxu0 %v581
      %v674 = vpop.f32.mrf.mxu0
      %v675 = vadd.f32 %v655, %v674
      %676 = vdwg.mxu0
      %677 = vmatpush.msra.mxu0 %v290
      %678 = vmatpush.msra.mxu0 %v289
      %679 = vmatpush.msra.mxu0 %v288
      %680 = vmatpush.msra.mxu0 %v287
      %681 = vmatpush.msra.mxu0 %v286
      %682 = vmatpush.msra.mxu0 %v285
      %683 = vmatpush.msra.mxu0 %v284
      %684 = vmatpush.msra.mxu0 %v283
      %685 = vmatpush.msra.mxu0 %v282
      %686 = vmatpush.msra.mxu0 %v281
      %687 = vmatpush.msra.mxu0 %v280
      %688 = vmatpush.msra.mxu0 %v279
      %689 = vmatpush.msra.mxu0 %v278
      %690 = vmatpush.msra.mxu0 %v277
      %691 = vmatpush.msra.mxu0 %v276
      %692 = vmatpush.msra.mxu0 %v275
      %693 = vmatmul.f32.gmra.mxu0 %v582
      %v694 = vpop.f32.mrf.mxu0
      %v695 = vadd.f32 %v675, %v694
      %696 = vdwg.mxu0
      %697 = vmatpush.msra.mxu0 %v306
      %698 = vmatpush.msra.mxu0 %v305
      %699 = vmatpush.msra.mxu0 %v304
      %700 = vmatpush.msra.mxu0 %v303
      %701 = vmatpush.msra.mxu0 %v302
      %702 = vmatpush.msra.mxu0 %v301
      %703 = vmatpush.msra.mxu0 %v300
      %704 = vmatpush.msra.mxu0 %v299
      %705 = vmatpush.msra.mxu0 %v298
      %706 = vmatpush.msra.mxu0 %v297
      %707 = vmatpush.msra.mxu0 %v296
      %708 = vmatpush.msra.mxu0 %v295
      %709 = vmatpush.msra.mxu0 %v294
      %710 = vmatpush.msra.mxu0 %v293
      %711 = vmatpush.msra.mxu0 %v292
      %712 = vmatpush.msra.mxu0 %v291
      %713 = vmatmul.f32.gmra.mxu0 %v583
      %v714 = vpop.f32.mrf.mxu0
      %v715 = vadd.f32 %v695, %v714
      %716 = vdwg.mxu0
      %717 = vmatpush.msra.mxu0 %v322
      %718 = vmatpush.msra.mxu0 %v321
      %719 = vmatpush.msra.mxu0 %v320
      %720 = vmatpush.msra.mxu0 %v319
      %721 = vmatpush.msra.mxu0 %v318
      %722 = vmatpush.msra.mxu0 %v317
      %723 = vmatpush.msra.mxu0 %v316
      %724 = vmatpush.msra.mxu0 %v315
      %725 = vmatpush.msra.mxu0 %v314
      %726 = vmatpush.msra.mxu0 %v313
      %727 = vmatpush.msra.mxu0 %v312
      %728 = vmatpush.msra.mxu0 %v311
      %729 = vmatpush.msra.mxu0 %v310
      %730 = vmatpush.msra.mxu0 %v309
      %731 = vmatpush.msra.mxu0 %v308
      %732 = vmatpush.msra.mxu0 %v307
      %733 = vmatmul.f32.gmra.mxu0 %v584
      %v734 = vpop.f32.mrf.mxu0
      %v735 = vadd.f32 %v715, %v734
      %736 = vdwg.mxu0
      %737 = vmatpush.msra.mxu0 %v338
      %738 = vmatpush.msra.mxu0 %v337
      %739 = vmatpush.msra.mxu0 %v336
      %740 = vmatpush.msra.mxu0 %v335
      %741 = vmatpush.msra.mxu0 %v334
      %742 = vmatpush.msra.mxu0 %v333
      %743 = vmatpush.msra.mxu0 %v332
      %744 = vmatpush.msra.mxu0 %v331
      %745 = vmatpush.msra.mxu0 %v330
      %746 = vmatpush.msra.mxu0 %v329
      %747 = vmatpush.msra.mxu0 %v328
      %748 = vmatpush.msra.mxu0 %v327
      %749 = vmatpush.msra.mxu0 %v326
      %750 = vmatpush.msra.mxu0 %v325
      %751 = vmatpush.msra.mxu0 %v324
      %752 = vmatpush.msra.mxu0 %v323
      %753 = vmatmul.f32.gmra.mxu0 %v585
      %v754 = vpop.f32.mrf.mxu0
      %v755 = vadd.f32 %v735, %v754
      %756 = vdwg.mxu0
      %757 = vmatpush.msra.mxu0 %v354
      %758 = vmatpush.msra.mxu0 %v353
      %759 = vmatpush.msra.mxu0 %v352
      %760 = vmatpush.msra.mxu0 %v351
      %761 = vmatpush.msra.mxu0 %v350
      %762 = vmatpush.msra.mxu0 %v349
      %763 = vmatpush.msra.mxu0 %v348
      %764 = vmatpush.msra.mxu0 %v347
      %765 = vmatpush.msra.mxu0 %v346
      %766 = vmatpush.msra.mxu0 %v345
      %767 = vmatpush.msra.mxu0 %v344
      %768 = vmatpush.msra.mxu0 %v343
      %769 = vmatpush.msra.mxu0 %v342
      %770 = vmatpush.msra.mxu0 %v341
      %771 = vmatpush.msra.mxu0 %v340
      %772 = vmatpush.msra.mxu0 %v339
      %773 = vmatmul.f32.gmra.mxu0 %v587
      %v774 = vpop.f32.mrf.mxu0
      %v775 = vadd.f32 %v755, %v774
      %776 = vdwg.mxu0
      %v777 = vmax.f32 %v775, 0.0
      %v778 = vmul.f32 %v567, 0.25
      %v779 = vmul.f32 %v567, 0.75
      %v780 = vadd.f32 %v778, %v779
      %v781 = vmul.f32 %v777, 0.25
      %v782 = vadd.f32 %v779, %v781
      %v783 = vmul.f32 %v780, 0.75
      %v785 = vrot.slane %v780, 7
      %vm787 = vcmask 1040384
      %v788 = vsel %vm787, %v780, %v785
      %v789 = vmul.f32 %v788, 0.25
      %v790 = vadd.f32 %v783, %v789
      %vm791 = vcmask 517120
      %792 = vst.msk [vmem:[%s205] sm:$0x3] %vm791, %v790
      %v793 = vrot.slane %v780, 1
      %v795 = vsel %vm787, %v793, %v780
      %v796 = vmul.f32 %v795, 0.25
      %v797 = vadd.f32 %v783, %v796
      %798 = vst.msk [vmem:[%s210] sm:$0x3] %vm791, %v797
      %v799 = vmul.f32 %v782, 0.75
      %v801 = vrot.slane %v782, 7
      %v803 = vsel %vm787, %v782, %v801
      %v804 = vmul.f32 %v803, 0.25
      %v805 = vadd.f32 %v799, %v804
      %s806 = scalar_lea.vmem %s205, 2
      %807 = vst.msk [vmem:[%s806] sm:$0x3] %vm791, %v805
      %v808 = vrot.slane %v782, 1
      %v810 = vsel %vm787, %v808, %v782
      %v811 = vmul.f32 %v810, 0.25
      %v812 = vadd.f32 %v799, %v811
      %s813 = scalar_lea.vmem %s210, 2
      %814 = vst.msk [vmem:[%s813] sm:$0x3] %vm791, %v812
      %v815 = vmul.f32 %v777, 0.75
      %v816 = vadd.f32 %v778, %v815
      %v817 = vadd.f32 %v815, %v781
      %v818 = vmul.f32 %v816, 0.75
      %v820 = vrot.slane %v816, 7
      %v822 = vsel %vm787, %v816, %v820
      %v823 = vmul.f32 %v822, 0.25
      %v824 = vadd.f32 %v818, %v823
      %s825 = scalar_lea.vmem %s205, 4
      %826 = vst.msk [vmem:[%s825] sm:$0x3] %vm791, %v824
      %v827 = vrot.slane %v816, 1
      %v829 = vsel %vm787, %v827, %v816
      %v830 = vmul.f32 %v829, 0.25
      %v831 = vadd.f32 %v818, %v830
      %s832 = scalar_lea.vmem %s210, 4
      %833 = vst.msk [vmem:[%s832] sm:$0x3] %vm791, %v831
      %v834 = vmul.f32 %v817, 0.75
      %v836 = vrot.slane %v817, 7
      %v838 = vsel %vm787, %v817, %v836
      %v839 = vmul.f32 %v838, 0.25
      %v840 = vadd.f32 %v834, %v839
      %s841 = scalar_lea.vmem %s205, 6
      %842 = vst.msk [vmem:[%s841] sm:$0x3] %vm791, %v840
      %v843 = vrot.slane %v817, 1
      %v845 = vsel %vm787, %v843, %v817
      %v846 = vmul.f32 %v845, 0.25
      %v847 = vadd.f32 %v834, %v846
      %s848 = scalar_lea.vmem %s210, 6
      %849 = vst.msk [vmem:[%s848] sm:$0x3] %vm791, %v847
      %p850 = scmp.lt.s32.totalorder %s16, 1
      %s851 = scalar_select %p850, %s16, 1
      %s852 = smul.addr %s851, 4
      %s853 = smul.addr %s852, 2
      %s854 = scalar_lea.vmem %s3, %s853
      %p855 = scmp.lt.s32.totalorder %s16, 1
      %s856 = scalar_select %p855, %s16, 1
      %s857 = smul.addr %s856, 4
      %s858 = smul.addr %s857, 2
      %s859 = scalar_lea.vmem %s4, %s858
      // Predicated region
      $region33: #{autoencoder_forward.9} parent=31 // pred_check
        %p860 = pneg %p102
      $region34: #{autoencoder_forward.9} parent=31 // pred_check_branch
        %862 = sbr.rel (%p860) target = $region36
      $region35: #{autoencoder_forward.9} parent=31 // pred_region
        _
      $region36: #{autoencoder_forward.9} parent=31 // pred_fallthru
        _
      // Predicated region
      $region37: #{autoencoder_forward.9} parent=31 // pred_check
        %p863 = pneg %p128
      $region38: #{autoencoder_forward.9} parent=31 // pred_check_branch
        %865 = sbr.rel (%p863) target = $region40
      $region39: #{autoencoder_forward.9} parent=31 // pred_region
        _
      $region40: #{autoencoder_forward.9} parent=31 // pred_fallthru
        _
    $region32: #{autoencoder_forward.9} parent=5 // pred_fallthru
      _
    %p866 = scmp.le.s32.totalorder 2, %s11
    // Predicated region
    $region41: #{autoencoder_forward.9} parent=5 // pred_check
      %p867 = pneg %p866
    $region42: #{autoencoder_forward.9} parent=5 // pred_check_branch
      %869 = sbr.rel (%p867) target = $region44
    $region43: #{autoencoder_forward.9} parent=5 // pred_region
      %s870 = ssub.s32 %s11, 2
      // Predicated region
      $region45: #{autoencoder_forward.9} parent=43 // pred_check
        %p871 = pneg %p108
      $region46: #{autoencoder_forward.9} parent=43 // pred_check_branch
        %873 = sbr.rel (%p871) target = $region48
      $region47: #{autoencoder_forward.9} parent=43 // pred_region
        %p874 = scmp.lt.s32.totalorder %s17, 1
        %s875 = scalar_select %p874, %s17, 1
        %s876 = smul.addr %s875, 4
        %s877 = smul.addr %s876, 2
        %s878 = scalar_lea.vmem %s3, %s877
      $region48: #{autoencoder_forward.9} parent=43 // pred_fallthru
        _
      // Predicated region
      $region49: #{autoencoder_forward.9} parent=43 // pred_check
        %p879 = pneg %p134
      $region50: #{autoencoder_forward.9} parent=43 // pred_check_branch
        %881 = sbr.rel (%p879) target = $region52
      $region51: #{autoencoder_forward.9} parent=43 // pred_region
        %p882 = scmp.lt.s32.totalorder %s17, 1
        %s883 = scalar_select %p882, %s17, 1
        %s884 = smul.addr %s883, 4
        %s885 = smul.addr %s884, 2
        %s886 = scalar_lea.vmem %s4, %s885
      $region52: #{autoencoder_forward.9} parent=43 // pred_fallthru
        _
    $region44: #{autoencoder_forward.9} parent=5 // pred_fallthru
      _
  $region6: #{autoencoder_forward.9} parent=0 // loop_footer
    %s15 = sadd.s32 1, %s11
  $region7: #{autoencoder_forward.9} parent=0 // loop_footer_branch
    %10 = sbr.rel target = $region3
  $region8: #{autoencoder_forward.9} parent=0 // loop_exit
    _

// kernel: autoencoder_forward.10
$region0: #{autoencoder_forward.10}
  #allocation0 [shape = 'u32[]', space=smem, size = 0x4, offset = 0x4, fixed_abs, tag = 'smem constant byte address 0x4 - core index']
  #allocation1 [shape = 'u32[72,128]{1,0:T(1,128)}', space=vmem, size = 0x9000, scoped, tag = 'internal scratch']
  %s0 = inlined_call_operand.vmem [shape: f32[2,4,4,576], index: 0, kind: input, shape index: {}]
  %s1 = inlined_call_operand.vmem [shape: f32[576,32], index: 1, kind: input, shape index: {}]
  %s2 = inlined_call_operand.vmem [shape: f32[1,32], index: 2, kind: input, shape index: {}]
  %s3 = inlined_call_operand.vmem [shape: f32[2,8,4,32], index: 3, kind: output, shape index: {0}]
  %s4 = inlined_call_operand.vmem [shape: f32[2,8,4,32], index: 4, kind: output, shape index: {1}]
  %5 = xla_tuple %s3, %s4
  %s6 = sld [smem:[#allocation0]]
  $region53: #{autoencoder_forward.10} parent=0
    _
  %s8 = ssub.s32 1, %s6
  %s9 = scalar_select 0, %s8, %s6
  loop: start=0, step=1, limit=4
  $region2: #{autoencoder_forward.10} parent=0 // loop_pre_header
    _
  $region3: #{autoencoder_forward.10} parent=0 // loop_header
    %s11 = sphi 0, %s15
    %p12 = scmp.ge.s32.totalorder %s11, 4
    %s21 = sphi 0, %s23
    %s24 = sphi 0, %s21
    %s25 = sphi 0, %s24
    %s41 = sphi 0, %s25
    %s45 = sphi 0, %s45
    %s47 = sphi 0, %s45
    %s48 = sphi 0, %s47
    %s62 = sphi 0, %s48
    %s66 = sphi 0, %s66
    %s68 = sphi 0, %s66
    %s69 = sphi 0, %s68
    %s83 = sphi 0, %s69
    %s89 = sphi 0, %s91
    %s92 = sphi 0, %s89
    %s93 = sphi 0, %s92
    %s109 = sphi 0, %s93
    %s115 = sphi 0, %s117
    %s118 = sphi 0, %s115
    %s119 = sphi 0, %s118
    %s135 = sphi 0, %s119
  $region4: #{autoencoder_forward.10} parent=0 // loop_header_branch
    %14 = sbr.rel (%p12) target = $region8
  $region5: #{autoencoder_forward.10} parent=0 // loop_body
    %s16 = ssub.s32 %s11, 1
    %s17 = ssub.s32 %s11, 2
    %s18 = sadd.s32 %s11, 1
    %s19 = ssub.s32 %s11, %s18
    %p20 = scmp.eq.s32.totalorder %s19, 0
    %s22 = sadd.s32 %s21, 1
    %s23 = scalar_select %p20, %s21, %s22
    %p26 = pneg %p20
    %p27 = scmp.eq.s32.totalorder %s11, 1
    %p28 = por %p26, %p27
    %p29 = scmp.ne.s32.totalorder %s21, %s24
    %p30 = scmp.eq.s32.totalorder %s11, 0
    %p31 = por %p29, %p30
    %p32 = scmp.ne.s32.totalorder %s21, %s24
    %p33 = scmp.eq.s32.totalorder %s16, 1
    %p34 = por %p32, %p33
    %p35 = scmp.ne.s32.totalorder %s24, %s25
    %p36 = scmp.eq.s32.totalorder %s16, 0
    %p37 = por %p35, %p36
    %p38 = scmp.ne.s32.totalorder %s24, %s25
    %p39 = scmp.eq.s32.totalorder %s17, 1
    %p40 = por %p38, %p39
    %p42 = scmp.ne.s32.totalorder %s25, %s41
    %p43 = scmp.eq.s32.totalorder %s17, 0
    %p44 = por %p42, %p43
    %s46 = sadd.s32 %s45, 1
    %p49 = scmp.eq.s32.totalorder %s11, 1
    %p50 = scmp.ne.s32.totalorder %s45, %s47
    %p51 = scmp.eq.s32.totalorder %s11, 0
    %p52 = por %p50, %p51
    %p53 = scmp.ne.s32.totalorder %s45, %s47
    %p54 = scmp.eq.s32.totalorder %s16, 1
    %p55 = por %p53, %p54
    %p56 = scmp.ne.s32.totalorder %s47, %s48
    %p57 = scmp.eq.s32.totalorder %s16, 0
    %p58 = por %p56, %p57
    %p59 = scmp.ne.s32.totalorder %s47, %s48
    %p60 = scmp.eq.s32.totalorder %s17, 1
    %p61 = por %p59, %p60
    %p63 = scmp.ne.s32.totalorder %s48, %s62
    %p64 = scmp.eq.s32.totalorder %s17, 0
    %p65 = por %p63, %p64
    %s67 = sadd.s32 %s66, 1
    %p70 = scmp.eq.s32.totalorder %s11, 1
    %p71 = scmp.ne.s32.totalorder %s66, %s68
    %p72 = scmp.eq.s32.totalorder %s11, 0
    %p73 = por %p71, %p72
    %p74 = scmp.ne.s32.totalorder %s66, %s68
    %p75 = scmp.eq.s32.totalorder %s16, 1
    %p76 = por %p74, %p75
    %p77 = scmp.ne.s32.totalorder %s68, %s69
    %p78 = scmp.eq.s32.totalorder %s16, 0
    %p79 = por %p77, %p78
    %p80 = scmp.ne.s32.totalorder %s68, %s69
    %p81 = scmp.eq.s32.totalorder %s17, 1
    %p82 = por %p80, %p81
    %p84 = scmp.ne.s32.totalorder %s69, %s83
    %p85 = scmp.eq.s32.totalorder %s17, 0
    %p86 = por %p84, %p85
    %s87 = ssub.s32 %s11, %s18
    %p88 = scmp.eq.s32.totalorder %s87, 0
    %s90 = sadd.s32 %s89, 1
    %s91 = scalar_select %p88, %s89, %s90
    %p94 = pneg %p88
    %p95 = scmp.eq.s32.totalorder %s11, 1
    %p96 = por %p94, %p95
    %p97 = scmp.ne.s32.totalorder %s89, %s92
    %p98 = scmp.eq.s32.totalorder %s11, 0
    %p99 = por %p97, %p98
    %p100 = scmp.ne.s32.totalorder %s89, %s92
    %p101 = scmp.eq.s32.totalorder %s16, 1
    %p102 = por %p100, %p101
    %p103 = scmp.ne.s32.totalorder %s92, %s93
    %p104 = scmp.eq.s32.totalorder %s16, 0
    %p105 = por %p103, %p104
    %p106 = scmp.ne.s32.totalorder %s92, %s93
    %p107 = scmp.eq.s32.totalorder %s17, 1
    %p108 = por %p106, %p107
    %p110 = scmp.ne.s32.totalorder %s93, %s109
    %p111 = scmp.eq.s32.totalorder %s17, 0
    %p112 = por %p110, %p111
    %s113 = ssub.s32 %s11, %s18
    %p114 = scmp.eq.s32.totalorder %s113, 0
    %s116 = sadd.s32 %s115, 1
    %s117 = scalar_select %p114, %s115, %s116
    %p120 = pneg %p114
    %p121 = scmp.eq.s32.totalorder %s11, 1
    %p122 = por %p120, %p121
    %p123 = scmp.ne.s32.totalorder %s115, %s118
    %p124 = scmp.eq.s32.totalorder %s11, 0
    %p125 = por %p123, %p124
    %p126 = scmp.ne.s32.totalorder %s115, %s118
    %p127 = scmp.eq.s32.totalorder %s16, 1
    %p128 = por %p126, %p127
    %p129 = scmp.ne.s32.totalorder %s118, %s119
    %p130 = scmp.eq.s32.totalorder %s16, 0
    %p131 = por %p129, %p130
    %p132 = scmp.ne.s32.totalorder %s118, %s119
    %p133 = scmp.eq.s32.totalorder %s17, 1
    %p134 = por %p132, %p133
    %p136 = scmp.ne.s32.totalorder %s119, %s135
    %p137 = scmp.eq.s32.totalorder %s17, 0
    %p138 = por %p136, %p137
    %p139 = scmp.le.s32.totalorder 1, %s11
    %p140 = scmp.lt.s32.totalorder %s11, 3
    %p141 = pnand %p139, %p140
    %p142 = pneg %p141
    // Predicated region
    $region9: #{autoencoder_forward.10} parent=5 // pred_check
      _
    $region10: #{autoencoder_forward.10} parent=5 // pred_check_branch
      %144 = sbr.rel (%p141) target = $region12
    $region11: #{autoencoder_forward.10} parent=5 // pred_region
      %s145 = ssub.s32 %s11, 1
      // Predicated region
      $region13: #{autoencoder_forward.10} parent=11 // pred_check
        %p146 = pneg %p58
      $region14: #{autoencoder_forward.10} parent=11 // pred_check_branch
        %148 = sbr.rel (%p146) target = $region16
      $region15: #{autoencoder_forward.10} parent=11 // pred_region
        _
      $region16: #{autoencoder_forward.10} parent=11 // pred_fallthru
        _
      // Predicated region
      $region17: #{autoencoder_forward.10} parent=11 // pred_check
        %p149 = pneg %p79
      $region18: #{autoencoder_forward.10} parent=11 // pred_check_branch
        %151 = sbr.rel (%p149) target = $region20
      $region19: #{autoencoder_forward.10} parent=11 // pred_region
        _
      $region20: #{autoencoder_forward.10} parent=11 // pred_fallthru
        _
    $region12: #{autoencoder_forward.10} parent=5 // pred_fallthru
      _
    %p152 = scmp.lt.s32.totalorder %s11, 2
    // Predicated region
    $region21: #{autoencoder_forward.10} parent=5 // pred_check
      %p153 = pneg %p152
    $region22: #{autoencoder_forward.10} parent=5 // pred_check_branch
      %155 = sbr.rel (%p153) target = $region24
    $region23: #{autoencoder_forward.10} parent=5 // pred_region
      // Predicated region
      $region25: #{autoencoder_forward.10} parent=23 // pred_check
        %p156 = pneg %p31
      $region26: #{autoencoder_forward.10} parent=23 // pred_check_branch
        %158 = sbr.rel (%p156) target = $region28
      $region27: #{autoencoder_forward.10} parent=23 // pred_region
        %p159 = scmp.lt.s32.totalorder %s11, 1
        %s160 = scalar_select %p159, %s11, 1
        %s161 = smul.addr %s160, 20
        %s162 = smul.addr %s161, 4
        %s163 = scalar_lea.vmem %s0, %s162
      $region28: #{autoencoder_forward.10} parent=23 // pred_fallthru
        _
    $region24: #{autoencoder_forward.10} parent=5 // pred_fallthru
      _
    %p164 = scmp.le.s32.totalorder 1, %s11
    %p165 = scmp.lt.s32.totalorder %s11, 3
    %p166 = pnand %p164, %p165
    %p167 = pneg %p166
    // Predicated region
    $region29: #{autoencoder_forward.10} parent=5 // pred_check
      _
    $region30: #{autoencoder_forward.10} parent=5 // pred_check_branch
      %169 = sbr.rel (%p166) target = $region32
    $region31: #{autoencoder_forward.10} parent=5 // pred_region
      %s170 = ssub.s32 %s11, 1
      %p171 = scmp.lt.s32.totalorder %s16, 1
      %s172 = scalar_select %p171, %s16, 1
      %s173 = smul.addr %s172, 20
      %s174 = smul.addr %s173, 4
      %s175 = scalar_lea.vmem %s0, %s174
      %p176 = pneg %p37
      %p177 = pneg %p34
      %p178 = pneg %p58
      %p179 = pneg %p55
      %p180 = pneg %p79
      %p181 = pneg %p76
      %p182 = pneg %p105
      %p183 = pneg %p102
      %p184 = scmp.lt.s32.totalorder %s16, 1
      %s185 = scalar_select %p184, %s16, 1
      %s186 = smul.addr %s185, 8
      %s187 = smul.addr %s186, 4
      %s188 = scalar_lea.vmem %s3, %s187
      %p189 = pneg %p131
      %p190 = pneg %p128
      %p191 = scmp.lt.s32.totalorder %s16, 1
      %s192 = scalar_select %p191, %s16, 1
      %s193 = smul.addr %s192, 8
      %s194 = smul.addr %s193, 4
      %s195 = scalar_lea.vmem %s4, %s194
      %p196 = scmp.lt.s32.totalorder %s16, 1
      %s197 = scalar_select %p196, %s16, 1
      %s198 = smul.addr %s197, 20
      %s199 = smul.addr %s198, 4
      %s200 = scalar_lea.vmem %s0, %s199
      %p201 = scmp.lt.s32.totalorder %s16, 1
      %s202 = scalar_select %p201, %s16, 1
      %s203 = smul.addr %s202, 8
      %s204 = smul.addr %s203, 4
      %s205 = scalar_lea.vmem %s3, %s204
      %p206 = scmp.lt.s32.totalorder %s16, 1
      %s207 = scalar_select %p206, %s16, 1
      %s208 = smul.addr %s207, 8
      %s209 = smul.addr %s208, 4
      %s210 = scalar_lea.vmem %s4, %s209
      %v211 = vld [vmem:[%s1] sm:$0xff]
      %v212 = vld [vmem:[%s1 + $0x8] sm:$0xff]
      %v213 = vld [vmem:[%s1 + $0x10] sm:$0xff]
      %v214 = vld [vmem:[%s1 + $0x18] sm:$0xff]
      %v215 = vld [vmem:[%s1 + $0x20] sm:$0xff]
      %v216 = vld [vmem:[%s1 + $0x28] sm:$0xff]
      %v217 = vld [vmem:[%s1 + $0x30] sm:$0xff]
      %v218 = vld [vmem:[%s1 + $0x38] sm:$0xff]
      %v219 = vld [vmem:[%s1 + $0x40] sm:$0xff]
      %v220 = vld [vmem:[%s1 + $0x48] sm:$0xff]
      %v221 = vld [vmem:[%s1 + $0x50] sm:$0xff]
      %v222 = vld [vmem:[%s1 + $0x58] sm:$0xff]
      %v223 = vld [vmem:[%s1 + $0x60] sm:$0xff]
      %v224 = vld [vmem:[%s1 + $0x68] sm:$0xff]
      %v225 = vld [vmem:[%s1 + $0x70] sm:$0xff]
      %v226 = vld [vmem:[%s1 + $0x78] sm:$0xff]
      %v227 = vld [vmem:[%s1 + $0x80] sm:$0xff]
      %v228 = vld [vmem:[%s1 + $0x88] sm:$0xff]
      %v229 = vld [vmem:[%s1 + $0x90] sm:$0xff]
      %v230 = vld [vmem:[%s1 + $0x98] sm:$0xff]
      %v231 = vld [vmem:[%s1 + $0xa0] sm:$0xff]
      %v232 = vld [vmem:[%s1 + $0xa8] sm:$0xff]
      %v233 = vld [vmem:[%s1 + $0xb0] sm:$0xff]
      %v234 = vld [vmem:[%s1 + $0xb8] sm:$0xff]
      %v235 = vld [vmem:[%s1 + $0xc0] sm:$0xff]
      %v236 = vld [vmem:[%s1 + $0xc8] sm:$0xff]
      %v237 = vld [vmem:[%s1 + $0xd0] sm:$0xff]
      %v238 = vld [vmem:[%s1 + $0xd8] sm:$0xff]
      %v239 = vld [vmem:[%s1 + $0xe0] sm:$0xff]
      %v240 = vld [vmem:[%s1 + $0xe8] sm:$0xff]
      %v241 = vld [vmem:[%s1 + $0xf0] sm:$0xff]
      %v242 = vld [vmem:[%s1 + $0xf8] sm:$0xff]
      %v243 = vld [vmem:[%s1 + $0x100] sm:$0xff]
      %v244 = vld [vmem:[%s1 + $0x108] sm:$0xff]
      %v245 = vld [vmem:[%s1 + $0x110] sm:$0xff]
      %v246 = vld [vmem:[%s1 + $0x118] sm:$0xff]
      %v247 = vld [vmem:[%s1 + $0x120] sm:$0xff]
      %v248 = vld [vmem:[%s1 + $0x128] sm:$0xff]
      %v249 = vld [vmem:[%s1 + $0x130] sm:$0xff]
      %v250 = vld [vmem:[%s1 + $0x138] sm:$0xff]
      %v251 = vld [vmem:[%s1 + $0x140] sm:$0xff]
      %v252 = vld [vmem:[%s1 + $0x148] sm:$0xff]
      %v253 = vld [vmem:[%s1 + $0x150] sm:$0xff]
      %v254 = vld [vmem:[%s1 + $0x158] sm:$0xff]
      %v255 = vld [vmem:[%s1 + $0x160] sm:$0xff]
      %v256 = vld [vmem:[%s1 + $0x168] sm:$0xff]
      %v257 = vld [vmem:[%s1 + $0x170] sm:$0xff]
      %v258 = vld [vmem:[%s1 + $0x178] sm:$0xff]
      %v259 = vld [vmem:[%s1 + $0x180] sm:$0xff]
      %v260 = vld [vmem:[%s1 + $0x188] sm:$0xff]
      %v261 = vld [vmem:[%s1 + $0x190] sm:$0xff]
      %v262 = vld [vmem:[%s1 + $0x198] sm:$0xff]
      %v263 = vld [vmem:[%s1 + $0x1a0] sm:$0xff]
      %v264 = vld [vmem:[%s1 + $0x1a8] sm:$0xff]
      %v265 = vld [vmem:[%s1 + $0x1b0] sm:$0xff]
      %v266 = vld [vmem:[%s1 + $0x1b8] sm:$0xff]
      %v267 = vld [vmem:[%s1 + $0x1c0] sm:$0xff]
      %v268 = vld [vmem:[%s1 + $0x1c8] sm:$0xff]
      %v269 = vld [vmem:[%s1 + $0x1d0] sm:$0xff]
      %v270 = vld [vmem:[%s1 + $0x1d8] sm:$0xff]
      %v271 = vld [vmem:[%s1 + $0x1e0] sm:$0xff]
      %v272 = vld [vmem:[%s1 + $0x1e8] sm:$0xff]
      %v273 = vld [vmem:[%s1 + $0x1f0] sm:$0xff]
      %v274 = vld [vmem:[%s1 + $0x1f8] sm:$0xff]
      %v275 = vld [vmem:[%s1 + $0x200] sm:$0xff]
      %v276 = vld [vmem:[%s1 + $0x208] sm:$0xff]
      %v277 = vld [vmem:[%s1 + $0x210] sm:$0xff]
      %v278 = vld [vmem:[%s1 + $0x218] sm:$0xff]
      %v279 = vld [vmem:[%s1 + $0x220] sm:$0xff]
      %v280 = vld [vmem:[%s1 + $0x228] sm:$0xff]
      %v281 = vld [vmem:[%s1 + $0x230] sm:$0xff]
      %v282 = vld [vmem:[%s1 + $0x238] sm:$0xff]
      %v283 = vld [vmem:[%s2] sm:$0x1]
      %v284 = vld [vmem:[%s200] sm:$0xff]
      %v285 = vld [vmem:[%s200 + $0x8] sm:$0xff]
      %v286 = vld [vmem:[%s200 + $0x10] sm:$0xf]
      %v288 = vperm.slane %v283, 0
      %293 = vst [vmem:[#allocation1] ss:$2 sm:$0xff] %v284
      %s294 = scalar_lea.vmem [#allocation1], 16
      %295 = vst [vmem:[%s294] ss:$2 sm:$0xff] %v285
      %s296 = scalar_lea.vmem [#allocation1], 32
      %297 = vst [vmem:[%s296] ss:$2 sm:$0xff] %v286
      %v298 = vld.sshfl [vmem:[#allocation1] sm:$0xff pattern:$0x75316420]
      %v299 = vld.sshfl [vmem:[#allocation1 + $0x8] sm:$0xff pattern:$0x75316420]
      %v300 = vld.sshfl [vmem:[#allocation1 + $0x10] sm:$0xff pattern:$0x75316420]
      %v301 = vld.sshfl [vmem:[#allocation1 + $0x18] sm:$0xff pattern:$0x75316420]
      %v302 = vld.sshfl [vmem:[#allocation1 + $0x20] sm:$0xff pattern:$0x75316420]
      %vm307 = vcmask 523264
      %v308 = vsel %vm307, %v302, 0
      %310 = vmatpush.msra.mxu0 %v226
      %311 = vmatpush.msra.mxu0 %v225
      %312 = vmatpush.msra.mxu0 %v224
      %313 = vmatpush.msra.mxu0 %v223
      %314 = vmatpush.msra.mxu0 %v222
      %315 = vmatpush.msra.mxu0 %v221
      %316 = vmatpush.msra.mxu0 %v220
      %317 = vmatpush.msra.mxu0 %v219
      %318 = vmatpush.msra.mxu0 %v218
      %319 = vmatpush.msra.mxu0 %v217
      %320 = vmatpush.msra.mxu0 %v216
      %321 = vmatpush.msra.mxu0 %v215
      %322 = vmatpush.msra.mxu0 %v214
      %323 = vmatpush.msra.mxu0 %v213
      %324 = vmatpush.msra.mxu0 %v212
      %325 = vmatpush.msra.mxu0 %v211
      %326 = vmatmul.f32.gmra.mxu0 %v298
      %v327 = vpop.f32.mrf.mxu0
      %v328 = vadd.f32 %v288, %v327
      %329 = vdwg.mxu0
      %330 = vmatpush.msra.mxu0 %v242
      %331 = vmatpush.msra.mxu0 %v241
      %332 = vmatpush.msra.mxu0 %v240
      %333 = vmatpush.msra.mxu0 %v239
      %334 = vmatpush.msra.mxu0 %v238
      %335 = vmatpush.msra.mxu0 %v237
      %336 = vmatpush.msra.mxu0 %v236
      %337 = vmatpush.msra.mxu0 %v235
      %338 = vmatpush.msra.mxu0 %v234
      %339 = vmatpush.msra.mxu0 %v233
      %340 = vmatpush.msra.mxu0 %v232
      %341 = vmatpush.msra.mxu0 %v231
      %342 = vmatpush.msra.mxu0 %v230
      %343 = vmatpush.msra.mxu0 %v229
      %344 = vmatpush.msra.mxu0 %v228
      %345 = vmatpush.msra.mxu0 %v227
      %346 = vmatmul.f32.gmra.mxu0 %v299
      %v347 = vpop.f32.mrf.mxu0
      %v348 = vadd.f32 %v328, %v347
      %349 = vdwg.mxu0
      %350 = vmatpush.msra.mxu0 %v258
      %351 = vmatpush.msra.mxu0 %v257
      %352 = vmatpush.msra.mxu0 %v256
      %353 = vmatpush.msra.mxu0 %v255
      %354 = vmatpush.msra.mxu0 %v254
      %355 = vmatpush.msra.mxu0 %v253
      %356 = vmatpush.msra.mxu0 %v252
      %357 = vmatpush.msra.mxu0 %v251
      %358 = vmatpush.msra.mxu0 %v250
      %359 = vmatpush.msra.mxu0 %v249
      %360 = vmatpush.msra.mxu0 %v248
      %361 = vmatpush.msra.mxu0 %v247
      %362 = vmatpush.msra.mxu0 %v246
      %363 = vmatpush.msra.mxu0 %v245
      %364 = vmatpush.msra.mxu0 %v244
      %365 = vmatpush.msra.mxu0 %v243
      %366 = vmatmul.f32.gmra.mxu0 %v300
      %v367 = vpop.f32.mrf.mxu0
      %v368 = vadd.f32 %v348, %v367
      %369 = vdwg.mxu0
      %370 = vmatpush.msra.mxu0 %v274
      %371 = vmatpush.msra.mxu0 %v273
      %372 = vmatpush.msra.mxu0 %v272
      %373 = vmatpush.msra.mxu0 %v271
      %374 = vmatpush.msra.mxu0 %v270
      %375 = vmatpush.msra.mxu0 %v269
      %376 = vmatpush.msra.mxu0 %v268
      %377 = vmatpush.msra.mxu0 %v267
      %378 = vmatpush.msra.mxu0 %v266
      %379 = vmatpush.msra.mxu0 %v265
      %380 = vmatpush.msra.mxu0 %v264
      %381 = vmatpush.msra.mxu0 %v263
      %382 = vmatpush.msra.mxu0 %v262
      %383 = vmatpush.msra.mxu0 %v261
      %384 = vmatpush.msra.mxu0 %v260
      %385 = vmatpush.msra.mxu0 %v259
      %386 = vmatmul.f32.gmra.mxu0 %v301
      %v387 = vpop.f32.mrf.mxu0
      %v388 = vadd.f32 %v368, %v387
      %389 = vdwg.mxu0
      %390 = vmatpush.msra.mxu0 0.0
      %391 = vmatpush.msra.mxu0 0.0
      %392 = vmatpush.msra.mxu0 0.0
      %393 = vmatpush.msra.mxu0 0.0
      %394 = vmatpush.msra.mxu0 0.0
      %395 = vmatpush.msra.mxu0 0.0
      %396 = vmatpush.msra.mxu0 0.0
      %397 = vmatpush.msra.mxu0 0.0
      %398 = vmatpush.msra.mxu0 %v282
      %399 = vmatpush.msra.mxu0 %v281
      %400 = vmatpush.msra.mxu0 %v280
      %401 = vmatpush.msra.mxu0 %v279
      %402 = vmatpush.msra.mxu0 %v278
      %403 = vmatpush.msra.mxu0 %v277
      %404 = vmatpush.msra.mxu0 %v276
      %405 = vmatpush.msra.mxu0 %v275
      %406 = vmatmul.f32.gmra.mxu0 %v308
      %v407 = vpop.f32.mrf.mxu0
      %v408 = vadd.f32 %v388, %v407
      %409 = vdwg.mxu0
      %v410 = vmax.f32 %v408, 0.0
      %s411 = scalar_lea.vmem %s200, 20
      %v412 = vld [vmem:[%s411] sm:$0xff]
      %v413 = vld [vmem:[%s411 + $0x8] sm:$0xff]
      %v414 = vld [vmem:[%s411 + $0x10] sm:$0xf]
      %418 = vst [vmem:[#allocation1] ss:$2 sm:$0xff] %v412
      %s419 = scalar_lea.vmem [#allocation1], 16
      %420 = vst [vmem:[%s419] ss:$2 sm:$0xff] %v413
      %s421 = scalar_lea.vmem [#allocation1], 32
      %422 = vst [vmem:[%s421] ss:$2 sm:$0xff] %v414
      %v423 = vld.sshfl [vmem:[#allocation1] sm:$0xff pattern:$0x75316420]
      %v424 = vld.sshfl [vmem:[#allocation1 + $0x8] sm:$0xff pattern:$0x75316420]
      %v425 = vld.sshfl [vmem:[#allocation1 + $0x10] sm:$0xff pattern:$0x75316420]
      %v426 = vld.sshfl [vmem:[#allocation1 + $0x18] sm:$0xff pattern:$0x75316420]
      %v427 = vld.sshfl [vmem:[#allocation1 + $0x20] sm:$0xff pattern:$0x75316420]
      %v432 = vsel %vm307, %v427, 0
      %434 = vmatpush.msra.mxu0 %v226
      %435 = vmatpush.msra.mxu0 %v225
      %436 = vmatpush.msra.mxu0 %v224
      %437 = vmatpush.msra.mxu0 %v223
      %438 = vmatpush.msra.mxu0 %v222
      %439 = vmatpush.msra.mxu0 %v221
      %440 = vmatpush.msra.mxu0 %v220
      %441 = vmatpush.msra.mxu0 %v219
      %442 = vmatpush.msra.mxu0 %v218
      %443 = vmatpush.msra.mxu0 %v217
      %444 = vmatpush.msra.mxu0 %v216
      %445 = vmatpush.msra.mxu0 %v215
      %446 = vmatpush.msra.mxu0 %v214
      %447 = vmatpush.msra.mxu0 %v213
      %448 = vmatpush.msra.mxu0 %v212
      %449 = vmatpush.msra.mxu0 %v211
      %450 = vmatmul.f32.gmra.mxu0 %v423
      %v451 = vpop.f32.mrf.mxu0
      %v452 = vadd.f32 %v288, %v451
      %453 = vdwg.mxu0
      %454 = vmatpush.msra.mxu0 %v242
      %455 = vmatpush.msra.mxu0 %v241
      %456 = vmatpush.msra.mxu0 %v240
      %457 = vmatpush.msra.mxu0 %v239
      %458 = vmatpush.msra.mxu0 %v238
      %459 = vmatpush.msra.mxu0 %v237
      %460 = vmatpush.msra.mxu0 %v236
      %461 = vmatpush.msra.mxu0 %v235
      %462 = vmatpush.msra.mxu0 %v234
      %463 = vmatpush.msra.mxu0 %v233
      %464 = vmatpush.msra.mxu0 %v232
      %465 = vmatpush.msra.mxu0 %v231
      %466 = vmatpush.msra.mxu0 %v230
      %467 = vmatpush.msra.mxu0 %v229
      %468 = vmatpush.msra.mxu0 %v228
      %469 = vmatpush.msra.mxu0 %v227
      %470 = vmatmul.f32.gmra.mxu0 %v424
      %v471 = vpop.f32.mrf.mxu0
      %v472 = vadd.f32 %v452, %v471
      %473 = vdwg.mxu0
      %474 = vmatpush.msra.mxu0 %v258
      %475 = vmatpush.msra.mxu0 %v257
      %476 = vmatpush.msra.mxu0 %v256
      %477 = vmatpush.msra.mxu0 %v255
      %478 = vmatpush.msra.mxu0 %v254
      %479 = vmatpush.msra.mxu0 %v253
      %480 = vmatpush.msra.mxu0 %v252
      %481 = vmatpush.msra.mxu0 %v251
      %482 = vmatpush.msra.mxu0 %v250
      %483 = vmatpush.msra.mxu0 %v249
      %484 = vmatpush.msra.mxu0 %v248
      %485 = vmatpush.msra.mxu0 %v247
      %486 = vmatpush.msra.mxu0 %v246
      %487 = vmatpush.msra.mxu0 %v245
      %488 = vmatpush.msra.mxu0 %v244
      %489 = vmatpush.msra.mxu0 %v243
      %490 = vmatmul.f32.gmra.mxu0 %v425
      %v491 = vpop.f32.mrf.mxu0
      %v492 = vadd.f32 %v472, %v491
      %493 = vdwg.mxu0
      %494 = vmatpush.msra.mxu0 %v274
      %495 = vmatpush.msra.mxu0 %v273
      %496 = vmatpush.msra.mxu0 %v272
      %497 = vmatpush.msra.mxu0 %v271
      %498 = vmatpush.msra.mxu0 %v270
      %499 = vmatpush.msra.mxu0 %v269
      %500 = vmatpush.msra.mxu0 %v268
      %501 = vmatpush.msra.mxu0 %v267
      %502 = vmatpush.msra.mxu0 %v266
      %503 = vmatpush.msra.mxu0 %v265
      %504 = vmatpush.msra.mxu0 %v264
      %505 = vmatpush.msra.mxu0 %v263
      %506 = vmatpush.msra.mxu0 %v262
      %507 = vmatpush.msra.mxu0 %v261
      %508 = vmatpush.msra.mxu0 %v260
      %509 = vmatpush.msra.mxu0 %v259
      %510 = vmatmul.f32.gmra.mxu0 %v426
      %v511 = vpop.f32.mrf.mxu0
      %v512 = vadd.f32 %v492, %v511
      %513 = vdwg.mxu0
      %514 = vmatpush.msra.mxu0 0.0
      %515 = vmatpush.msra.mxu0 0.0
      %516 = vmatpush.msra.mxu0 0.0
      %517 = vmatpush.msra.mxu0 0.0
      %518 = vmatpush.msra.mxu0 0.0
      %519 = vmatpush.msra.mxu0 0.0
      %520 = vmatpush.msra.mxu0 0.0
      %521 = vmatpush.msra.mxu0 0.0
      %522 = vmatpush.msra.mxu0 %v282
      %523 = vmatpush.msra.mxu0 %v281
      %524 = vmatpush.msra.mxu0 %v280
      %525 = vmatpush.msra.mxu0 %v279
      %526 = vmatpush.msra.mxu0 %v278
      %527 = vmatpush.msra.mxu0 %v277
      %528 = vmatpush.msra.mxu0 %v276
      %529 = vmatpush.msra.mxu0 %v275
      %530 = vmatmul.f32.gmra.mxu0 %v432
      %v531 = vpop.f32.mrf.mxu0
      %v532 = vadd.f32 %v512, %v531
      %533 = vdwg.mxu0
      %v534 = vmax.f32 %v532, 0.0
      %s535 = scalar_lea.vmem %s200, 40
      %v536 = vld [vmem:[%s535] sm:$0xff]
      %v537 = vld [vmem:[%s535 + $0x8] sm:$0xff]
      %v538 = vld [vmem:[%s535 + $0x10] sm:$0xf]
      %542 = vst [vmem:[#allocation1] ss:$2 sm:$0xff] %v536
      %s543 = scalar_lea.vmem [#allocation1], 16
      %544 = vst [vmem:[%s543] ss:$2 sm:$0xff] %v537
      %s545 = scalar_lea.vmem [#allocation1], 32
      %546 = vst [vmem:[%s545] ss:$2 sm:$0xff] %v538
      %v547 = vld.sshfl [vmem:[#allocation1] sm:$0xff pattern:$0x75316420]
      %v548 = vld.sshfl [vmem:[#allocation1 + $0x8] sm:$0xff pattern:$0x75316420]
      %v549 = vld.sshfl [vmem:[#allocation1 + $0x10] sm:$0xff pattern:$0x75316420]
      %v550 = vld.sshfl [vmem:[#allocation1 + $0x18] sm:$0xff pattern:$0x75316420]
      %v551 = vld.sshfl [vmem:[#allocation1 + $0x20] sm:$0xff pattern:$0x75316420]
      %v556 = vsel %vm307, %v551, 0
      %558 = vmatpush.msra.mxu0 %v226
      %559 = vmatpush.msra.mxu0 %v225
      %560 = vmatpush.msra.mxu0 %v224
      %561 = vmatpush.msra.mxu0 %v223
      %562 = vmatpush.msra.mxu0 %v222
      %563 = vmatpush.msra.mxu0 %v221
      %564 = vmatpush.msra.mxu0 %v220
      %565 = vmatpush.msra.mxu0 %v219
      %566 = vmatpush.msra.mxu0 %v218
      %567 = vmatpush.msra.mxu0 %v217
      %568 = vmatpush.msra.mxu0 %v216
      %569 = vmatpush.msra.mxu0 %v215
      %570 = vmatpush.msra.mxu0 %v214
      %571 = vmatpush.msra.mxu0 %v213
      %572 = vmatpush.msra.mxu0 %v212
      %573 = vmatpush.msra.mxu0 %v211
      %574 = vmatmul.f32.gmra.mxu0 %v547
      %v575 = vpop.f32.mrf.mxu0
      %v576 = vadd.f32 %v288, %v575
      %577 = vdwg.mxu0
      %578 = vmatpush.msra.mxu0 %v242
      %579 = vmatpush.msra.mxu0 %v241
      %580 = vmatpush.msra.mxu0 %v240
      %581 = vmatpush.msra.mxu0 %v239
      %582 = vmatpush.msra.mxu0 %v238
      %583 = vmatpush.msra.mxu0 %v237
      %584 = vmatpush.msra.mxu0 %v236
      %585 = vmatpush.msra.mxu0 %v235
      %586 = vmatpush.msra.mxu0 %v234
      %587 = vmatpush.msra.mxu0 %v233
      %588 = vmatpush.msra.mxu0 %v232
      %589 = vmatpush.msra.mxu0 %v231
      %590 = vmatpush.msra.mxu0 %v230
      %591 = vmatpush.msra.mxu0 %v229
      %592 = vmatpush.msra.mxu0 %v228
      %593 = vmatpush.msra.mxu0 %v227
      %594 = vmatmul.f32.gmra.mxu0 %v548
      %v595 = vpop.f32.mrf.mxu0
      %v596 = vadd.f32 %v576, %v595
      %597 = vdwg.mxu0
      %598 = vmatpush.msra.mxu0 %v258
      %599 = vmatpush.msra.mxu0 %v257
      %600 = vmatpush.msra.mxu0 %v256
      %601 = vmatpush.msra.mxu0 %v255
      %602 = vmatpush.msra.mxu0 %v254
      %603 = vmatpush.msra.mxu0 %v253
      %604 = vmatpush.msra.mxu0 %v252
      %605 = vmatpush.msra.mxu0 %v251
      %606 = vmatpush.msra.mxu0 %v250
      %607 = vmatpush.msra.mxu0 %v249
      %608 = vmatpush.msra.mxu0 %v248
      %609 = vmatpush.msra.mxu0 %v247
      %610 = vmatpush.msra.mxu0 %v246
      %611 = vmatpush.msra.mxu0 %v245
      %612 = vmatpush.msra.mxu0 %v244
      %613 = vmatpush.msra.mxu0 %v243
      %614 = vmatmul.f32.gmra.mxu0 %v549
      %v615 = vpop.f32.mrf.mxu0
      %v616 = vadd.f32 %v596, %v615
      %617 = vdwg.mxu0
      %618 = vmatpush.msra.mxu0 %v274
      %619 = vmatpush.msra.mxu0 %v273
      %620 = vmatpush.msra.mxu0 %v272
      %621 = vmatpush.msra.mxu0 %v271
      %622 = vmatpush.msra.mxu0 %v270
      %623 = vmatpush.msra.mxu0 %v269
      %624 = vmatpush.msra.mxu0 %v268
      %625 = vmatpush.msra.mxu0 %v267
      %626 = vmatpush.msra.mxu0 %v266
      %627 = vmatpush.msra.mxu0 %v265
      %628 = vmatpush.msra.mxu0 %v264
      %629 = vmatpush.msra.mxu0 %v263
      %630 = vmatpush.msra.mxu0 %v262
      %631 = vmatpush.msra.mxu0 %v261
      %632 = vmatpush.msra.mxu0 %v260
      %633 = vmatpush.msra.mxu0 %v259
      %634 = vmatmul.f32.gmra.mxu0 %v550
      %v635 = vpop.f32.mrf.mxu0
      %v636 = vadd.f32 %v616, %v635
      %637 = vdwg.mxu0
      %638 = vmatpush.msra.mxu0 0.0
      %639 = vmatpush.msra.mxu0 0.0
      %640 = vmatpush.msra.mxu0 0.0
      %641 = vmatpush.msra.mxu0 0.0
      %642 = vmatpush.msra.mxu0 0.0
      %643 = vmatpush.msra.mxu0 0.0
      %644 = vmatpush.msra.mxu0 0.0
      %645 = vmatpush.msra.mxu0 0.0
      %646 = vmatpush.msra.mxu0 %v282
      %647 = vmatpush.msra.mxu0 %v281
      %648 = vmatpush.msra.mxu0 %v280
      %649 = vmatpush.msra.mxu0 %v279
      %650 = vmatpush.msra.mxu0 %v278
      %651 = vmatpush.msra.mxu0 %v277
      %652 = vmatpush.msra.mxu0 %v276
      %653 = vmatpush.msra.mxu0 %v275
      %654 = vmatmul.f32.gmra.mxu0 %v556
      %v655 = vpop.f32.mrf.mxu0
      %v656 = vadd.f32 %v636, %v655
      %657 = vdwg.mxu0
      %v658 = vmax.f32 %v656, 0.0
      %s659 = scalar_lea.vmem %s200, 60
      %v660 = vld [vmem:[%s659] sm:$0xff]
      %v661 = vld [vmem:[%s659 + $0x8] sm:$0xff]
      %v662 = vld [vmem:[%s659 + $0x10] sm:$0xf]
      %666 = vst [vmem:[#allocation1] ss:$2 sm:$0xff] %v660
      %s667 = scalar_lea.vmem [#allocation1], 16
      %668 = vst [vmem:[%s667] ss:$2 sm:$0xff] %v661
      %s669 = scalar_lea.vmem [#allocation1], 32
      %670 = vst [vmem:[%s669] ss:$2 sm:$0xff] %v662
      %v671 = vld.sshfl [vmem:[#allocation1] sm:$0xff pattern:$0x75316420]
      %v672 = vld.sshfl [vmem:[#allocation1 + $0x8] sm:$0xff pattern:$0x75316420]
      %v673 = vld.sshfl [vmem:[#allocation1 + $0x10] sm:$0xff pattern:$0x75316420]
      %v674 = vld.sshfl [vmem:[#allocation1 + $0x18] sm:$0xff pattern:$0x75316420]
      %v675 = vld.sshfl [vmem:[#allocation1 + $0x20] sm:$0xff pattern:$0x75316420]
      %v680 = vsel %vm307, %v675, 0
      %682 = vmatpush.msra.mxu0 %v226
      %683 = vmatpush.msra.mxu0 %v225
      %684 = vmatpush.msra.mxu0 %v224
      %685 = vmatpush.msra.mxu0 %v223
      %686 = vmatpush.msra.mxu0 %v222
      %687 = vmatpush.msra.mxu0 %v221
      %688 = vmatpush.msra.mxu0 %v220
      %689 = vmatpush.msra.mxu0 %v219
      %690 = vmatpush.msra.mxu0 %v218
      %691 = vmatpush.msra.mxu0 %v217
      %692 = vmatpush.msra.mxu0 %v216
      %693 = vmatpush.msra.mxu0 %v215
      %694 = vmatpush.msra.mxu0 %v214
      %695 = vmatpush.msra.mxu0 %v213
      %696 = vmatpush.msra.mxu0 %v212
      %697 = vmatpush.msra.mxu0 %v211
      %698 = vmatmul.f32.gmra.mxu0 %v671
      %v699 = vpop.f32.mrf.mxu0
      %v700 = vadd.f32 %v288, %v699
      %701 = vdwg.mxu0
      %702 = vmatpush.msra.mxu0 %v242
      %703 = vmatpush.msra.mxu0 %v241
      %704 = vmatpush.msra.mxu0 %v240
      %705 = vmatpush.msra.mxu0 %v239
      %706 = vmatpush.msra.mxu0 %v238
      %707 = vmatpush.msra.mxu0 %v237
      %708 = vmatpush.msra.mxu0 %v236
      %709 = vmatpush.msra.mxu0 %v235
      %710 = vmatpush.msra.mxu0 %v234
      %711 = vmatpush.msra.mxu0 %v233
      %712 = vmatpush.msra.mxu0 %v232
      %713 = vmatpush.msra.mxu0 %v231
      %714 = vmatpush.msra.mxu0 %v230
      %715 = vmatpush.msra.mxu0 %v229
      %716 = vmatpush.msra.mxu0 %v228
      %717 = vmatpush.msra.mxu0 %v227
      %718 = vmatmul.f32.gmra.mxu0 %v672
      %v719 = vpop.f32.mrf.mxu0
      %v720 = vadd.f32 %v700, %v719
      %721 = vdwg.mxu0
      %722 = vmatpush.msra.mxu0 %v258
      %723 = vmatpush.msra.mxu0 %v257
      %724 = vmatpush.msra.mxu0 %v256
      %725 = vmatpush.msra.mxu0 %v255
      %726 = vmatpush.msra.mxu0 %v254
      %727 = vmatpush.msra.mxu0 %v253
      %728 = vmatpush.msra.mxu0 %v252
      %729 = vmatpush.msra.mxu0 %v251
      %730 = vmatpush.msra.mxu0 %v250
      %731 = vmatpush.msra.mxu0 %v249
      %732 = vmatpush.msra.mxu0 %v248
      %733 = vmatpush.msra.mxu0 %v247
      %734 = vmatpush.msra.mxu0 %v246
      %735 = vmatpush.msra.mxu0 %v245
      %736 = vmatpush.msra.mxu0 %v244
      %737 = vmatpush.msra.mxu0 %v243
      %738 = vmatmul.f32.gmra.mxu0 %v673
      %v739 = vpop.f32.mrf.mxu0
      %v740 = vadd.f32 %v720, %v739
      %741 = vdwg.mxu0
      %742 = vmatpush.msra.mxu0 %v274
      %743 = vmatpush.msra.mxu0 %v273
      %744 = vmatpush.msra.mxu0 %v272
      %745 = vmatpush.msra.mxu0 %v271
      %746 = vmatpush.msra.mxu0 %v270
      %747 = vmatpush.msra.mxu0 %v269
      %748 = vmatpush.msra.mxu0 %v268
      %749 = vmatpush.msra.mxu0 %v267
      %750 = vmatpush.msra.mxu0 %v266
      %751 = vmatpush.msra.mxu0 %v265
      %752 = vmatpush.msra.mxu0 %v264
      %753 = vmatpush.msra.mxu0 %v263
      %754 = vmatpush.msra.mxu0 %v262
      %755 = vmatpush.msra.mxu0 %v261
      %756 = vmatpush.msra.mxu0 %v260
      %757 = vmatpush.msra.mxu0 %v259
      %758 = vmatmul.f32.gmra.mxu0 %v674
      %v759 = vpop.f32.mrf.mxu0
      %v760 = vadd.f32 %v740, %v759
      %761 = vdwg.mxu0
      %762 = vmatpush.msra.mxu0 0.0
      %763 = vmatpush.msra.mxu0 0.0
      %764 = vmatpush.msra.mxu0 0.0
      %765 = vmatpush.msra.mxu0 0.0
      %766 = vmatpush.msra.mxu0 0.0
      %767 = vmatpush.msra.mxu0 0.0
      %768 = vmatpush.msra.mxu0 0.0
      %769 = vmatpush.msra.mxu0 0.0
      %770 = vmatpush.msra.mxu0 %v282
      %771 = vmatpush.msra.mxu0 %v281
      %772 = vmatpush.msra.mxu0 %v280
      %773 = vmatpush.msra.mxu0 %v279
      %774 = vmatpush.msra.mxu0 %v278
      %775 = vmatpush.msra.mxu0 %v277
      %776 = vmatpush.msra.mxu0 %v276
      %777 = vmatpush.msra.mxu0 %v275
      %778 = vmatmul.f32.gmra.mxu0 %v680
      %v779 = vpop.f32.mrf.mxu0
      %v780 = vadd.f32 %v760, %v779
      %781 = vdwg.mxu0
      %v782 = vmax.f32 %v780, 0.0
      %v783 = vmul.f32 %v410, 0.25
      %v784 = vmul.f32 %v410, 0.75
      %v785 = vadd.f32 %v783, %v784
      %v786 = vmul.f32 %v534, 0.25
      %v787 = vadd.f32 %v784, %v786
      %v788 = vmul.f32 %v785, 0.75
      %v790 = vrot.slane %v785, 7
      %vm792 = vcmask 1040384
      %v793 = vsel %vm792, %v785, %v790
      %v794 = vmul.f32 %v793, 0.25
      %v795 = vadd.f32 %v788, %v794
      %vm796 = vcmask 257024
      %797 = vst.msk [vmem:[%s205] sm:$0xf] %vm796, %v795
      %v798 = vrot.slane %v785, 1
      %vm800 = vcmask 1042432
      %v801 = vsel %vm800, %v798, %v785
      %v802 = vmul.f32 %v801, 0.25
      %v803 = vadd.f32 %v788, %v802
      %804 = vst.msk [vmem:[%s210] sm:$0xf] %vm796, %v803
      %v805 = vmul.f32 %v787, 0.75
      %v807 = vrot.slane %v787, 7
      %v809 = vsel %vm792, %v787, %v807
      %v810 = vmul.f32 %v809, 0.25
      %v811 = vadd.f32 %v805, %v810
      %s812 = scalar_lea.vmem %s205, 4
      %813 = vst.msk [vmem:[%s812] sm:$0xf] %vm796, %v811
      %v814 = vrot.slane %v787, 1
      %v816 = vsel %vm800, %v814, %v787
      %v817 = vmul.f32 %v816, 0.25
      %v818 = vadd.f32 %v805, %v817
      %s819 = scalar_lea.vmem %s210, 4
      %820 = vst.msk [vmem:[%s819] sm:$0xf] %vm796, %v818
      %v821 = vmul.f32 %v534, 0.75
      %v822 = vadd.f32 %v783, %v821
      %v823 = vmul.f32 %v658, 0.25
      %v824 = vadd.f32 %v821, %v823
      %v825 = vmul.f32 %v822, 0.75
      %v827 = vrot.slane %v822, 7
      %v829 = vsel %vm792, %v822, %v827
      %v830 = vmul.f32 %v829, 0.25
      %v831 = vadd.f32 %v825, %v830
      %s832 = scalar_lea.vmem %s205, 8
      %833 = vst.msk [vmem:[%s832] sm:$0xf] %vm796, %v831
      %v834 = vrot.slane %v822, 1
      %v836 = vsel %vm800, %v834, %v822
      %v837 = vmul.f32 %v836, 0.25
      %v838 = vadd.f32 %v825, %v837
      %s839 = scalar_lea.vmem %s210, 8
      %840 = vst.msk [vmem:[%s839] sm:$0xf] %vm796, %v838
      %v841 = vmul.f32 %v824, 0.75
      %v843 = vrot.slane %v824, 7
      %v845 = vsel %vm792, %v824, %v843
      %v846 = vmul.f32 %v845, 0.25
      %v847 = vadd.f32 %v841, %v846
      %s848 = scalar_lea.vmem %s205, 12
      %849 = vst.msk [vmem:[%s848] sm:$0xf] %vm796, %v847
      %v850 = vrot.slane %v824, 1
      %v852 = vsel %vm800, %v850, %v824
      %v853 = vmul.f32 %v852, 0.25
      %v854 = vadd.f32 %v841, %v853
      %s855 = scalar_lea.vmem %s210, 12
      %856 = vst.msk [vmem:[%s855] sm:$0xf] %vm796, %v854
      %v857 = vmul.f32 %v658, 0.75
      %v858 = vadd.f32 %v786, %v857
      %v859 = vmul.f32 %v782, 0.25
      %v860 = vadd.f32 %v857, %v859
      %v861 = vmul.f32 %v858, 0.75
      %v863 = vrot.slane %v858, 7
      %v865 = vsel %vm792, %v858, %v863
      %v866 = vmul.f32 %v865, 0.25
      %v867 = vadd.f32 %v861, %v866
      %s868 = scalar_lea.vmem %s205, 16
      %869 = vst.msk [vmem:[%s868] sm:$0xf] %vm796, %v867
      %v870 = vrot.slane %v858, 1
      %v872 = vsel %vm800, %v870, %v858
      %v873 = vmul.f32 %v872, 0.25
      %v874 = vadd.f32 %v861, %v873
      %s875 = scalar_lea.vmem %s210, 16
      %876 = vst.msk [vmem:[%s875] sm:$0xf] %vm796, %v874
      %v877 = vmul.f32 %v860, 0.75
      %v879 = vrot.slane %v860, 7
      %v881 = vsel %vm792, %v860, %v879
      %v882 = vmul.f32 %v881, 0.25
      %v883 = vadd.f32 %v877, %v882
      %s884 = scalar_lea.vmem %s205, 20
      %885 = vst.msk [vmem:[%s884] sm:$0xf] %vm796, %v883
      %v886 = vrot.slane %v860, 1
      %v888 = vsel %vm800, %v886, %v860
      %v889 = vmul.f32 %v888, 0.25
      %v890 = vadd.f32 %v877, %v889
      %s891 = scalar_lea.vmem %s210, 20
      %892 = vst.msk [vmem:[%s891] sm:$0xf] %vm796, %v890
      %v893 = vmul.f32 %v782, 0.75
      %v894 = vadd.f32 %v823, %v893
      %v895 = vadd.f32 %v893, %v859
      %v896 = vmul.f32 %v894, 0.75
      %v898 = vrot.slane %v894, 7
      %v900 = vsel %vm792, %v894, %v898
      %v901 = vmul.f32 %v900, 0.25
      %v902 = vadd.f32 %v896, %v901
      %s903 = scalar_lea.vmem %s205, 24
      %904 = vst.msk [vmem:[%s903] sm:$0xf] %vm796, %v902
      %v905 = vrot.slane %v894, 1
      %v907 = vsel %vm800, %v905, %v894
      %v908 = vmul.f32 %v907, 0.25
      %v909 = vadd.f32 %v896, %v908
      %s910 = scalar_lea.vmem %s210, 24
      %911 = vst.msk [vmem:[%s910] sm:$0xf] %vm796, %v909
      %v912 = vmul.f32 %v895, 0.75
      %v914 = vrot.slane %v895, 7
      %v916 = vsel %vm792, %v895, %v914
      %v917 = vmul.f32 %v916, 0.25
      %v918 = vadd.f32 %v912, %v917
      %s919 = scalar_lea.vmem %s205, 28
      %920 = vst.msk [vmem:[%s919] sm:$0xf] %vm796, %v918
      %v921 = vrot.slane %v895, 1
      %v923 = vsel %vm800, %v921, %v895
      %v924 = vmul.f32 %v923, 0.25
      %v925 = vadd.f32 %v912, %v924
      %s926 = scalar_lea.vmem %s210, 28
      %927 = vst.msk [vmem:[%s926] sm:$0xf] %vm796, %v925
      %p928 = scmp.lt.s32.totalorder %s16, 1
      %s929 = scalar_select %p928, %s16, 1
      %s930 = smul.addr %s929, 8
      %s931 = smul.addr %s930, 4
      %s932 = scalar_lea.vmem %s3, %s931
      %p933 = scmp.lt.s32.totalorder %s16, 1
      %s934 = scalar_select %p933, %s16, 1
      %s935 = smul.addr %s934, 8
      %s936 = smul.addr %s935, 4
      %s937 = scalar_lea.vmem %s4, %s936
      // Predicated region
      $region33: #{autoencoder_forward.10} parent=31 // pred_check
        %p938 = pneg %p102
      $region34: #{autoencoder_forward.10} parent=31 // pred_check_branch
        %940 = sbr.rel (%p938) target = $region36
      $region35: #{autoencoder_forward.10} parent=31 // pred_region
        _
      $region36: #{autoencoder_forward.10} parent=31 // pred_fallthru
        _
      // Predicated region
      $region37: #{autoencoder_forward.10} parent=31 // pred_check
        %p941 = pneg %p128
      $region38: #{autoencoder_forward.10} parent=31 // pred_check_branch
        %943 = sbr.rel (%p941) target = $region40
      $region39: #{autoencoder_forward.10} parent=31 // pred_region
        _
      $region40: #{autoencoder_forward.10} parent=31 // pred_fallthru
        _
    $region32: #{autoencoder_forward.10} parent=5 // pred_fallthru
      _
    %p944 = scmp.le.s32.totalorder 2, %s11
    // Predicated region
    $region41: #{autoencoder_forward.10} parent=5 // pred_check
      %p945 = pneg %p944
    $region42: #{autoencoder_forward.10} parent=5 // pred_check_branch
      %947 = sbr.rel (%p945) target = $region44
    $region43: #{autoencoder_forward.10} parent=5 // pred_region
      %s948 = ssub.s32 %s11, 2
      // Predicated region
      $region45: #{autoencoder_forward.10} parent=43 // pred_check
        %p949 = pneg %p108
      $region46: #{autoencoder_forward.10} parent=43 // pred_check_branch
        %951 = sbr.rel (%p949) target = $region48
      $region47: #{autoencoder_forward.10} parent=43 // pred_region
        %p952 = scmp.lt.s32.totalorder %s17, 1
        %s953 = scalar_select %p952, %s17, 1
        %s954 = smul.addr %s953, 8
        %s955 = smul.addr %s954, 4
        %s956 = scalar_lea.vmem %s3, %s955
      $region48: #{autoencoder_forward.10} parent=43 // pred_fallthru
        _
      // Predicated region
      $region49: #{autoencoder_forward.10} parent=43 // pred_check
        %p957 = pneg %p134
      $region50: #{autoencoder_forward.10} parent=43 // pred_check_branch
        %959 = sbr.rel (%p957) target = $region52
      $region51: #{autoencoder_forward.10} parent=43 // pred_region
        %p960 = scmp.lt.s32.totalorder %s17, 1
        %s961 = scalar_select %p960, %s17, 1
        %s962 = smul.addr %s961, 8
        %s963 = smul.addr %s962, 4
        %s964 = scalar_lea.vmem %s4, %s963
      $region52: #{autoencoder_forward.10} parent=43 // pred_fallthru
        _
    $region44: #{autoencoder_forward.10} parent=5 // pred_fallthru
      _
  $region6: #{autoencoder_forward.10} parent=0 // loop_footer
    %s15 = sadd.s32 1, %s11
  $region7: #{autoencoder_forward.10} parent=0 // loop_footer_branch
    %10 = sbr.rel target = $region3
  $region8: #{autoencoder_forward.10} parent=0 // loop_exit
    _

// kernel: autoencoder_forward.11
$region0: #{autoencoder_forward.11}
  #allocation0 [shape = 'u32[]', space=smem, size = 0x4, offset = 0x4, fixed_abs, tag = 'smem constant byte address 0x4 - core index']
  #allocation1 [shape = 'u32[72,128]{1,0:T(1,128)}', space=vmem, size = 0x9000, scoped, tag = 'internal scratch']
  %s0 = inlined_call_operand.vmem [shape: f32[2,8,8,288], index: 0, kind: input, shape index: {}]
  %s1 = inlined_call_operand.vmem [shape: f32[288,3], index: 1, kind: input, shape index: {}]
  %s2 = inlined_call_operand.vmem [shape: f32[1,3], index: 2, kind: input, shape index: {}]
  %s3 = inlined_call_operand.vmem [shape: f32[2,16,8,3], index: 3, kind: output, shape index: {0}]
  %s4 = inlined_call_operand.vmem [shape: f32[2,16,8,3], index: 4, kind: output, shape index: {1}]
  %5 = xla_tuple %s3, %s4
  %s6 = sld [smem:[#allocation0]]
  $region53: #{autoencoder_forward.11} parent=0
    _
  %s8 = ssub.s32 1, %s6
  %s9 = scalar_select 0, %s8, %s6
  loop: start=0, step=1, limit=4
  $region2: #{autoencoder_forward.11} parent=0 // loop_pre_header
    _
  $region3: #{autoencoder_forward.11} parent=0 // loop_header
    %s11 = sphi 0, %s15
    %p12 = scmp.ge.s32.totalorder %s11, 4
    %s21 = sphi 0, %s23
    %s24 = sphi 0, %s21
    %s25 = sphi 0, %s24
    %s41 = sphi 0, %s25
    %s45 = sphi 0, %s45
    %s47 = sphi 0, %s45
    %s48 = sphi 0, %s47
    %s62 = sphi 0, %s48
    %s66 = sphi 0, %s66
    %s68 = sphi 0, %s66
    %s69 = sphi 0, %s68
    %s83 = sphi 0, %s69
    %s89 = sphi 0, %s91
    %s92 = sphi 0, %s89
    %s93 = sphi 0, %s92
    %s109 = sphi 0, %s93
    %s115 = sphi 0, %s117
    %s118 = sphi 0, %s115
    %s119 = sphi 0, %s118
    %s135 = sphi 0, %s119
  $region4: #{autoencoder_forward.11} parent=0 // loop_header_branch
    %14 = sbr.rel (%p12) target = $region8
  $region5: #{autoencoder_forward.11} parent=0 // loop_body
    %s16 = ssub.s32 %s11, 1
    %s17 = ssub.s32 %s11, 2
    %s18 = sadd.s32 %s11, 1
    %s19 = ssub.s32 %s11, %s18
    %p20 = scmp.eq.s32.totalorder %s19, 0
    %s22 = sadd.s32 %s21, 1
    %s23 = scalar_select %p20, %s21, %s22
    %p26 = pneg %p20
    %p27 = scmp.eq.s32.totalorder %s11, 1
    %p28 = por %p26, %p27
    %p29 = scmp.ne.s32.totalorder %s21, %s24
    %p30 = scmp.eq.s32.totalorder %s11, 0
    %p31 = por %p29, %p30
    %p32 = scmp.ne.s32.totalorder %s21, %s24
    %p33 = scmp.eq.s32.totalorder %s16, 1
    %p34 = por %p32, %p33
    %p35 = scmp.ne.s32.totalorder %s24, %s25
    %p36 = scmp.eq.s32.totalorder %s16, 0
    %p37 = por %p35, %p36
    %p38 = scmp.ne.s32.totalorder %s24, %s25
    %p39 = scmp.eq.s32.totalorder %s17, 1
    %p40 = por %p38, %p39
    %p42 = scmp.ne.s32.totalorder %s25, %s41
    %p43 = scmp.eq.s32.totalorder %s17, 0
    %p44 = por %p42, %p43
    %s46 = sadd.s32 %s45, 1
    %p49 = scmp.eq.s32.totalorder %s11, 1
    %p50 = scmp.ne.s32.totalorder %s45, %s47
    %p51 = scmp.eq.s32.totalorder %s11, 0
    %p52 = por %p50, %p51
    %p53 = scmp.ne.s32.totalorder %s45, %s47
    %p54 = scmp.eq.s32.totalorder %s16, 1
    %p55 = por %p53, %p54
    %p56 = scmp.ne.s32.totalorder %s47, %s48
    %p57 = scmp.eq.s32.totalorder %s16, 0
    %p58 = por %p56, %p57
    %p59 = scmp.ne.s32.totalorder %s47, %s48
    %p60 = scmp.eq.s32.totalorder %s17, 1
    %p61 = por %p59, %p60
    %p63 = scmp.ne.s32.totalorder %s48, %s62
    %p64 = scmp.eq.s32.totalorder %s17, 0
    %p65 = por %p63, %p64
    %s67 = sadd.s32 %s66, 1
    %p70 = scmp.eq.s32.totalorder %s11, 1
    %p71 = scmp.ne.s32.totalorder %s66, %s68
    %p72 = scmp.eq.s32.totalorder %s11, 0
    %p73 = por %p71, %p72
    %p74 = scmp.ne.s32.totalorder %s66, %s68
    %p75 = scmp.eq.s32.totalorder %s16, 1
    %p76 = por %p74, %p75
    %p77 = scmp.ne.s32.totalorder %s68, %s69
    %p78 = scmp.eq.s32.totalorder %s16, 0
    %p79 = por %p77, %p78
    %p80 = scmp.ne.s32.totalorder %s68, %s69
    %p81 = scmp.eq.s32.totalorder %s17, 1
    %p82 = por %p80, %p81
    %p84 = scmp.ne.s32.totalorder %s69, %s83
    %p85 = scmp.eq.s32.totalorder %s17, 0
    %p86 = por %p84, %p85
    %s87 = ssub.s32 %s11, %s18
    %p88 = scmp.eq.s32.totalorder %s87, 0
    %s90 = sadd.s32 %s89, 1
    %s91 = scalar_select %p88, %s89, %s90
    %p94 = pneg %p88
    %p95 = scmp.eq.s32.totalorder %s11, 1
    %p96 = por %p94, %p95
    %p97 = scmp.ne.s32.totalorder %s89, %s92
    %p98 = scmp.eq.s32.totalorder %s11, 0
    %p99 = por %p97, %p98
    %p100 = scmp.ne.s32.totalorder %s89, %s92
    %p101 = scmp.eq.s32.totalorder %s16, 1
    %p102 = por %p100, %p101
    %p103 = scmp.ne.s32.totalorder %s92, %s93
    %p104 = scmp.eq.s32.totalorder %s16, 0
    %p105 = por %p103, %p104
    %p106 = scmp.ne.s32.totalorder %s92, %s93
    %p107 = scmp.eq.s32.totalorder %s17, 1
    %p108 = por %p106, %p107
    %p110 = scmp.ne.s32.totalorder %s93, %s109
    %p111 = scmp.eq.s32.totalorder %s17, 0
    %p112 = por %p110, %p111
    %s113 = ssub.s32 %s11, %s18
    %p114 = scmp.eq.s32.totalorder %s113, 0
    %s116 = sadd.s32 %s115, 1
    %s117 = scalar_select %p114, %s115, %s116
    %p120 = pneg %p114
    %p121 = scmp.eq.s32.totalorder %s11, 1
    %p122 = por %p120, %p121
    %p123 = scmp.ne.s32.totalorder %s115, %s118
    %p124 = scmp.eq.s32.totalorder %s11, 0
    %p125 = por %p123, %p124
    %p126 = scmp.ne.s32.totalorder %s115, %s118
    %p127 = scmp.eq.s32.totalorder %s16, 1
    %p128 = por %p126, %p127
    %p129 = scmp.ne.s32.totalorder %s118, %s119
    %p130 = scmp.eq.s32.totalorder %s16, 0
    %p131 = por %p129, %p130
    %p132 = scmp.ne.s32.totalorder %s118, %s119
    %p133 = scmp.eq.s32.totalorder %s17, 1
    %p134 = por %p132, %p133
    %p136 = scmp.ne.s32.totalorder %s119, %s135
    %p137 = scmp.eq.s32.totalorder %s17, 0
    %p138 = por %p136, %p137
    %p139 = scmp.le.s32.totalorder 1, %s11
    %p140 = scmp.lt.s32.totalorder %s11, 3
    %p141 = pnand %p139, %p140
    %p142 = pneg %p141
    // Predicated region
    $region9: #{autoencoder_forward.11} parent=5 // pred_check
      _
    $region10: #{autoencoder_forward.11} parent=5 // pred_check_branch
      %144 = sbr.rel (%p141) target = $region12
    $region11: #{autoencoder_forward.11} parent=5 // pred_region
      %s145 = ssub.s32 %s11, 1
      // Predicated region
      $region13: #{autoencoder_forward.11} parent=11 // pred_check
        %p146 = pneg %p58
      $region14: #{autoencoder_forward.11} parent=11 // pred_check_branch
        %148 = sbr.rel (%p146) target = $region16
      $region15: #{autoencoder_forward.11} parent=11 // pred_region
        _
      $region16: #{autoencoder_forward.11} parent=11 // pred_fallthru
        _
      // Predicated region
      $region17: #{autoencoder_forward.11} parent=11 // pred_check
        %p149 = pneg %p79
      $region18: #{autoencoder_forward.11} parent=11 // pred_check_branch
        %151 = sbr.rel (%p149) target = $region20
      $region19: #{autoencoder_forward.11} parent=11 // pred_region
        _
      $region20: #{autoencoder_forward.11} parent=11 // pred_fallthru
        _
    $region12: #{autoencoder_forward.11} parent=5 // pred_fallthru
      _
    %p152 = scmp.lt.s32.totalorder %s11, 2
    // Predicated region
    $region21: #{autoencoder_forward.11} parent=5 // pred_check
      %p153 = pneg %p152
    $region22: #{autoencoder_forward.11} parent=5 // pred_check_branch
      %155 = sbr.rel (%p153) target = $region24
    $region23: #{autoencoder_forward.11} parent=5 // pred_region
      // Predicated region
      $region25: #{autoencoder_forward.11} parent=23 // pred_check
        %p156 = pneg %p31
      $region26: #{autoencoder_forward.11} parent=23 // pred_check_branch
        %158 = sbr.rel (%p156) target = $region28
      $region27: #{autoencoder_forward.11} parent=23 // pred_region
        %p159 = scmp.lt.s32.totalorder %s11, 1
        %s160 = scalar_select %p159, %s11, 1
        %s161 = smul.addr %s160, 24
        %s162 = smul.addr %s161, 8
        %s163 = scalar_lea.vmem %s0, %s162
      $region28: #{autoencoder_forward.11} parent=23 // pred_fallthru
        _
    $region24: #{autoencoder_forward.11} parent=5 // pred_fallthru
      _
    %p164 = scmp.le.s32.totalorder 1, %s11
    %p165 = scmp.lt.s32.totalorder %s11, 3
    %p166 = pnand %p164, %p165
    %p167 = pneg %p166
    // Predicated region
    $region29: #{autoencoder_forward.11} parent=5 // pred_check
      _
    $region30: #{autoencoder_forward.11} parent=5 // pred_check_branch
      %169 = sbr.rel (%p166) target = $region32
    $region31: #{autoencoder_forward.11} parent=5 // pred_region
      %s170 = ssub.s32 %s11, 1
      %p171 = scmp.lt.s32.totalorder %s16, 1
      %s172 = scalar_select %p171, %s16, 1
      %s173 = smul.addr %s172, 24
      %s174 = smul.addr %s173, 8
      %s175 = scalar_lea.vmem %s0, %s174
      %p176 = pneg %p37
      %p177 = pneg %p34
      %p178 = pneg %p58
      %p179 = pneg %p55
      %p180 = pneg %p79
      %p181 = pneg %p76
      %p182 = pneg %p105
      %p183 = pneg %p102
      %p184 = scmp.lt.s32.totalorder %s16, 1
      %s185 = scalar_select %p184, %s16, 1
      %s186 = smul.addr %s185, 16
      %s187 = smul.addr %s186, 8
      %s188 = scalar_lea.vmem %s3, %s187
      %p189 = pneg %p131
      %p190 = pneg %p128
      %p191 = scmp.lt.s32.totalorder %s16, 1
      %s192 = scalar_select %p191, %s16, 1
      %s193 = smul.addr %s192, 16
      %s194 = smul.addr %s193, 8
      %s195 = scalar_lea.vmem %s4, %s194
      %p196 = scmp.lt.s32.totalorder %s16, 1
      %s197 = scalar_select %p196, %s16, 1
      %s198 = smul.addr %s197, 24
      %s199 = smul.addr %s198, 8
      %s200 = scalar_lea.vmem %s0, %s199
      %p201 = scmp.lt.s32.totalorder %s16, 1
      %s202 = scalar_select %p201, %s16, 1
      %s203 = smul.addr %s202, 16
      %s204 = smul.addr %s203, 8
      %s205 = scalar_lea.vmem %s3, %s204
      %p206 = scmp.lt.s32.totalorder %s16, 1
      %s207 = scalar_select %p206, %s16, 1
      %s208 = smul.addr %s207, 16
      %s209 = smul.addr %s208, 8
      %s210 = scalar_lea.vmem %s4, %s209
      %v211 = vld [vmem:[%s1] sm:$0xff]
      %v212 = vld [vmem:[%s1 + $0x8] sm:$0xff]
      %v213 = vld [vmem:[%s1 + $0x10] sm:$0xff]
      %v214 = vld [vmem:[%s1 + $0x18] sm:$0xff]
      %v215 = vld [vmem:[%s1 + $0x20] sm:$0xff]
      %v216 = vld [vmem:[%s1 + $0x28] sm:$0xff]
      %v217 = vld [vmem:[%s1 + $0x30] sm:$0xff]
      %v218 = vld [vmem:[%s1 + $0x38] sm:$0xff]
      %v219 = vld [vmem:[%s1 + $0x40] sm:$0xff]
      %v220 = vld [vmem:[%s1 + $0x48] sm:$0xff]
      %v221 = vld [vmem:[%s1 + $0x50] sm:$0xff]
      %v222 = vld [vmem:[%s1 + $0x58] sm:$0xff]
      %v223 = vld [vmem:[%s1 + $0x60] sm:$0xff]
      %v224 = vld [vmem:[%s1 + $0x68] sm:$0xff]
      %v225 = vld [vmem:[%s1 + $0x70] sm:$0xff]
      %v226 = vld [vmem:[%s1 + $0x78] sm:$0xff]
      %v227 = vld [vmem:[%s1 + $0x80] sm:$0xff]
      %v228 = vld [vmem:[%s1 + $0x88] sm:$0xff]
      %v229 = vld [vmem:[%s1 + $0x90] sm:$0xff]
      %v230 = vld [vmem:[%s1 + $0x98] sm:$0xff]
      %v231 = vld [vmem:[%s1 + $0xa0] sm:$0xff]
      %v232 = vld [vmem:[%s1 + $0xa8] sm:$0xff]
      %v233 = vld [vmem:[%s1 + $0xb0] sm:$0xff]
      %v234 = vld [vmem:[%s1 + $0xb8] sm:$0xff]
      %v235 = vld [vmem:[%s1 + $0xc0] sm:$0xff]
      %v236 = vld [vmem:[%s1 + $0xc8] sm:$0xff]
      %v237 = vld [vmem:[%s1 + $0xd0] sm:$0xff]
      %v238 = vld [vmem:[%s1 + $0xd8] sm:$0xff]
      %v239 = vld [vmem:[%s1 + $0xe0] sm:$0xff]
      %v240 = vld [vmem:[%s1 + $0xe8] sm:$0xff]
      %v241 = vld [vmem:[%s1 + $0xf0] sm:$0xff]
      %v242 = vld [vmem:[%s1 + $0xf8] sm:$0xff]
      %v243 = vld [vmem:[%s1 + $0x100] sm:$0xff]
      %v244 = vld [vmem:[%s1 + $0x108] sm:$0xff]
      %v245 = vld [vmem:[%s1 + $0x110] sm:$0xff]
      %v246 = vld [vmem:[%s1 + $0x118] sm:$0xff]
      %v247 = vld [vmem:[%s2] sm:$0x1]
      %v248 = vld [vmem:[%s200] sm:$0xff]
      %v249 = vld [vmem:[%s200 + $0x8] sm:$0xff]
      %v250 = vld [vmem:[%s200 + $0x10] sm:$0xff]
      %v252 = vperm.slane %v247, 0
      %vm254 = vcmask 261120
      %v256 = vsel %vm254, %v250, 0
      %258 = vmatpush.msra.mxu0 %v226
      %259 = vmatpush.msra.mxu0 %v225
      %260 = vmatpush.msra.mxu0 %v224
      %261 = vmatpush.msra.mxu0 %v223
      %262 = vmatpush.msra.mxu0 %v222
      %263 = vmatpush.msra.mxu0 %v221
      %264 = vmatpush.msra.mxu0 %v220
      %265 = vmatpush.msra.mxu0 %v219
      %266 = vmatpush.msra.mxu0 %v218
      %267 = vmatpush.msra.mxu0 %v217
      %268 = vmatpush.msra.mxu0 %v216
      %269 = vmatpush.msra.mxu0 %v215
      %270 = vmatpush.msra.mxu0 %v214
      %271 = vmatpush.msra.mxu0 %v213
      %272 = vmatpush.msra.mxu0 %v212
      %273 = vmatpush.msra.mxu0 %v211
      %274 = vmatmul.f32.gmra.mxu0 %v248
      %v275 = vpop.f32.mrf.mxu0
      %v276 = vadd.f32 %v252, %v275
      %277 = vdwg.mxu0
      %278 = vmatpush.msra.mxu0 %v242
      %279 = vmatpush.msra.mxu0 %v241
      %280 = vmatpush.msra.mxu0 %v240
      %281 = vmatpush.msra.mxu0 %v239
      %282 = vmatpush.msra.mxu0 %v238
      %283 = vmatpush.msra.mxu0 %v237
      %284 = vmatpush.msra.mxu0 %v236
      %285 = vmatpush.msra.mxu0 %v235
      %286 = vmatpush.msra.mxu0 %v234
      %287 = vmatpush.msra.mxu0 %v233
      %288 = vmatpush.msra.mxu0 %v232
      %289 = vmatpush.msra.mxu0 %v231
      %290 = vmatpush.msra.mxu0 %v230
      %291 = vmatpush.msra.mxu0 %v229
      %292 = vmatpush.msra.mxu0 %v228
      %293 = vmatpush.msra.mxu0 %v227
      %294 = vmatmul.f32.gmra.mxu0 %v249
      %v295 = vpop.f32.mrf.mxu0
      %v296 = vadd.f32 %v276, %v295
      %297 = vdwg.mxu0
      %298 = vmatpush.msra.mxu0 0.0
      %299 = vmatpush.msra.mxu0 0.0
      %300 = vmatpush.msra.mxu0 0.0
      %301 = vmatpush.msra.mxu0 0.0
      %302 = vmatpush.msra.mxu0 0.0
      %303 = vmatpush.msra.mxu0 0.0
      %304 = vmatpush.msra.mxu0 0.0
      %305 = vmatpush.msra.mxu0 0.0
      %306 = vmatpush.msra.mxu0 0.0
      %307 = vmatpush.msra.mxu0 0.0
      %308 = vmatpush.msra.mxu0 0.0
      %309 = vmatpush.msra.mxu0 0.0
      %310 = vmatpush.msra.mxu0 %v246
      %311 = vmatpush.msra.mxu0 %v245
      %312 = vmatpush.msra.mxu0 %v244
      %313 = vmatpush.msra.mxu0 %v243
      %314 = vmatmul.f32.gmra.mxu0 %v256
      %v315 = vpop.f32.mrf.mxu0
      %v316 = vadd.f32 %v296, %v315
      %317 = vdwg.mxu0
      %v318 = vmax.f32 %v316, 0.0
      %s319 = scalar_lea.vmem %s200, 24
      %v320 = vld [vmem:[%s319] sm:$0xff]
      %v321 = vld [vmem:[%s319 + $0x8] sm:$0xff]
      %v322 = vld [vmem:[%s319 + $0x10] sm:$0xff]
      %v324 = vsel %vm254, %v322, 0
      %326 = vmatpush.msra.mxu0 %v226
      %327 = vmatpush.msra.mxu0 %v225
      %328 = vmatpush.msra.mxu0 %v224
      %329 = vmatpush.msra.mxu0 %v223
      %330 = vmatpush.msra.mxu0 %v222
      %331 = vmatpush.msra.mxu0 %v221
      %332 = vmatpush.msra.mxu0 %v220
      %333 = vmatpush.msra.mxu0 %v219
      %334 = vmatpush.msra.mxu0 %v218
      %335 = vmatpush.msra.mxu0 %v217
      %336 = vmatpush.msra.mxu0 %v216
      %337 = vmatpush.msra.mxu0 %v215
      %338 = vmatpush.msra.mxu0 %v214
      %339 = vmatpush.msra.mxu0 %v213
      %340 = vmatpush.msra.mxu0 %v212
      %341 = vmatpush.msra.mxu0 %v211
      %342 = vmatmul.f32.gmra.mxu0 %v320
      %v343 = vpop.f32.mrf.mxu0
      %v344 = vadd.f32 %v252, %v343
      %345 = vdwg.mxu0
      %346 = vmatpush.msra.mxu0 %v242
      %347 = vmatpush.msra.mxu0 %v241
      %348 = vmatpush.msra.mxu0 %v240
      %349 = vmatpush.msra.mxu0 %v239
      %350 = vmatpush.msra.mxu0 %v238
      %351 = vmatpush.msra.mxu0 %v237
      %352 = vmatpush.msra.mxu0 %v236
      %353 = vmatpush.msra.mxu0 %v235
      %354 = vmatpush.msra.mxu0 %v234
      %355 = vmatpush.msra.mxu0 %v233
      %356 = vmatpush.msra.mxu0 %v232
      %357 = vmatpush.msra.mxu0 %v231
      %358 = vmatpush.msra.mxu0 %v230
      %359 = vmatpush.msra.mxu0 %v229
      %360 = vmatpush.msra.mxu0 %v228
      %361 = vmatpush.msra.mxu0 %v227
      %362 = vmatmul.f32.gmra.mxu0 %v321
      %v363 = vpop.f32.mrf.mxu0
      %v364 = vadd.f32 %v344, %v363
      %365 = vdwg.mxu0
      %366 = vmatpush.msra.mxu0 0.0
      %367 = vmatpush.msra.mxu0 0.0
      %368 = vmatpush.msra.mxu0 0.0
      %369 = vmatpush.msra.mxu0 0.0
      %370 = vmatpush.msra.mxu0 0.0
      %371 = vmatpush.msra.mxu0 0.0
      %372 = vmatpush.msra.mxu0 0.0
      %373 = vmatpush.msra.mxu0 0.0
      %374 = vmatpush.msra.mxu0 0.0
      %375 = vmatpush.msra.mxu0 0.0
      %376 = vmatpush.msra.mxu0 0.0
      %377 = vmatpush.msra.mxu0 0.0
      %378 = vmatpush.msra.mxu0 %v246
      %379 = vmatpush.msra.mxu0 %v245
      %380 = vmatpush.msra.mxu0 %v244
      %381 = vmatpush.msra.mxu0 %v243
      %382 = vmatmul.f32.gmra.mxu0 %v324
      %v383 = vpop.f32.mrf.mxu0
      %v384 = vadd.f32 %v364, %v383
      %385 = vdwg.mxu0
      %v386 = vmax.f32 %v384, 0.0
      %s387 = scalar_lea.vmem %s200, 48
      %v388 = vld [vmem:[%s387] sm:$0xff]
      %v389 = vld [vmem:[%s387 + $0x8] sm:$0xff]
      %v390 = vld [vmem:[%s387 + $0x10] sm:$0xff]
      %v392 = vsel %vm254, %v390, 0
      %394 = vmatpush.msra.mxu0 %v226
      %395 = vmatpush.msra.mxu0 %v225
      %396 = vmatpush.msra.mxu0 %v224
      %397 = vmatpush.msra.mxu0 %v223
      %398 = vmatpush.msra.mxu0 %v222
      %399 = vmatpush.msra.mxu0 %v221
      %400 = vmatpush.msra.mxu0 %v220
      %401 = vmatpush.msra.mxu0 %v219
      %402 = vmatpush.msra.mxu0 %v218
      %403 = vmatpush.msra.mxu0 %v217
      %404 = vmatpush.msra.mxu0 %v216
      %405 = vmatpush.msra.mxu0 %v215
      %406 = vmatpush.msra.mxu0 %v214
      %407 = vmatpush.msra.mxu0 %v213
      %408 = vmatpush.msra.mxu0 %v212
      %409 = vmatpush.msra.mxu0 %v211
      %410 = vmatmul.f32.gmra.mxu0 %v388
      %v411 = vpop.f32.mrf.mxu0
      %v412 = vadd.f32 %v252, %v411
      %413 = vdwg.mxu0
      %414 = vmatpush.msra.mxu0 %v242
      %415 = vmatpush.msra.mxu0 %v241
      %416 = vmatpush.msra.mxu0 %v240
      %417 = vmatpush.msra.mxu0 %v239
      %418 = vmatpush.msra.mxu0 %v238
      %419 = vmatpush.msra.mxu0 %v237
      %420 = vmatpush.msra.mxu0 %v236
      %421 = vmatpush.msra.mxu0 %v235
      %422 = vmatpush.msra.mxu0 %v234
      %423 = vmatpush.msra.mxu0 %v233
      %424 = vmatpush.msra.mxu0 %v232
      %425 = vmatpush.msra.mxu0 %v231
      %426 = vmatpush.msra.mxu0 %v230
      %427 = vmatpush.msra.mxu0 %v229
      %428 = vmatpush.msra.mxu0 %v228
      %429 = vmatpush.msra.mxu0 %v227
      %430 = vmatmul.f32.gmra.mxu0 %v389
      %v431 = vpop.f32.mrf.mxu0
      %v432 = vadd.f32 %v412, %v431
      %433 = vdwg.mxu0
      %434 = vmatpush.msra.mxu0 0.0
      %435 = vmatpush.msra.mxu0 0.0
      %436 = vmatpush.msra.mxu0 0.0
      %437 = vmatpush.msra.mxu0 0.0
      %438 = vmatpush.msra.mxu0 0.0
      %439 = vmatpush.msra.mxu0 0.0
      %440 = vmatpush.msra.mxu0 0.0
      %441 = vmatpush.msra.mxu0 0.0
      %442 = vmatpush.msra.mxu0 0.0
      %443 = vmatpush.msra.mxu0 0.0
      %444 = vmatpush.msra.mxu0 0.0
      %445 = vmatpush.msra.mxu0 0.0
      %446 = vmatpush.msra.mxu0 %v246
      %447 = vmatpush.msra.mxu0 %v245
      %448 = vmatpush.msra.mxu0 %v244
      %449 = vmatpush.msra.mxu0 %v243
      %450 = vmatmul.f32.gmra.mxu0 %v392
      %v451 = vpop.f32.mrf.mxu0
      %v452 = vadd.f32 %v432, %v451
      %453 = vdwg.mxu0
      %v454 = vmax.f32 %v452, 0.0
      %s455 = scalar_lea.vmem %s200, 72
      %v456 = vld [vmem:[%s455] sm:$0xff]
      %v457 = vld [vmem:[%s455 + $0x8] sm:$0xff]
      %v458 = vld [vmem:[%s455 + $0x10] sm:$0xff]
      %v460 = vsel %vm254, %v458, 0
      %462 = vmatpush.msra.mxu0 %v226
      %463 = vmatpush.msra.mxu0 %v225
      %464 = vmatpush.msra.mxu0 %v224
      %465 = vmatpush.msra.mxu0 %v223
      %466 = vmatpush.msra.mxu0 %v222
      %467 = vmatpush.msra.mxu0 %v221
      %468 = vmatpush.msra.mxu0 %v220
      %469 = vmatpush.msra.mxu0 %v219
      %470 = vmatpush.msra.mxu0 %v218
      %471 = vmatpush.msra.mxu0 %v217
      %472 = vmatpush.msra.mxu0 %v216
      %473 = vmatpush.msra.mxu0 %v215
      %474 = vmatpush.msra.mxu0 %v214
      %475 = vmatpush.msra.mxu0 %v213
      %476 = vmatpush.msra.mxu0 %v212
      %477 = vmatpush.msra.mxu0 %v211
      %478 = vmatmul.f32.gmra.mxu0 %v456
      %v479 = vpop.f32.mrf.mxu0
      %v480 = vadd.f32 %v252, %v479
      %481 = vdwg.mxu0
      %482 = vmatpush.msra.mxu0 %v242
      %483 = vmatpush.msra.mxu0 %v241
      %484 = vmatpush.msra.mxu0 %v240
      %485 = vmatpush.msra.mxu0 %v239
      %486 = vmatpush.msra.mxu0 %v238
      %487 = vmatpush.msra.mxu0 %v237
      %488 = vmatpush.msra.mxu0 %v236
      %489 = vmatpush.msra.mxu0 %v235
      %490 = vmatpush.msra.mxu0 %v234
      %491 = vmatpush.msra.mxu0 %v233
      %492 = vmatpush.msra.mxu0 %v232
      %493 = vmatpush.msra.mxu0 %v231
      %494 = vmatpush.msra.mxu0 %v230
      %495 = vmatpush.msra.mxu0 %v229
      %496 = vmatpush.msra.mxu0 %v228
      %497 = vmatpush.msra.mxu0 %v227
      %498 = vmatmul.f32.gmra.mxu0 %v457
      %v499 = vpop.f32.mrf.mxu0
      %v500 = vadd.f32 %v480, %v499
      %501 = vdwg.mxu0
      %502 = vmatpush.msra.mxu0 0.0
      %503 = vmatpush.msra.mxu0 0.0
      %504 = vmatpush.msra.mxu0 0.0
      %505 = vmatpush.msra.mxu0 0.0
      %506 = vmatpush.msra.mxu0 0.0
      %507 = vmatpush.msra.mxu0 0.0
      %508 = vmatpush.msra.mxu0 0.0
      %509 = vmatpush.msra.mxu0 0.0
      %510 = vmatpush.msra.mxu0 0.0
      %511 = vmatpush.msra.mxu0 0.0
      %512 = vmatpush.msra.mxu0 0.0
      %513 = vmatpush.msra.mxu0 0.0
      %514 = vmatpush.msra.mxu0 %v246
      %515 = vmatpush.msra.mxu0 %v245
      %516 = vmatpush.msra.mxu0 %v244
      %517 = vmatpush.msra.mxu0 %v243
      %518 = vmatmul.f32.gmra.mxu0 %v460
      %v519 = vpop.f32.mrf.mxu0
      %v520 = vadd.f32 %v500, %v519
      %521 = vdwg.mxu0
      %v522 = vmax.f32 %v520, 0.0
      %s523 = scalar_lea.vmem %s200, 96
      %v524 = vld [vmem:[%s523] sm:$0xff]
      %v525 = vld [vmem:[%s523 + $0x8] sm:$0xff]
      %v526 = vld [vmem:[%s523 + $0x10] sm:$0xff]
      %v528 = vsel %vm254, %v526, 0
      %530 = vmatpush.msra.mxu0 %v226
      %531 = vmatpush.msra.mxu0 %v225
      %532 = vmatpush.msra.mxu0 %v224
      %533 = vmatpush.msra.mxu0 %v223
      %534 = vmatpush.msra.mxu0 %v222
      %535 = vmatpush.msra.mxu0 %v221
      %536 = vmatpush.msra.mxu0 %v220
      %537 = vmatpush.msra.mxu0 %v219
      %538 = vmatpush.msra.mxu0 %v218
      %539 = vmatpush.msra.mxu0 %v217
      %540 = vmatpush.msra.mxu0 %v216
      %541 = vmatpush.msra.mxu0 %v215
      %542 = vmatpush.msra.mxu0 %v214
      %543 = vmatpush.msra.mxu0 %v213
      %544 = vmatpush.msra.mxu0 %v212
      %545 = vmatpush.msra.mxu0 %v211
      %546 = vmatmul.f32.gmra.mxu0 %v524
      %v547 = vpop.f32.mrf.mxu0
      %v548 = vadd.f32 %v252, %v547
      %549 = vdwg.mxu0
      %550 = vmatpush.msra.mxu0 %v242
      %551 = vmatpush.msra.mxu0 %v241
      %552 = vmatpush.msra.mxu0 %v240
      %553 = vmatpush.msra.mxu0 %v239
      %554 = vmatpush.msra.mxu0 %v238
      %555 = vmatpush.msra.mxu0 %v237
      %556 = vmatpush.msra.mxu0 %v236
      %557 = vmatpush.msra.mxu0 %v235
      %558 = vmatpush.msra.mxu0 %v234
      %559 = vmatpush.msra.mxu0 %v233
      %560 = vmatpush.msra.mxu0 %v232
      %561 = vmatpush.msra.mxu0 %v231
      %562 = vmatpush.msra.mxu0 %v230
      %563 = vmatpush.msra.mxu0 %v229
      %564 = vmatpush.msra.mxu0 %v228
      %565 = vmatpush.msra.mxu0 %v227
      %566 = vmatmul.f32.gmra.mxu0 %v525
      %v567 = vpop.f32.mrf.mxu0
      %v568 = vadd.f32 %v548, %v567
      %569 = vdwg.mxu0
      %570 = vmatpush.msra.mxu0 0.0
      %571 = vmatpush.msra.mxu0 0.0
      %572 = vmatpush.msra.mxu0 0.0
      %573 = vmatpush.msra.mxu0 0.0
      %574 = vmatpush.msra.mxu0 0.0
      %575 = vmatpush.msra.mxu0 0.0
      %576 = vmatpush.msra.mxu0 0.0
      %577 = vmatpush.msra.mxu0 0.0
      %578 = vmatpush.msra.mxu0 0.0
      %579 = vmatpush.msra.mxu0 0.0
      %580 = vmatpush.msra.mxu0 0.0
      %581 = vmatpush.msra.mxu0 0.0
      %582 = vmatpush.msra.mxu0 %v246
      %583 = vmatpush.msra.mxu0 %v245
      %584 = vmatpush.msra.mxu0 %v244
      %585 = vmatpush.msra.mxu0 %v243
      %586 = vmatmul.f32.gmra.mxu0 %v528
      %v587 = vpop.f32.mrf.mxu0
      %v588 = vadd.f32 %v568, %v587
      %589 = vdwg.mxu0
      %v590 = vmax.f32 %v588, 0.0
      %s591 = scalar_lea.vmem %s200, 120
      %v592 = vld [vmem:[%s591] sm:$0xff]
      %v593 = vld [vmem:[%s591 + $0x8] sm:$0xff]
      %v594 = vld [vmem:[%s591 + $0x10] sm:$0xff]
      %v596 = vsel %vm254, %v594, 0
      %598 = vmatpush.msra.mxu0 %v226
      %599 = vmatpush.msra.mxu0 %v225
      %600 = vmatpush.msra.mxu0 %v224
      %601 = vmatpush.msra.mxu0 %v223
      %602 = vmatpush.msra.mxu0 %v222
      %603 = vmatpush.msra.mxu0 %v221
      %604 = vmatpush.msra.mxu0 %v220
      %605 = vmatpush.msra.mxu0 %v219
      %606 = vmatpush.msra.mxu0 %v218
      %607 = vmatpush.msra.mxu0 %v217
      %608 = vmatpush.msra.mxu0 %v216
      %609 = vmatpush.msra.mxu0 %v215
      %610 = vmatpush.msra.mxu0 %v214
      %611 = vmatpush.msra.mxu0 %v213
      %612 = vmatpush.msra.mxu0 %v212
      %613 = vmatpush.msra.mxu0 %v211
      %614 = vmatmul.f32.gmra.mxu0 %v592
      %v615 = vpop.f32.mrf.mxu0
      %v616 = vadd.f32 %v252, %v615
      %617 = vdwg.mxu0
      %618 = vmatpush.msra.mxu0 %v242
      %619 = vmatpush.msra.mxu0 %v241
      %620 = vmatpush.msra.mxu0 %v240
      %621 = vmatpush.msra.mxu0 %v239
      %622 = vmatpush.msra.mxu0 %v238
      %623 = vmatpush.msra.mxu0 %v237
      %624 = vmatpush.msra.mxu0 %v236
      %625 = vmatpush.msra.mxu0 %v235
      %626 = vmatpush.msra.mxu0 %v234
      %627 = vmatpush.msra.mxu0 %v233
      %628 = vmatpush.msra.mxu0 %v232
      %629 = vmatpush.msra.mxu0 %v231
      %630 = vmatpush.msra.mxu0 %v230
      %631 = vmatpush.msra.mxu0 %v229
      %632 = vmatpush.msra.mxu0 %v228
      %633 = vmatpush.msra.mxu0 %v227
      %634 = vmatmul.f32.gmra.mxu0 %v593
      %v635 = vpop.f32.mrf.mxu0
      %v636 = vadd.f32 %v616, %v635
      %637 = vdwg.mxu0
      %638 = vmatpush.msra.mxu0 0.0
      %639 = vmatpush.msra.mxu0 0.0
      %640 = vmatpush.msra.mxu0 0.0
      %641 = vmatpush.msra.mxu0 0.0
      %642 = vmatpush.msra.mxu0 0.0
      %643 = vmatpush.msra.mxu0 0.0
      %644 = vmatpush.msra.mxu0 0.0
      %645 = vmatpush.msra.mxu0 0.0
      %646 = vmatpush.msra.mxu0 0.0
      %647 = vmatpush.msra.mxu0 0.0
      %648 = vmatpush.msra.mxu0 0.0
      %649 = vmatpush.msra.mxu0 0.0
      %650 = vmatpush.msra.mxu0 %v246
      %651 = vmatpush.msra.mxu0 %v245
      %652 = vmatpush.msra.mxu0 %v244
      %653 = vmatpush.msra.mxu0 %v243
      %654 = vmatmul.f32.gmra.mxu0 %v596
      %v655 = vpop.f32.mrf.mxu0
      %v656 = vadd.f32 %v636, %v655
      %657 = vdwg.mxu0
      %v658 = vmax.f32 %v656, 0.0
      %s659 = scalar_lea.vmem %s200, 144
      %v660 = vld [vmem:[%s659] sm:$0xff]
      %v661 = vld [vmem:[%s659 + $0x8] sm:$0xff]
      %v662 = vld [vmem:[%s659 + $0x10] sm:$0xff]
      %v664 = vsel %vm254, %v662, 0
      %666 = vmatpush.msra.mxu0 %v226
      %667 = vmatpush.msra.mxu0 %v225
      %668 = vmatpush.msra.mxu0 %v224
      %669 = vmatpush.msra.mxu0 %v223
      %670 = vmatpush.msra.mxu0 %v222
      %671 = vmatpush.msra.mxu0 %v221
      %672 = vmatpush.msra.mxu0 %v220
      %673 = vmatpush.msra.mxu0 %v219
      %674 = vmatpush.msra.mxu0 %v218
      %675 = vmatpush.msra.mxu0 %v217
      %676 = vmatpush.msra.mxu0 %v216
      %677 = vmatpush.msra.mxu0 %v215
      %678 = vmatpush.msra.mxu0 %v214
      %679 = vmatpush.msra.mxu0 %v213
      %680 = vmatpush.msra.mxu0 %v212
      %681 = vmatpush.msra.mxu0 %v211
      %682 = vmatmul.f32.gmra.mxu0 %v660
      %v683 = vpop.f32.mrf.mxu0
      %v684 = vadd.f32 %v252, %v683
      %685 = vdwg.mxu0
      %686 = vmatpush.msra.mxu0 %v242
      %687 = vmatpush.msra.mxu0 %v241
      %688 = vmatpush.msra.mxu0 %v240
      %689 = vmatpush.msra.mxu0 %v239
      %690 = vmatpush.msra.mxu0 %v238
      %691 = vmatpush.msra.mxu0 %v237
      %692 = vmatpush.msra.mxu0 %v236
      %693 = vmatpush.msra.mxu0 %v235
      %694 = vmatpush.msra.mxu0 %v234
      %695 = vmatpush.msra.mxu0 %v233
      %696 = vmatpush.msra.mxu0 %v232
      %697 = vmatpush.msra.mxu0 %v231
      %698 = vmatpush.msra.mxu0 %v230
      %699 = vmatpush.msra.mxu0 %v229
      %700 = vmatpush.msra.mxu0 %v228
      %701 = vmatpush.msra.mxu0 %v227
      %702 = vmatmul.f32.gmra.mxu0 %v661
      %v703 = vpop.f32.mrf.mxu0
      %v704 = vadd.f32 %v684, %v703
      %705 = vdwg.mxu0
      %706 = vmatpush.msra.mxu0 0.0
      %707 = vmatpush.msra.mxu0 0.0
      %708 = vmatpush.msra.mxu0 0.0
      %709 = vmatpush.msra.mxu0 0.0
      %710 = vmatpush.msra.mxu0 0.0
      %711 = vmatpush.msra.mxu0 0.0
      %712 = vmatpush.msra.mxu0 0.0
      %713 = vmatpush.msra.mxu0 0.0
      %714 = vmatpush.msra.mxu0 0.0
      %715 = vmatpush.msra.mxu0 0.0
      %716 = vmatpush.msra.mxu0 0.0
      %717 = vmatpush.msra.mxu0 0.0
      %718 = vmatpush.msra.mxu0 %v246
      %719 = vmatpush.msra.mxu0 %v245
      %720 = vmatpush.msra.mxu0 %v244
      %721 = vmatpush.msra.mxu0 %v243
      %722 = vmatmul.f32.gmra.mxu0 %v664
      %v723 = vpop.f32.mrf.mxu0
      %v724 = vadd.f32 %v704, %v723
      %725 = vdwg.mxu0
      %v726 = vmax.f32 %v724, 0.0
      %s727 = scalar_lea.vmem %s200, 168
      %v728 = vld [vmem:[%s727] sm:$0xff]
      %v729 = vld [vmem:[%s727 + $0x8] sm:$0xff]
      %v730 = vld [vmem:[%s727 + $0x10] sm:$0xff]
      %v732 = vsel %vm254, %v730, 0
      %734 = vmatpush.msra.mxu0 %v226
      %735 = vmatpush.msra.mxu0 %v225
      %736 = vmatpush.msra.mxu0 %v224
      %737 = vmatpush.msra.mxu0 %v223
      %738 = vmatpush.msra.mxu0 %v222
      %739 = vmatpush.msra.mxu0 %v221
      %740 = vmatpush.msra.mxu0 %v220
      %741 = vmatpush.msra.mxu0 %v219
      %742 = vmatpush.msra.mxu0 %v218
      %743 = vmatpush.msra.mxu0 %v217
      %744 = vmatpush.msra.mxu0 %v216
      %745 = vmatpush.msra.mxu0 %v215
      %746 = vmatpush.msra.mxu0 %v214
      %747 = vmatpush.msra.mxu0 %v213
      %748 = vmatpush.msra.mxu0 %v212
      %749 = vmatpush.msra.mxu0 %v211
      %750 = vmatmul.f32.gmra.mxu0 %v728
      %v751 = vpop.f32.mrf.mxu0
      %v752 = vadd.f32 %v252, %v751
      %753 = vdwg.mxu0
      %754 = vmatpush.msra.mxu0 %v242
      %755 = vmatpush.msra.mxu0 %v241
      %756 = vmatpush.msra.mxu0 %v240
      %757 = vmatpush.msra.mxu0 %v239
      %758 = vmatpush.msra.mxu0 %v238
      %759 = vmatpush.msra.mxu0 %v237
      %760 = vmatpush.msra.mxu0 %v236
      %761 = vmatpush.msra.mxu0 %v235
      %762 = vmatpush.msra.mxu0 %v234
      %763 = vmatpush.msra.mxu0 %v233
      %764 = vmatpush.msra.mxu0 %v232
      %765 = vmatpush.msra.mxu0 %v231
      %766 = vmatpush.msra.mxu0 %v230
      %767 = vmatpush.msra.mxu0 %v229
      %768 = vmatpush.msra.mxu0 %v228
      %769 = vmatpush.msra.mxu0 %v227
      %770 = vmatmul.f32.gmra.mxu0 %v729
      %v771 = vpop.f32.mrf.mxu0
      %v772 = vadd.f32 %v752, %v771
      %773 = vdwg.mxu0
      %774 = vmatpush.msra.mxu0 0.0
      %775 = vmatpush.msra.mxu0 0.0
      %776 = vmatpush.msra.mxu0 0.0
      %777 = vmatpush.msra.mxu0 0.0
      %778 = vmatpush.msra.mxu0 0.0
      %779 = vmatpush.msra.mxu0 0.0
      %780 = vmatpush.msra.mxu0 0.0
      %781 = vmatpush.msra.mxu0 0.0
      %782 = vmatpush.msra.mxu0 0.0
      %783 = vmatpush.msra.mxu0 0.0
      %784 = vmatpush.msra.mxu0 0.0
      %785 = vmatpush.msra.mxu0 0.0
      %786 = vmatpush.msra.mxu0 %v246
      %787 = vmatpush.msra.mxu0 %v245
      %788 = vmatpush.msra.mxu0 %v244
      %789 = vmatpush.msra.mxu0 %v243
      %790 = vmatmul.f32.gmra.mxu0 %v732
      %v791 = vpop.f32.mrf.mxu0
      %v792 = vadd.f32 %v772, %v791
      %793 = vdwg.mxu0
      %v794 = vmax.f32 %v792, 0.0
      %v795 = vmul.f32 %v318, 0.25
      %v796 = vmul.f32 %v318, 0.75
      %v797 = vadd.f32 %v795, %v796
      %v798 = vmul.f32 %v386, 0.25
      %v799 = vadd.f32 %v796, %v798
      %v800 = vmul.f32 %v797, 0.75
      %v802 = vrot.slane %v797, 7
      %vm804 = vcmask 1040384
      %v805 = vsel %vm804, %v797, %v802
      %v806 = vmul.f32 %v805, 0.25
      %v807 = vadd.f32 %v800, %v806
      %vm808 = vcmask 23552
      %809 = vst.msk [vmem:[%s205] sm:$0xff] %vm808, %v807
      %v810 = vrot.slane %v797, 1
      %vm812 = vcmask 1046528
      %v813 = vsel %vm812, %v810, %v797
      %v814 = vmul.f32 %v813, 0.25
      %v815 = vadd.f32 %v800, %v814
      %816 = vst.msk [vmem:[%s210] sm:$0xff] %vm808, %v815
      %v817 = vmul.f32 %v799, 0.75
      %v819 = vrot.slane %v799, 7
      %v821 = vsel %vm804, %v799, %v819
      %v822 = vmul.f32 %v821, 0.25
      %v823 = vadd.f32 %v817, %v822
      %s824 = scalar_lea.vmem %s205, 8
      %825 = vst.msk [vmem:[%s824] sm:$0xff] %vm808, %v823
      %v826 = vrot.slane %v799, 1
      %v828 = vsel %vm812, %v826, %v799
      %v829 = vmul.f32 %v828, 0.25
      %v830 = vadd.f32 %v817, %v829
      %s831 = scalar_lea.vmem %s210, 8
      %832 = vst.msk [vmem:[%s831] sm:$0xff] %vm808, %v830
      %v833 = vmul.f32 %v386, 0.75
      %v834 = vadd.f32 %v795, %v833
      %v835 = vmul.f32 %v454, 0.25
      %v836 = vadd.f32 %v833, %v835
      %v837 = vmul.f32 %v834, 0.75
      %v839 = vrot.slane %v834, 7
      %v841 = vsel %vm804, %v834, %v839
      %v842 = vmul.f32 %v841, 0.25
      %v843 = vadd.f32 %v837, %v842
      %s844 = scalar_lea.vmem %s205, 16
      %845 = vst.msk [vmem:[%s844] sm:$0xff] %vm808, %v843
      %v846 = vrot.slane %v834, 1
      %v848 = vsel %vm812, %v846, %v834
      %v849 = vmul.f32 %v848, 0.25
      %v850 = vadd.f32 %v837, %v849
      %s851 = scalar_lea.vmem %s210, 16
      %852 = vst.msk [vmem:[%s851] sm:$0xff] %vm808, %v850
      %v853 = vmul.f32 %v836, 0.75
      %v855 = vrot.slane %v836, 7
      %v857 = vsel %vm804, %v836, %v855
      %v858 = vmul.f32 %v857, 0.25
      %v859 = vadd.f32 %v853, %v858
      %s860 = scalar_lea.vmem %s205, 24
      %861 = vst.msk [vmem:[%s860] sm:$0xff] %vm808, %v859
      %v862 = vrot.slane %v836, 1
      %v864 = vsel %vm812, %v862, %v836
      %v865 = vmul.f32 %v864, 0.25
      %v866 = vadd.f32 %v853, %v865
      %s867 = scalar_lea.vmem %s210, 24
      %868 = vst.msk [vmem:[%s867] sm:$0xff] %vm808, %v866
      %v869 = vmul.f32 %v454, 0.75
      %v870 = vadd.f32 %v798, %v869
      %v871 = vmul.f32 %v522, 0.25
      %v872 = vadd.f32 %v869, %v871
      %v873 = vmul.f32 %v870, 0.75
      %v875 = vrot.slane %v870, 7
      %v877 = vsel %vm804, %v870, %v875
      %v878 = vmul.f32 %v877, 0.25
      %v879 = vadd.f32 %v873, %v878
      %s880 = scalar_lea.vmem %s205, 32
      %881 = vst.msk [vmem:[%s880] sm:$0xff] %vm808, %v879
      %v882 = vrot.slane %v870, 1
      %v884 = vsel %vm812, %v882, %v870
      %v885 = vmul.f32 %v884, 0.25
      %v886 = vadd.f32 %v873, %v885
      %s887 = scalar_lea.vmem %s210, 32
      %888 = vst.msk [vmem:[%s887] sm:$0xff] %vm808, %v886
      %v889 = vmul.f32 %v872, 0.75
      %v891 = vrot.slane %v872, 7
      %v893 = vsel %vm804, %v872, %v891
      %v894 = vmul.f32 %v893, 0.25
      %v895 = vadd.f32 %v889, %v894
      %s896 = scalar_lea.vmem %s205, 40
      %897 = vst.msk [vmem:[%s896] sm:$0xff] %vm808, %v895
      %v898 = vrot.slane %v872, 1
      %v900 = vsel %vm812, %v898, %v872
      %v901 = vmul.f32 %v900, 0.25
      %v902 = vadd.f32 %v889, %v901
      %s903 = scalar_lea.vmem %s210, 40
      %904 = vst.msk [vmem:[%s903] sm:$0xff] %vm808, %v902
      %v905 = vmul.f32 %v522, 0.75
      %v906 = vadd.f32 %v835, %v905
      %v907 = vmul.f32 %v590, 0.25
      %v908 = vadd.f32 %v905, %v907
      %v909 = vmul.f32 %v906, 0.75
      %v911 = vrot.slane %v906, 7
      %v913 = vsel %vm804, %v906, %v911
      %v914 = vmul.f32 %v913, 0.25
      %v915 = vadd.f32 %v909, %v914
      %s916 = scalar_lea.vmem %s205, 48
      %917 = vst.msk [vmem:[%s916] sm:$0xff] %vm808, %v915
      %v918 = vrot.slane %v906, 1
      %v920 = vsel %vm812, %v918, %v906
      %v921 = vmul.f32 %v920, 0.25
      %v922 = vadd.f32 %v909, %v921
      %s923 = scalar_lea.vmem %s210, 48
      %924 = vst.msk [vmem:[%s923] sm:$0xff] %vm808, %v922
      %v925 = vmul.f32 %v908, 0.75
      %v927 = vrot.slane %v908, 7
      %v929 = vsel %vm804, %v908, %v927
      %v930 = vmul.f32 %v929, 0.25
      %v931 = vadd.f32 %v925, %v930
      %s932 = scalar_lea.vmem %s205, 56
      %933 = vst.msk [vmem:[%s932] sm:$0xff] %vm808, %v931
      %v934 = vrot.slane %v908, 1
      %v936 = vsel %vm812, %v934, %v908
      %v937 = vmul.f32 %v936, 0.25
      %v938 = vadd.f32 %v925, %v937
      %s939 = scalar_lea.vmem %s210, 56
      %940 = vst.msk [vmem:[%s939] sm:$0xff] %vm808, %v938
      %v941 = vmul.f32 %v590, 0.75
      %v942 = vadd.f32 %v871, %v941
      %v943 = vmul.f32 %v658, 0.25
      %v944 = vadd.f32 %v941, %v943
      %v945 = vmul.f32 %v942, 0.75
      %v947 = vrot.slane %v942, 7
      %v949 = vsel %vm804, %v942, %v947
      %v950 = vmul.f32 %v949, 0.25
      %v951 = vadd.f32 %v945, %v950
      %s952 = scalar_lea.vmem %s205, 64
      %953 = vst.msk [vmem:[%s952] sm:$0xff] %vm808, %v951
      %v954 = vrot.slane %v942, 1
      %v956 = vsel %vm812, %v954, %v942
      %v957 = vmul.f32 %v956, 0.25
      %v958 = vadd.f32 %v945, %v957
      %s959 = scalar_lea.vmem %s210, 64
      %960 = vst.msk [vmem:[%s959] sm:$0xff] %vm808, %v958
      %v961 = vmul.f32 %v944, 0.75
      %v963 = vrot.slane %v944, 7
      %v965 = vsel %vm804, %v944, %v963
      %v966 = vmul.f32 %v965, 0.25
      %v967 = vadd.f32 %v961, %v966
      %s968 = scalar_lea.vmem %s205, 72
      %969 = vst.msk [vmem:[%s968] sm:$0xff] %vm808, %v967
      %v970 = vrot.slane %v944, 1
      %v972 = vsel %vm812, %v970, %v944
      %v973 = vmul.f32 %v972, 0.25
      %v974 = vadd.f32 %v961, %v973
      %s975 = scalar_lea.vmem %s210, 72
      %976 = vst.msk [vmem:[%s975] sm:$0xff] %vm808, %v974
      %v977 = vmul.f32 %v658, 0.75
      %v978 = vadd.f32 %v907, %v977
      %v979 = vmul.f32 %v726, 0.25
      %v980 = vadd.f32 %v977, %v979
      %v981 = vmul.f32 %v978, 0.75
      %v983 = vrot.slane %v978, 7
      %v985 = vsel %vm804, %v978, %v983
      %v986 = vmul.f32 %v985, 0.25
      %v987 = vadd.f32 %v981, %v986
      %s988 = scalar_lea.vmem %s205, 80
      %989 = vst.msk [vmem:[%s988] sm:$0xff] %vm808, %v987
      %v990 = vrot.slane %v978, 1
      %v992 = vsel %vm812, %v990, %v978
      %v993 = vmul.f32 %v992, 0.25
      %v994 = vadd.f32 %v981, %v993
      %s995 = scalar_lea.vmem %s210, 80
      %996 = vst.msk [vmem:[%s995] sm:$0xff] %vm808, %v994
      %v997 = vmul.f32 %v980, 0.75
      %v999 = vrot.slane %v980, 7
      %v1001 = vsel %vm804, %v980, %v999
      %v1002 = vmul.f32 %v1001, 0.25
      %v1003 = vadd.f32 %v997, %v1002
      %s1004 = scalar_lea.vmem %s205, 88
      %1005 = vst.msk [vmem:[%s1004] sm:$0xff] %vm808, %v1003
      %v1006 = vrot.slane %v980, 1
      %v1008 = vsel %vm812, %v1006, %v980
      %v1009 = vmul.f32 %v1008, 0.25
      %v1010 = vadd.f32 %v997, %v1009
      %s1011 = scalar_lea.vmem %s210, 88
      %1012 = vst.msk [vmem:[%s1011] sm:$0xff] %vm808, %v1010
      %v1013 = vmul.f32 %v726, 0.75
      %v1014 = vadd.f32 %v943, %v1013
      %v1015 = vmul.f32 %v794, 0.25
      %v1016 = vadd.f32 %v1013, %v1015
      %v1017 = vmul.f32 %v1014, 0.75
      %v1019 = vrot.slane %v1014, 7
      %v1021 = vsel %vm804, %v1014, %v1019
      %v1022 = vmul.f32 %v1021, 0.25
      %v1023 = vadd.f32 %v1017, %v1022
      %s1024 = scalar_lea.vmem %s205, 96
      %1025 = vst.msk [vmem:[%s1024] sm:$0xff] %vm808, %v1023
      %v1026 = vrot.slane %v1014, 1
      %v1028 = vsel %vm812, %v1026, %v1014
      %v1029 = vmul.f32 %v1028, 0.25
      %v1030 = vadd.f32 %v1017, %v1029
      %s1031 = scalar_lea.vmem %s210, 96
      %1032 = vst.msk [vmem:[%s1031] sm:$0xff] %vm808, %v1030
      %v1033 = vmul.f32 %v1016, 0.75
      %v1035 = vrot.slane %v1016, 7
      %v1037 = vsel %vm804, %v1016, %v1035
      %v1038 = vmul.f32 %v1037, 0.25
      %v1039 = vadd.f32 %v1033, %v1038
      %s1040 = scalar_lea.vmem %s205, 104
      %1041 = vst.msk [vmem:[%s1040] sm:$0xff] %vm808, %v1039
      %v1042 = vrot.slane %v1016, 1
      %v1044 = vsel %vm812, %v1042, %v1016
      %v1045 = vmul.f32 %v1044, 0.25
      %v1046 = vadd.f32 %v1033, %v1045
      %s1047 = scalar_lea.vmem %s210, 104
      %1048 = vst.msk [vmem:[%s1047] sm:$0xff] %vm808, %v1046
      %v1049 = vmul.f32 %v794, 0.75
      %v1050 = vadd.f32 %v979, %v1049
      %v1051 = vadd.f32 %v1049, %v1015
      %v1052 = vmul.f32 %v1050, 0.75
      %v1054 = vrot.slane %v1050, 7
      %v1056 = vsel %vm804, %v1050, %v1054
      %v1057 = vmul.f32 %v1056, 0.25
      %v1058 = vadd.f32 %v1052, %v1057
      %s1059 = scalar_lea.vmem %s205, 112
      %1060 = vst.msk [vmem:[%s1059] sm:$0xff] %vm808, %v1058
      %v1061 = vrot.slane %v1050, 1
      %v1063 = vsel %vm812, %v1061, %v1050
      %v1064 = vmul.f32 %v1063, 0.25
      %v1065 = vadd.f32 %v1052, %v1064
      %s1066 = scalar_lea.vmem %s210, 112
      %1067 = vst.msk [vmem:[%s1066] sm:$0xff] %vm808, %v1065
      %v1068 = vmul.f32 %v1051, 0.75
      %v1070 = vrot.slane %v1051, 7
      %v1072 = vsel %vm804, %v1051, %v1070
      %v1073 = vmul.f32 %v1072, 0.25
      %v1074 = vadd.f32 %v1068, %v1073
      %s1075 = scalar_lea.vmem %s205, 120
      %1076 = vst.msk [vmem:[%s1075] sm:$0xff] %vm808, %v1074
      %v1077 = vrot.slane %v1051, 1
      %v1079 = vsel %vm812, %v1077, %v1051
      %v1080 = vmul.f32 %v1079, 0.25
      %v1081 = vadd.f32 %v1068, %v1080
      %s1082 = scalar_lea.vmem %s210, 120
      %1083 = vst.msk [vmem:[%s1082] sm:$0xff] %vm808, %v1081
      %p1084 = scmp.lt.s32.totalorder %s16, 1
      %s1085 = scalar_select %p1084, %s16, 1
      %s1086 = smul.addr %s1085, 16
      %s1087 = smul.addr %s1086, 8
      %s1088 = scalar_lea.vmem %s3, %s1087
      %p1089 = scmp.lt.s32.totalorder %s16, 1
      %s1090 = scalar_select %p1089, %s16, 1
      %s1091 = smul.addr %s1090, 16
      %s1092 = smul.addr %s1091, 8
      %s1093 = scalar_lea.vmem %s4, %s1092
      // Predicated region
      $region33: #{autoencoder_forward.11} parent=31 // pred_check
        %p1094 = pneg %p102
      $region34: #{autoencoder_forward.11} parent=31 // pred_check_branch
        %1096 = sbr.rel (%p1094) target = $region36
      $region35: #{autoencoder_forward.11} parent=31 // pred_region
        _
      $region36: #{autoencoder_forward.11} parent=31 // pred_fallthru
        _
      // Predicated region
      $region37: #{autoencoder_forward.11} parent=31 // pred_check
        %p1097 = pneg %p128
      $region38: #{autoencoder_forward.11} parent=31 // pred_check_branch
        %1099 = sbr.rel (%p1097) target = $region40
      $region39: #{autoencoder_forward.11} parent=31 // pred_region
        _
      $region40: #{autoencoder_forward.11} parent=31 // pred_fallthru
        _
    $region32: #{autoencoder_forward.11} parent=5 // pred_fallthru
      _
    %p1100 = scmp.le.s32.totalorder 2, %s11
    // Predicated region
    $region41: #{autoencoder_forward.11} parent=5 // pred_check
      %p1101 = pneg %p1100
    $region42: #{autoencoder_forward.11} parent=5 // pred_check_branch
      %1103 = sbr.rel (%p1101) target = $region44
    $region43: #{autoencoder_forward.11} parent=5 // pred_region
      %s1104 = ssub.s32 %s11, 2
      // Predicated region
      $region45: #{autoencoder_forward.11} parent=43 // pred_check
        %p1105 = pneg %p108
      $region46: #{autoencoder_forward.11} parent=43 // pred_check_branch
        %1107 = sbr.rel (%p1105) target = $region48
      $region47: #{autoencoder_forward.11} parent=43 // pred_region
        %p1108 = scmp.lt.s32.totalorder %s17, 1
        %s1109 = scalar_select %p1108, %s17, 1
        %s1110 = smul.addr %s1109, 16
        %s1111 = smul.addr %s1110, 8
        %s1112 = scalar_lea.vmem %s3, %s1111
      $region48: #{autoencoder_forward.11} parent=43 // pred_fallthru
        _
      // Predicated region
      $region49: #{autoencoder_forward.11} parent=43 // pred_check
        %p1113 = pneg %p134
      $region50: #{autoencoder_forward.11} parent=43 // pred_check_branch
        %1115 = sbr.rel (%p1113) target = $region52
      $region51: #{autoencoder_forward.11} parent=43 // pred_region
        %p1116 = scmp.lt.s32.totalorder %s17, 1
        %s1117 = scalar_select %p1116, %s17, 1
        %s1118 = smul.addr %s1117, 16
        %s1119 = smul.addr %s1118, 8
        %s1120 = scalar_lea.vmem %s4, %s1119
      $region52: #{autoencoder_forward.11} parent=43 // pred_fallthru
        _
    $region44: #{autoencoder_forward.11} parent=5 // pred_fallthru
      _
  $region6: #{autoencoder_forward.11} parent=0 // loop_footer
    %s15 = sadd.s32 1, %s11
  $region7: #{autoencoder_forward.11} parent=0 // loop_footer_branch
    %10 = sbr.rel target = $region3
  $region8: #{autoencoder_forward.11} parent=0 // loop_exit
    _

</llo_original>
